<compile_context>
chip_gen: v7x
topology: tpu7x:2x2x1
jax: 0.10.0
libtpu: 0.0.40
codegen_flags: <defaults>
</compile_context>

<pallas_src>
import functools

import jax
import jax.numpy as jnp
from jax.experimental import pallas as pl
from jax.experimental.pallas import tpu as pltpu

_EPS = 1e-5


def _sublane_tile(dtype) -> int:
    """Sublane-tile row count for `dtype`: 8 (f32), 16 (bf16), 32 (int8/fp8)."""
    return max(8, 32 // jnp.dtype(dtype).itemsize)


def _instance_norm(y):
    """InstanceNorm(affine=False) over the spatial axes of an (H, W, C) f32 tile.

    Single-sweep statistics (sum and sum-of-squares in one pass,
    var = E[x^2] - mean^2, clamped at 0) to avoid a second full-image VALU
    pass.  NOTE: this form can lose precision vs the two-pass variance when
    |mean| >> std; here the conv inputs are zero-mean-ish (x or an IN'd,
    bias-free conv output) so the cancellation risk is negligible.  Switch to
    the subtract-mean two-pass form if bit-tight parity is ever required.
    """
    h, w, _ = y.shape
    inv_n = 1.0 / float(h * w)
    s = jnp.sum(y, axis=(0, 1), keepdims=True)
    s2 = jnp.sum(y * y, axis=(0, 1), keepdims=True)
    mean = s * inv_n
    var = jnp.maximum(s2 * inv_n - mean * mean, 0.0)
    return (y - mean) * jax.lax.rsqrt(var + _EPS)


def resblock_kernel(x_ref, w1_ref, w2_ref, out_ref, pad_ref, *, padl, flatten_ok):
    # x_ref:   (1, H, W, C)  one image, NHWC (C on the lane axis)
    # w*_ref:  (9, Cin, Cout) one matrix per 3x3 tap, index = kh*3 + kw
    # out_ref: (1, H, W, C)
    # pad_ref: VMEM scratch (H+2, W+2*padl, C); interior lives at
    #          [1:H+1, padl:padl+W], 1-px zero halo around it; padl is the
    #          dtype sublane tile so the interior stores are tile-aligned.
    _, H, W, C = x_ref.shape

    # Zero only the thin halo strips the conv reads; the interior is fully
    # overwritten before each conv.  Kept per grid step on purpose: with
    # dimension_semantics=("parallel",) the batch axis may be sharded across
    # TensorCores, so "first iteration on this core" is not portably
    # detectable, and these strips are O((H+W)*C) vs O(H*W*C*C) conv work.
    zrow = jnp.zeros((1, W + 2, C), pad_ref.dtype)
    zcol = jnp.zeros((H, 1, C), pad_ref.dtype)
    pad_ref[0:1, padl - 1:padl + W + 1, :] = zrow
    pad_ref[H + 1:H + 2, padl - 1:padl + W + 1, :] = zrow
    pad_ref[1:H + 1, padl - 1:padl, :] = zcol
    pad_ref[1:H + 1, padl + W:padl + W + 1, :] = zcol

    def conv3x3(w_ref):
        """3x3, stride-1, pad-1 conv of the pad_ref interior; f32 accumulation."""
        w = w_ref[...]                                               # (9, Cin, Cout)
        acc = None
        for kw in range(3):
            # One width-shifted band load per kw (hoisted out of the kh loop).
            # kw=1 is sublane-aligned; kw=0/2 start one row off a tile
            # boundary, which Mosaic realigns with XLU sublane rotates.
            # TODO(synk): if a bundle dump shows these two loads retiling
            # through VMEM, replace them with one aligned pad_ref[...] load +
            # pltpu.roll(buf, shift=(1-kw) % (W + 2*padl), axis=1) followed by
            # the aligned [:, padl:padl+W] slice (the wrap lands in the
            # never-read padding columns).
            band = pad_ref[:, padl - 1 + kw:padl - 1 + kw + W, :]    # (H+2, W, C)
            for kh in range(3):
                patch = band[kh:kh + H]          # leading-axis slab select: free
                if flatten_ok:
                    # W is a multiple of the sublane tile, so this reshape is a
                    # layout no-op (pure vreg regrouping, no data movement).
                    tap = jnp.dot(patch.reshape(H * W, C), w[kh * 3 + kw],
                                  preferred_element_type=jnp.float32)
                else:
                    # Layout-preserving last-axis contraction on the 3-D patch:
                    # avoids the relayout a (H,W,C)->(H*W,C) reshape would
                    # force when W is not a sublane-tile multiple.
                    tap = jax.lax.dot_general(
                        patch, w[kh * 3 + kw],
                        dimension_numbers=(((2,), (0,)), ((), ())),
                        preferred_element_type=jnp.float32)
                # TODO(synk): on v7x the MRB can accumulate all 9 taps at one
                # MXU accumulator address (pltpu.matmul_push_rhs / acc_lhs /
                # pop), removing these 8 f32 VPU adds per conv; keep the simple
                # += chain until a bundle dump shows VALU as the binding slot.
                acc = tap if acc is None else acc + tap
        return acc.reshape(H, W, C) if flatten_ok else acc

    # conv1 + IN + ReLU.  Conv biases are dropped on purpose: each conv is
    # immediately followed by InstanceNorm(affine=False), whose mean
    # subtraction removes a per-channel constant exactly.  Only valid for this
    # ResBlock config (norm='in'); re-add bias adds if norm ever changes.
    pad_ref[1:H + 1, padl:padl + W, :] = x_ref[0].astype(pad_ref.dtype)
    h = jnp.maximum(_instance_norm(conv3x3(w1_ref)), 0.0)

    # conv2 + IN, reusing the same pad scratch (halo is still zero).
    pad_ref[1:H + 1, padl:padl + W, :] = h.astype(pad_ref.dtype)
    h = _instance_norm(conv3x3(w2_ref))

    # Residual: re-read x here instead of keeping it live through both convs.
    out_ref[0] = (h + x_ref[0].astype(jnp.float32)).astype(out_ref.dtype)


def _to_taps(w_oihw, compute_dtype):
    """(Cout, Cin, 3, 3) OIHW -> (9, Cin, Cout) per-tap matrices, tap = kh*3+kw."""
    cout, cin = w_oihw.shape[0], w_oihw.shape[1]
    return jnp.transpose(w_oihw, (2, 3, 1, 0)).reshape(9, cin, cout).astype(compute_dtype)


@functools.partial(jax.jit, static_argnames=("compute_dtype",))
def resblock_forward_nhwc(x_nhwc, w1_oihw, b1, w2_oihw, b2, *, compute_dtype=jnp.float32):
    """ResBlock forward on NHWC activations (preferred layout on TPU).

    compute_dtype: dtype fed to the MXU for the 9-tap matmuls; accumulation is
    always f32 and InstanceNorm statistics / ReLU / residual stay f32.  Use
    jnp.bfloat16 on v5e, v6e AND v7x: all three MXUs are bf16-native (f32
    operands cost ~3x on v5e), and it halves the pad-scratch VMEM and band
    traffic.  Expect small (~1e-2) drift vs the f32 path because the
    inter-conv activation h is cast to bf16 (documented, not a bug).

    Channel granularity: per-tap matmuls use K=N=C, so C should be a multiple
    of 128 (v5e) and ideally 256 (v6e/v7x); pad channels or K-pack taps before
    instantiating this block with small C in production.
    """
    # InstanceNorm(affine=False) right after each conv cancels the bias exactly.
    del b1, b2
    N, H, W, C = x_nhwc.shape

    padl = _sublane_tile(compute_dtype)   # interior offset: keeps hot stores aligned
    flatten_ok = (W % padl == 0)          # (H,W,C)->(H*W,C) is a layout no-op

    w1t = _to_taps(w1_oihw, compute_dtype)
    w2t = _to_taps(w2_oihw, compute_dtype)

    c_item = jnp.dtype(compute_dtype).itemsize
    x_item = x_nhwc.dtype.itemsize
    img_elems = H * W * C
    # Working set per grid step: double-buffered x/out blocks, double-buffered
    # (small, constant-index) weight blocks, the pad scratch, shifted band
    # temporaries and the f32 conv/IN temporaries.
    working_set = (
        4 * img_elems * x_item                        # 2 x-bufs + 2 out-bufs
        + 2 * 2 * 9 * C * C * c_item                  # two weights, double-buffered
        + (H + 2) * (W + 2 * padl) * C * c_item       # pad scratch
        + 3 * (H + 2) * W * C * c_item                # band temporaries
        + 4 * img_elems * 4)                          # f32 acc / IN / h temporaries
    try:
        vmem_phys = int(pltpu.get_tpu_info().vmem_capacity_bytes)
    except Exception:
        vmem_phys = 64 * 2**20                        # v7x per-TensorCore VMEM (smallest)
    vmem_cap = int(0.75 * vmem_phys)                  # leave compiler/pipeline headroom
    vmem_limit = int(min(vmem_cap, max(32 * 2**20, 2 * working_set)))

    cost = pl.CostEstimate(
        flops=2 * 2 * 9 * N * H * W * C * C,          # two 3x3 convs
        transcendentals=2 * N * C,                     # rsqrt per (image, channel, conv)
        bytes_accessed=2 * N * img_elems * x_item + 2 * 9 * C * C * c_item,
    )

    # TODO(synk): for N == 1 inference on v7x, split into two pallas_calls
    # (conv1+IN+ReLU, then conv2+IN+residual) with a (N, Cout-tile) grid so
    # both TensorCores get work; per-Cout-tile IN statistics are exact.
    # TODO(synk): the constant-index weight inputs could be single-buffered
    # (pipeline_mode=pl.Buffered(1)) to reclaim ~2*9*C*C bytes of VMEM on v7x.
    return pl.pallas_call(
        functools.partial(resblock_kernel, padl=padl, flatten_ok=flatten_ok),
        out_shape=jax.ShapeDtypeStruct((N, H, W, C), x_nhwc.dtype),
        grid_spec=pltpu.PrefetchScalarGridSpec(
            num_scalar_prefetch=0,
            grid=(N,),                                  # pipeline HBM<->VMEM over images
            in_specs=[
                pl.BlockSpec((1, H, W, C), lambda n: (n, 0, 0, 0)),
                pl.BlockSpec((9, C, C), lambda n: (0, 0, 0)),   # weights stay resident
                pl.BlockSpec((9, C, C), lambda n: (0, 0, 0)),
            ],
            out_specs=pl.BlockSpec((1, H, W, C), lambda n: (n, 0, 0, 0)),
            scratch_shapes=[pltpu.VMEM((H + 2, W + 2 * padl, C), compute_dtype)],
        ),
        compiler_params=pltpu.CompilerParams(
            dimension_semantics=("parallel",),          # v7x: shard images across both TCs
            vmem_limit_bytes=vmem_limit,
        ),
        cost_estimate=cost,
    )(x_nhwc, w1t, w2t)


@functools.partial(jax.jit, static_argnames=("compute_dtype",))
def resblock_forward(x_nchw, w1_oihw, b1, w2_oihw, b2, *, compute_dtype=jnp.float32):
    """PyTorch-style NCHW / OIHW interface around `resblock_forward_nhwc`.

    NOTE: each transpose below is a full HBM round-trip of the activation;
    when chaining ResBlocks inside the full ACGPN generator keep activations
    NHWC across blocks and call `resblock_forward_nhwc` directly.
    TODO(synk): alternatively try CompilerParams(allow_input_fusion=...) so
    XLA can fuse the input transpose into the pallas_call operand.
    """
    x = jnp.transpose(x_nchw, (0, 2, 3, 1))                          # -> NHWC
    out = resblock_forward_nhwc(x, w1_oihw, b1, w2_oihw, b2,
                                compute_dtype=compute_dtype)
    return jnp.transpose(out, (0, 3, 1, 2))                          # back to NCHW


def ref_resblock(x, w1, b1, w2, b2):
    """Pure-JAX NCHW reference mirroring the PyTorch module (biases included)."""
    def conv(y, w, b):
        out = jax.lax.conv_general_dilated(
            y, w, window_strides=(1, 1), padding=((1, 1), (1, 1)),
            dimension_numbers=("NCHW", "OIHW", "NCHW"))
        return out + b.reshape(1, -1, 1, 1)

    def inorm(y):
        m = jnp.mean(y, axis=(2, 3), keepdims=True)
        v = jnp.mean((y - m) ** 2, axis=(2, 3), keepdims=True)
        return (y - m) * jax.lax.rsqrt(v + _EPS)

    h = jnp.maximum(inorm(conv(x, w1, b1)), 0.0)
    h = inorm(conv(h, w2, b2))
    return h + x


if __name__ == "__main__":
    N, C, H, W = 2, 4, 16, 16
    key = jax.random.PRNGKey(0)
    kx, kw1, kb1, kw2, kb2 = jax.random.split(key, 5)

    x = jax.random.normal(kx, (N, C, H, W), jnp.float32)
    w1 = 0.2 * jax.random.normal(kw1, (C, C, 3, 3), jnp.float32)   # OIHW, like PyTorch
    b1 = 0.1 * jax.random.normal(kb1, (C,), jnp.float32)
    w2 = 0.2 * jax.random.normal(kw2, (C, C, 3, 3), jnp.float32)
    b2 = 0.1 * jax.random.normal(kb2, (C,), jnp.float32)

    ref = jax.block_until_ready(ref_resblock(x, w1, b1, w2, b2))

    # f32 MXU path: tight match with the PyTorch-equivalent f32 reference.
    out = jax.block_until_ready(
        resblock_forward(x, w1, b1, w2, b2, compute_dtype=jnp.float32))
    assert out.shape == (N, C, H, W)
    assert jnp.allclose(out, ref, rtol=1e-4, atol=1e-4), "f32 kernel mismatch vs reference"

    # bf16 MXU-operand fast path (recommended on v5e/v6e/v7x): f32 accumulation
    # + f32 IN statistics; the inter-conv activation is bf16, so only small
    # quantization drift is expected (documented behaviour).
    out_bf16 = jax.block_until_ready(
        resblock_forward(x, w1, b1, w2, b2, compute_dtype=jnp.bfloat16))
    assert jnp.allclose(out_bf16, ref, rtol=1e-1, atol=1e-1), "bf16 kernel drift too large"

    print("KERNEL_OK")
</pallas_src>

<mosaic_0001>
module attributes {stable_mosaic.version = 11 : i64} {
  func.func @resblock_kernel(%arg0: i32, %arg1: memref<1x16x16x4xf32, #tpu.memory_space<vmem>>, %arg2: memref<9x4x4xf32, #tpu.memory_space<vmem>>, %arg3: memref<9x4x4xf32, #tpu.memory_space<vmem>>, %arg4: memref<1x16x16x4xf32, #tpu.memory_space<vmem>>, %arg5: memref<18x32x4xf32, #tpu.memory_space<vmem>>) attributes {dimension_semantics = [#tpu.dimension_semantics<parallel>], iteration_bounds = array<i64: 2>, scalar_prefetch = 0 : i64, scratch_operands = 1 : i64, tpu.core_type = #tpu.core_type<tc>, window_params = [{transform_indices = @transform_0, window_bounds = array<i64: 1, 16, 16, 4>}, {pipeline_mode = #tpu.pipeline_mode<synchronous>, transform_indices = @transform_1, window_bounds = array<i64: 9, 4, 4>}, {pipeline_mode = #tpu.pipeline_mode<synchronous>, transform_indices = @transform_2, window_bounds = array<i64: 9, 4, 4>}, {transform_indices = @transform_3, window_bounds = array<i64: 1, 16, 16, 4>}]} {
    %cst = arith.constant 0.000000e+00 : f32
    %0 = vector.broadcast %cst : f32 to vector<1x18x4xf32>
    %cst_0 = arith.constant 0.000000e+00 : f32
    %1 = vector.broadcast %cst_0 : f32 to vector<16x1x4xf32>
    %c0 = arith.constant 0 : index
    %c7 = arith.constant 7 : index
    %c0_1 = arith.constant 0 : index
    %2 = vector.load %arg5[%c0, %c7, %c0_1] : memref<18x32x4xf32, #tpu.memory_space<vmem>>, vector<1x18x4xf32>
    tpu.vector_store %arg5[%c0, %c7, %c0_1], %0 {strides = array<i32>} : memref<18x32x4xf32, #tpu.memory_space<vmem>>, vector<1x18x4xf32>,
    %c17 = arith.constant 17 : index
    %c7_2 = arith.constant 7 : index
    %c0_3 = arith.constant 0 : index
    %3 = vector.load %arg5[%c17, %c7_2, %c0_3] : memref<18x32x4xf32, #tpu.memory_space<vmem>>, vector<1x18x4xf32>
    tpu.vector_store %arg5[%c17, %c7_2, %c0_3], %0 {strides = array<i32>} : memref<18x32x4xf32, #tpu.memory_space<vmem>>, vector<1x18x4xf32>,
    %c1 = arith.constant 1 : index
    %c7_4 = arith.constant 7 : index
    %c0_5 = arith.constant 0 : index
    %4 = vector.load %arg5[%c1, %c7_4, %c0_5] : memref<18x32x4xf32, #tpu.memory_space<vmem>>, vector<16x1x4xf32>
    tpu.vector_store %arg5[%c1, %c7_4, %c0_5], %1 {strides = array<i32>} : memref<18x32x4xf32, #tpu.memory_space<vmem>>, vector<16x1x4xf32>,
    %c1_6 = arith.constant 1 : index
    %c24 = arith.constant 24 : index
    %c0_7 = arith.constant 0 : index
    %5 = vector.load %arg5[%c1_6, %c24, %c0_7] : memref<18x32x4xf32, #tpu.memory_space<vmem>>, vector<16x1x4xf32>
    tpu.vector_store %arg5[%c1_6, %c24, %c0_7], %1 {strides = array<i32>} : memref<18x32x4xf32, #tpu.memory_space<vmem>>, vector<16x1x4xf32>,
    %c0_8 = arith.constant 0 : index
    %c0_9 = arith.constant 0 : index
    %c0_10 = arith.constant 0 : index
    %c0_11 = arith.constant 0 : index
    %6 = vector.load %arg1[%c0_8, %c0_9, %c0_10, %c0_11] : memref<1x16x16x4xf32, #tpu.memory_space<vmem>>, vector<1x16x16x4xf32>
    %7 = vector.shape_cast %6 : vector<1x16x16x4xf32> to vector<16x16x4xf32>
    %c1_12 = arith.constant 1 : index
    %c8 = arith.constant 8 : index
    %c0_13 = arith.constant 0 : index
    %8 = vector.load %arg5[%c1_12, %c8, %c0_13] : memref<18x32x4xf32, #tpu.memory_space<vmem>>, vector<16x16x4xf32>
    tpu.vector_store %arg5[%c1_12, %c8, %c0_13], %7 {strides = array<i32>} : memref<18x32x4xf32, #tpu.memory_space<vmem>>, vector<16x16x4xf32>,
    %c0_14 = arith.constant 0 : index
    %c0_15 = arith.constant 0 : index
    %c0_16 = arith.constant 0 : index
    %9 = vector.load %arg2[%c0_14, %c0_15, %c0_16] : memref<9x4x4xf32, #tpu.memory_space<vmem>>, vector<9x4x4xf32>
    %c0_17 = arith.constant 0 : index
    %c7_18 = arith.constant 7 : index
    %c0_19 = arith.constant 0 : index
    %10 = vector.load %arg5[%c0_17, %c7_18, %c0_19] : memref<18x32x4xf32, #tpu.memory_space<vmem>>, vector<18x16x4xf32>
    %11 = vector.extract_strided_slice %10 {offsets = [0, 0, 0], sizes = [16, 16, 4], strides = [1, 1, 1]} : vector<18x16x4xf32> to vector<16x16x4xf32>
    %12 = vector.shape_cast %11 : vector<16x16x4xf32> to vector<256x4xf32>
    %13 = vector.extract_strided_slice %9 {offsets = [0, 0, 0], sizes = [1, 4, 4], strides = [1, 1, 1]} : vector<9x4x4xf32> to vector<1x4x4xf32>
    %14 = vector.shape_cast %13 : vector<1x4x4xf32> to vector<4x4xf32>
    %cst_20 = arith.constant dense<0.000000e+00> : vector<256x4xf32>
    %15 = tpu.matmul %12, %14, %cst_20 {dimension_numbers = #tpu.dot_dimension_numbers<[1], [0], [0], [1], [0, 0, 1, 1], [], []>} : vector<256x4xf32>, vector<4x4xf32>, vector<256x4xf32> -> vector<256x4xf32>
    %16 = vector.extract_strided_slice %10 {offsets = [1, 0, 0], sizes = [16, 16, 4], strides = [1, 1, 1]} : vector<18x16x4xf32> to vector<16x16x4xf32>
    %17 = vector.shape_cast %16 : vector<16x16x4xf32> to vector<256x4xf32>
    %18 = vector.extract_strided_slice %9 {offsets = [3, 0, 0], sizes = [1, 4, 4], strides = [1, 1, 1]} : vector<9x4x4xf32> to vector<1x4x4xf32>
    %19 = vector.shape_cast %18 : vector<1x4x4xf32> to vector<4x4xf32>
    %cst_21 = arith.constant dense<0.000000e+00> : vector<256x4xf32>
    %20 = tpu.matmul %17, %19, %cst_21 {dimension_numbers = #tpu.dot_dimension_numbers<[1], [0], [0], [1], [0, 0, 1, 1], [], []>} : vector<256x4xf32>, vector<4x4xf32>, vector<256x4xf32> -> vector<256x4xf32>
    %21 = arith.addf %15, %20 : vector<256x4xf32>
    %22 = vector.extract_strided_slice %10 {offsets = [2, 0, 0], sizes = [16, 16, 4], strides = [1, 1, 1]} : vector<18x16x4xf32> to vector<16x16x4xf32>
    %23 = vector.shape_cast %22 : vector<16x16x4xf32> to vector<256x4xf32>
    %24 = vector.extract_strided_slice %9 {offsets = [6, 0, 0], sizes = [1, 4, 4], strides = [1, 1, 1]} : vector<9x4x4xf32> to vector<1x4x4xf32>
    %25 = vector.shape_cast %24 : vector<1x4x4xf32> to vector<4x4xf32>
    %cst_22 = arith.constant dense<0.000000e+00> : vector<256x4xf32>
    %26 = tpu.matmul %23, %25, %cst_22 {dimension_numbers = #tpu.dot_dimension_numbers<[1], [0], [0], [1], [0, 0, 1, 1], [], []>} : vector<256x4xf32>, vector<4x4xf32>, vector<256x4xf32> -> vector<256x4xf32>
    %27 = arith.addf %21, %26 : vector<256x4xf32>
    %c0_23 = arith.constant 0 : index
    %c8_24 = arith.constant 8 : index
    %c0_25 = arith.constant 0 : index
    %28 = vector.load %arg5[%c0_23, %c8_24, %c0_25] : memref<18x32x4xf32, #tpu.memory_space<vmem>>, vector<18x16x4xf32>
    %29 = vector.extract_strided_slice %28 {offsets = [0, 0, 0], sizes = [16, 16, 4], strides = [1, 1, 1]} : vector<18x16x4xf32> to vector<16x16x4xf32>
    %30 = vector.shape_cast %29 : vector<16x16x4xf32> to vector<256x4xf32>
    %31 = vector.extract_strided_slice %9 {offsets = [1, 0, 0], sizes = [1, 4, 4], strides = [1, 1, 1]} : vector<9x4x4xf32> to vector<1x4x4xf32>
    %32 = vector.shape_cast %31 : vector<1x4x4xf32> to vector<4x4xf32>
    %cst_26 = arith.constant dense<0.000000e+00> : vector<256x4xf32>
    %33 = tpu.matmul %30, %32, %cst_26 {dimension_numbers = #tpu.dot_dimension_numbers<[1], [0], [0], [1], [0, 0, 1, 1], [], []>} : vector<256x4xf32>, vector<4x4xf32>, vector<256x4xf32> -> vector<256x4xf32>
    %34 = arith.addf %27, %33 : vector<256x4xf32>
    %35 = vector.extract_strided_slice %28 {offsets = [1, 0, 0], sizes = [16, 16, 4], strides = [1, 1, 1]} : vector<18x16x4xf32> to vector<16x16x4xf32>
    %36 = vector.shape_cast %35 : vector<16x16x4xf32> to vector<256x4xf32>
    %37 = vector.extract_strided_slice %9 {offsets = [4, 0, 0], sizes = [1, 4, 4], strides = [1, 1, 1]} : vector<9x4x4xf32> to vector<1x4x4xf32>
    %38 = vector.shape_cast %37 : vector<1x4x4xf32> to vector<4x4xf32>
    %cst_27 = arith.constant dense<0.000000e+00> : vector<256x4xf32>
    %39 = tpu.matmul %36, %38, %cst_27 {dimension_numbers = #tpu.dot_dimension_numbers<[1], [0], [0], [1], [0, 0, 1, 1], [], []>} : vector<256x4xf32>, vector<4x4xf32>, vector<256x4xf32> -> vector<256x4xf32>
    %40 = arith.addf %34, %39 : vector<256x4xf32>
    %41 = vector.extract_strided_slice %28 {offsets = [2, 0, 0], sizes = [16, 16, 4], strides = [1, 1, 1]} : vector<18x16x4xf32> to vector<16x16x4xf32>
    %42 = vector.shape_cast %41 : vector<16x16x4xf32> to vector<256x4xf32>
    %43 = vector.extract_strided_slice %9 {offsets = [7, 0, 0], sizes = [1, 4, 4], strides = [1, 1, 1]} : vector<9x4x4xf32> to vector<1x4x4xf32>
    %44 = vector.shape_cast %43 : vector<1x4x4xf32> to vector<4x4xf32>
    %cst_28 = arith.constant dense<0.000000e+00> : vector<256x4xf32>
    %45 = tpu.matmul %42, %44, %cst_28 {dimension_numbers = #tpu.dot_dimension_numbers<[1], [0], [0], [1], [0, 0, 1, 1], [], []>} : vector<256x4xf32>, vector<4x4xf32>, vector<256x4xf32> -> vector<256x4xf32>
    %46 = arith.addf %40, %45 : vector<256x4xf32>
    %c0_29 = arith.constant 0 : index
    %c9 = arith.constant 9 : index
    %c0_30 = arith.constant 0 : index
    %47 = vector.load %arg5[%c0_29, %c9, %c0_30] : memref<18x32x4xf32, #tpu.memory_space<vmem>>, vector<18x16x4xf32>
    %48 = vector.extract_strided_slice %47 {offsets = [0, 0, 0], sizes = [16, 16, 4], strides = [1, 1, 1]} : vector<18x16x4xf32> to vector<16x16x4xf32>
    %49 = vector.shape_cast %48 : vector<16x16x4xf32> to vector<256x4xf32>
    %50 = vector.extract_strided_slice %9 {offsets = [2, 0, 0], sizes = [1, 4, 4], strides = [1, 1, 1]} : vector<9x4x4xf32> to vector<1x4x4xf32>
    %51 = vector.shape_cast %50 : vector<1x4x4xf32> to vector<4x4xf32>
    %cst_31 = arith.constant dense<0.000000e+00> : vector<256x4xf32>
    %52 = tpu.matmul %49, %51, %cst_31 {dimension_numbers = #tpu.dot_dimension_numbers<[1], [0], [0], [1], [0, 0, 1, 1], [], []>} : vector<256x4xf32>, vector<4x4xf32>, vector<256x4xf32> -> vector<256x4xf32>
    %53 = arith.addf %46, %52 : vector<256x4xf32>
    %54 = vector.extract_strided_slice %47 {offsets = [1, 0, 0], sizes = [16, 16, 4], strides = [1, 1, 1]} : vector<18x16x4xf32> to vector<16x16x4xf32>
    %55 = vector.shape_cast %54 : vector<16x16x4xf32> to vector<256x4xf32>
    %56 = vector.extract_strided_slice %9 {offsets = [5, 0, 0], sizes = [1, 4, 4], strides = [1, 1, 1]} : vector<9x4x4xf32> to vector<1x4x4xf32>
    %57 = vector.shape_cast %56 : vector<1x4x4xf32> to vector<4x4xf32>
    %cst_32 = arith.constant dense<0.000000e+00> : vector<256x4xf32>
    %58 = tpu.matmul %55, %57, %cst_32 {dimension_numbers = #tpu.dot_dimension_numbers<[1], [0], [0], [1], [0, 0, 1, 1], [], []>} : vector<256x4xf32>, vector<4x4xf32>, vector<256x4xf32> -> vector<256x4xf32>
    %59 = arith.addf %53, %58 : vector<256x4xf32>
    %60 = vector.extract_strided_slice %47 {offsets = [2, 0, 0], sizes = [16, 16, 4], strides = [1, 1, 1]} : vector<18x16x4xf32> to vector<16x16x4xf32>
    %61 = vector.shape_cast %60 : vector<16x16x4xf32> to vector<256x4xf32>
    %62 = vector.extract_strided_slice %9 {offsets = [8, 0, 0], sizes = [1, 4, 4], strides = [1, 1, 1]} : vector<9x4x4xf32> to vector<1x4x4xf32>
    %63 = vector.shape_cast %62 : vector<1x4x4xf32> to vector<4x4xf32>
    %cst_33 = arith.constant dense<0.000000e+00> : vector<256x4xf32>
    %64 = tpu.matmul %61, %63, %cst_33 {dimension_numbers = #tpu.dot_dimension_numbers<[1], [0], [0], [1], [0, 0, 1, 1], [], []>} : vector<256x4xf32>, vector<4x4xf32>, vector<256x4xf32> -> vector<256x4xf32>
    %65 = arith.addf %59, %64 : vector<256x4xf32>
    %66 = vector.shape_cast %65 : vector<256x4xf32> to vector<16x16x4xf32>
    %cst_34 = arith.constant dense<0.000000e+00> : vector<4xf32>
    %67 = vector.multi_reduction <add>, %66, %cst_34 [0, 1] : vector<16x16x4xf32> to vector<4xf32>
    %68 = vector.shape_cast %67 : vector<4xf32> to vector<1x1x4xf32>
    %69 = arith.mulf %66, %66 : vector<16x16x4xf32>
    %cst_35 = arith.constant dense<0.000000e+00> : vector<4xf32>
    %70 = vector.multi_reduction <add>, %69, %cst_35 [0, 1] : vector<16x16x4xf32> to vector<4xf32>
    %71 = vector.shape_cast %70 : vector<4xf32> to vector<1x1x4xf32>
    %cst_36 = arith.constant 3.906250e-03 : f32
    %72 = vector.broadcast %cst_36 : f32 to vector<1x1x4xf32>
    %73 = arith.mulf %68, %72 : vector<1x1x4xf32>
    %cst_37 = arith.constant 3.906250e-03 : f32
    %74 = vector.broadcast %cst_37 : f32 to vector<1x1x4xf32>
    %75 = arith.mulf %71, %74 : vector<1x1x4xf32>
    %76 = arith.mulf %73, %73 : vector<1x1x4xf32>
    %77 = arith.subf %75, %76 : vector<1x1x4xf32>
    %cst_38 = arith.constant 0.000000e+00 : f32
    %78 = vector.broadcast %cst_38 : f32 to vector<1x1x4xf32>
    %79 = arith.maximumf %77, %78 : vector<1x1x4xf32>
    %80 = vector.broadcast %73 : vector<1x1x4xf32> to vector<16x16x4xf32>
    %81 = arith.subf %66, %80 : vector<16x16x4xf32>
    %cst_39 = arith.constant 9.99999974E-6 : f32
    %82 = vector.broadcast %cst_39 : f32 to vector<1x1x4xf32>
    %83 = arith.addf %79, %82 : vector<1x1x4xf32>
    %84 = math.rsqrt %83 : vector<1x1x4xf32>
    %85 = vector.broadcast %84 : vector<1x1x4xf32> to vector<16x16x4xf32>
    %86 = arith.mulf %81, %85 : vector<16x16x4xf32>
    %cst_40 = arith.constant 0.000000e+00 : f32
    %87 = vector.broadcast %cst_40 : f32 to vector<16x16x4xf32>
    %88 = arith.maximumf %86, %87 : vector<16x16x4xf32>
    %c1_41 = arith.constant 1 : index
    %c8_42 = arith.constant 8 : index
    %c0_43 = arith.constant 0 : index
    %89 = vector.load %arg5[%c1_41, %c8_42, %c0_43] : memref<18x32x4xf32, #tpu.memory_space<vmem>>, vector<16x16x4xf32>
    tpu.vector_store %arg5[%c1_41, %c8_42, %c0_43], %88 {strides = array<i32>} : memref<18x32x4xf32, #tpu.memory_space<vmem>>, vector<16x16x4xf32>,
    %c0_44 = arith.constant 0 : index
    %c0_45 = arith.constant 0 : index
    %c0_46 = arith.constant 0 : index
    %90 = vector.load %arg3[%c0_44, %c0_45, %c0_46] : memref<9x4x4xf32, #tpu.memory_space<vmem>>, vector<9x4x4xf32>
    %c0_47 = arith.constant 0 : index
    %c7_48 = arith.constant 7 : index
    %c0_49 = arith.constant 0 : index
    %91 = vector.load %arg5[%c0_47, %c7_48, %c0_49] : memref<18x32x4xf32, #tpu.memory_space<vmem>>, vector<18x16x4xf32>
    %92 = vector.extract_strided_slice %91 {offsets = [0, 0, 0], sizes = [16, 16, 4], strides = [1, 1, 1]} : vector<18x16x4xf32> to vector<16x16x4xf32>
    %93 = vector.shape_cast %92 : vector<16x16x4xf32> to vector<256x4xf32>
    %94 = vector.extract_strided_slice %90 {offsets = [0, 0, 0], sizes = [1, 4, 4], strides = [1, 1, 1]} : vector<9x4x4xf32> to vector<1x4x4xf32>
    %95 = vector.shape_cast %94 : vector<1x4x4xf32> to vector<4x4xf32>
    %cst_50 = arith.constant dense<0.000000e+00> : vector<256x4xf32>
    %96 = tpu.matmul %93, %95, %cst_50 {dimension_numbers = #tpu.dot_dimension_numbers<[1], [0], [0], [1], [0, 0, 1, 1], [], []>} : vector<256x4xf32>, vector<4x4xf32>, vector<256x4xf32> -> vector<256x4xf32>
    %97 = vector.extract_strided_slice %91 {offsets = [1, 0, 0], sizes = [16, 16, 4], strides = [1, 1, 1]} : vector<18x16x4xf32> to vector<16x16x4xf32>
    %98 = vector.shape_cast %97 : vector<16x16x4xf32> to vector<256x4xf32>
    %99 = vector.extract_strided_slice %90 {offsets = [3, 0, 0], sizes = [1, 4, 4], strides = [1, 1, 1]} : vector<9x4x4xf32> to vector<1x4x4xf32>
    %100 = vector.shape_cast %99 : vector<1x4x4xf32> to vector<4x4xf32>
    %cst_51 = arith.constant dense<0.000000e+00> : vector<256x4xf32>
    %101 = tpu.matmul %98, %100, %cst_51 {dimension_numbers = #tpu.dot_dimension_numbers<[1], [0], [0], [1], [0, 0, 1, 1], [], []>} : vector<256x4xf32>, vector<4x4xf32>, vector<256x4xf32> -> vector<256x4xf32>
    %102 = arith.addf %96, %101 : vector<256x4xf32>
    %103 = vector.extract_strided_slice %91 {offsets = [2, 0, 0], sizes = [16, 16, 4], strides = [1, 1, 1]} : vector<18x16x4xf32> to vector<16x16x4xf32>
    %104 = vector.shape_cast %103 : vector<16x16x4xf32> to vector<256x4xf32>
    %105 = vector.extract_strided_slice %90 {offsets = [6, 0, 0], sizes = [1, 4, 4], strides = [1, 1, 1]} : vector<9x4x4xf32> to vector<1x4x4xf32>
    %106 = vector.shape_cast %105 : vector<1x4x4xf32> to vector<4x4xf32>
    %cst_52 = arith.constant dense<0.000000e+00> : vector<256x4xf32>
    %107 = tpu.matmul %104, %106, %cst_52 {dimension_numbers = #tpu.dot_dimension_numbers<[1], [0], [0], [1], [0, 0, 1, 1], [], []>} : vector<256x4xf32>, vector<4x4xf32>, vector<256x4xf32> -> vector<256x4xf32>
    %108 = arith.addf %102, %107 : vector<256x4xf32>
    %c0_53 = arith.constant 0 : index
    %c8_54 = arith.constant 8 : index
    %c0_55 = arith.constant 0 : index
    %109 = vector.load %arg5[%c0_53, %c8_54, %c0_55] : memref<18x32x4xf32, #tpu.memory_space<vmem>>, vector<18x16x4xf32>
    %110 = vector.extract_strided_slice %109 {offsets = [0, 0, 0], sizes = [16, 16, 4], strides = [1, 1, 1]} : vector<18x16x4xf32> to vector<16x16x4xf32>
    %111 = vector.shape_cast %110 : vector<16x16x4xf32> to vector<256x4xf32>
    %112 = vector.extract_strided_slice %90 {offsets = [1, 0, 0], sizes = [1, 4, 4], strides = [1, 1, 1]} : vector<9x4x4xf32> to vector<1x4x4xf32>
    %113 = vector.shape_cast %112 : vector<1x4x4xf32> to vector<4x4xf32>
    %cst_56 = arith.constant dense<0.000000e+00> : vector<256x4xf32>
    %114 = tpu.matmul %111, %113, %cst_56 {dimension_numbers = #tpu.dot_dimension_numbers<[1], [0], [0], [1], [0, 0, 1, 1], [], []>} : vector<256x4xf32>, vector<4x4xf32>, vector<256x4xf32> -> vector<256x4xf32>
    %115 = arith.addf %108, %114 : vector<256x4xf32>
    %116 = vector.extract_strided_slice %109 {offsets = [1, 0, 0], sizes = [16, 16, 4], strides = [1, 1, 1]} : vector<18x16x4xf32> to vector<16x16x4xf32>
    %117 = vector.shape_cast %116 : vector<16x16x4xf32> to vector<256x4xf32>
    %118 = vector.extract_strided_slice %90 {offsets = [4, 0, 0], sizes = [1, 4, 4], strides = [1, 1, 1]} : vector<9x4x4xf32> to vector<1x4x4xf32>
    %119 = vector.shape_cast %118 : vector<1x4x4xf32> to vector<4x4xf32>
    %cst_57 = arith.constant dense<0.000000e+00> : vector<256x4xf32>
    %120 = tpu.matmul %117, %119, %cst_57 {dimension_numbers = #tpu.dot_dimension_numbers<[1], [0], [0], [1], [0, 0, 1, 1], [], []>} : vector<256x4xf32>, vector<4x4xf32>, vector<256x4xf32> -> vector<256x4xf32>
    %121 = arith.addf %115, %120 : vector<256x4xf32>
    %122 = vector.extract_strided_slice %109 {offsets = [2, 0, 0], sizes = [16, 16, 4], strides = [1, 1, 1]} : vector<18x16x4xf32> to vector<16x16x4xf32>
    %123 = vector.shape_cast %122 : vector<16x16x4xf32> to vector<256x4xf32>
    %124 = vector.extract_strided_slice %90 {offsets = [7, 0, 0], sizes = [1, 4, 4], strides = [1, 1, 1]} : vector<9x4x4xf32> to vector<1x4x4xf32>
    %125 = vector.shape_cast %124 : vector<1x4x4xf32> to vector<4x4xf32>
    %cst_58 = arith.constant dense<0.000000e+00> : vector<256x4xf32>
    %126 = tpu.matmul %123, %125, %cst_58 {dimension_numbers = #tpu.dot_dimension_numbers<[1], [0], [0], [1], [0, 0, 1, 1], [], []>} : vector<256x4xf32>, vector<4x4xf32>, vector<256x4xf32> -> vector<256x4xf32>
    %127 = arith.addf %121, %126 : vector<256x4xf32>
    %c0_59 = arith.constant 0 : index
    %c9_60 = arith.constant 9 : index
    %c0_61 = arith.constant 0 : index
    %128 = vector.load %arg5[%c0_59, %c9_60, %c0_61] : memref<18x32x4xf32, #tpu.memory_space<vmem>>, vector<18x16x4xf32>
    %129 = vector.extract_strided_slice %128 {offsets = [0, 0, 0], sizes = [16, 16, 4], strides = [1, 1, 1]} : vector<18x16x4xf32> to vector<16x16x4xf32>
    %130 = vector.shape_cast %129 : vector<16x16x4xf32> to vector<256x4xf32>
    %131 = vector.extract_strided_slice %90 {offsets = [2, 0, 0], sizes = [1, 4, 4], strides = [1, 1, 1]} : vector<9x4x4xf32> to vector<1x4x4xf32>
    %132 = vector.shape_cast %131 : vector<1x4x4xf32> to vector<4x4xf32>
    %cst_62 = arith.constant dense<0.000000e+00> : vector<256x4xf32>
    %133 = tpu.matmul %130, %132, %cst_62 {dimension_numbers = #tpu.dot_dimension_numbers<[1], [0], [0], [1], [0, 0, 1, 1], [], []>} : vector<256x4xf32>, vector<4x4xf32>, vector<256x4xf32> -> vector<256x4xf32>
    %134 = arith.addf %127, %133 : vector<256x4xf32>
    %135 = vector.extract_strided_slice %128 {offsets = [1, 0, 0], sizes = [16, 16, 4], strides = [1, 1, 1]} : vector<18x16x4xf32> to vector<16x16x4xf32>
    %136 = vector.shape_cast %135 : vector<16x16x4xf32> to vector<256x4xf32>
    %137 = vector.extract_strided_slice %90 {offsets = [5, 0, 0], sizes = [1, 4, 4], strides = [1, 1, 1]} : vector<9x4x4xf32> to vector<1x4x4xf32>
    %138 = vector.shape_cast %137 : vector<1x4x4xf32> to vector<4x4xf32>
    %cst_63 = arith.constant dense<0.000000e+00> : vector<256x4xf32>
    %139 = tpu.matmul %136, %138, %cst_63 {dimension_numbers = #tpu.dot_dimension_numbers<[1], [0], [0], [1], [0, 0, 1, 1], [], []>} : vector<256x4xf32>, vector<4x4xf32>, vector<256x4xf32> -> vector<256x4xf32>
    %140 = arith.addf %134, %139 : vector<256x4xf32>
    %141 = vector.extract_strided_slice %128 {offsets = [2, 0, 0], sizes = [16, 16, 4], strides = [1, 1, 1]} : vector<18x16x4xf32> to vector<16x16x4xf32>
    %142 = vector.shape_cast %141 : vector<16x16x4xf32> to vector<256x4xf32>
    %143 = vector.extract_strided_slice %90 {offsets = [8, 0, 0], sizes = [1, 4, 4], strides = [1, 1, 1]} : vector<9x4x4xf32> to vector<1x4x4xf32>
    %144 = vector.shape_cast %143 : vector<1x4x4xf32> to vector<4x4xf32>
    %cst_64 = arith.constant dense<0.000000e+00> : vector<256x4xf32>
    %145 = tpu.matmul %142, %144, %cst_64 {dimension_numbers = #tpu.dot_dimension_numbers<[1], [0], [0], [1], [0, 0, 1, 1], [], []>} : vector<256x4xf32>, vector<4x4xf32>, vector<256x4xf32> -> vector<256x4xf32>
    %146 = arith.addf %140, %145 : vector<256x4xf32>
    %147 = vector.shape_cast %146 : vector<256x4xf32> to vector<16x16x4xf32>
    %cst_65 = arith.constant dense<0.000000e+00> : vector<4xf32>
    %148 = vector.multi_reduction <add>, %147, %cst_65 [0, 1] : vector<16x16x4xf32> to vector<4xf32>
    %149 = vector.shape_cast %148 : vector<4xf32> to vector<1x1x4xf32>
    %150 = arith.mulf %147, %147 : vector<16x16x4xf32>
    %cst_66 = arith.constant dense<0.000000e+00> : vector<4xf32>
    %151 = vector.multi_reduction <add>, %150, %cst_66 [0, 1] : vector<16x16x4xf32> to vector<4xf32>
    %152 = vector.shape_cast %151 : vector<4xf32> to vector<1x1x4xf32>
    %cst_67 = arith.constant 3.906250e-03 : f32
    %153 = vector.broadcast %cst_67 : f32 to vector<1x1x4xf32>
    %154 = arith.mulf %149, %153 : vector<1x1x4xf32>
    %cst_68 = arith.constant 3.906250e-03 : f32
    %155 = vector.broadcast %cst_68 : f32 to vector<1x1x4xf32>
    %156 = arith.mulf %152, %155 : vector<1x1x4xf32>
    %157 = arith.mulf %154, %154 : vector<1x1x4xf32>
    %158 = arith.subf %156, %157 : vector<1x1x4xf32>
    %cst_69 = arith.constant 0.000000e+00 : f32
    %159 = vector.broadcast %cst_69 : f32 to vector<1x1x4xf32>
    %160 = arith.maximumf %158, %159 : vector<1x1x4xf32>
    %161 = vector.broadcast %154 : vector<1x1x4xf32> to vector<16x16x4xf32>
    %162 = arith.subf %147, %161 : vector<16x16x4xf32>
    %cst_70 = arith.constant 9.99999974E-6 : f32
    %163 = vector.broadcast %cst_70 : f32 to vector<1x1x4xf32>
    %164 = arith.addf %160, %163 : vector<1x1x4xf32>
    %165 = math.rsqrt %164 : vector<1x1x4xf32>
    %166 = vector.broadcast %165 : vector<1x1x4xf32> to vector<16x16x4xf32>
    %167 = arith.mulf %162, %166 : vector<16x16x4xf32>
    %c0_71 = arith.constant 0 : index
    %c0_72 = arith.constant 0 : index
    %c0_73 = arith.constant 0 : index
    %c0_74 = arith.constant 0 : index
    %168 = vector.load %arg1[%c0_71, %c0_72, %c0_73, %c0_74] : memref<1x16x16x4xf32, #tpu.memory_space<vmem>>, vector<1x16x16x4xf32>
    %169 = vector.shape_cast %168 : vector<1x16x16x4xf32> to vector<16x16x4xf32>
    %170 = arith.addf %167, %169 : vector<16x16x4xf32>
    %c0_75 = arith.constant 0 : index
    %c0_76 = arith.constant 0 : index
    %c0_77 = arith.constant 0 : index
    %c0_78 = arith.constant 0 : index
    %171 = vector.load %arg4[%c0_75, %c0_76, %c0_77, %c0_78] : memref<1x16x16x4xf32, #tpu.memory_space<vmem>>, vector<1x16x16x4xf32>
    %172 = vector.shape_cast %171 : vector<1x16x16x4xf32> to vector<16x16x4xf32>
    %173 = vector.shape_cast %170 : vector<16x16x4xf32> to vector<1x16x16x4xf32>
    tpu.vector_store %arg4[%c0_75, %c0_76, %c0_77, %c0_78], %173 {strides = array<i32>} : memref<1x16x16x4xf32, #tpu.memory_space<vmem>>, vector<1x16x16x4xf32>,
    return
  }
  func.func @transform_0(%arg0: i32) -> (i32, i32, i32, i32) {
    %c0_i32 = arith.constant 0 : i32
    %c0_i32_0 = arith.constant 0 : i32
    %c0_i32_1 = arith.constant 0 : i32
    %c0_i32_2 = arith.constant 0 : i32
    return %arg0, %c0_i32, %c0_i32_0, %c0_i32_1 : i32, i32, i32, i32
  }
  func.func @transform_1(%arg0: i32) -> (i32, i32, i32) {
    %c0_i32 = arith.constant 0 : i32
    %c0_i32_0 = arith.constant 0 : i32
    %c0_i32_1 = arith.constant 0 : i32
    %c0_i32_2 = arith.constant 0 : i32
    return %c0_i32, %c0_i32_0, %c0_i32_1 : i32, i32, i32
  }
  func.func @transform_2(%arg0: i32) -> (i32, i32, i32) {
    %c0_i32 = arith.constant 0 : i32
    %c0_i32_0 = arith.constant 0 : i32
    %c0_i32_1 = arith.constant 0 : i32
    %c0_i32_2 = arith.constant 0 : i32
    return %c0_i32, %c0_i32_0, %c0_i32_1 : i32, i32, i32
  }
  func.func @transform_3(%arg0: i32) -> (i32, i32, i32, i32) {
    %c0_i32 = arith.constant 0 : i32
    %c0_i32_0 = arith.constant 0 : i32
    %c0_i32_1 = arith.constant 0 : i32
    %c0_i32_2 = arith.constant 0 : i32
    return %arg0, %c0_i32, %c0_i32_0, %c0_i32_1 : i32, i32, i32, i32
  }
}

</mosaic_0001>

<llo_original>
// kernel: resblock_forward_nhwc.1
$region0: #{resblock_forward_nhwc.1}
  #allocation0 [shape = 'u32[]', space=smem, size = 0x4, offset = 0x4, fixed_abs, tag = 'smem constant byte address 0x4 - core index']
  #allocation1 [shape = 'u32[144,128]{1,0:T(1,128)}', space=vmem, size = 0x12000, scoped, tag = 'internal scratch']
  #allocation2 [shape = 'f32[18,32,4]{2,1,0:T(8,128)}', space=vmem, size = 0x48000, scoped, tag = 'scratch operand']
  %s0 = inlined_call_operand.vmem [shape: f32[2,16,16,4], index: 0, kind: input, shape index: {}]
  %s1 = inlined_call_operand.vmem [shape: f32[9,4,4], index: 1, kind: input, shape index: {}]
  %s2 = inlined_call_operand.vmem [shape: f32[9,4,4], index: 2, kind: input, shape index: {}]
  %s3 = inlined_call_operand.vmem [shape: f32[2,16,16,4], index: 3, kind: output, shape index: {}]
  %s4 = sld [smem:[#allocation0]]
  $region45: #{resblock_forward_nhwc.1} parent=0
    _
  %s6 = ssub.s32 1, %s4
  %s7 = scalar_select 0, %s6, %s4
  loop: start=0, step=1, limit=4
  $region2: #{resblock_forward_nhwc.1} parent=0 // loop_pre_header
    _
  $region3: #{resblock_forward_nhwc.1} parent=0 // loop_header
    %s9 = sphi 0, %s13
    %p10 = scmp.ge.s32.totalorder %s9, 4
    %s19 = sphi 0, %s21
    %s22 = sphi 0, %s19
    %s23 = sphi 0, %s22
    %s39 = sphi 0, %s23
    %s43 = sphi 0, %s43
    %s45 = sphi 0, %s43
    %s46 = sphi 0, %s45
    %s60 = sphi 0, %s46
    %s64 = sphi 0, %s64
    %s66 = sphi 0, %s64
    %s67 = sphi 0, %s66
    %s81 = sphi 0, %s67
    %s87 = sphi 0, %s89
    %s90 = sphi 0, %s87
    %s91 = sphi 0, %s90
    %s107 = sphi 0, %s91
  $region4: #{resblock_forward_nhwc.1} parent=0 // loop_header_branch
    %12 = sbr.rel (%p10) target = $region8
  $region5: #{resblock_forward_nhwc.1} parent=0 // loop_body
    %s14 = ssub.s32 %s9, 1
    %s15 = ssub.s32 %s9, 2
    %s16 = sadd.s32 %s9, 1
    %s17 = ssub.s32 %s9, %s16
    %p18 = scmp.eq.s32.totalorder %s17, 0
    %s20 = sadd.s32 %s19, 1
    %s21 = scalar_select %p18, %s19, %s20
    %p24 = pneg %p18
    %p25 = scmp.eq.s32.totalorder %s9, 1
    %p26 = por %p24, %p25
    %p27 = scmp.ne.s32.totalorder %s19, %s22
    %p28 = scmp.eq.s32.totalorder %s9, 0
    %p29 = por %p27, %p28
    %p30 = scmp.ne.s32.totalorder %s19, %s22
    %p31 = scmp.eq.s32.totalorder %s14, 1
    %p32 = por %p30, %p31
    %p33 = scmp.ne.s32.totalorder %s22, %s23
    %p34 = scmp.eq.s32.totalorder %s14, 0
    %p35 = por %p33, %p34
    %p36 = scmp.ne.s32.totalorder %s22, %s23
    %p37 = scmp.eq.s32.totalorder %s15, 1
    %p38 = por %p36, %p37
    %p40 = scmp.ne.s32.totalorder %s23, %s39
    %p41 = scmp.eq.s32.totalorder %s15, 0
    %p42 = por %p40, %p41
    %s44 = sadd.s32 %s43, 1
    %p47 = scmp.eq.s32.totalorder %s9, 1
    %p48 = scmp.ne.s32.totalorder %s43, %s45
    %p49 = scmp.eq.s32.totalorder %s9, 0
    %p50 = por %p48, %p49
    %p51 = scmp.ne.s32.totalorder %s43, %s45
    %p52 = scmp.eq.s32.totalorder %s14, 1
    %p53 = por %p51, %p52
    %p54 = scmp.ne.s32.totalorder %s45, %s46
    %p55 = scmp.eq.s32.totalorder %s14, 0
    %p56 = por %p54, %p55
    %p57 = scmp.ne.s32.totalorder %s45, %s46
    %p58 = scmp.eq.s32.totalorder %s15, 1
    %p59 = por %p57, %p58
    %p61 = scmp.ne.s32.totalorder %s46, %s60
    %p62 = scmp.eq.s32.totalorder %s15, 0
    %p63 = por %p61, %p62
    %s65 = sadd.s32 %s64, 1
    %p68 = scmp.eq.s32.totalorder %s9, 1
    %p69 = scmp.ne.s32.totalorder %s64, %s66
    %p70 = scmp.eq.s32.totalorder %s9, 0
    %p71 = por %p69, %p70
    %p72 = scmp.ne.s32.totalorder %s64, %s66
    %p73 = scmp.eq.s32.totalorder %s14, 1
    %p74 = por %p72, %p73
    %p75 = scmp.ne.s32.totalorder %s66, %s67
    %p76 = scmp.eq.s32.totalorder %s14, 0
    %p77 = por %p75, %p76
    %p78 = scmp.ne.s32.totalorder %s66, %s67
    %p79 = scmp.eq.s32.totalorder %s15, 1
    %p80 = por %p78, %p79
    %p82 = scmp.ne.s32.totalorder %s67, %s81
    %p83 = scmp.eq.s32.totalorder %s15, 0
    %p84 = por %p82, %p83
    %s85 = ssub.s32 %s9, %s16
    %p86 = scmp.eq.s32.totalorder %s85, 0
    %s88 = sadd.s32 %s87, 1
    %s89 = scalar_select %p86, %s87, %s88
    %p92 = pneg %p86
    %p93 = scmp.eq.s32.totalorder %s9, 1
    %p94 = por %p92, %p93
    %p95 = scmp.ne.s32.totalorder %s87, %s90
    %p96 = scmp.eq.s32.totalorder %s9, 0
    %p97 = por %p95, %p96
    %p98 = scmp.ne.s32.totalorder %s87, %s90
    %p99 = scmp.eq.s32.totalorder %s14, 1
    %p100 = por %p98, %p99
    %p101 = scmp.ne.s32.totalorder %s90, %s91
    %p102 = scmp.eq.s32.totalorder %s14, 0
    %p103 = por %p101, %p102
    %p104 = scmp.ne.s32.totalorder %s90, %s91
    %p105 = scmp.eq.s32.totalorder %s15, 1
    %p106 = por %p104, %p105
    %p108 = scmp.ne.s32.totalorder %s91, %s107
    %p109 = scmp.eq.s32.totalorder %s15, 0
    %p110 = por %p108, %p109
    %p111 = scmp.le.s32.totalorder 1, %s9
    %p112 = scmp.lt.s32.totalorder %s9, 3
    %p113 = pnand %p111, %p112
    %p114 = pneg %p113
    // Predicated region
    $region9: #{resblock_forward_nhwc.1} parent=5 // pred_check
      _
    $region10: #{resblock_forward_nhwc.1} parent=5 // pred_check_branch
      %116 = sbr.rel (%p113) target = $region12
    $region11: #{resblock_forward_nhwc.1} parent=5 // pred_region
      %s117 = ssub.s32 %s9, 1
      // Predicated region
      $region13: #{resblock_forward_nhwc.1} parent=11 // pred_check
        %p118 = pneg %p56
      $region14: #{resblock_forward_nhwc.1} parent=11 // pred_check_branch
        %120 = sbr.rel (%p118) target = $region16
      $region15: #{resblock_forward_nhwc.1} parent=11 // pred_region
        _
      $region16: #{resblock_forward_nhwc.1} parent=11 // pred_fallthru
        _
      // Predicated region
      $region17: #{resblock_forward_nhwc.1} parent=11 // pred_check
        %p121 = pneg %p77
      $region18: #{resblock_forward_nhwc.1} parent=11 // pred_check_branch
        %123 = sbr.rel (%p121) target = $region20
      $region19: #{resblock_forward_nhwc.1} parent=11 // pred_region
        _
      $region20: #{resblock_forward_nhwc.1} parent=11 // pred_fallthru
        _
    $region12: #{resblock_forward_nhwc.1} parent=5 // pred_fallthru
      _
    %p124 = scmp.lt.s32.totalorder %s9, 2
    // Predicated region
    $region21: #{resblock_forward_nhwc.1} parent=5 // pred_check
      %p125 = pneg %p124
    $region22: #{resblock_forward_nhwc.1} parent=5 // pred_check_branch
      %127 = sbr.rel (%p125) target = $region24
    $region23: #{resblock_forward_nhwc.1} parent=5 // pred_region
      // Predicated region
      $region25: #{resblock_forward_nhwc.1} parent=23 // pred_check
        %p128 = pneg %p29
      $region26: #{resblock_forward_nhwc.1} parent=23 // pred_check_branch
        %130 = sbr.rel (%p128) target = $region28
      $region27: #{resblock_forward_nhwc.1} parent=23 // pred_region
        %p131 = scmp.lt.s32.totalorder %s9, 1
        %s132 = scalar_select %p131, %s9, 1
        %s133 = smul.addr %s132, 32
        %s134 = smul.addr %s133, 8
        %s135 = scalar_lea.vmem %s0, %s134
      $region28: #{resblock_forward_nhwc.1} parent=23 // pred_fallthru
        _
    $region24: #{resblock_forward_nhwc.1} parent=5 // pred_fallthru
      _
    %p136 = scmp.le.s32.totalorder 1, %s9
    %p137 = scmp.lt.s32.totalorder %s9, 3
    %p138 = pnand %p136, %p137
    %p139 = pneg %p138
    // Predicated region
    $region29: #{resblock_forward_nhwc.1} parent=5 // pred_check
      _
    $region30: #{resblock_forward_nhwc.1} parent=5 // pred_check_branch
      %141 = sbr.rel (%p138) target = $region32
    $region31: #{resblock_forward_nhwc.1} parent=5 // pred_region
      %s142 = ssub.s32 %s9, 1
      %p143 = scmp.lt.s32.totalorder %s14, 1
      %s144 = scalar_select %p143, %s14, 1
      %s145 = smul.addr %s144, 32
      %s146 = smul.addr %s145, 8
      %s147 = scalar_lea.vmem %s0, %s146
      %p148 = pneg %p35
      %p149 = pneg %p32
      %p150 = pneg %p56
      %p151 = pneg %p53
      %p152 = pneg %p77
      %p153 = pneg %p74
      %p154 = pneg %p103
      %p155 = pneg %p100
      %p156 = scmp.lt.s32.totalorder %s14, 1
      %s157 = scalar_select %p156, %s14, 1
      %s158 = smul.addr %s157, 32
      %s159 = smul.addr %s158, 8
      %s160 = scalar_lea.vmem %s3, %s159
      %p161 = scmp.lt.s32.totalorder %s14, 1
      %s162 = scalar_select %p161, %s14, 1
      %s163 = smul.addr %s162, 32
      %s164 = smul.addr %s163, 8
      %s165 = scalar_lea.vmem %s0, %s164
      %p166 = scmp.lt.s32.totalorder %s14, 1
      %s167 = scalar_select %p166, %s14, 1
      %s168 = smul.addr %s167, 32
      %s169 = smul.addr %s168, 8
      %s170 = scalar_lea.vmem %s3, %s169
      %vm171 = vcmask 31744
      %172 = vst.msk [vmem:[#allocation2 + $0x7] sm:$0xff] %vm171, 0.0
      %173 = vst.msk [vmem:[#allocation2 + $0xf] sm:$0xff] %vm171, 0.0
      %vm174 = vcmask 25600
      %175 = vst.msk [vmem:[#allocation2 + $0x17] sm:$0x3] %vm174, 0.0
      %s176 = scalar_lea.vmem [#allocation2], 544
      %177 = vst.msk [vmem:[%s176 + $0x7] sm:$0xff] %vm171, 0.0
      %178 = vst.msk [vmem:[%s176 + $0xf] sm:$0xff] %vm171, 0.0
      %179 = vst.msk [vmem:[%s176 + $0x17] sm:$0x3] %vm174, 0.0
      %s180 = scalar_lea.vmem [#allocation2], 32
      %vm181 = vcmask 24576
      %182 = vst.msk [vmem:[%s180 + $0x7] sm:$0x1] %vm181, 0.0
      %183 = vst.msk [vmem:[%s180 + $0x27] sm:$0x1] %vm181, 0.0
      %184 = vst.msk [vmem:[%s180 + $0x47] sm:$0x1] %vm181, 0.0
      %185 = vst.msk [vmem:[%s180 + $0x67] sm:$0x1] %vm181, 0.0
      %186 = vst.msk [vmem:[%s180 + $0x87] sm:$0x1] %vm181, 0.0
      %187 = vst.msk [vmem:[%s180 + $0xa7] sm:$0x1] %vm181, 0.0
      %188 = vst.msk [vmem:[%s180 + $0xc7] sm:$0x1] %vm181, 0.0
      %189 = vst.msk [vmem:[%s180 + $0xe7] sm:$0x1] %vm181, 0.0
      %190 = vst.msk [vmem:[%s180 + $0x107] sm:$0x1] %vm181, 0.0
      %191 = vst.msk [vmem:[%s180 + $0x127] sm:$0x1] %vm181, 0.0
      %192 = vst.msk [vmem:[%s180 + $0x147] sm:$0x1] %vm181, 0.0
      %193 = vst.msk [vmem:[%s180 + $0x167] sm:$0x1] %vm181, 0.0
      %194 = vst.msk [vmem:[%s180 + $0x187] sm:$0x1] %vm181, 0.0
      %195 = vst.msk [vmem:[%s180 + $0x1a7] sm:$0x1] %vm181, 0.0
      %196 = vst.msk [vmem:[%s180 + $0x1c7] sm:$0x1] %vm181, 0.0
      %197 = vst.msk [vmem:[%s180 + $0x1e7] sm:$0x1] %vm181, 0.0
      %198 = vst.msk [vmem:[%s180 + $0x18] sm:$0x1] %vm181, 0.0
      %199 = vst.msk [vmem:[%s180 + $0x38] sm:$0x1] %vm181, 0.0
      %200 = vst.msk [vmem:[%s180 + $0x58] sm:$0x1] %vm181, 0.0
      %201 = vst.msk [vmem:[%s180 + $0x78] sm:$0x1] %vm181, 0.0
      %202 = vst.msk [vmem:[%s180 + $0x98] sm:$0x1] %vm181, 0.0
      %203 = vst.msk [vmem:[%s180 + $0xb8] sm:$0x1] %vm181, 0.0
      %204 = vst.msk [vmem:[%s180 + $0xd8] sm:$0x1] %vm181, 0.0
      %205 = vst.msk [vmem:[%s180 + $0xf8] sm:$0x1] %vm181, 0.0
      %206 = vst.msk [vmem:[%s180 + $0x118] sm:$0x1] %vm181, 0.0
      %207 = vst.msk [vmem:[%s180 + $0x138] sm:$0x1] %vm181, 0.0
      %208 = vst.msk [vmem:[%s180 + $0x158] sm:$0x1] %vm181, 0.0
      %209 = vst.msk [vmem:[%s180 + $0x178] sm:$0x1] %vm181, 0.0
      %210 = vst.msk [vmem:[%s180 + $0x198] sm:$0x1] %vm181, 0.0
      %211 = vst.msk [vmem:[%s180 + $0x1b8] sm:$0x1] %vm181, 0.0
      %212 = vst.msk [vmem:[%s180 + $0x1d8] sm:$0x1] %vm181, 0.0
      %213 = vst.msk [vmem:[%s180 + $0x1f8] sm:$0x1] %vm181, 0.0
      %v214 = vld [vmem:[%s165] sm:$0xff]
      %v215 = vld [vmem:[%s165 + $0x8] sm:$0xff]
      %v216 = vld [vmem:[%s165 + $0x10] sm:$0xff]
      %v217 = vld [vmem:[%s165 + $0x18] sm:$0xff]
      %v218 = vld [vmem:[%s165 + $0x20] sm:$0xff]
      %v219 = vld [vmem:[%s165 + $0x28] sm:$0xff]
      %v220 = vld [vmem:[%s165 + $0x30] sm:$0xff]
      %v221 = vld [vmem:[%s165 + $0x38] sm:$0xff]
      %v222 = vld [vmem:[%s165 + $0x40] sm:$0xff]
      %v223 = vld [vmem:[%s165 + $0x48] sm:$0xff]
      %v224 = vld [vmem:[%s165 + $0x50] sm:$0xff]
      %v225 = vld [vmem:[%s165 + $0x58] sm:$0xff]
      %v226 = vld [vmem:[%s165 + $0x60] sm:$0xff]
      %v227 = vld [vmem:[%s165 + $0x68] sm:$0xff]
      %v228 = vld [vmem:[%s165 + $0x70] sm:$0xff]
      %v229 = vld [vmem:[%s165 + $0x78] sm:$0xff]
      %v230 = vld [vmem:[%s165 + $0x80] sm:$0xff]
      %v231 = vld [vmem:[%s165 + $0x88] sm:$0xff]
      %v232 = vld [vmem:[%s165 + $0x90] sm:$0xff]
      %v233 = vld [vmem:[%s165 + $0x98] sm:$0xff]
      %v234 = vld [vmem:[%s165 + $0xa0] sm:$0xff]
      %v235 = vld [vmem:[%s165 + $0xa8] sm:$0xff]
      %v236 = vld [vmem:[%s165 + $0xb0] sm:$0xff]
      %v237 = vld [vmem:[%s165 + $0xb8] sm:$0xff]
      %v238 = vld [vmem:[%s165 + $0xc0] sm:$0xff]
      %v239 = vld [vmem:[%s165 + $0xc8] sm:$0xff]
      %v240 = vld [vmem:[%s165 + $0xd0] sm:$0xff]
      %v241 = vld [vmem:[%s165 + $0xd8] sm:$0xff]
      %v242 = vld [vmem:[%s165 + $0xe0] sm:$0xff]
      %v243 = vld [vmem:[%s165 + $0xe8] sm:$0xff]
      %v244 = vld [vmem:[%s165 + $0xf0] sm:$0xff]
      %v245 = vld [vmem:[%s165 + $0xf8] sm:$0xff]
      %246 = vst.msk [vmem:[%s180 + $0x8] sm:$0xff] %vm171, %v214
      %247 = vst.msk [vmem:[%s180 + $0x10] sm:$0xff] %vm171, %v215
      %248 = vst.msk [vmem:[%s180 + $0x28] sm:$0xff] %vm171, %v216
      %249 = vst.msk [vmem:[%s180 + $0x30] sm:$0xff] %vm171, %v217
      %250 = vst.msk [vmem:[%s180 + $0x48] sm:$0xff] %vm171, %v218
      %251 = vst.msk [vmem:[%s180 + $0x50] sm:$0xff] %vm171, %v219
      %252 = vst.msk [vmem:[%s180 + $0x68] sm:$0xff] %vm171, %v220
      %253 = vst.msk [vmem:[%s180 + $0x70] sm:$0xff] %vm171, %v221
      %254 = vst.msk [vmem:[%s180 + $0x88] sm:$0xff] %vm171, %v222
      %255 = vst.msk [vmem:[%s180 + $0x90] sm:$0xff] %vm171, %v223
      %256 = vst.msk [vmem:[%s180 + $0xa8] sm:$0xff] %vm171, %v224
      %257 = vst.msk [vmem:[%s180 + $0xb0] sm:$0xff] %vm171, %v225
      %258 = vst.msk [vmem:[%s180 + $0xc8] sm:$0xff] %vm171, %v226
      %259 = vst.msk [vmem:[%s180 + $0xd0] sm:$0xff] %vm171, %v227
      %260 = vst.msk [vmem:[%s180 + $0xe8] sm:$0xff] %vm171, %v228
      %261 = vst.msk [vmem:[%s180 + $0xf0] sm:$0xff] %vm171, %v229
      %262 = vst.msk [vmem:[%s180 + $0x108] sm:$0xff] %vm171, %v230
      %263 = vst.msk [vmem:[%s180 + $0x110] sm:$0xff] %vm171, %v231
      %264 = vst.msk [vmem:[%s180 + $0x128] sm:$0xff] %vm171, %v232
      %265 = vst.msk [vmem:[%s180 + $0x130] sm:$0xff] %vm171, %v233
      %266 = vst.msk [vmem:[%s180 + $0x148] sm:$0xff] %vm171, %v234
      %267 = vst.msk [vmem:[%s180 + $0x150] sm:$0xff] %vm171, %v235
      %268 = vst.msk [vmem:[%s180 + $0x168] sm:$0xff] %vm171, %v236
      %269 = vst.msk [vmem:[%s180 + $0x170] sm:$0xff] %vm171, %v237
      %270 = vst.msk [vmem:[%s180 + $0x188] sm:$0xff] %vm171, %v238
      %271 = vst.msk [vmem:[%s180 + $0x190] sm:$0xff] %vm171, %v239
      %272 = vst.msk [vmem:[%s180 + $0x1a8] sm:$0xff] %vm171, %v240
      %273 = vst.msk [vmem:[%s180 + $0x1b0] sm:$0xff] %vm171, %v241
      %274 = vst.msk [vmem:[%s180 + $0x1c8] sm:$0xff] %vm171, %v242
      %275 = vst.msk [vmem:[%s180 + $0x1d0] sm:$0xff] %vm171, %v243
      %276 = vst.msk [vmem:[%s180 + $0x1e8] sm:$0xff] %vm171, %v244
      %277 = vst.msk [vmem:[%s180 + $0x1f0] sm:$0xff] %vm171, %v245
      %v278 = vld [vmem:[%s1] sm:$0xf]
      %v279 = vld [vmem:[%s1 + $0x4] sm:$0xf]
      %v280 = vld [vmem:[%s1 + $0x8] sm:$0xf]
      %v281 = vld [vmem:[%s1 + $0xc] sm:$0xf]
      %v282 = vld [vmem:[%s1 + $0x10] sm:$0xf]
      %v283 = vld [vmem:[%s1 + $0x14] sm:$0xf]
      %v284 = vld [vmem:[%s1 + $0x18] sm:$0xf]
      %v285 = vld [vmem:[%s1 + $0x1c] sm:$0xf]
      %v286 = vld [vmem:[%s1 + $0x20] sm:$0xf]
      %v287 = vld [vmem:[#allocation2 + $0x7] sm:$0xff]
      %v288 = vld [vmem:[#allocation2 + $0xf] sm:$0xff]
      %v289 = vld [vmem:[#allocation2 + $0x27] sm:$0xff]
      %v290 = vld [vmem:[#allocation2 + $0x2f] sm:$0xff]
      %v291 = vld [vmem:[#allocation2 + $0x47] sm:$0xff]
      %v292 = vld [vmem:[#allocation2 + $0x4f] sm:$0xff]
      %v293 = vld [vmem:[#allocation2 + $0x67] sm:$0xff]
      %v294 = vld [vmem:[#allocation2 + $0x6f] sm:$0xff]
      %v295 = vld [vmem:[#allocation2 + $0x87] sm:$0xff]
      %v296 = vld [vmem:[#allocation2 + $0x8f] sm:$0xff]
      %v297 = vld [vmem:[#allocation2 + $0xa7] sm:$0xff]
      %v298 = vld [vmem:[#allocation2 + $0xaf] sm:$0xff]
      %v299 = vld [vmem:[#allocation2 + $0xc7] sm:$0xff]
      %v300 = vld [vmem:[#allocation2 + $0xcf] sm:$0xff]
      %v301 = vld [vmem:[#allocation2 + $0xe7] sm:$0xff]
      %v302 = vld [vmem:[#allocation2 + $0xef] sm:$0xff]
      %v303 = vld [vmem:[#allocation2 + $0x107] sm:$0xff]
      %v304 = vld [vmem:[#allocation2 + $0x10f] sm:$0xff]
      %v305 = vld [vmem:[#allocation2 + $0x127] sm:$0xff]
      %v306 = vld [vmem:[#allocation2 + $0x12f] sm:$0xff]
      %v307 = vld [vmem:[#allocation2 + $0x147] sm:$0xff]
      %v308 = vld [vmem:[#allocation2 + $0x14f] sm:$0xff]
      %v309 = vld [vmem:[#allocation2 + $0x167] sm:$0xff]
      %v310 = vld [vmem:[#allocation2 + $0x16f] sm:$0xff]
      %v311 = vld [vmem:[#allocation2 + $0x187] sm:$0xff]
      %v312 = vld [vmem:[#allocation2 + $0x18f] sm:$0xff]
      %v313 = vld [vmem:[#allocation2 + $0x1a7] sm:$0xff]
      %v314 = vld [vmem:[#allocation2 + $0x1af] sm:$0xff]
      %v315 = vld [vmem:[#allocation2 + $0x1c7] sm:$0xff]
      %v316 = vld [vmem:[#allocation2 + $0x1cf] sm:$0xff]
      %v317 = vld [vmem:[#allocation2 + $0x1e7] sm:$0xff]
      %v318 = vld [vmem:[#allocation2 + $0x1ef] sm:$0xff]
      %v319 = vld [vmem:[#allocation2 + $0x207] sm:$0xff]
      %v320 = vld [vmem:[#allocation2 + $0x20f] sm:$0xff]
      %v321 = vld [vmem:[#allocation2 + $0x227] sm:$0xff]
      %v322 = vld [vmem:[#allocation2 + $0x22f] sm:$0xff]
      %v324 = vsel %vm171, %v289, 0
      %v327 = vsel %vm171, %v290, 0
      %v330 = vsel %vm171, %v291, 0
      %v333 = vsel %vm171, %v292, 0
      %v336 = vsel %vm171, %v293, 0
      %v339 = vsel %vm171, %v294, 0
      %v342 = vsel %vm171, %v295, 0
      %v345 = vsel %vm171, %v296, 0
      %v348 = vsel %vm171, %v297, 0
      %v351 = vsel %vm171, %v298, 0
      %v354 = vsel %vm171, %v299, 0
      %v357 = vsel %vm171, %v300, 0
      %v360 = vsel %vm171, %v301, 0
      %v363 = vsel %vm171, %v302, 0
      %v366 = vsel %vm171, %v303, 0
      %v369 = vsel %vm171, %v304, 0
      %v372 = vsel %vm171, %v305, 0
      %v375 = vsel %vm171, %v306, 0
      %v378 = vsel %vm171, %v307, 0
      %v381 = vsel %vm171, %v308, 0
      %v384 = vsel %vm171, %v309, 0
      %v387 = vsel %vm171, %v310, 0
      %v390 = vsel %vm171, %v311, 0
      %v393 = vsel %vm171, %v312, 0
      %v396 = vsel %vm171, %v313, 0
      %v399 = vsel %vm171, %v314, 0
      %v402 = vsel %vm171, %v315, 0
      %v405 = vsel %vm171, %v316, 0
      %v408 = vsel %vm171, %v317, 0
      %v411 = vsel %vm171, %v318, 0
      %v414 = vsel %vm171, %v319, 0
      %v417 = vsel %vm171, %v320, 0
      %vm419 = vcmask 1043456
      %v421 = vsel %vm419, %v281, 0
      %423 = vmatprep.subr.mxu0 0.0
      %424 = vmatpush1.msra.mxu0 %v421
      %425 = vmatprep.subr.mxu0 0.0
      %426 = vmatpush1.msra.mxu0 0.0
      %427 = vmatprep.subr.mxu0 0.0
      %428 = vmatpush1.msra.mxu0 0.0
      %429 = vmatprep.subr.mxu0 0.0
      %430 = vmatpush1.msra.mxu0 0.0
      %431 = vmatprep.subr.mxu0 0.0
      %432 = vmatpush1.msra.mxu0 0.0
      %433 = vmatprep.subr.mxu0 0.0
      %434 = vmatpush1.msra.mxu0 0.0
      %435 = vmatprep.subr.mxu0 0.0
      %436 = vmatpush1.msra.mxu0 0.0
      %437 = vmatprep.subr.mxu0 0.0
      %438 = vmatpush1.msra.mxu0 0.0
      %439 = vmatprep.subr.mxu0 0.0
      %440 = vmatpush1.msra.mxu0 0.0
      %441 = vmatprep.subr.mxu0 0.0
      %442 = vmatpush1.msra.mxu0 0.0
      %443 = vmatprep.subr.mxu0 0.0
      %444 = vmatpush1.msra.mxu0 0.0
      %445 = vmatprep.subr.mxu0 0.0
      %446 = vmatpush1.msra.mxu0 0.0
      %447 = vmatprep.subr.mxu0 0.0
      %448 = vmatpush1.msra.mxu0 0.0
      %449 = vmatprep.subr.mxu0 0.0
      %450 = vmatpush1.msra.mxu0 0.0
      %451 = vmatprep.subr.mxu0 0.0
      %452 = vmatpush1.msra.mxu0 0.0
      %453 = vmatprep.subr.mxu0 0.0
      %454 = vmatpush1.msra.mxu0 0.0
      %455 = vmatprep.subr.mxu0 0.0
      %456 = vmatpush1.msra.mxu0 0.0
      %457 = vmatprep.subr.mxu0 0.0
      %458 = vmatpush1.msra.mxu0 0.0
      %459 = vmatprep.subr.mxu0 0.0
      %460 = vmatpush1.msra.mxu0 0.0
      %461 = vmatprep.subr.mxu0 0.0
      %462 = vmatpush1.msra.mxu0 0.0
      %463 = vmatprep.subr.mxu0 0.0
      %464 = vmatpush1.msra.mxu0 0.0
      %465 = vmatprep.subr.mxu0 0.0
      %466 = vmatpush1.msra.mxu0 0.0
      %467 = vmatprep.subr.mxu0 0.0
      %468 = vmatpush1.msra.mxu0 0.0
      %469 = vmatprep.subr.mxu0 0.0
      %470 = vmatpush1.msra.mxu0 0.0
      %471 = vmatprep.subr.mxu0 0.0
      %472 = vmatpush1.msra.mxu0 0.0
      %473 = vmatprep.subr.mxu0 0.0
      %474 = vmatpush1.msra.mxu0 0.0
      %475 = vmatprep.subr.mxu0 0.0
      %476 = vmatpush1.msra.mxu0 0.0
      %477 = vmatprep.subr.mxu0 0.0
      %478 = vmatpush1.msra.mxu0 0.0
      %479 = vmatprep.subr.mxu0 0.0
      %480 = vmatpush1.msra.mxu0 0.0
      %481 = vmatprep.subr.mxu0 0.0
      %482 = vmatpush1.msra.mxu0 0.0
      %483 = vmatprep.subr.mxu0 0.0
      %484 = vmatpush1.msra.mxu0 0.0
      %485 = vmatprep.subr.mxu0 0.0
      %486 = vmatpush1.msra.mxu0 0.0
      %487 = vmatprep.mubr.f32.mxu0 0.0
      %488 = vmatmul.mubr.f32.gmra.mrb[0].mxu0 %v324
      %v489 = vpop.f32.mrb[0].mxu0
      %v490 = vadd.f32 0.0, %v489
      %v491 = vpop.f32.mrb[0].mxu0
      %492 = vmatprep.mubr.f32.mxu0 0.0
      %493 = vmatmul.mubr.f32.gmra.mrb[0].mxu0 %v327
      %v494 = vpop.f32.mrb[0].mxu0
      %v495 = vadd.f32 0.0, %v494
      %v496 = vpop.f32.mrb[0].mxu0
      %497 = vmatprep.mubr.f32.mxu0 0.0
      %498 = vmatmul.mubr.f32.gmra.mrb[0].mxu0 %v330
      %v499 = vpop.f32.mrb[0].mxu0
      %v500 = vadd.f32 0.0, %v499
      %v501 = vpop.f32.mrb[0].mxu0
      %502 = vmatprep.mubr.f32.mxu0 0.0
      %503 = vmatmul.mubr.f32.gmra.mrb[0].mxu0 %v333
      %v504 = vpop.f32.mrb[0].mxu0
      %v505 = vadd.f32 0.0, %v504
      %v506 = vpop.f32.mrb[0].mxu0
      %507 = vmatprep.mubr.f32.mxu0 0.0
      %508 = vmatmul.mubr.f32.gmra.mrb[0].mxu0 %v336
      %v509 = vpop.f32.mrb[0].mxu0
      %v510 = vadd.f32 0.0, %v509
      %v511 = vpop.f32.mrb[0].mxu0
      %512 = vmatprep.mubr.f32.mxu0 0.0
      %513 = vmatmul.mubr.f32.gmra.mrb[0].mxu0 %v339
      %v514 = vpop.f32.mrb[0].mxu0
      %v515 = vadd.f32 0.0, %v514
      %v516 = vpop.f32.mrb[0].mxu0
      %517 = vmatprep.mubr.f32.mxu0 0.0
      %518 = vmatmul.mubr.f32.gmra.mrb[0].mxu0 %v342
      %v519 = vpop.f32.mrb[0].mxu0
      %v520 = vadd.f32 0.0, %v519
      %v521 = vpop.f32.mrb[0].mxu0
      %522 = vmatprep.mubr.f32.mxu0 0.0
      %523 = vmatmul.mubr.f32.gmra.mrb[0].mxu0 %v345
      %v524 = vpop.f32.mrb[0].mxu0
      %v525 = vadd.f32 0.0, %v524
      %v526 = vpop.f32.mrb[0].mxu0
      %527 = vmatprep.mubr.f32.mxu0 0.0
      %528 = vmatmul.mubr.f32.gmra.mrb[0].mxu0 %v348
      %v529 = vpop.f32.mrb[0].mxu0
      %v530 = vadd.f32 0.0, %v529
      %v531 = vpop.f32.mrb[0].mxu0
      %532 = vmatprep.mubr.f32.mxu0 0.0
      %533 = vmatmul.mubr.f32.gmra.mrb[0].mxu0 %v351
      %v534 = vpop.f32.mrb[0].mxu0
      %v535 = vadd.f32 0.0, %v534
      %v536 = vpop.f32.mrb[0].mxu0
      %537 = vmatprep.mubr.f32.mxu0 0.0
      %538 = vmatmul.mubr.f32.gmra.mrb[0].mxu0 %v354
      %v539 = vpop.f32.mrb[0].mxu0
      %v540 = vadd.f32 0.0, %v539
      %v541 = vpop.f32.mrb[0].mxu0
      %542 = vmatprep.mubr.f32.mxu0 0.0
      %543 = vmatmul.mubr.f32.gmra.mrb[0].mxu0 %v357
      %v544 = vpop.f32.mrb[0].mxu0
      %v545 = vadd.f32 0.0, %v544
      %v546 = vpop.f32.mrb[0].mxu0
      %547 = vmatprep.mubr.f32.mxu0 0.0
      %548 = vmatmul.mubr.f32.gmra.mrb[0].mxu0 %v360
      %v549 = vpop.f32.mrb[0].mxu0
      %v550 = vadd.f32 0.0, %v549
      %v551 = vpop.f32.mrb[0].mxu0
      %552 = vmatprep.mubr.f32.mxu0 0.0
      %553 = vmatmul.mubr.f32.gmra.mrb[0].mxu0 %v363
      %v554 = vpop.f32.mrb[0].mxu0
      %v555 = vadd.f32 0.0, %v554
      %v556 = vpop.f32.mrb[0].mxu0
      %557 = vmatprep.mubr.f32.mxu0 0.0
      %558 = vmatmul.mubr.f32.gmra.mrb[0].mxu0 %v366
      %v559 = vpop.f32.mrb[0].mxu0
      %v560 = vadd.f32 0.0, %v559
      %v561 = vpop.f32.mrb[0].mxu0
      %562 = vmatprep.mubr.f32.mxu0 0.0
      %563 = vmatmul.mubr.f32.gmra.mrb[0].mxu0 %v369
      %v564 = vpop.f32.mrb[0].mxu0
      %v565 = vadd.f32 0.0, %v564
      %v566 = vpop.f32.mrb[0].mxu0
      %567 = vmatprep.mubr.f32.mxu0 0.0
      %568 = vmatmul.mubr.f32.gmra.mrb[0].mxu0 %v372
      %v569 = vpop.f32.mrb[0].mxu0
      %v570 = vadd.f32 0.0, %v569
      %v571 = vpop.f32.mrb[0].mxu0
      %572 = vmatprep.mubr.f32.mxu0 0.0
      %573 = vmatmul.mubr.f32.gmra.mrb[0].mxu0 %v375
      %v574 = vpop.f32.mrb[0].mxu0
      %v575 = vadd.f32 0.0, %v574
      %v576 = vpop.f32.mrb[0].mxu0
      %577 = vmatprep.mubr.f32.mxu0 0.0
      %578 = vmatmul.mubr.f32.gmra.mrb[0].mxu0 %v378
      %v579 = vpop.f32.mrb[0].mxu0
      %v580 = vadd.f32 0.0, %v579
      %v581 = vpop.f32.mrb[0].mxu0
      %582 = vmatprep.mubr.f32.mxu0 0.0
      %583 = vmatmul.mubr.f32.gmra.mrb[0].mxu0 %v381
      %v584 = vpop.f32.mrb[0].mxu0
      %v585 = vadd.f32 0.0, %v584
      %v586 = vpop.f32.mrb[0].mxu0
      %587 = vmatprep.mubr.f32.mxu0 0.0
      %588 = vmatmul.mubr.f32.gmra.mrb[0].mxu0 %v384
      %v589 = vpop.f32.mrb[0].mxu0
      %v590 = vadd.f32 0.0, %v589
      %v591 = vpop.f32.mrb[0].mxu0
      %592 = vmatprep.mubr.f32.mxu0 0.0
      %593 = vmatmul.mubr.f32.gmra.mrb[0].mxu0 %v387
      %v594 = vpop.f32.mrb[0].mxu0
      %v595 = vadd.f32 0.0, %v594
      %v596 = vpop.f32.mrb[0].mxu0
      %597 = vmatprep.mubr.f32.mxu0 0.0
      %598 = vmatmul.mubr.f32.gmra.mrb[0].mxu0 %v390
      %v599 = vpop.f32.mrb[0].mxu0
      %v600 = vadd.f32 0.0, %v599
      %v601 = vpop.f32.mrb[0].mxu0
      %602 = vmatprep.mubr.f32.mxu0 0.0
      %603 = vmatmul.mubr.f32.gmra.mrb[0].mxu0 %v393
      %v604 = vpop.f32.mrb[0].mxu0
      %v605 = vadd.f32 0.0, %v604
      %v606 = vpop.f32.mrb[0].mxu0
      %607 = vmatprep.mubr.f32.mxu0 0.0
      %608 = vmatmul.mubr.f32.gmra.mrb[0].mxu0 %v396
      %v609 = vpop.f32.mrb[0].mxu0
      %v610 = vadd.f32 0.0, %v609
      %v611 = vpop.f32.mrb[0].mxu0
      %612 = vmatprep.mubr.f32.mxu0 0.0
      %613 = vmatmul.mubr.f32.gmra.mrb[0].mxu0 %v399
      %v614 = vpop.f32.mrb[0].mxu0
      %v615 = vadd.f32 0.0, %v614
      %v616 = vpop.f32.mrb[0].mxu0
      %617 = vmatprep.mubr.f32.mxu0 0.0
      %618 = vmatmul.mubr.f32.gmra.mrb[0].mxu0 %v402
      %v619 = vpop.f32.mrb[0].mxu0
      %v620 = vadd.f32 0.0, %v619
      %v621 = vpop.f32.mrb[0].mxu0
      %622 = vmatprep.mubr.f32.mxu0 0.0
      %623 = vmatmul.mubr.f32.gmra.mrb[0].mxu0 %v405
      %v624 = vpop.f32.mrb[0].mxu0
      %v625 = vadd.f32 0.0, %v624
      %v626 = vpop.f32.mrb[0].mxu0
      %627 = vmatprep.mubr.f32.mxu0 0.0
      %628 = vmatmul.mubr.f32.gmra.mrb[0].mxu0 %v408
      %v629 = vpop.f32.mrb[0].mxu0
      %v630 = vadd.f32 0.0, %v629
      %v631 = vpop.f32.mrb[0].mxu0
      %632 = vmatprep.mubr.f32.mxu0 0.0
      %633 = vmatmul.mubr.f32.gmra.mrb[0].mxu0 %v411
      %v634 = vpop.f32.mrb[0].mxu0
      %v635 = vadd.f32 0.0, %v634
      %v636 = vpop.f32.mrb[0].mxu0
      %637 = vmatprep.mubr.f32.mxu0 0.0
      %638 = vmatmul.mubr.f32.gmra.mrb[0].mxu0 %v414
      %v639 = vpop.f32.mrb[0].mxu0
      %v640 = vadd.f32 0.0, %v639
      %v641 = vpop.f32.mrb[0].mxu0
      %642 = vmatprep.mubr.f32.mxu0 0.0
      %643 = vmatmul.mubr.f32.gmra.mrb[0].mxu0 %v417
      %v644 = vpop.f32.mrb[0].mxu0
      %v645 = vadd.f32 0.0, %v644
      %v646 = vpop.f32.mrb[0].mxu0
      %647 = vdwg.mxu0
      %v649 = vsel %vm171, %v287, 0
      %v652 = vsel %vm171, %v288, 0
      %v655 = vsel %vm419, %v278, 0
      %657 = vmatprep.subr.mxu0 0.0
      %658 = vmatpush1.msra.mxu0 %v655
      %659 = vmatprep.subr.mxu0 0.0
      %660 = vmatpush1.msra.mxu0 0.0
      %661 = vmatprep.subr.mxu0 0.0
      %662 = vmatpush1.msra.mxu0 0.0
      %663 = vmatprep.subr.mxu0 0.0
      %664 = vmatpush1.msra.mxu0 0.0
      %665 = vmatprep.subr.mxu0 0.0
      %666 = vmatpush1.msra.mxu0 0.0
      %667 = vmatprep.subr.mxu0 0.0
      %668 = vmatpush1.msra.mxu0 0.0
      %669 = vmatprep.subr.mxu0 0.0
      %670 = vmatpush1.msra.mxu0 0.0
      %671 = vmatprep.subr.mxu0 0.0
      %672 = vmatpush1.msra.mxu0 0.0
      %673 = vmatprep.subr.mxu0 0.0
      %674 = vmatpush1.msra.mxu0 0.0
      %675 = vmatprep.subr.mxu0 0.0
      %676 = vmatpush1.msra.mxu0 0.0
      %677 = vmatprep.subr.mxu0 0.0
      %678 = vmatpush1.msra.mxu0 0.0
      %679 = vmatprep.subr.mxu0 0.0
      %680 = vmatpush1.msra.mxu0 0.0
      %681 = vmatprep.subr.mxu0 0.0
      %682 = vmatpush1.msra.mxu0 0.0
      %683 = vmatprep.subr.mxu0 0.0
      %684 = vmatpush1.msra.mxu0 0.0
      %685 = vmatprep.subr.mxu0 0.0
      %686 = vmatpush1.msra.mxu0 0.0
      %687 = vmatprep.subr.mxu0 0.0
      %688 = vmatpush1.msra.mxu0 0.0
      %689 = vmatprep.subr.mxu0 0.0
      %690 = vmatpush1.msra.mxu0 0.0
      %691 = vmatprep.subr.mxu0 0.0
      %692 = vmatpush1.msra.mxu0 0.0
      %693 = vmatprep.subr.mxu0 0.0
      %694 = vmatpush1.msra.mxu0 0.0
      %695 = vmatprep.subr.mxu0 0.0
      %696 = vmatpush1.msra.mxu0 0.0
      %697 = vmatprep.subr.mxu0 0.0
      %698 = vmatpush1.msra.mxu0 0.0
      %699 = vmatprep.subr.mxu0 0.0
      %700 = vmatpush1.msra.mxu0 0.0
      %701 = vmatprep.subr.mxu0 0.0
      %702 = vmatpush1.msra.mxu0 0.0
      %703 = vmatprep.subr.mxu0 0.0
      %704 = vmatpush1.msra.mxu0 0.0
      %705 = vmatprep.subr.mxu0 0.0
      %706 = vmatpush1.msra.mxu0 0.0
      %707 = vmatprep.subr.mxu0 0.0
      %708 = vmatpush1.msra.mxu0 0.0
      %709 = vmatprep.subr.mxu0 0.0
      %710 = vmatpush1.msra.mxu0 0.0
      %711 = vmatprep.subr.mxu0 0.0
      %712 = vmatpush1.msra.mxu0 0.0
      %713 = vmatprep.subr.mxu0 0.0
      %714 = vmatpush1.msra.mxu0 0.0
      %715 = vmatprep.subr.mxu0 0.0
      %716 = vmatpush1.msra.mxu0 0.0
      %717 = vmatprep.subr.mxu0 0.0
      %718 = vmatpush1.msra.mxu0 0.0
      %719 = vmatprep.subr.mxu0 0.0
      %720 = vmatpush1.msra.mxu0 0.0
      %721 = vmatprep.mubr.f32.mxu0 0.0
      %722 = vmatmul.mubr.f32.gmra.mrb[0].mxu0 %v649
      %v723 = vpop.f32.mrb[0].mxu0
      %v724 = vadd.f32 %v490, %v723
      %v725 = vpop.f32.mrb[0].mxu0
      %726 = vmatprep.mubr.f32.mxu0 0.0
      %727 = vmatmul.mubr.f32.gmra.mrb[0].mxu0 %v652
      %v728 = vpop.f32.mrb[0].mxu0
      %v729 = vadd.f32 %v495, %v728
      %v730 = vpop.f32.mrb[0].mxu0
      %731 = vmatprep.mubr.f32.mxu0 0.0
      %732 = vmatmul.mubr.f32.gmra.mrb[0].mxu0 %v324
      %v733 = vpop.f32.mrb[0].mxu0
      %v734 = vadd.f32 %v500, %v733
      %v735 = vpop.f32.mrb[0].mxu0
      %736 = vmatprep.mubr.f32.mxu0 0.0
      %737 = vmatmul.mubr.f32.gmra.mrb[0].mxu0 %v327
      %v738 = vpop.f32.mrb[0].mxu0
      %v739 = vadd.f32 %v505, %v738
      %v740 = vpop.f32.mrb[0].mxu0
      %741 = vmatprep.mubr.f32.mxu0 0.0
      %742 = vmatmul.mubr.f32.gmra.mrb[0].mxu0 %v330
      %v743 = vpop.f32.mrb[0].mxu0
      %v744 = vadd.f32 %v510, %v743
      %v745 = vpop.f32.mrb[0].mxu0
      %746 = vmatprep.mubr.f32.mxu0 0.0
      %747 = vmatmul.mubr.f32.gmra.mrb[0].mxu0 %v333
      %v748 = vpop.f32.mrb[0].mxu0
      %v749 = vadd.f32 %v515, %v748
      %v750 = vpop.f32.mrb[0].mxu0
      %751 = vmatprep.mubr.f32.mxu0 0.0
      %752 = vmatmul.mubr.f32.gmra.mrb[0].mxu0 %v336
      %v753 = vpop.f32.mrb[0].mxu0
      %v754 = vadd.f32 %v520, %v753
      %v755 = vpop.f32.mrb[0].mxu0
      %756 = vmatprep.mubr.f32.mxu0 0.0
      %757 = vmatmul.mubr.f32.gmra.mrb[0].mxu0 %v339
      %v758 = vpop.f32.mrb[0].mxu0
      %v759 = vadd.f32 %v525, %v758
      %v760 = vpop.f32.mrb[0].mxu0
      %761 = vmatprep.mubr.f32.mxu0 0.0
      %762 = vmatmul.mubr.f32.gmra.mrb[0].mxu0 %v342
      %v763 = vpop.f32.mrb[0].mxu0
      %v764 = vadd.f32 %v530, %v763
      %v765 = vpop.f32.mrb[0].mxu0
      %766 = vmatprep.mubr.f32.mxu0 0.0
      %767 = vmatmul.mubr.f32.gmra.mrb[0].mxu0 %v345
      %v768 = vpop.f32.mrb[0].mxu0
      %v769 = vadd.f32 %v535, %v768
      %v770 = vpop.f32.mrb[0].mxu0
      %771 = vmatprep.mubr.f32.mxu0 0.0
      %772 = vmatmul.mubr.f32.gmra.mrb[0].mxu0 %v348
      %v773 = vpop.f32.mrb[0].mxu0
      %v774 = vadd.f32 %v540, %v773
      %v775 = vpop.f32.mrb[0].mxu0
      %776 = vmatprep.mubr.f32.mxu0 0.0
      %777 = vmatmul.mubr.f32.gmra.mrb[0].mxu0 %v351
      %v778 = vpop.f32.mrb[0].mxu0
      %v779 = vadd.f32 %v545, %v778
      %v780 = vpop.f32.mrb[0].mxu0
      %781 = vmatprep.mubr.f32.mxu0 0.0
      %782 = vmatmul.mubr.f32.gmra.mrb[0].mxu0 %v354
      %v783 = vpop.f32.mrb[0].mxu0
      %v784 = vadd.f32 %v550, %v783
      %v785 = vpop.f32.mrb[0].mxu0
      %786 = vmatprep.mubr.f32.mxu0 0.0
      %787 = vmatmul.mubr.f32.gmra.mrb[0].mxu0 %v357
      %v788 = vpop.f32.mrb[0].mxu0
      %v789 = vadd.f32 %v555, %v788
      %v790 = vpop.f32.mrb[0].mxu0
      %791 = vmatprep.mubr.f32.mxu0 0.0
      %792 = vmatmul.mubr.f32.gmra.mrb[0].mxu0 %v360
      %v793 = vpop.f32.mrb[0].mxu0
      %v794 = vadd.f32 %v560, %v793
      %v795 = vpop.f32.mrb[0].mxu0
      %796 = vmatprep.mubr.f32.mxu0 0.0
      %797 = vmatmul.mubr.f32.gmra.mrb[0].mxu0 %v363
      %v798 = vpop.f32.mrb[0].mxu0
      %v799 = vadd.f32 %v565, %v798
      %v800 = vpop.f32.mrb[0].mxu0
      %801 = vmatprep.mubr.f32.mxu0 0.0
      %802 = vmatmul.mubr.f32.gmra.mrb[0].mxu0 %v366
      %v803 = vpop.f32.mrb[0].mxu0
      %v804 = vadd.f32 %v570, %v803
      %v805 = vpop.f32.mrb[0].mxu0
      %806 = vmatprep.mubr.f32.mxu0 0.0
      %807 = vmatmul.mubr.f32.gmra.mrb[0].mxu0 %v369
      %v808 = vpop.f32.mrb[0].mxu0
      %v809 = vadd.f32 %v575, %v808
      %v810 = vpop.f32.mrb[0].mxu0
      %811 = vmatprep.mubr.f32.mxu0 0.0
      %812 = vmatmul.mubr.f32.gmra.mrb[0].mxu0 %v372
      %v813 = vpop.f32.mrb[0].mxu0
      %v814 = vadd.f32 %v580, %v813
      %v815 = vpop.f32.mrb[0].mxu0
      %816 = vmatprep.mubr.f32.mxu0 0.0
      %817 = vmatmul.mubr.f32.gmra.mrb[0].mxu0 %v375
      %v818 = vpop.f32.mrb[0].mxu0
      %v819 = vadd.f32 %v585, %v818
      %v820 = vpop.f32.mrb[0].mxu0
      %821 = vmatprep.mubr.f32.mxu0 0.0
      %822 = vmatmul.mubr.f32.gmra.mrb[0].mxu0 %v378
      %v823 = vpop.f32.mrb[0].mxu0
      %v824 = vadd.f32 %v590, %v823
      %v825 = vpop.f32.mrb[0].mxu0
      %826 = vmatprep.mubr.f32.mxu0 0.0
      %827 = vmatmul.mubr.f32.gmra.mrb[0].mxu0 %v381
      %v828 = vpop.f32.mrb[0].mxu0
      %v829 = vadd.f32 %v595, %v828
      %v830 = vpop.f32.mrb[0].mxu0
      %831 = vmatprep.mubr.f32.mxu0 0.0
      %832 = vmatmul.mubr.f32.gmra.mrb[0].mxu0 %v384
      %v833 = vpop.f32.mrb[0].mxu0
      %v834 = vadd.f32 %v600, %v833
      %v835 = vpop.f32.mrb[0].mxu0
      %836 = vmatprep.mubr.f32.mxu0 0.0
      %837 = vmatmul.mubr.f32.gmra.mrb[0].mxu0 %v387
      %v838 = vpop.f32.mrb[0].mxu0
      %v839 = vadd.f32 %v605, %v838
      %v840 = vpop.f32.mrb[0].mxu0
      %841 = vmatprep.mubr.f32.mxu0 0.0
      %842 = vmatmul.mubr.f32.gmra.mrb[0].mxu0 %v390
      %v843 = vpop.f32.mrb[0].mxu0
      %v844 = vadd.f32 %v610, %v843
      %v845 = vpop.f32.mrb[0].mxu0
      %846 = vmatprep.mubr.f32.mxu0 0.0
      %847 = vmatmul.mubr.f32.gmra.mrb[0].mxu0 %v393
      %v848 = vpop.f32.mrb[0].mxu0
      %v849 = vadd.f32 %v615, %v848
      %v850 = vpop.f32.mrb[0].mxu0
      %851 = vmatprep.mubr.f32.mxu0 0.0
      %852 = vmatmul.mubr.f32.gmra.mrb[0].mxu0 %v396
      %v853 = vpop.f32.mrb[0].mxu0
      %v854 = vadd.f32 %v620, %v853
      %v855 = vpop.f32.mrb[0].mxu0
      %856 = vmatprep.mubr.f32.mxu0 0.0
      %857 = vmatmul.mubr.f32.gmra.mrb[0].mxu0 %v399
      %v858 = vpop.f32.mrb[0].mxu0
      %v859 = vadd.f32 %v625, %v858
      %v860 = vpop.f32.mrb[0].mxu0
      %861 = vmatprep.mubr.f32.mxu0 0.0
      %862 = vmatmul.mubr.f32.gmra.mrb[0].mxu0 %v402
      %v863 = vpop.f32.mrb[0].mxu0
      %v864 = vadd.f32 %v630, %v863
      %v865 = vpop.f32.mrb[0].mxu0
      %866 = vmatprep.mubr.f32.mxu0 0.0
      %867 = vmatmul.mubr.f32.gmra.mrb[0].mxu0 %v405
      %v868 = vpop.f32.mrb[0].mxu0
      %v869 = vadd.f32 %v635, %v868
      %v870 = vpop.f32.mrb[0].mxu0
      %871 = vmatprep.mubr.f32.mxu0 0.0
      %872 = vmatmul.mubr.f32.gmra.mrb[0].mxu0 %v408
      %v873 = vpop.f32.mrb[0].mxu0
      %v874 = vadd.f32 %v640, %v873
      %v875 = vpop.f32.mrb[0].mxu0
      %876 = vmatprep.mubr.f32.mxu0 0.0
      %877 = vmatmul.mubr.f32.gmra.mrb[0].mxu0 %v411
      %v878 = vpop.f32.mrb[0].mxu0
      %v879 = vadd.f32 %v645, %v878
      %v880 = vpop.f32.mrb[0].mxu0
      %881 = vdwg.mxu0
      %v883 = vsel %vm171, %v321, 0
      %v886 = vsel %vm171, %v322, 0
      %v889 = vsel %vm419, %v284, 0
      %891 = vmatprep.subr.mxu0 0.0
      %892 = vmatpush1.msra.mxu0 %v889
      %893 = vmatprep.subr.mxu0 0.0
      %894 = vmatpush1.msra.mxu0 0.0
      %895 = vmatprep.subr.mxu0 0.0
      %896 = vmatpush1.msra.mxu0 0.0
      %897 = vmatprep.subr.mxu0 0.0
      %898 = vmatpush1.msra.mxu0 0.0
      %899 = vmatprep.subr.mxu0 0.0
      %900 = vmatpush1.msra.mxu0 0.0
      %901 = vmatprep.subr.mxu0 0.0
      %902 = vmatpush1.msra.mxu0 0.0
      %903 = vmatprep.subr.mxu0 0.0
      %904 = vmatpush1.msra.mxu0 0.0
      %905 = vmatprep.subr.mxu0 0.0
      %906 = vmatpush1.msra.mxu0 0.0
      %907 = vmatprep.subr.mxu0 0.0
      %908 = vmatpush1.msra.mxu0 0.0
      %909 = vmatprep.subr.mxu0 0.0
      %910 = vmatpush1.msra.mxu0 0.0
      %911 = vmatprep.subr.mxu0 0.0
      %912 = vmatpush1.msra.mxu0 0.0
      %913 = vmatprep.subr.mxu0 0.0
      %914 = vmatpush1.msra.mxu0 0.0
      %915 = vmatprep.subr.mxu0 0.0
      %916 = vmatpush1.msra.mxu0 0.0
      %917 = vmatprep.subr.mxu0 0.0
      %918 = vmatpush1.msra.mxu0 0.0
      %919 = vmatprep.subr.mxu0 0.0
      %920 = vmatpush1.msra.mxu0 0.0
      %921 = vmatprep.subr.mxu0 0.0
      %922 = vmatpush1.msra.mxu0 0.0
      %923 = vmatprep.subr.mxu0 0.0
      %924 = vmatpush1.msra.mxu0 0.0
      %925 = vmatprep.subr.mxu0 0.0
      %926 = vmatpush1.msra.mxu0 0.0
      %927 = vmatprep.subr.mxu0 0.0
      %928 = vmatpush1.msra.mxu0 0.0
      %929 = vmatprep.subr.mxu0 0.0
      %930 = vmatpush1.msra.mxu0 0.0
      %931 = vmatprep.subr.mxu0 0.0
      %932 = vmatpush1.msra.mxu0 0.0
      %933 = vmatprep.subr.mxu0 0.0
      %934 = vmatpush1.msra.mxu0 0.0
      %935 = vmatprep.subr.mxu0 0.0
      %936 = vmatpush1.msra.mxu0 0.0
      %937 = vmatprep.subr.mxu0 0.0
      %938 = vmatpush1.msra.mxu0 0.0
      %939 = vmatprep.subr.mxu0 0.0
      %940 = vmatpush1.msra.mxu0 0.0
      %941 = vmatprep.subr.mxu0 0.0
      %942 = vmatpush1.msra.mxu0 0.0
      %943 = vmatprep.subr.mxu0 0.0
      %944 = vmatpush1.msra.mxu0 0.0
      %945 = vmatprep.subr.mxu0 0.0
      %946 = vmatpush1.msra.mxu0 0.0
      %947 = vmatprep.subr.mxu0 0.0
      %948 = vmatpush1.msra.mxu0 0.0
      %949 = vmatprep.subr.mxu0 0.0
      %950 = vmatpush1.msra.mxu0 0.0
      %951 = vmatprep.subr.mxu0 0.0
      %952 = vmatpush1.msra.mxu0 0.0
      %953 = vmatprep.subr.mxu0 0.0
      %954 = vmatpush1.msra.mxu0 0.0
      %955 = vmatprep.mubr.f32.mxu0 0.0
      %956 = vmatmul.mubr.f32.gmra.mrb[0].mxu0 %v330
      %v957 = vpop.f32.mrb[0].mxu0
      %v958 = vadd.f32 0.0, %v957
      %v959 = vpop.f32.mrb[0].mxu0
      %960 = vmatprep.mubr.f32.mxu0 0.0
      %961 = vmatmul.mubr.f32.gmra.mrb[0].mxu0 %v333
      %v962 = vpop.f32.mrb[0].mxu0
      %v963 = vadd.f32 0.0, %v962
      %v964 = vpop.f32.mrb[0].mxu0
      %965 = vmatprep.mubr.f32.mxu0 0.0
      %966 = vmatmul.mubr.f32.gmra.mrb[0].mxu0 %v336
      %v967 = vpop.f32.mrb[0].mxu0
      %v968 = vadd.f32 0.0, %v967
      %v969 = vpop.f32.mrb[0].mxu0
      %970 = vmatprep.mubr.f32.mxu0 0.0
      %971 = vmatmul.mubr.f32.gmra.mrb[0].mxu0 %v339
      %v972 = vpop.f32.mrb[0].mxu0
      %v973 = vadd.f32 0.0, %v972
      %v974 = vpop.f32.mrb[0].mxu0
      %975 = vmatprep.mubr.f32.mxu0 0.0
      %976 = vmatmul.mubr.f32.gmra.mrb[0].mxu0 %v342
      %v977 = vpop.f32.mrb[0].mxu0
      %v978 = vadd.f32 0.0, %v977
      %v979 = vpop.f32.mrb[0].mxu0
      %980 = vmatprep.mubr.f32.mxu0 0.0
      %981 = vmatmul.mubr.f32.gmra.mrb[0].mxu0 %v345
      %v982 = vpop.f32.mrb[0].mxu0
      %v983 = vadd.f32 0.0, %v982
      %v984 = vpop.f32.mrb[0].mxu0
      %985 = vmatprep.mubr.f32.mxu0 0.0
      %986 = vmatmul.mubr.f32.gmra.mrb[0].mxu0 %v348
      %v987 = vpop.f32.mrb[0].mxu0
      %v988 = vadd.f32 0.0, %v987
      %v989 = vpop.f32.mrb[0].mxu0
      %990 = vmatprep.mubr.f32.mxu0 0.0
      %991 = vmatmul.mubr.f32.gmra.mrb[0].mxu0 %v351
      %v992 = vpop.f32.mrb[0].mxu0
      %v993 = vadd.f32 0.0, %v992
      %v994 = vpop.f32.mrb[0].mxu0
      %995 = vmatprep.mubr.f32.mxu0 0.0
      %996 = vmatmul.mubr.f32.gmra.mrb[0].mxu0 %v354
      %v997 = vpop.f32.mrb[0].mxu0
      %v998 = vadd.f32 0.0, %v997
      %v999 = vpop.f32.mrb[0].mxu0
      %1000 = vmatprep.mubr.f32.mxu0 0.0
      %1001 = vmatmul.mubr.f32.gmra.mrb[0].mxu0 %v357
      %v1002 = vpop.f32.mrb[0].mxu0
      %v1003 = vadd.f32 0.0, %v1002
      %v1004 = vpop.f32.mrb[0].mxu0
      %1005 = vmatprep.mubr.f32.mxu0 0.0
      %1006 = vmatmul.mubr.f32.gmra.mrb[0].mxu0 %v360
      %v1007 = vpop.f32.mrb[0].mxu0
      %v1008 = vadd.f32 0.0, %v1007
      %v1009 = vpop.f32.mrb[0].mxu0
      %1010 = vmatprep.mubr.f32.mxu0 0.0
      %1011 = vmatmul.mubr.f32.gmra.mrb[0].mxu0 %v363
      %v1012 = vpop.f32.mrb[0].mxu0
      %v1013 = vadd.f32 0.0, %v1012
      %v1014 = vpop.f32.mrb[0].mxu0
      %1015 = vmatprep.mubr.f32.mxu0 0.0
      %1016 = vmatmul.mubr.f32.gmra.mrb[0].mxu0 %v366
      %v1017 = vpop.f32.mrb[0].mxu0
      %v1018 = vadd.f32 0.0, %v1017
      %v1019 = vpop.f32.mrb[0].mxu0
      %1020 = vmatprep.mubr.f32.mxu0 0.0
      %1021 = vmatmul.mubr.f32.gmra.mrb[0].mxu0 %v369
      %v1022 = vpop.f32.mrb[0].mxu0
      %v1023 = vadd.f32 0.0, %v1022
      %v1024 = vpop.f32.mrb[0].mxu0
      %1025 = vmatprep.mubr.f32.mxu0 0.0
      %1026 = vmatmul.mubr.f32.gmra.mrb[0].mxu0 %v372
      %v1027 = vpop.f32.mrb[0].mxu0
      %v1028 = vadd.f32 0.0, %v1027
      %v1029 = vpop.f32.mrb[0].mxu0
      %1030 = vmatprep.mubr.f32.mxu0 0.0
      %1031 = vmatmul.mubr.f32.gmra.mrb[0].mxu0 %v375
      %v1032 = vpop.f32.mrb[0].mxu0
      %v1033 = vadd.f32 0.0, %v1032
      %v1034 = vpop.f32.mrb[0].mxu0
      %1035 = vmatprep.mubr.f32.mxu0 0.0
      %1036 = vmatmul.mubr.f32.gmra.mrb[0].mxu0 %v378
      %v1037 = vpop.f32.mrb[0].mxu0
      %v1038 = vadd.f32 0.0, %v1037
      %v1039 = vpop.f32.mrb[0].mxu0
      %1040 = vmatprep.mubr.f32.mxu0 0.0
      %1041 = vmatmul.mubr.f32.gmra.mrb[0].mxu0 %v381
      %v1042 = vpop.f32.mrb[0].mxu0
      %v1043 = vadd.f32 0.0, %v1042
      %v1044 = vpop.f32.mrb[0].mxu0
      %1045 = vmatprep.mubr.f32.mxu0 0.0
      %1046 = vmatmul.mubr.f32.gmra.mrb[0].mxu0 %v384
      %v1047 = vpop.f32.mrb[0].mxu0
      %v1048 = vadd.f32 0.0, %v1047
      %v1049 = vpop.f32.mrb[0].mxu0
      %1050 = vmatprep.mubr.f32.mxu0 0.0
      %1051 = vmatmul.mubr.f32.gmra.mrb[0].mxu0 %v387
      %v1052 = vpop.f32.mrb[0].mxu0
      %v1053 = vadd.f32 0.0, %v1052
      %v1054 = vpop.f32.mrb[0].mxu0
      %1055 = vmatprep.mubr.f32.mxu0 0.0
      %1056 = vmatmul.mubr.f32.gmra.mrb[0].mxu0 %v390
      %v1057 = vpop.f32.mrb[0].mxu0
      %v1058 = vadd.f32 0.0, %v1057
      %v1059 = vpop.f32.mrb[0].mxu0
      %1060 = vmatprep.mubr.f32.mxu0 0.0
      %1061 = vmatmul.mubr.f32.gmra.mrb[0].mxu0 %v393
      %v1062 = vpop.f32.mrb[0].mxu0
      %v1063 = vadd.f32 0.0, %v1062
      %v1064 = vpop.f32.mrb[0].mxu0
      %1065 = vmatprep.mubr.f32.mxu0 0.0
      %1066 = vmatmul.mubr.f32.gmra.mrb[0].mxu0 %v396
      %v1067 = vpop.f32.mrb[0].mxu0
      %v1068 = vadd.f32 0.0, %v1067
      %v1069 = vpop.f32.mrb[0].mxu0
      %1070 = vmatprep.mubr.f32.mxu0 0.0
      %1071 = vmatmul.mubr.f32.gmra.mrb[0].mxu0 %v399
      %v1072 = vpop.f32.mrb[0].mxu0
      %v1073 = vadd.f32 0.0, %v1072
      %v1074 = vpop.f32.mrb[0].mxu0
      %1075 = vmatprep.mubr.f32.mxu0 0.0
      %1076 = vmatmul.mubr.f32.gmra.mrb[0].mxu0 %v402
      %v1077 = vpop.f32.mrb[0].mxu0
      %v1078 = vadd.f32 0.0, %v1077
      %v1079 = vpop.f32.mrb[0].mxu0
      %1080 = vmatprep.mubr.f32.mxu0 0.0
      %1081 = vmatmul.mubr.f32.gmra.mrb[0].mxu0 %v405
      %v1082 = vpop.f32.mrb[0].mxu0
      %v1083 = vadd.f32 0.0, %v1082
      %v1084 = vpop.f32.mrb[0].mxu0
      %1085 = vmatprep.mubr.f32.mxu0 0.0
      %1086 = vmatmul.mubr.f32.gmra.mrb[0].mxu0 %v408
      %v1087 = vpop.f32.mrb[0].mxu0
      %v1088 = vadd.f32 0.0, %v1087
      %v1089 = vpop.f32.mrb[0].mxu0
      %1090 = vmatprep.mubr.f32.mxu0 0.0
      %1091 = vmatmul.mubr.f32.gmra.mrb[0].mxu0 %v411
      %v1092 = vpop.f32.mrb[0].mxu0
      %v1093 = vadd.f32 0.0, %v1092
      %v1094 = vpop.f32.mrb[0].mxu0
      %1095 = vmatprep.mubr.f32.mxu0 0.0
      %1096 = vmatmul.mubr.f32.gmra.mrb[0].mxu0 %v414
      %v1097 = vpop.f32.mrb[0].mxu0
      %v1098 = vadd.f32 0.0, %v1097
      %v1099 = vpop.f32.mrb[0].mxu0
      %1100 = vmatprep.mubr.f32.mxu0 0.0
      %1101 = vmatmul.mubr.f32.gmra.mrb[0].mxu0 %v417
      %v1102 = vpop.f32.mrb[0].mxu0
      %v1103 = vadd.f32 0.0, %v1102
      %v1104 = vpop.f32.mrb[0].mxu0
      %1105 = vmatprep.mubr.f32.mxu0 0.0
      %1106 = vmatmul.mubr.f32.gmra.mrb[0].mxu0 %v883
      %v1107 = vpop.f32.mrb[0].mxu0
      %v1108 = vadd.f32 0.0, %v1107
      %v1109 = vpop.f32.mrb[0].mxu0
      %1110 = vmatprep.mubr.f32.mxu0 0.0
      %1111 = vmatmul.mubr.f32.gmra.mrb[0].mxu0 %v886
      %v1112 = vpop.f32.mrb[0].mxu0
      %v1113 = vadd.f32 0.0, %v1112
      %v1114 = vpop.f32.mrb[0].mxu0
      %1115 = vdwg.mxu0
      %v1116 = vadd.f32 %v724, %v958
      %v1117 = vadd.f32 %v729, %v963
      %v1118 = vadd.f32 %v734, %v968
      %v1119 = vadd.f32 %v739, %v973
      %v1120 = vadd.f32 %v744, %v978
      %v1121 = vadd.f32 %v749, %v983
      %v1122 = vadd.f32 %v754, %v988
      %v1123 = vadd.f32 %v759, %v993
      %v1124 = vadd.f32 %v764, %v998
      %v1125 = vadd.f32 %v769, %v1003
      %v1126 = vadd.f32 %v774, %v1008
      %v1127 = vadd.f32 %v779, %v1013
      %v1128 = vadd.f32 %v784, %v1018
      %v1129 = vadd.f32 %v789, %v1023
      %v1130 = vadd.f32 %v794, %v1028
      %v1131 = vadd.f32 %v799, %v1033
      %v1132 = vadd.f32 %v804, %v1038
      %v1133 = vadd.f32 %v809, %v1043
      %v1134 = vadd.f32 %v814, %v1048
      %v1135 = vadd.f32 %v819, %v1053
      %v1136 = vadd.f32 %v824, %v1058
      %v1137 = vadd.f32 %v829, %v1063
      %v1138 = vadd.f32 %v834, %v1068
      %v1139 = vadd.f32 %v839, %v1073
      %v1140 = vadd.f32 %v844, %v1078
      %v1141 = vadd.f32 %v849, %v1083
      %v1142 = vadd.f32 %v854, %v1088
      %v1143 = vadd.f32 %v859, %v1093
      %v1144 = vadd.f32 %v864, %v1098
      %v1145 = vadd.f32 %v869, %v1103
      %v1146 = vadd.f32 %v874, %v1108
      %v1147 = vadd.f32 %v879, %v1113
      %v1148 = vld [vmem:[#allocation2 + $0x8] sm:$0xff]
      %v1149 = vld [vmem:[#allocation2 + $0x10] sm:$0xff]
      %v1150 = vld [vmem:[#allocation2 + $0x28] sm:$0xff]
      %v1151 = vld [vmem:[#allocation2 + $0x30] sm:$0xff]
      %v1152 = vld [vmem:[#allocation2 + $0x48] sm:$0xff]
      %v1153 = vld [vmem:[#allocation2 + $0x50] sm:$0xff]
      %v1154 = vld [vmem:[#allocation2 + $0x68] sm:$0xff]
      %v1155 = vld [vmem:[#allocation2 + $0x70] sm:$0xff]
      %v1156 = vld [vmem:[#allocation2 + $0x88] sm:$0xff]
      %v1157 = vld [vmem:[#allocation2 + $0x90] sm:$0xff]
      %v1158 = vld [vmem:[#allocation2 + $0xa8] sm:$0xff]
      %v1159 = vld [vmem:[#allocation2 + $0xb0] sm:$0xff]
      %v1160 = vld [vmem:[#allocation2 + $0xc8] sm:$0xff]
      %v1161 = vld [vmem:[#allocation2 + $0xd0] sm:$0xff]
      %v1162 = vld [vmem:[#allocation2 + $0xe8] sm:$0xff]
      %v1163 = vld [vmem:[#allocation2 + $0xf0] sm:$0xff]
      %v1164 = vld [vmem:[#allocation2 + $0x108] sm:$0xff]
      %v1165 = vld [vmem:[#allocation2 + $0x110] sm:$0xff]
      %v1166 = vld [vmem:[#allocation2 + $0x128] sm:$0xff]
      %v1167 = vld [vmem:[#allocation2 + $0x130] sm:$0xff]
      %v1168 = vld [vmem:[#allocation2 + $0x148] sm:$0xff]
      %v1169 = vld [vmem:[#allocation2 + $0x150] sm:$0xff]
      %v1170 = vld [vmem:[#allocation2 + $0x168] sm:$0xff]
      %v1171 = vld [vmem:[#allocation2 + $0x170] sm:$0xff]
      %v1172 = vld [vmem:[#allocation2 + $0x188] sm:$0xff]
      %v1173 = vld [vmem:[#allocation2 + $0x190] sm:$0xff]
      %v1174 = vld [vmem:[#allocation2 + $0x1a8] sm:$0xff]
      %v1175 = vld [vmem:[#allocation2 + $0x1b0] sm:$0xff]
      %v1176 = vld [vmem:[#allocation2 + $0x1c8] sm:$0xff]
      %v1177 = vld [vmem:[#allocation2 + $0x1d0] sm:$0xff]
      %v1178 = vld [vmem:[#allocation2 + $0x1e8] sm:$0xff]
      %v1179 = vld [vmem:[#allocation2 + $0x1f0] sm:$0xff]
      %v1180 = vld [vmem:[#allocation2 + $0x208] sm:$0xff]
      %v1181 = vld [vmem:[#allocation2 + $0x210] sm:$0xff]
      %v1182 = vld [vmem:[#allocation2 + $0x228] sm:$0xff]
      %v1183 = vld [vmem:[#allocation2 + $0x230] sm:$0xff]
      %v1185 = vsel %vm171, %v1148, 0
      %v1188 = vsel %vm171, %v1149, 0
      %v1191 = vsel %vm171, %v1150, 0
      %v1194 = vsel %vm171, %v1151, 0
      %v1197 = vsel %vm171, %v1152, 0
      %v1200 = vsel %vm171, %v1153, 0
      %v1203 = vsel %vm171, %v1154, 0
      %v1206 = vsel %vm171, %v1155, 0
      %v1209 = vsel %vm171, %v1156, 0
      %v1212 = vsel %vm171, %v1157, 0
      %v1215 = vsel %vm171, %v1158, 0
      %v1218 = vsel %vm171, %v1159, 0
      %v1221 = vsel %vm171, %v1160, 0
      %v1224 = vsel %vm171, %v1161, 0
      %v1227 = vsel %vm171, %v1162, 0
      %v1230 = vsel %vm171, %v1163, 0
      %v1233 = vsel %vm171, %v1164, 0
      %v1236 = vsel %vm171, %v1165, 0
      %v1239 = vsel %vm171, %v1166, 0
      %v1242 = vsel %vm171, %v1167, 0
      %v1245 = vsel %vm171, %v1168, 0
      %v1248 = vsel %vm171, %v1169, 0
      %v1251 = vsel %vm171, %v1170, 0
      %v1254 = vsel %vm171, %v1171, 0
      %v1257 = vsel %vm171, %v1172, 0
      %v1260 = vsel %vm171, %v1173, 0
      %v1263 = vsel %vm171, %v1174, 0
      %v1266 = vsel %vm171, %v1175, 0
      %v1269 = vsel %vm171, %v1176, 0
      %v1272 = vsel %vm171, %v1177, 0
      %v1275 = vsel %vm171, %v1178, 0
      %v1278 = vsel %vm171, %v1179, 0
      %v1281 = vsel %vm419, %v279, 0
      %1283 = vmatprep.subr.mxu0 0.0
      %1284 = vmatpush1.msra.mxu0 %v1281
      %1285 = vmatprep.subr.mxu0 0.0
      %1286 = vmatpush1.msra.mxu0 0.0
      %1287 = vmatprep.subr.mxu0 0.0
      %1288 = vmatpush1.msra.mxu0 0.0
      %1289 = vmatprep.subr.mxu0 0.0
      %1290 = vmatpush1.msra.mxu0 0.0
      %1291 = vmatprep.subr.mxu0 0.0
      %1292 = vmatpush1.msra.mxu0 0.0
      %1293 = vmatprep.subr.mxu0 0.0
      %1294 = vmatpush1.msra.mxu0 0.0
      %1295 = vmatprep.subr.mxu0 0.0
      %1296 = vmatpush1.msra.mxu0 0.0
      %1297 = vmatprep.subr.mxu0 0.0
      %1298 = vmatpush1.msra.mxu0 0.0
      %1299 = vmatprep.subr.mxu0 0.0
      %1300 = vmatpush1.msra.mxu0 0.0
      %1301 = vmatprep.subr.mxu0 0.0
      %1302 = vmatpush1.msra.mxu0 0.0
      %1303 = vmatprep.subr.mxu0 0.0
      %1304 = vmatpush1.msra.mxu0 0.0
      %1305 = vmatprep.subr.mxu0 0.0
      %1306 = vmatpush1.msra.mxu0 0.0
      %1307 = vmatprep.subr.mxu0 0.0
      %1308 = vmatpush1.msra.mxu0 0.0
      %1309 = vmatprep.subr.mxu0 0.0
      %1310 = vmatpush1.msra.mxu0 0.0
      %1311 = vmatprep.subr.mxu0 0.0
      %1312 = vmatpush1.msra.mxu0 0.0
      %1313 = vmatprep.subr.mxu0 0.0
      %1314 = vmatpush1.msra.mxu0 0.0
      %1315 = vmatprep.subr.mxu0 0.0
      %1316 = vmatpush1.msra.mxu0 0.0
      %1317 = vmatprep.subr.mxu0 0.0
      %1318 = vmatpush1.msra.mxu0 0.0
      %1319 = vmatprep.subr.mxu0 0.0
      %1320 = vmatpush1.msra.mxu0 0.0
      %1321 = vmatprep.subr.mxu0 0.0
      %1322 = vmatpush1.msra.mxu0 0.0
      %1323 = vmatprep.subr.mxu0 0.0
      %1324 = vmatpush1.msra.mxu0 0.0
      %1325 = vmatprep.subr.mxu0 0.0
      %1326 = vmatpush1.msra.mxu0 0.0
      %1327 = vmatprep.subr.mxu0 0.0
      %1328 = vmatpush1.msra.mxu0 0.0
      %1329 = vmatprep.subr.mxu0 0.0
      %1330 = vmatpush1.msra.mxu0 0.0
      %1331 = vmatprep.subr.mxu0 0.0
      %1332 = vmatpush1.msra.mxu0 0.0
      %1333 = vmatprep.subr.mxu0 0.0
      %1334 = vmatpush1.msra.mxu0 0.0
      %1335 = vmatprep.subr.mxu0 0.0
      %1336 = vmatpush1.msra.mxu0 0.0
      %1337 = vmatprep.subr.mxu0 0.0
      %1338 = vmatpush1.msra.mxu0 0.0
      %1339 = vmatprep.subr.mxu0 0.0
      %1340 = vmatpush1.msra.mxu0 0.0
      %1341 = vmatprep.subr.mxu0 0.0
      %1342 = vmatpush1.msra.mxu0 0.0
      %1343 = vmatprep.subr.mxu0 0.0
      %1344 = vmatpush1.msra.mxu0 0.0
      %1345 = vmatprep.subr.mxu0 0.0
      %1346 = vmatpush1.msra.mxu0 0.0
      %1347 = vmatprep.mubr.f32.mxu0 0.0
      %1348 = vmatmul.mubr.f32.gmra.mrb[0].mxu0 %v1185
      %v1349 = vpop.f32.mrb[0].mxu0
      %v1350 = vadd.f32 0.0, %v1349
      %v1351 = vpop.f32.mrb[0].mxu0
      %1352 = vmatprep.mubr.f32.mxu0 0.0
      %1353 = vmatmul.mubr.f32.gmra.mrb[0].mxu0 %v1188
      %v1354 = vpop.f32.mrb[0].mxu0
      %v1355 = vadd.f32 0.0, %v1354
      %v1356 = vpop.f32.mrb[0].mxu0
      %1357 = vmatprep.mubr.f32.mxu0 0.0
      %1358 = vmatmul.mubr.f32.gmra.mrb[0].mxu0 %v1191
      %v1359 = vpop.f32.mrb[0].mxu0
      %v1360 = vadd.f32 0.0, %v1359
      %v1361 = vpop.f32.mrb[0].mxu0
      %1362 = vmatprep.mubr.f32.mxu0 0.0
      %1363 = vmatmul.mubr.f32.gmra.mrb[0].mxu0 %v1194
      %v1364 = vpop.f32.mrb[0].mxu0
      %v1365 = vadd.f32 0.0, %v1364
      %v1366 = vpop.f32.mrb[0].mxu0
      %1367 = vmatprep.mubr.f32.mxu0 0.0
      %1368 = vmatmul.mubr.f32.gmra.mrb[0].mxu0 %v1197
      %v1369 = vpop.f32.mrb[0].mxu0
      %v1370 = vadd.f32 0.0, %v1369
      %v1371 = vpop.f32.mrb[0].mxu0
      %1372 = vmatprep.mubr.f32.mxu0 0.0
      %1373 = vmatmul.mubr.f32.gmra.mrb[0].mxu0 %v1200
      %v1374 = vpop.f32.mrb[0].mxu0
      %v1375 = vadd.f32 0.0, %v1374
      %v1376 = vpop.f32.mrb[0].mxu0
      %1377 = vmatprep.mubr.f32.mxu0 0.0
      %1378 = vmatmul.mubr.f32.gmra.mrb[0].mxu0 %v1203
      %v1379 = vpop.f32.mrb[0].mxu0
      %v1380 = vadd.f32 0.0, %v1379
      %v1381 = vpop.f32.mrb[0].mxu0
      %1382 = vmatprep.mubr.f32.mxu0 0.0
      %1383 = vmatmul.mubr.f32.gmra.mrb[0].mxu0 %v1206
      %v1384 = vpop.f32.mrb[0].mxu0
      %v1385 = vadd.f32 0.0, %v1384
      %v1386 = vpop.f32.mrb[0].mxu0
      %1387 = vmatprep.mubr.f32.mxu0 0.0
      %1388 = vmatmul.mubr.f32.gmra.mrb[0].mxu0 %v1209
      %v1389 = vpop.f32.mrb[0].mxu0
      %v1390 = vadd.f32 0.0, %v1389
      %v1391 = vpop.f32.mrb[0].mxu0
      %1392 = vmatprep.mubr.f32.mxu0 0.0
      %1393 = vmatmul.mubr.f32.gmra.mrb[0].mxu0 %v1212
      %v1394 = vpop.f32.mrb[0].mxu0
      %v1395 = vadd.f32 0.0, %v1394
      %v1396 = vpop.f32.mrb[0].mxu0
      %1397 = vmatprep.mubr.f32.mxu0 0.0
      %1398 = vmatmul.mubr.f32.gmra.mrb[0].mxu0 %v1215
      %v1399 = vpop.f32.mrb[0].mxu0
      %v1400 = vadd.f32 0.0, %v1399
      %v1401 = vpop.f32.mrb[0].mxu0
      %1402 = vmatprep.mubr.f32.mxu0 0.0
      %1403 = vmatmul.mubr.f32.gmra.mrb[0].mxu0 %v1218
      %v1404 = vpop.f32.mrb[0].mxu0
      %v1405 = vadd.f32 0.0, %v1404
      %v1406 = vpop.f32.mrb[0].mxu0
      %1407 = vmatprep.mubr.f32.mxu0 0.0
      %1408 = vmatmul.mubr.f32.gmra.mrb[0].mxu0 %v1221
      %v1409 = vpop.f32.mrb[0].mxu0
      %v1410 = vadd.f32 0.0, %v1409
      %v1411 = vpop.f32.mrb[0].mxu0
      %1412 = vmatprep.mubr.f32.mxu0 0.0
      %1413 = vmatmul.mubr.f32.gmra.mrb[0].mxu0 %v1224
      %v1414 = vpop.f32.mrb[0].mxu0
      %v1415 = vadd.f32 0.0, %v1414
      %v1416 = vpop.f32.mrb[0].mxu0
      %1417 = vmatprep.mubr.f32.mxu0 0.0
      %1418 = vmatmul.mubr.f32.gmra.mrb[0].mxu0 %v1227
      %v1419 = vpop.f32.mrb[0].mxu0
      %v1420 = vadd.f32 0.0, %v1419
      %v1421 = vpop.f32.mrb[0].mxu0
      %1422 = vmatprep.mubr.f32.mxu0 0.0
      %1423 = vmatmul.mubr.f32.gmra.mrb[0].mxu0 %v1230
      %v1424 = vpop.f32.mrb[0].mxu0
      %v1425 = vadd.f32 0.0, %v1424
      %v1426 = vpop.f32.mrb[0].mxu0
      %1427 = vmatprep.mubr.f32.mxu0 0.0
      %1428 = vmatmul.mubr.f32.gmra.mrb[0].mxu0 %v1233
      %v1429 = vpop.f32.mrb[0].mxu0
      %v1430 = vadd.f32 0.0, %v1429
      %v1431 = vpop.f32.mrb[0].mxu0
      %1432 = vmatprep.mubr.f32.mxu0 0.0
      %1433 = vmatmul.mubr.f32.gmra.mrb[0].mxu0 %v1236
      %v1434 = vpop.f32.mrb[0].mxu0
      %v1435 = vadd.f32 0.0, %v1434
      %v1436 = vpop.f32.mrb[0].mxu0
      %1437 = vmatprep.mubr.f32.mxu0 0.0
      %1438 = vmatmul.mubr.f32.gmra.mrb[0].mxu0 %v1239
      %v1439 = vpop.f32.mrb[0].mxu0
      %v1440 = vadd.f32 0.0, %v1439
      %v1441 = vpop.f32.mrb[0].mxu0
      %1442 = vmatprep.mubr.f32.mxu0 0.0
      %1443 = vmatmul.mubr.f32.gmra.mrb[0].mxu0 %v1242
      %v1444 = vpop.f32.mrb[0].mxu0
      %v1445 = vadd.f32 0.0, %v1444
      %v1446 = vpop.f32.mrb[0].mxu0
      %1447 = vmatprep.mubr.f32.mxu0 0.0
      %1448 = vmatmul.mubr.f32.gmra.mrb[0].mxu0 %v1245
      %v1449 = vpop.f32.mrb[0].mxu0
      %v1450 = vadd.f32 0.0, %v1449
      %v1451 = vpop.f32.mrb[0].mxu0
      %1452 = vmatprep.mubr.f32.mxu0 0.0
      %1453 = vmatmul.mubr.f32.gmra.mrb[0].mxu0 %v1248
      %v1454 = vpop.f32.mrb[0].mxu0
      %v1455 = vadd.f32 0.0, %v1454
      %v1456 = vpop.f32.mrb[0].mxu0
      %1457 = vmatprep.mubr.f32.mxu0 0.0
      %1458 = vmatmul.mubr.f32.gmra.mrb[0].mxu0 %v1251
      %v1459 = vpop.f32.mrb[0].mxu0
      %v1460 = vadd.f32 0.0, %v1459
      %v1461 = vpop.f32.mrb[0].mxu0
      %1462 = vmatprep.mubr.f32.mxu0 0.0
      %1463 = vmatmul.mubr.f32.gmra.mrb[0].mxu0 %v1254
      %v1464 = vpop.f32.mrb[0].mxu0
      %v1465 = vadd.f32 0.0, %v1464
      %v1466 = vpop.f32.mrb[0].mxu0
      %1467 = vmatprep.mubr.f32.mxu0 0.0
      %1468 = vmatmul.mubr.f32.gmra.mrb[0].mxu0 %v1257
      %v1469 = vpop.f32.mrb[0].mxu0
      %v1470 = vadd.f32 0.0, %v1469
      %v1471 = vpop.f32.mrb[0].mxu0
      %1472 = vmatprep.mubr.f32.mxu0 0.0
      %1473 = vmatmul.mubr.f32.gmra.mrb[0].mxu0 %v1260
      %v1474 = vpop.f32.mrb[0].mxu0
      %v1475 = vadd.f32 0.0, %v1474
      %v1476 = vpop.f32.mrb[0].mxu0
      %1477 = vmatprep.mubr.f32.mxu0 0.0
      %1478 = vmatmul.mubr.f32.gmra.mrb[0].mxu0 %v1263
      %v1479 = vpop.f32.mrb[0].mxu0
      %v1480 = vadd.f32 0.0, %v1479
      %v1481 = vpop.f32.mrb[0].mxu0
      %1482 = vmatprep.mubr.f32.mxu0 0.0
      %1483 = vmatmul.mubr.f32.gmra.mrb[0].mxu0 %v1266
      %v1484 = vpop.f32.mrb[0].mxu0
      %v1485 = vadd.f32 0.0, %v1484
      %v1486 = vpop.f32.mrb[0].mxu0
      %1487 = vmatprep.mubr.f32.mxu0 0.0
      %1488 = vmatmul.mubr.f32.gmra.mrb[0].mxu0 %v1269
      %v1489 = vpop.f32.mrb[0].mxu0
      %v1490 = vadd.f32 0.0, %v1489
      %v1491 = vpop.f32.mrb[0].mxu0
      %1492 = vmatprep.mubr.f32.mxu0 0.0
      %1493 = vmatmul.mubr.f32.gmra.mrb[0].mxu0 %v1272
      %v1494 = vpop.f32.mrb[0].mxu0
      %v1495 = vadd.f32 0.0, %v1494
      %v1496 = vpop.f32.mrb[0].mxu0
      %1497 = vmatprep.mubr.f32.mxu0 0.0
      %1498 = vmatmul.mubr.f32.gmra.mrb[0].mxu0 %v1275
      %v1499 = vpop.f32.mrb[0].mxu0
      %v1500 = vadd.f32 0.0, %v1499
      %v1501 = vpop.f32.mrb[0].mxu0
      %1502 = vmatprep.mubr.f32.mxu0 0.0
      %1503 = vmatmul.mubr.f32.gmra.mrb[0].mxu0 %v1278
      %v1504 = vpop.f32.mrb[0].mxu0
      %v1505 = vadd.f32 0.0, %v1504
      %v1506 = vpop.f32.mrb[0].mxu0
      %1507 = vdwg.mxu0
      %v1508 = vadd.f32 %v1116, %v1350
      %v1509 = vadd.f32 %v1117, %v1355
      %v1510 = vadd.f32 %v1118, %v1360
      %v1511 = vadd.f32 %v1119, %v1365
      %v1512 = vadd.f32 %v1120, %v1370
      %v1513 = vadd.f32 %v1121, %v1375
      %v1514 = vadd.f32 %v1122, %v1380
      %v1515 = vadd.f32 %v1123, %v1385
      %v1516 = vadd.f32 %v1124, %v1390
      %v1517 = vadd.f32 %v1125, %v1395
      %v1518 = vadd.f32 %v1126, %v1400
      %v1519 = vadd.f32 %v1127, %v1405
      %v1520 = vadd.f32 %v1128, %v1410
      %v1521 = vadd.f32 %v1129, %v1415
      %v1522 = vadd.f32 %v1130, %v1420
      %v1523 = vadd.f32 %v1131, %v1425
      %v1524 = vadd.f32 %v1132, %v1430
      %v1525 = vadd.f32 %v1133, %v1435
      %v1526 = vadd.f32 %v1134, %v1440
      %v1527 = vadd.f32 %v1135, %v1445
      %v1528 = vadd.f32 %v1136, %v1450
      %v1529 = vadd.f32 %v1137, %v1455
      %v1530 = vadd.f32 %v1138, %v1460
      %v1531 = vadd.f32 %v1139, %v1465
      %v1532 = vadd.f32 %v1140, %v1470
      %v1533 = vadd.f32 %v1141, %v1475
      %v1534 = vadd.f32 %v1142, %v1480
      %v1535 = vadd.f32 %v1143, %v1485
      %v1536 = vadd.f32 %v1144, %v1490
      %v1537 = vadd.f32 %v1145, %v1495
      %v1538 = vadd.f32 %v1146, %v1500
      %v1539 = vadd.f32 %v1147, %v1505
      %v1541 = vsel %vm171, %v1180, 0
      %v1544 = vsel %vm171, %v1181, 0
      %v1547 = vsel %vm419, %v282, 0
      %1549 = vmatprep.subr.mxu0 0.0
      %1550 = vmatpush1.msra.mxu0 %v1547
      %1551 = vmatprep.subr.mxu0 0.0
      %1552 = vmatpush1.msra.mxu0 0.0
      %1553 = vmatprep.subr.mxu0 0.0
      %1554 = vmatpush1.msra.mxu0 0.0
      %1555 = vmatprep.subr.mxu0 0.0
      %1556 = vmatpush1.msra.mxu0 0.0
      %1557 = vmatprep.subr.mxu0 0.0
      %1558 = vmatpush1.msra.mxu0 0.0
      %1559 = vmatprep.subr.mxu0 0.0
      %1560 = vmatpush1.msra.mxu0 0.0
      %1561 = vmatprep.subr.mxu0 0.0
      %1562 = vmatpush1.msra.mxu0 0.0
      %1563 = vmatprep.subr.mxu0 0.0
      %1564 = vmatpush1.msra.mxu0 0.0
      %1565 = vmatprep.subr.mxu0 0.0
      %1566 = vmatpush1.msra.mxu0 0.0
      %1567 = vmatprep.subr.mxu0 0.0
      %1568 = vmatpush1.msra.mxu0 0.0
      %1569 = vmatprep.subr.mxu0 0.0
      %1570 = vmatpush1.msra.mxu0 0.0
      %1571 = vmatprep.subr.mxu0 0.0
      %1572 = vmatpush1.msra.mxu0 0.0
      %1573 = vmatprep.subr.mxu0 0.0
      %1574 = vmatpush1.msra.mxu0 0.0
      %1575 = vmatprep.subr.mxu0 0.0
      %1576 = vmatpush1.msra.mxu0 0.0
      %1577 = vmatprep.subr.mxu0 0.0
      %1578 = vmatpush1.msra.mxu0 0.0
      %1579 = vmatprep.subr.mxu0 0.0
      %1580 = vmatpush1.msra.mxu0 0.0
      %1581 = vmatprep.subr.mxu0 0.0
      %1582 = vmatpush1.msra.mxu0 0.0
      %1583 = vmatprep.subr.mxu0 0.0
      %1584 = vmatpush1.msra.mxu0 0.0
      %1585 = vmatprep.subr.mxu0 0.0
      %1586 = vmatpush1.msra.mxu0 0.0
      %1587 = vmatprep.subr.mxu0 0.0
      %1588 = vmatpush1.msra.mxu0 0.0
      %1589 = vmatprep.subr.mxu0 0.0
      %1590 = vmatpush1.msra.mxu0 0.0
      %1591 = vmatprep.subr.mxu0 0.0
      %1592 = vmatpush1.msra.mxu0 0.0
      %1593 = vmatprep.subr.mxu0 0.0
      %1594 = vmatpush1.msra.mxu0 0.0
      %1595 = vmatprep.subr.mxu0 0.0
      %1596 = vmatpush1.msra.mxu0 0.0
      %1597 = vmatprep.subr.mxu0 0.0
      %1598 = vmatpush1.msra.mxu0 0.0
      %1599 = vmatprep.subr.mxu0 0.0
      %1600 = vmatpush1.msra.mxu0 0.0
      %1601 = vmatprep.subr.mxu0 0.0
      %1602 = vmatpush1.msra.mxu0 0.0
      %1603 = vmatprep.subr.mxu0 0.0
      %1604 = vmatpush1.msra.mxu0 0.0
      %1605 = vmatprep.subr.mxu0 0.0
      %1606 = vmatpush1.msra.mxu0 0.0
      %1607 = vmatprep.subr.mxu0 0.0
      %1608 = vmatpush1.msra.mxu0 0.0
      %1609 = vmatprep.subr.mxu0 0.0
      %1610 = vmatpush1.msra.mxu0 0.0
      %1611 = vmatprep.subr.mxu0 0.0
      %1612 = vmatpush1.msra.mxu0 0.0
      %1613 = vmatprep.mubr.f32.mxu0 0.0
      %1614 = vmatmul.mubr.f32.gmra.mrb[0].mxu0 %v1191
      %v1615 = vpop.f32.mrb[0].mxu0
      %v1616 = vadd.f32 0.0, %v1615
      %v1617 = vpop.f32.mrb[0].mxu0
      %1618 = vmatprep.mubr.f32.mxu0 0.0
      %1619 = vmatmul.mubr.f32.gmra.mrb[0].mxu0 %v1194
      %v1620 = vpop.f32.mrb[0].mxu0
      %v1621 = vadd.f32 0.0, %v1620
      %v1622 = vpop.f32.mrb[0].mxu0
      %1623 = vmatprep.mubr.f32.mxu0 0.0
      %1624 = vmatmul.mubr.f32.gmra.mrb[0].mxu0 %v1197
      %v1625 = vpop.f32.mrb[0].mxu0
      %v1626 = vadd.f32 0.0, %v1625
      %v1627 = vpop.f32.mrb[0].mxu0
      %1628 = vmatprep.mubr.f32.mxu0 0.0
      %1629 = vmatmul.mubr.f32.gmra.mrb[0].mxu0 %v1200
      %v1630 = vpop.f32.mrb[0].mxu0
      %v1631 = vadd.f32 0.0, %v1630
      %v1632 = vpop.f32.mrb[0].mxu0
      %1633 = vmatprep.mubr.f32.mxu0 0.0
      %1634 = vmatmul.mubr.f32.gmra.mrb[0].mxu0 %v1203
      %v1635 = vpop.f32.mrb[0].mxu0
      %v1636 = vadd.f32 0.0, %v1635
      %v1637 = vpop.f32.mrb[0].mxu0
      %1638 = vmatprep.mubr.f32.mxu0 0.0
      %1639 = vmatmul.mubr.f32.gmra.mrb[0].mxu0 %v1206
      %v1640 = vpop.f32.mrb[0].mxu0
      %v1641 = vadd.f32 0.0, %v1640
      %v1642 = vpop.f32.mrb[0].mxu0
      %1643 = vmatprep.mubr.f32.mxu0 0.0
      %1644 = vmatmul.mubr.f32.gmra.mrb[0].mxu0 %v1209
      %v1645 = vpop.f32.mrb[0].mxu0
      %v1646 = vadd.f32 0.0, %v1645
      %v1647 = vpop.f32.mrb[0].mxu0
      %1648 = vmatprep.mubr.f32.mxu0 0.0
      %1649 = vmatmul.mubr.f32.gmra.mrb[0].mxu0 %v1212
      %v1650 = vpop.f32.mrb[0].mxu0
      %v1651 = vadd.f32 0.0, %v1650
      %v1652 = vpop.f32.mrb[0].mxu0
      %1653 = vmatprep.mubr.f32.mxu0 0.0
      %1654 = vmatmul.mubr.f32.gmra.mrb[0].mxu0 %v1215
      %v1655 = vpop.f32.mrb[0].mxu0
      %v1656 = vadd.f32 0.0, %v1655
      %v1657 = vpop.f32.mrb[0].mxu0
      %1658 = vmatprep.mubr.f32.mxu0 0.0
      %1659 = vmatmul.mubr.f32.gmra.mrb[0].mxu0 %v1218
      %v1660 = vpop.f32.mrb[0].mxu0
      %v1661 = vadd.f32 0.0, %v1660
      %v1662 = vpop.f32.mrb[0].mxu0
      %1663 = vmatprep.mubr.f32.mxu0 0.0
      %1664 = vmatmul.mubr.f32.gmra.mrb[0].mxu0 %v1221
      %v1665 = vpop.f32.mrb[0].mxu0
      %v1666 = vadd.f32 0.0, %v1665
      %v1667 = vpop.f32.mrb[0].mxu0
      %1668 = vmatprep.mubr.f32.mxu0 0.0
      %1669 = vmatmul.mubr.f32.gmra.mrb[0].mxu0 %v1224
      %v1670 = vpop.f32.mrb[0].mxu0
      %v1671 = vadd.f32 0.0, %v1670
      %v1672 = vpop.f32.mrb[0].mxu0
      %1673 = vmatprep.mubr.f32.mxu0 0.0
      %1674 = vmatmul.mubr.f32.gmra.mrb[0].mxu0 %v1227
      %v1675 = vpop.f32.mrb[0].mxu0
      %v1676 = vadd.f32 0.0, %v1675
      %v1677 = vpop.f32.mrb[0].mxu0
      %1678 = vmatprep.mubr.f32.mxu0 0.0
      %1679 = vmatmul.mubr.f32.gmra.mrb[0].mxu0 %v1230
      %v1680 = vpop.f32.mrb[0].mxu0
      %v1681 = vadd.f32 0.0, %v1680
      %v1682 = vpop.f32.mrb[0].mxu0
      %1683 = vmatprep.mubr.f32.mxu0 0.0
      %1684 = vmatmul.mubr.f32.gmra.mrb[0].mxu0 %v1233
      %v1685 = vpop.f32.mrb[0].mxu0
      %v1686 = vadd.f32 0.0, %v1685
      %v1687 = vpop.f32.mrb[0].mxu0
      %1688 = vmatprep.mubr.f32.mxu0 0.0
      %1689 = vmatmul.mubr.f32.gmra.mrb[0].mxu0 %v1236
      %v1690 = vpop.f32.mrb[0].mxu0
      %v1691 = vadd.f32 0.0, %v1690
      %v1692 = vpop.f32.mrb[0].mxu0
      %1693 = vmatprep.mubr.f32.mxu0 0.0
      %1694 = vmatmul.mubr.f32.gmra.mrb[0].mxu0 %v1239
      %v1695 = vpop.f32.mrb[0].mxu0
      %v1696 = vadd.f32 0.0, %v1695
      %v1697 = vpop.f32.mrb[0].mxu0
      %1698 = vmatprep.mubr.f32.mxu0 0.0
      %1699 = vmatmul.mubr.f32.gmra.mrb[0].mxu0 %v1242
      %v1700 = vpop.f32.mrb[0].mxu0
      %v1701 = vadd.f32 0.0, %v1700
      %v1702 = vpop.f32.mrb[0].mxu0
      %1703 = vmatprep.mubr.f32.mxu0 0.0
      %1704 = vmatmul.mubr.f32.gmra.mrb[0].mxu0 %v1245
      %v1705 = vpop.f32.mrb[0].mxu0
      %v1706 = vadd.f32 0.0, %v1705
      %v1707 = vpop.f32.mrb[0].mxu0
      %1708 = vmatprep.mubr.f32.mxu0 0.0
      %1709 = vmatmul.mubr.f32.gmra.mrb[0].mxu0 %v1248
      %v1710 = vpop.f32.mrb[0].mxu0
      %v1711 = vadd.f32 0.0, %v1710
      %v1712 = vpop.f32.mrb[0].mxu0
      %1713 = vmatprep.mubr.f32.mxu0 0.0
      %1714 = vmatmul.mubr.f32.gmra.mrb[0].mxu0 %v1251
      %v1715 = vpop.f32.mrb[0].mxu0
      %v1716 = vadd.f32 0.0, %v1715
      %v1717 = vpop.f32.mrb[0].mxu0
      %1718 = vmatprep.mubr.f32.mxu0 0.0
      %1719 = vmatmul.mubr.f32.gmra.mrb[0].mxu0 %v1254
      %v1720 = vpop.f32.mrb[0].mxu0
      %v1721 = vadd.f32 0.0, %v1720
      %v1722 = vpop.f32.mrb[0].mxu0
      %1723 = vmatprep.mubr.f32.mxu0 0.0
      %1724 = vmatmul.mubr.f32.gmra.mrb[0].mxu0 %v1257
      %v1725 = vpop.f32.mrb[0].mxu0
      %v1726 = vadd.f32 0.0, %v1725
      %v1727 = vpop.f32.mrb[0].mxu0
      %1728 = vmatprep.mubr.f32.mxu0 0.0
      %1729 = vmatmul.mubr.f32.gmra.mrb[0].mxu0 %v1260
      %v1730 = vpop.f32.mrb[0].mxu0
      %v1731 = vadd.f32 0.0, %v1730
      %v1732 = vpop.f32.mrb[0].mxu0
      %1733 = vmatprep.mubr.f32.mxu0 0.0
      %1734 = vmatmul.mubr.f32.gmra.mrb[0].mxu0 %v1263
      %v1735 = vpop.f32.mrb[0].mxu0
      %v1736 = vadd.f32 0.0, %v1735
      %v1737 = vpop.f32.mrb[0].mxu0
      %1738 = vmatprep.mubr.f32.mxu0 0.0
      %1739 = vmatmul.mubr.f32.gmra.mrb[0].mxu0 %v1266
      %v1740 = vpop.f32.mrb[0].mxu0
      %v1741 = vadd.f32 0.0, %v1740
      %v1742 = vpop.f32.mrb[0].mxu0
      %1743 = vmatprep.mubr.f32.mxu0 0.0
      %1744 = vmatmul.mubr.f32.gmra.mrb[0].mxu0 %v1269
      %v1745 = vpop.f32.mrb[0].mxu0
      %v1746 = vadd.f32 0.0, %v1745
      %v1747 = vpop.f32.mrb[0].mxu0
      %1748 = vmatprep.mubr.f32.mxu0 0.0
      %1749 = vmatmul.mubr.f32.gmra.mrb[0].mxu0 %v1272
      %v1750 = vpop.f32.mrb[0].mxu0
      %v1751 = vadd.f32 0.0, %v1750
      %v1752 = vpop.f32.mrb[0].mxu0
      %1753 = vmatprep.mubr.f32.mxu0 0.0
      %1754 = vmatmul.mubr.f32.gmra.mrb[0].mxu0 %v1275
      %v1755 = vpop.f32.mrb[0].mxu0
      %v1756 = vadd.f32 0.0, %v1755
      %v1757 = vpop.f32.mrb[0].mxu0
      %1758 = vmatprep.mubr.f32.mxu0 0.0
      %1759 = vmatmul.mubr.f32.gmra.mrb[0].mxu0 %v1278
      %v1760 = vpop.f32.mrb[0].mxu0
      %v1761 = vadd.f32 0.0, %v1760
      %v1762 = vpop.f32.mrb[0].mxu0
      %1763 = vmatprep.mubr.f32.mxu0 0.0
      %1764 = vmatmul.mubr.f32.gmra.mrb[0].mxu0 %v1541
      %v1765 = vpop.f32.mrb[0].mxu0
      %v1766 = vadd.f32 0.0, %v1765
      %v1767 = vpop.f32.mrb[0].mxu0
      %1768 = vmatprep.mubr.f32.mxu0 0.0
      %1769 = vmatmul.mubr.f32.gmra.mrb[0].mxu0 %v1544
      %v1770 = vpop.f32.mrb[0].mxu0
      %v1771 = vadd.f32 0.0, %v1770
      %v1772 = vpop.f32.mrb[0].mxu0
      %1773 = vdwg.mxu0
      %v1774 = vadd.f32 %v1508, %v1616
      %v1775 = vadd.f32 %v1509, %v1621
      %v1776 = vadd.f32 %v1510, %v1626
      %v1777 = vadd.f32 %v1511, %v1631
      %v1778 = vadd.f32 %v1512, %v1636
      %v1779 = vadd.f32 %v1513, %v1641
      %v1780 = vadd.f32 %v1514, %v1646
      %v1781 = vadd.f32 %v1515, %v1651
      %v1782 = vadd.f32 %v1516, %v1656
      %v1783 = vadd.f32 %v1517, %v1661
      %v1784 = vadd.f32 %v1518, %v1666
      %v1785 = vadd.f32 %v1519, %v1671
      %v1786 = vadd.f32 %v1520, %v1676
      %v1787 = vadd.f32 %v1521, %v1681
      %v1788 = vadd.f32 %v1522, %v1686
      %v1789 = vadd.f32 %v1523, %v1691
      %v1790 = vadd.f32 %v1524, %v1696
      %v1791 = vadd.f32 %v1525, %v1701
      %v1792 = vadd.f32 %v1526, %v1706
      %v1793 = vadd.f32 %v1527, %v1711
      %v1794 = vadd.f32 %v1528, %v1716
      %v1795 = vadd.f32 %v1529, %v1721
      %v1796 = vadd.f32 %v1530, %v1726
      %v1797 = vadd.f32 %v1531, %v1731
      %v1798 = vadd.f32 %v1532, %v1736
      %v1799 = vadd.f32 %v1533, %v1741
      %v1800 = vadd.f32 %v1534, %v1746
      %v1801 = vadd.f32 %v1535, %v1751
      %v1802 = vadd.f32 %v1536, %v1756
      %v1803 = vadd.f32 %v1537, %v1761
      %v1804 = vadd.f32 %v1538, %v1766
      %v1805 = vadd.f32 %v1539, %v1771
      %v1807 = vsel %vm171, %v1182, 0
      %v1810 = vsel %vm171, %v1183, 0
      %v1813 = vsel %vm419, %v285, 0
      %1815 = vmatprep.subr.mxu0 0.0
      %1816 = vmatpush1.msra.mxu0 %v1813
      %1817 = vmatprep.subr.mxu0 0.0
      %1818 = vmatpush1.msra.mxu0 0.0
      %1819 = vmatprep.subr.mxu0 0.0
      %1820 = vmatpush1.msra.mxu0 0.0
      %1821 = vmatprep.subr.mxu0 0.0
      %1822 = vmatpush1.msra.mxu0 0.0
      %1823 = vmatprep.subr.mxu0 0.0
      %1824 = vmatpush1.msra.mxu0 0.0
      %1825 = vmatprep.subr.mxu0 0.0
      %1826 = vmatpush1.msra.mxu0 0.0
      %1827 = vmatprep.subr.mxu0 0.0
      %1828 = vmatpush1.msra.mxu0 0.0
      %1829 = vmatprep.subr.mxu0 0.0
      %1830 = vmatpush1.msra.mxu0 0.0
      %1831 = vmatprep.subr.mxu0 0.0
      %1832 = vmatpush1.msra.mxu0 0.0
      %1833 = vmatprep.subr.mxu0 0.0
      %1834 = vmatpush1.msra.mxu0 0.0
      %1835 = vmatprep.subr.mxu0 0.0
      %1836 = vmatpush1.msra.mxu0 0.0
      %1837 = vmatprep.subr.mxu0 0.0
      %1838 = vmatpush1.msra.mxu0 0.0
      %1839 = vmatprep.subr.mxu0 0.0
      %1840 = vmatpush1.msra.mxu0 0.0
      %1841 = vmatprep.subr.mxu0 0.0
      %1842 = vmatpush1.msra.mxu0 0.0
      %1843 = vmatprep.subr.mxu0 0.0
      %1844 = vmatpush1.msra.mxu0 0.0
      %1845 = vmatprep.subr.mxu0 0.0
      %1846 = vmatpush1.msra.mxu0 0.0
      %1847 = vmatprep.subr.mxu0 0.0
      %1848 = vmatpush1.msra.mxu0 0.0
      %1849 = vmatprep.subr.mxu0 0.0
      %1850 = vmatpush1.msra.mxu0 0.0
      %1851 = vmatprep.subr.mxu0 0.0
      %1852 = vmatpush1.msra.mxu0 0.0
      %1853 = vmatprep.subr.mxu0 0.0
      %1854 = vmatpush1.msra.mxu0 0.0
      %1855 = vmatprep.subr.mxu0 0.0
      %1856 = vmatpush1.msra.mxu0 0.0
      %1857 = vmatprep.subr.mxu0 0.0
      %1858 = vmatpush1.msra.mxu0 0.0
      %1859 = vmatprep.subr.mxu0 0.0
      %1860 = vmatpush1.msra.mxu0 0.0
      %1861 = vmatprep.subr.mxu0 0.0
      %1862 = vmatpush1.msra.mxu0 0.0
      %1863 = vmatprep.subr.mxu0 0.0
      %1864 = vmatpush1.msra.mxu0 0.0
      %1865 = vmatprep.subr.mxu0 0.0
      %1866 = vmatpush1.msra.mxu0 0.0
      %1867 = vmatprep.subr.mxu0 0.0
      %1868 = vmatpush1.msra.mxu0 0.0
      %1869 = vmatprep.subr.mxu0 0.0
      %1870 = vmatpush1.msra.mxu0 0.0
      %1871 = vmatprep.subr.mxu0 0.0
      %1872 = vmatpush1.msra.mxu0 0.0
      %1873 = vmatprep.subr.mxu0 0.0
      %1874 = vmatpush1.msra.mxu0 0.0
      %1875 = vmatprep.subr.mxu0 0.0
      %1876 = vmatpush1.msra.mxu0 0.0
      %1877 = vmatprep.subr.mxu0 0.0
      %1878 = vmatpush1.msra.mxu0 0.0
      %1879 = vmatprep.mubr.f32.mxu0 0.0
      %1880 = vmatmul.mubr.f32.gmra.mrb[0].mxu0 %v1197
      %v1881 = vpop.f32.mrb[0].mxu0
      %v1882 = vadd.f32 0.0, %v1881
      %v1883 = vpop.f32.mrb[0].mxu0
      %1884 = vmatprep.mubr.f32.mxu0 0.0
      %1885 = vmatmul.mubr.f32.gmra.mrb[0].mxu0 %v1200
      %v1886 = vpop.f32.mrb[0].mxu0
      %v1887 = vadd.f32 0.0, %v1886
      %v1888 = vpop.f32.mrb[0].mxu0
      %1889 = vmatprep.mubr.f32.mxu0 0.0
      %1890 = vmatmul.mubr.f32.gmra.mrb[0].mxu0 %v1203
      %v1891 = vpop.f32.mrb[0].mxu0
      %v1892 = vadd.f32 0.0, %v1891
      %v1893 = vpop.f32.mrb[0].mxu0
      %1894 = vmatprep.mubr.f32.mxu0 0.0
      %1895 = vmatmul.mubr.f32.gmra.mrb[0].mxu0 %v1206
      %v1896 = vpop.f32.mrb[0].mxu0
      %v1897 = vadd.f32 0.0, %v1896
      %v1898 = vpop.f32.mrb[0].mxu0
      %1899 = vmatprep.mubr.f32.mxu0 0.0
      %1900 = vmatmul.mubr.f32.gmra.mrb[0].mxu0 %v1209
      %v1901 = vpop.f32.mrb[0].mxu0
      %v1902 = vadd.f32 0.0, %v1901
      %v1903 = vpop.f32.mrb[0].mxu0
      %1904 = vmatprep.mubr.f32.mxu0 0.0
      %1905 = vmatmul.mubr.f32.gmra.mrb[0].mxu0 %v1212
      %v1906 = vpop.f32.mrb[0].mxu0
      %v1907 = vadd.f32 0.0, %v1906
      %v1908 = vpop.f32.mrb[0].mxu0
      %1909 = vmatprep.mubr.f32.mxu0 0.0
      %1910 = vmatmul.mubr.f32.gmra.mrb[0].mxu0 %v1215
      %v1911 = vpop.f32.mrb[0].mxu0
      %v1912 = vadd.f32 0.0, %v1911
      %v1913 = vpop.f32.mrb[0].mxu0
      %1914 = vmatprep.mubr.f32.mxu0 0.0
      %1915 = vmatmul.mubr.f32.gmra.mrb[0].mxu0 %v1218
      %v1916 = vpop.f32.mrb[0].mxu0
      %v1917 = vadd.f32 0.0, %v1916
      %v1918 = vpop.f32.mrb[0].mxu0
      %1919 = vmatprep.mubr.f32.mxu0 0.0
      %1920 = vmatmul.mubr.f32.gmra.mrb[0].mxu0 %v1221
      %v1921 = vpop.f32.mrb[0].mxu0
      %v1922 = vadd.f32 0.0, %v1921
      %v1923 = vpop.f32.mrb[0].mxu0
      %1924 = vmatprep.mubr.f32.mxu0 0.0
      %1925 = vmatmul.mubr.f32.gmra.mrb[0].mxu0 %v1224
      %v1926 = vpop.f32.mrb[0].mxu0
      %v1927 = vadd.f32 0.0, %v1926
      %v1928 = vpop.f32.mrb[0].mxu0
      %1929 = vmatprep.mubr.f32.mxu0 0.0
      %1930 = vmatmul.mubr.f32.gmra.mrb[0].mxu0 %v1227
      %v1931 = vpop.f32.mrb[0].mxu0
      %v1932 = vadd.f32 0.0, %v1931
      %v1933 = vpop.f32.mrb[0].mxu0
      %1934 = vmatprep.mubr.f32.mxu0 0.0
      %1935 = vmatmul.mubr.f32.gmra.mrb[0].mxu0 %v1230
      %v1936 = vpop.f32.mrb[0].mxu0
      %v1937 = vadd.f32 0.0, %v1936
      %v1938 = vpop.f32.mrb[0].mxu0
      %1939 = vmatprep.mubr.f32.mxu0 0.0
      %1940 = vmatmul.mubr.f32.gmra.mrb[0].mxu0 %v1233
      %v1941 = vpop.f32.mrb[0].mxu0
      %v1942 = vadd.f32 0.0, %v1941
      %v1943 = vpop.f32.mrb[0].mxu0
      %1944 = vmatprep.mubr.f32.mxu0 0.0
      %1945 = vmatmul.mubr.f32.gmra.mrb[0].mxu0 %v1236
      %v1946 = vpop.f32.mrb[0].mxu0
      %v1947 = vadd.f32 0.0, %v1946
      %v1948 = vpop.f32.mrb[0].mxu0
      %1949 = vmatprep.mubr.f32.mxu0 0.0
      %1950 = vmatmul.mubr.f32.gmra.mrb[0].mxu0 %v1239
      %v1951 = vpop.f32.mrb[0].mxu0
      %v1952 = vadd.f32 0.0, %v1951
      %v1953 = vpop.f32.mrb[0].mxu0
      %1954 = vmatprep.mubr.f32.mxu0 0.0
      %1955 = vmatmul.mubr.f32.gmra.mrb[0].mxu0 %v1242
      %v1956 = vpop.f32.mrb[0].mxu0
      %v1957 = vadd.f32 0.0, %v1956
      %v1958 = vpop.f32.mrb[0].mxu0
      %1959 = vmatprep.mubr.f32.mxu0 0.0
      %1960 = vmatmul.mubr.f32.gmra.mrb[0].mxu0 %v1245
      %v1961 = vpop.f32.mrb[0].mxu0
      %v1962 = vadd.f32 0.0, %v1961
      %v1963 = vpop.f32.mrb[0].mxu0
      %1964 = vmatprep.mubr.f32.mxu0 0.0
      %1965 = vmatmul.mubr.f32.gmra.mrb[0].mxu0 %v1248
      %v1966 = vpop.f32.mrb[0].mxu0
      %v1967 = vadd.f32 0.0, %v1966
      %v1968 = vpop.f32.mrb[0].mxu0
      %1969 = vmatprep.mubr.f32.mxu0 0.0
      %1970 = vmatmul.mubr.f32.gmra.mrb[0].mxu0 %v1251
      %v1971 = vpop.f32.mrb[0].mxu0
      %v1972 = vadd.f32 0.0, %v1971
      %v1973 = vpop.f32.mrb[0].mxu0
      %1974 = vmatprep.mubr.f32.mxu0 0.0
      %1975 = vmatmul.mubr.f32.gmra.mrb[0].mxu0 %v1254
      %v1976 = vpop.f32.mrb[0].mxu0
      %v1977 = vadd.f32 0.0, %v1976
      %v1978 = vpop.f32.mrb[0].mxu0
      %1979 = vmatprep.mubr.f32.mxu0 0.0
      %1980 = vmatmul.mubr.f32.gmra.mrb[0].mxu0 %v1257
      %v1981 = vpop.f32.mrb[0].mxu0
      %v1982 = vadd.f32 0.0, %v1981
      %v1983 = vpop.f32.mrb[0].mxu0
      %1984 = vmatprep.mubr.f32.mxu0 0.0
      %1985 = vmatmul.mubr.f32.gmra.mrb[0].mxu0 %v1260
      %v1986 = vpop.f32.mrb[0].mxu0
      %v1987 = vadd.f32 0.0, %v1986
      %v1988 = vpop.f32.mrb[0].mxu0
      %1989 = vmatprep.mubr.f32.mxu0 0.0
      %1990 = vmatmul.mubr.f32.gmra.mrb[0].mxu0 %v1263
      %v1991 = vpop.f32.mrb[0].mxu0
      %v1992 = vadd.f32 0.0, %v1991
      %v1993 = vpop.f32.mrb[0].mxu0
      %1994 = vmatprep.mubr.f32.mxu0 0.0
      %1995 = vmatmul.mubr.f32.gmra.mrb[0].mxu0 %v1266
      %v1996 = vpop.f32.mrb[0].mxu0
      %v1997 = vadd.f32 0.0, %v1996
      %v1998 = vpop.f32.mrb[0].mxu0
      %1999 = vmatprep.mubr.f32.mxu0 0.0
      %2000 = vmatmul.mubr.f32.gmra.mrb[0].mxu0 %v1269
      %v2001 = vpop.f32.mrb[0].mxu0
      %v2002 = vadd.f32 0.0, %v2001
      %v2003 = vpop.f32.mrb[0].mxu0
      %2004 = vmatprep.mubr.f32.mxu0 0.0
      %2005 = vmatmul.mubr.f32.gmra.mrb[0].mxu0 %v1272
      %v2006 = vpop.f32.mrb[0].mxu0
      %v2007 = vadd.f32 0.0, %v2006
      %v2008 = vpop.f32.mrb[0].mxu0
      %2009 = vmatprep.mubr.f32.mxu0 0.0
      %2010 = vmatmul.mubr.f32.gmra.mrb[0].mxu0 %v1275
      %v2011 = vpop.f32.mrb[0].mxu0
      %v2012 = vadd.f32 0.0, %v2011
      %v2013 = vpop.f32.mrb[0].mxu0
      %2014 = vmatprep.mubr.f32.mxu0 0.0
      %2015 = vmatmul.mubr.f32.gmra.mrb[0].mxu0 %v1278
      %v2016 = vpop.f32.mrb[0].mxu0
      %v2017 = vadd.f32 0.0, %v2016
      %v2018 = vpop.f32.mrb[0].mxu0
      %2019 = vmatprep.mubr.f32.mxu0 0.0
      %2020 = vmatmul.mubr.f32.gmra.mrb[0].mxu0 %v1541
      %v2021 = vpop.f32.mrb[0].mxu0
      %v2022 = vadd.f32 0.0, %v2021
      %v2023 = vpop.f32.mrb[0].mxu0
      %2024 = vmatprep.mubr.f32.mxu0 0.0
      %2025 = vmatmul.mubr.f32.gmra.mrb[0].mxu0 %v1544
      %v2026 = vpop.f32.mrb[0].mxu0
      %v2027 = vadd.f32 0.0, %v2026
      %v2028 = vpop.f32.mrb[0].mxu0
      %2029 = vmatprep.mubr.f32.mxu0 0.0
      %2030 = vmatmul.mubr.f32.gmra.mrb[0].mxu0 %v1807
      %v2031 = vpop.f32.mrb[0].mxu0
      %v2032 = vadd.f32 0.0, %v2031
      %v2033 = vpop.f32.mrb[0].mxu0
      %2034 = vmatprep.mubr.f32.mxu0 0.0
      %2035 = vmatmul.mubr.f32.gmra.mrb[0].mxu0 %v1810
      %v2036 = vpop.f32.mrb[0].mxu0
      %v2037 = vadd.f32 0.0, %v2036
      %v2038 = vpop.f32.mrb[0].mxu0
      %2039 = vdwg.mxu0
      %v2040 = vadd.f32 %v1774, %v1882
      %v2041 = vadd.f32 %v1775, %v1887
      %v2042 = vadd.f32 %v1776, %v1892
      %v2043 = vadd.f32 %v1777, %v1897
      %v2044 = vadd.f32 %v1778, %v1902
      %v2045 = vadd.f32 %v1779, %v1907
      %v2046 = vadd.f32 %v1780, %v1912
      %v2047 = vadd.f32 %v1781, %v1917
      %v2048 = vadd.f32 %v1782, %v1922
      %v2049 = vadd.f32 %v1783, %v1927
      %v2050 = vadd.f32 %v1784, %v1932
      %v2051 = vadd.f32 %v1785, %v1937
      %v2052 = vadd.f32 %v1786, %v1942
      %v2053 = vadd.f32 %v1787, %v1947
      %v2054 = vadd.f32 %v1788, %v1952
      %v2055 = vadd.f32 %v1789, %v1957
      %v2056 = vadd.f32 %v1790, %v1962
      %v2057 = vadd.f32 %v1791, %v1967
      %v2058 = vadd.f32 %v1792, %v1972
      %v2059 = vadd.f32 %v1793, %v1977
      %v2060 = vadd.f32 %v1794, %v1982
      %v2061 = vadd.f32 %v1795, %v1987
      %v2062 = vadd.f32 %v1796, %v1992
      %v2063 = vadd.f32 %v1797, %v1997
      %v2064 = vadd.f32 %v1798, %v2002
      %v2065 = vadd.f32 %v1799, %v2007
      %v2066 = vadd.f32 %v1800, %v2012
      %v2067 = vadd.f32 %v1801, %v2017
      %v2068 = vadd.f32 %v1802, %v2022
      %v2069 = vadd.f32 %v1803, %v2027
      %v2070 = vadd.f32 %v1804, %v2032
      %v2071 = vadd.f32 %v1805, %v2037
      %v2072 = vld [vmem:[#allocation2 + $0x9] sm:$0xff]
      %v2073 = vld [vmem:[#allocation2 + $0x11] sm:$0xff]
      %v2074 = vld [vmem:[#allocation2 + $0x29] sm:$0xff]
      %v2075 = vld [vmem:[#allocation2 + $0x31] sm:$0xff]
      %v2076 = vld [vmem:[#allocation2 + $0x49] sm:$0xff]
      %v2077 = vld [vmem:[#allocation2 + $0x51] sm:$0xff]
      %v2078 = vld [vmem:[#allocation2 + $0x69] sm:$0xff]
      %v2079 = vld [vmem:[#allocation2 + $0x71] sm:$0xff]
      %v2080 = vld [vmem:[#allocation2 + $0x89] sm:$0xff]
      %v2081 = vld [vmem:[#allocation2 + $0x91] sm:$0xff]
      %v2082 = vld [vmem:[#allocation2 + $0xa9] sm:$0xff]
      %v2083 = vld [vmem:[#allocation2 + $0xb1] sm:$0xff]
      %v2084 = vld [vmem:[#allocation2 + $0xc9] sm:$0xff]
      %v2085 = vld [vmem:[#allocation2 + $0xd1] sm:$0xff]
      %v2086 = vld [vmem:[#allocation2 + $0xe9] sm:$0xff]
      %v2087 = vld [vmem:[#allocation2 + $0xf1] sm:$0xff]
      %v2088 = vld [vmem:[#allocation2 + $0x109] sm:$0xff]
      %v2089 = vld [vmem:[#allocation2 + $0x111] sm:$0xff]
      %v2090 = vld [vmem:[#allocation2 + $0x129] sm:$0xff]
      %v2091 = vld [vmem:[#allocation2 + $0x131] sm:$0xff]
      %v2092 = vld [vmem:[#allocation2 + $0x149] sm:$0xff]
      %v2093 = vld [vmem:[#allocation2 + $0x151] sm:$0xff]
      %v2094 = vld [vmem:[#allocation2 + $0x169] sm:$0xff]
      %v2095 = vld [vmem:[#allocation2 + $0x171] sm:$0xff]
      %v2096 = vld [vmem:[#allocation2 + $0x189] sm:$0xff]
      %v2097 = vld [vmem:[#allocation2 + $0x191] sm:$0xff]
      %v2098 = vld [vmem:[#allocation2 + $0x1a9] sm:$0xff]
      %v2099 = vld [vmem:[#allocation2 + $0x1b1] sm:$0xff]
      %v2100 = vld [vmem:[#allocation2 + $0x1c9] sm:$0xff]
      %v2101 = vld [vmem:[#allocation2 + $0x1d1] sm:$0xff]
      %v2102 = vld [vmem:[#allocation2 + $0x1e9] sm:$0xff]
      %v2103 = vld [vmem:[#allocation2 + $0x1f1] sm:$0xff]
      %v2104 = vld [vmem:[#allocation2 + $0x209] sm:$0xff]
      %v2105 = vld [vmem:[#allocation2 + $0x211] sm:$0xff]
      %v2106 = vld [vmem:[#allocation2 + $0x229] sm:$0xff]
      %v2107 = vld [vmem:[#allocation2 + $0x231] sm:$0xff]
      %v2109 = vsel %vm171, %v2072, 0
      %v2112 = vsel %vm171, %v2073, 0
      %v2115 = vsel %vm171, %v2074, 0
      %v2118 = vsel %vm171, %v2075, 0
      %v2121 = vsel %vm171, %v2076, 0
      %v2124 = vsel %vm171, %v2077, 0
      %v2127 = vsel %vm171, %v2078, 0
      %v2130 = vsel %vm171, %v2079, 0
      %v2133 = vsel %vm171, %v2080, 0
      %v2136 = vsel %vm171, %v2081, 0
      %v2139 = vsel %vm171, %v2082, 0
      %v2142 = vsel %vm171, %v2083, 0
      %v2145 = vsel %vm171, %v2084, 0
      %v2148 = vsel %vm171, %v2085, 0
      %v2151 = vsel %vm171, %v2086, 0
      %v2154 = vsel %vm171, %v2087, 0
      %v2157 = vsel %vm171, %v2088, 0
      %v2160 = vsel %vm171, %v2089, 0
      %v2163 = vsel %vm171, %v2090, 0
      %v2166 = vsel %vm171, %v2091, 0
      %v2169 = vsel %vm171, %v2092, 0
      %v2172 = vsel %vm171, %v2093, 0
      %v2175 = vsel %vm171, %v2094, 0
      %v2178 = vsel %vm171, %v2095, 0
      %v2181 = vsel %vm171, %v2096, 0
      %v2184 = vsel %vm171, %v2097, 0
      %v2187 = vsel %vm171, %v2098, 0
      %v2190 = vsel %vm171, %v2099, 0
      %v2193 = vsel %vm171, %v2100, 0
      %v2196 = vsel %vm171, %v2101, 0
      %v2199 = vsel %vm171, %v2102, 0
      %v2202 = vsel %vm171, %v2103, 0
      %v2205 = vsel %vm419, %v280, 0
      %2207 = vmatprep.subr.mxu0 0.0
      %2208 = vmatpush1.msra.mxu0 %v2205
      %2209 = vmatprep.subr.mxu0 0.0
      %2210 = vmatpush1.msra.mxu0 0.0
      %2211 = vmatprep.subr.mxu0 0.0
      %2212 = vmatpush1.msra.mxu0 0.0
      %2213 = vmatprep.subr.mxu0 0.0
      %2214 = vmatpush1.msra.mxu0 0.0
      %2215 = vmatprep.subr.mxu0 0.0
      %2216 = vmatpush1.msra.mxu0 0.0
      %2217 = vmatprep.subr.mxu0 0.0
      %2218 = vmatpush1.msra.mxu0 0.0
      %2219 = vmatprep.subr.mxu0 0.0
      %2220 = vmatpush1.msra.mxu0 0.0
      %2221 = vmatprep.subr.mxu0 0.0
      %2222 = vmatpush1.msra.mxu0 0.0
      %2223 = vmatprep.subr.mxu0 0.0
      %2224 = vmatpush1.msra.mxu0 0.0
      %2225 = vmatprep.subr.mxu0 0.0
      %2226 = vmatpush1.msra.mxu0 0.0
      %2227 = vmatprep.subr.mxu0 0.0
      %2228 = vmatpush1.msra.mxu0 0.0
      %2229 = vmatprep.subr.mxu0 0.0
      %2230 = vmatpush1.msra.mxu0 0.0
      %2231 = vmatprep.subr.mxu0 0.0
      %2232 = vmatpush1.msra.mxu0 0.0
      %2233 = vmatprep.subr.mxu0 0.0
      %2234 = vmatpush1.msra.mxu0 0.0
      %2235 = vmatprep.subr.mxu0 0.0
      %2236 = vmatpush1.msra.mxu0 0.0
      %2237 = vmatprep.subr.mxu0 0.0
      %2238 = vmatpush1.msra.mxu0 0.0
      %2239 = vmatprep.subr.mxu0 0.0
      %2240 = vmatpush1.msra.mxu0 0.0
      %2241 = vmatprep.subr.mxu0 0.0
      %2242 = vmatpush1.msra.mxu0 0.0
      %2243 = vmatprep.subr.mxu0 0.0
      %2244 = vmatpush1.msra.mxu0 0.0
      %2245 = vmatprep.subr.mxu0 0.0
      %2246 = vmatpush1.msra.mxu0 0.0
      %2247 = vmatprep.subr.mxu0 0.0
      %2248 = vmatpush1.msra.mxu0 0.0
      %2249 = vmatprep.subr.mxu0 0.0
      %2250 = vmatpush1.msra.mxu0 0.0
      %2251 = vmatprep.subr.mxu0 0.0
      %2252 = vmatpush1.msra.mxu0 0.0
      %2253 = vmatprep.subr.mxu0 0.0
      %2254 = vmatpush1.msra.mxu0 0.0
      %2255 = vmatprep.subr.mxu0 0.0
      %2256 = vmatpush1.msra.mxu0 0.0
      %2257 = vmatprep.subr.mxu0 0.0
      %2258 = vmatpush1.msra.mxu0 0.0
      %2259 = vmatprep.subr.mxu0 0.0
      %2260 = vmatpush1.msra.mxu0 0.0
      %2261 = vmatprep.subr.mxu0 0.0
      %2262 = vmatpush1.msra.mxu0 0.0
      %2263 = vmatprep.subr.mxu0 0.0
      %2264 = vmatpush1.msra.mxu0 0.0
      %2265 = vmatprep.subr.mxu0 0.0
      %2266 = vmatpush1.msra.mxu0 0.0
      %2267 = vmatprep.subr.mxu0 0.0
      %2268 = vmatpush1.msra.mxu0 0.0
      %2269 = vmatprep.subr.mxu0 0.0
      %2270 = vmatpush1.msra.mxu0 0.0
      %2271 = vmatprep.mubr.f32.mxu0 0.0
      %2272 = vmatmul.mubr.f32.gmra.mrb[0].mxu0 %v2109
      %v2273 = vpop.f32.mrb[0].mxu0
      %v2274 = vadd.f32 0.0, %v2273
      %v2275 = vpop.f32.mrb[0].mxu0
      %2276 = vmatprep.mubr.f32.mxu0 0.0
      %2277 = vmatmul.mubr.f32.gmra.mrb[0].mxu0 %v2112
      %v2278 = vpop.f32.mrb[0].mxu0
      %v2279 = vadd.f32 0.0, %v2278
      %v2280 = vpop.f32.mrb[0].mxu0
      %2281 = vmatprep.mubr.f32.mxu0 0.0
      %2282 = vmatmul.mubr.f32.gmra.mrb[0].mxu0 %v2115
      %v2283 = vpop.f32.mrb[0].mxu0
      %v2284 = vadd.f32 0.0, %v2283
      %v2285 = vpop.f32.mrb[0].mxu0
      %2286 = vmatprep.mubr.f32.mxu0 0.0
      %2287 = vmatmul.mubr.f32.gmra.mrb[0].mxu0 %v2118
      %v2288 = vpop.f32.mrb[0].mxu0
      %v2289 = vadd.f32 0.0, %v2288
      %v2290 = vpop.f32.mrb[0].mxu0
      %2291 = vmatprep.mubr.f32.mxu0 0.0
      %2292 = vmatmul.mubr.f32.gmra.mrb[0].mxu0 %v2121
      %v2293 = vpop.f32.mrb[0].mxu0
      %v2294 = vadd.f32 0.0, %v2293
      %v2295 = vpop.f32.mrb[0].mxu0
      %2296 = vmatprep.mubr.f32.mxu0 0.0
      %2297 = vmatmul.mubr.f32.gmra.mrb[0].mxu0 %v2124
      %v2298 = vpop.f32.mrb[0].mxu0
      %v2299 = vadd.f32 0.0, %v2298
      %v2300 = vpop.f32.mrb[0].mxu0
      %2301 = vmatprep.mubr.f32.mxu0 0.0
      %2302 = vmatmul.mubr.f32.gmra.mrb[0].mxu0 %v2127
      %v2303 = vpop.f32.mrb[0].mxu0
      %v2304 = vadd.f32 0.0, %v2303
      %v2305 = vpop.f32.mrb[0].mxu0
      %2306 = vmatprep.mubr.f32.mxu0 0.0
      %2307 = vmatmul.mubr.f32.gmra.mrb[0].mxu0 %v2130
      %v2308 = vpop.f32.mrb[0].mxu0
      %v2309 = vadd.f32 0.0, %v2308
      %v2310 = vpop.f32.mrb[0].mxu0
      %2311 = vmatprep.mubr.f32.mxu0 0.0
      %2312 = vmatmul.mubr.f32.gmra.mrb[0].mxu0 %v2133
      %v2313 = vpop.f32.mrb[0].mxu0
      %v2314 = vadd.f32 0.0, %v2313
      %v2315 = vpop.f32.mrb[0].mxu0
      %2316 = vmatprep.mubr.f32.mxu0 0.0
      %2317 = vmatmul.mubr.f32.gmra.mrb[0].mxu0 %v2136
      %v2318 = vpop.f32.mrb[0].mxu0
      %v2319 = vadd.f32 0.0, %v2318
      %v2320 = vpop.f32.mrb[0].mxu0
      %2321 = vmatprep.mubr.f32.mxu0 0.0
      %2322 = vmatmul.mubr.f32.gmra.mrb[0].mxu0 %v2139
      %v2323 = vpop.f32.mrb[0].mxu0
      %v2324 = vadd.f32 0.0, %v2323
      %v2325 = vpop.f32.mrb[0].mxu0
      %2326 = vmatprep.mubr.f32.mxu0 0.0
      %2327 = vmatmul.mubr.f32.gmra.mrb[0].mxu0 %v2142
      %v2328 = vpop.f32.mrb[0].mxu0
      %v2329 = vadd.f32 0.0, %v2328
      %v2330 = vpop.f32.mrb[0].mxu0
      %2331 = vmatprep.mubr.f32.mxu0 0.0
      %2332 = vmatmul.mubr.f32.gmra.mrb[0].mxu0 %v2145
      %v2333 = vpop.f32.mrb[0].mxu0
      %v2334 = vadd.f32 0.0, %v2333
      %v2335 = vpop.f32.mrb[0].mxu0
      %2336 = vmatprep.mubr.f32.mxu0 0.0
      %2337 = vmatmul.mubr.f32.gmra.mrb[0].mxu0 %v2148
      %v2338 = vpop.f32.mrb[0].mxu0
      %v2339 = vadd.f32 0.0, %v2338
      %v2340 = vpop.f32.mrb[0].mxu0
      %2341 = vmatprep.mubr.f32.mxu0 0.0
      %2342 = vmatmul.mubr.f32.gmra.mrb[0].mxu0 %v2151
      %v2343 = vpop.f32.mrb[0].mxu0
      %v2344 = vadd.f32 0.0, %v2343
      %v2345 = vpop.f32.mrb[0].mxu0
      %2346 = vmatprep.mubr.f32.mxu0 0.0
      %2347 = vmatmul.mubr.f32.gmra.mrb[0].mxu0 %v2154
      %v2348 = vpop.f32.mrb[0].mxu0
      %v2349 = vadd.f32 0.0, %v2348
      %v2350 = vpop.f32.mrb[0].mxu0
      %2351 = vmatprep.mubr.f32.mxu0 0.0
      %2352 = vmatmul.mubr.f32.gmra.mrb[0].mxu0 %v2157
      %v2353 = vpop.f32.mrb[0].mxu0
      %v2354 = vadd.f32 0.0, %v2353
      %v2355 = vpop.f32.mrb[0].mxu0
      %2356 = vmatprep.mubr.f32.mxu0 0.0
      %2357 = vmatmul.mubr.f32.gmra.mrb[0].mxu0 %v2160
      %v2358 = vpop.f32.mrb[0].mxu0
      %v2359 = vadd.f32 0.0, %v2358
      %v2360 = vpop.f32.mrb[0].mxu0
      %2361 = vmatprep.mubr.f32.mxu0 0.0
      %2362 = vmatmul.mubr.f32.gmra.mrb[0].mxu0 %v2163
      %v2363 = vpop.f32.mrb[0].mxu0
      %v2364 = vadd.f32 0.0, %v2363
      %v2365 = vpop.f32.mrb[0].mxu0
      %2366 = vmatprep.mubr.f32.mxu0 0.0
      %2367 = vmatmul.mubr.f32.gmra.mrb[0].mxu0 %v2166
      %v2368 = vpop.f32.mrb[0].mxu0
      %v2369 = vadd.f32 0.0, %v2368
      %v2370 = vpop.f32.mrb[0].mxu0
      %2371 = vmatprep.mubr.f32.mxu0 0.0
      %2372 = vmatmul.mubr.f32.gmra.mrb[0].mxu0 %v2169
      %v2373 = vpop.f32.mrb[0].mxu0
      %v2374 = vadd.f32 0.0, %v2373
      %v2375 = vpop.f32.mrb[0].mxu0
      %2376 = vmatprep.mubr.f32.mxu0 0.0
      %2377 = vmatmul.mubr.f32.gmra.mrb[0].mxu0 %v2172
      %v2378 = vpop.f32.mrb[0].mxu0
      %v2379 = vadd.f32 0.0, %v2378
      %v2380 = vpop.f32.mrb[0].mxu0
      %2381 = vmatprep.mubr.f32.mxu0 0.0
      %2382 = vmatmul.mubr.f32.gmra.mrb[0].mxu0 %v2175
      %v2383 = vpop.f32.mrb[0].mxu0
      %v2384 = vadd.f32 0.0, %v2383
      %v2385 = vpop.f32.mrb[0].mxu0
      %2386 = vmatprep.mubr.f32.mxu0 0.0
      %2387 = vmatmul.mubr.f32.gmra.mrb[0].mxu0 %v2178
      %v2388 = vpop.f32.mrb[0].mxu0
      %v2389 = vadd.f32 0.0, %v2388
      %v2390 = vpop.f32.mrb[0].mxu0
      %2391 = vmatprep.mubr.f32.mxu0 0.0
      %2392 = vmatmul.mubr.f32.gmra.mrb[0].mxu0 %v2181
      %v2393 = vpop.f32.mrb[0].mxu0
      %v2394 = vadd.f32 0.0, %v2393
      %v2395 = vpop.f32.mrb[0].mxu0
      %2396 = vmatprep.mubr.f32.mxu0 0.0
      %2397 = vmatmul.mubr.f32.gmra.mrb[0].mxu0 %v2184
      %v2398 = vpop.f32.mrb[0].mxu0
      %v2399 = vadd.f32 0.0, %v2398
      %v2400 = vpop.f32.mrb[0].mxu0
      %2401 = vmatprep.mubr.f32.mxu0 0.0
      %2402 = vmatmul.mubr.f32.gmra.mrb[0].mxu0 %v2187
      %v2403 = vpop.f32.mrb[0].mxu0
      %v2404 = vadd.f32 0.0, %v2403
      %v2405 = vpop.f32.mrb[0].mxu0
      %2406 = vmatprep.mubr.f32.mxu0 0.0
      %2407 = vmatmul.mubr.f32.gmra.mrb[0].mxu0 %v2190
      %v2408 = vpop.f32.mrb[0].mxu0
      %v2409 = vadd.f32 0.0, %v2408
      %v2410 = vpop.f32.mrb[0].mxu0
      %2411 = vmatprep.mubr.f32.mxu0 0.0
      %2412 = vmatmul.mubr.f32.gmra.mrb[0].mxu0 %v2193
      %v2413 = vpop.f32.mrb[0].mxu0
      %v2414 = vadd.f32 0.0, %v2413
      %v2415 = vpop.f32.mrb[0].mxu0
      %2416 = vmatprep.mubr.f32.mxu0 0.0
      %2417 = vmatmul.mubr.f32.gmra.mrb[0].mxu0 %v2196
      %v2418 = vpop.f32.mrb[0].mxu0
      %v2419 = vadd.f32 0.0, %v2418
      %v2420 = vpop.f32.mrb[0].mxu0
      %2421 = vmatprep.mubr.f32.mxu0 0.0
      %2422 = vmatmul.mubr.f32.gmra.mrb[0].mxu0 %v2199
      %v2423 = vpop.f32.mrb[0].mxu0
      %v2424 = vadd.f32 0.0, %v2423
      %v2425 = vpop.f32.mrb[0].mxu0
      %2426 = vmatprep.mubr.f32.mxu0 0.0
      %2427 = vmatmul.mubr.f32.gmra.mrb[0].mxu0 %v2202
      %v2428 = vpop.f32.mrb[0].mxu0
      %v2429 = vadd.f32 0.0, %v2428
      %v2430 = vpop.f32.mrb[0].mxu0
      %2431 = vdwg.mxu0
      %v2432 = vadd.f32 %v2040, %v2274
      %v2433 = vadd.f32 %v2041, %v2279
      %v2434 = vadd.f32 %v2042, %v2284
      %v2435 = vadd.f32 %v2043, %v2289
      %v2436 = vadd.f32 %v2044, %v2294
      %v2437 = vadd.f32 %v2045, %v2299
      %v2438 = vadd.f32 %v2046, %v2304
      %v2439 = vadd.f32 %v2047, %v2309
      %v2440 = vadd.f32 %v2048, %v2314
      %v2441 = vadd.f32 %v2049, %v2319
      %v2442 = vadd.f32 %v2050, %v2324
      %v2443 = vadd.f32 %v2051, %v2329
      %v2444 = vadd.f32 %v2052, %v2334
      %v2445 = vadd.f32 %v2053, %v2339
      %v2446 = vadd.f32 %v2054, %v2344
      %v2447 = vadd.f32 %v2055, %v2349
      %v2448 = vadd.f32 %v2056, %v2354
      %v2449 = vadd.f32 %v2057, %v2359
      %v2450 = vadd.f32 %v2058, %v2364
      %v2451 = vadd.f32 %v2059, %v2369
      %v2452 = vadd.f32 %v2060, %v2374
      %v2453 = vadd.f32 %v2061, %v2379
      %v2454 = vadd.f32 %v2062, %v2384
      %v2455 = vadd.f32 %v2063, %v2389
      %v2456 = vadd.f32 %v2064, %v2394
      %v2457 = vadd.f32 %v2065, %v2399
      %v2458 = vadd.f32 %v2066, %v2404
      %v2459 = vadd.f32 %v2067, %v2409
      %v2460 = vadd.f32 %v2068, %v2414
      %v2461 = vadd.f32 %v2069, %v2419
      %v2462 = vadd.f32 %v2070, %v2424
      %v2463 = vadd.f32 %v2071, %v2429
      %v2465 = vsel %vm171, %v2104, 0
      %v2468 = vsel %vm171, %v2105, 0
      %v2471 = vsel %vm419, %v283, 0
      %2473 = vmatprep.subr.mxu0 0.0
      %2474 = vmatpush1.msra.mxu0 %v2471
      %2475 = vmatprep.subr.mxu0 0.0
      %2476 = vmatpush1.msra.mxu0 0.0
      %2477 = vmatprep.subr.mxu0 0.0
      %2478 = vmatpush1.msra.mxu0 0.0
      %2479 = vmatprep.subr.mxu0 0.0
      %2480 = vmatpush1.msra.mxu0 0.0
      %2481 = vmatprep.subr.mxu0 0.0
      %2482 = vmatpush1.msra.mxu0 0.0
      %2483 = vmatprep.subr.mxu0 0.0
      %2484 = vmatpush1.msra.mxu0 0.0
      %2485 = vmatprep.subr.mxu0 0.0
      %2486 = vmatpush1.msra.mxu0 0.0
      %2487 = vmatprep.subr.mxu0 0.0
      %2488 = vmatpush1.msra.mxu0 0.0
      %2489 = vmatprep.subr.mxu0 0.0
      %2490 = vmatpush1.msra.mxu0 0.0
      %2491 = vmatprep.subr.mxu0 0.0
      %2492 = vmatpush1.msra.mxu0 0.0
      %2493 = vmatprep.subr.mxu0 0.0
      %2494 = vmatpush1.msra.mxu0 0.0
      %2495 = vmatprep.subr.mxu0 0.0
      %2496 = vmatpush1.msra.mxu0 0.0
      %2497 = vmatprep.subr.mxu0 0.0
      %2498 = vmatpush1.msra.mxu0 0.0
      %2499 = vmatprep.subr.mxu0 0.0
      %2500 = vmatpush1.msra.mxu0 0.0
      %2501 = vmatprep.subr.mxu0 0.0
      %2502 = vmatpush1.msra.mxu0 0.0
      %2503 = vmatprep.subr.mxu0 0.0
      %2504 = vmatpush1.msra.mxu0 0.0
      %2505 = vmatprep.subr.mxu0 0.0
      %2506 = vmatpush1.msra.mxu0 0.0
      %2507 = vmatprep.subr.mxu0 0.0
      %2508 = vmatpush1.msra.mxu0 0.0
      %2509 = vmatprep.subr.mxu0 0.0
      %2510 = vmatpush1.msra.mxu0 0.0
      %2511 = vmatprep.subr.mxu0 0.0
      %2512 = vmatpush1.msra.mxu0 0.0
      %2513 = vmatprep.subr.mxu0 0.0
      %2514 = vmatpush1.msra.mxu0 0.0
      %2515 = vmatprep.subr.mxu0 0.0
      %2516 = vmatpush1.msra.mxu0 0.0
      %2517 = vmatprep.subr.mxu0 0.0
      %2518 = vmatpush1.msra.mxu0 0.0
      %2519 = vmatprep.subr.mxu0 0.0
      %2520 = vmatpush1.msra.mxu0 0.0
      %2521 = vmatprep.subr.mxu0 0.0
      %2522 = vmatpush1.msra.mxu0 0.0
      %2523 = vmatprep.subr.mxu0 0.0
      %2524 = vmatpush1.msra.mxu0 0.0
      %2525 = vmatprep.subr.mxu0 0.0
      %2526 = vmatpush1.msra.mxu0 0.0
      %2527 = vmatprep.subr.mxu0 0.0
      %2528 = vmatpush1.msra.mxu0 0.0
      %2529 = vmatprep.subr.mxu0 0.0
      %2530 = vmatpush1.msra.mxu0 0.0
      %2531 = vmatprep.subr.mxu0 0.0
      %2532 = vmatpush1.msra.mxu0 0.0
      %2533 = vmatprep.subr.mxu0 0.0
      %2534 = vmatpush1.msra.mxu0 0.0
      %2535 = vmatprep.subr.mxu0 0.0
      %2536 = vmatpush1.msra.mxu0 0.0
      %2537 = vmatprep.mubr.f32.mxu0 0.0
      %2538 = vmatmul.mubr.f32.gmra.mrb[0].mxu0 %v2115
      %v2539 = vpop.f32.mrb[0].mxu0
      %v2540 = vadd.f32 0.0, %v2539
      %v2541 = vpop.f32.mrb[0].mxu0
      %2542 = vmatprep.mubr.f32.mxu0 0.0
      %2543 = vmatmul.mubr.f32.gmra.mrb[0].mxu0 %v2118
      %v2544 = vpop.f32.mrb[0].mxu0
      %v2545 = vadd.f32 0.0, %v2544
      %v2546 = vpop.f32.mrb[0].mxu0
      %2547 = vmatprep.mubr.f32.mxu0 0.0
      %2548 = vmatmul.mubr.f32.gmra.mrb[0].mxu0 %v2121
      %v2549 = vpop.f32.mrb[0].mxu0
      %v2550 = vadd.f32 0.0, %v2549
      %v2551 = vpop.f32.mrb[0].mxu0
      %2552 = vmatprep.mubr.f32.mxu0 0.0
      %2553 = vmatmul.mubr.f32.gmra.mrb[0].mxu0 %v2124
      %v2554 = vpop.f32.mrb[0].mxu0
      %v2555 = vadd.f32 0.0, %v2554
      %v2556 = vpop.f32.mrb[0].mxu0
      %2557 = vmatprep.mubr.f32.mxu0 0.0
      %2558 = vmatmul.mubr.f32.gmra.mrb[0].mxu0 %v2127
      %v2559 = vpop.f32.mrb[0].mxu0
      %v2560 = vadd.f32 0.0, %v2559
      %v2561 = vpop.f32.mrb[0].mxu0
      %2562 = vmatprep.mubr.f32.mxu0 0.0
      %2563 = vmatmul.mubr.f32.gmra.mrb[0].mxu0 %v2130
      %v2564 = vpop.f32.mrb[0].mxu0
      %v2565 = vadd.f32 0.0, %v2564
      %v2566 = vpop.f32.mrb[0].mxu0
      %2567 = vmatprep.mubr.f32.mxu0 0.0
      %2568 = vmatmul.mubr.f32.gmra.mrb[0].mxu0 %v2133
      %v2569 = vpop.f32.mrb[0].mxu0
      %v2570 = vadd.f32 0.0, %v2569
      %v2571 = vpop.f32.mrb[0].mxu0
      %2572 = vmatprep.mubr.f32.mxu0 0.0
      %2573 = vmatmul.mubr.f32.gmra.mrb[0].mxu0 %v2136
      %v2574 = vpop.f32.mrb[0].mxu0
      %v2575 = vadd.f32 0.0, %v2574
      %v2576 = vpop.f32.mrb[0].mxu0
      %2577 = vmatprep.mubr.f32.mxu0 0.0
      %2578 = vmatmul.mubr.f32.gmra.mrb[0].mxu0 %v2139
      %v2579 = vpop.f32.mrb[0].mxu0
      %v2580 = vadd.f32 0.0, %v2579
      %v2581 = vpop.f32.mrb[0].mxu0
      %2582 = vmatprep.mubr.f32.mxu0 0.0
      %2583 = vmatmul.mubr.f32.gmra.mrb[0].mxu0 %v2142
      %v2584 = vpop.f32.mrb[0].mxu0
      %v2585 = vadd.f32 0.0, %v2584
      %v2586 = vpop.f32.mrb[0].mxu0
      %2587 = vmatprep.mubr.f32.mxu0 0.0
      %2588 = vmatmul.mubr.f32.gmra.mrb[0].mxu0 %v2145
      %v2589 = vpop.f32.mrb[0].mxu0
      %v2590 = vadd.f32 0.0, %v2589
      %v2591 = vpop.f32.mrb[0].mxu0
      %2592 = vmatprep.mubr.f32.mxu0 0.0
      %2593 = vmatmul.mubr.f32.gmra.mrb[0].mxu0 %v2148
      %v2594 = vpop.f32.mrb[0].mxu0
      %v2595 = vadd.f32 0.0, %v2594
      %v2596 = vpop.f32.mrb[0].mxu0
      %2597 = vmatprep.mubr.f32.mxu0 0.0
      %2598 = vmatmul.mubr.f32.gmra.mrb[0].mxu0 %v2151
      %v2599 = vpop.f32.mrb[0].mxu0
      %v2600 = vadd.f32 0.0, %v2599
      %v2601 = vpop.f32.mrb[0].mxu0
      %2602 = vmatprep.mubr.f32.mxu0 0.0
      %2603 = vmatmul.mubr.f32.gmra.mrb[0].mxu0 %v2154
      %v2604 = vpop.f32.mrb[0].mxu0
      %v2605 = vadd.f32 0.0, %v2604
      %v2606 = vpop.f32.mrb[0].mxu0
      %2607 = vmatprep.mubr.f32.mxu0 0.0
      %2608 = vmatmul.mubr.f32.gmra.mrb[0].mxu0 %v2157
      %v2609 = vpop.f32.mrb[0].mxu0
      %v2610 = vadd.f32 0.0, %v2609
      %v2611 = vpop.f32.mrb[0].mxu0
      %2612 = vmatprep.mubr.f32.mxu0 0.0
      %2613 = vmatmul.mubr.f32.gmra.mrb[0].mxu0 %v2160
      %v2614 = vpop.f32.mrb[0].mxu0
      %v2615 = vadd.f32 0.0, %v2614
      %v2616 = vpop.f32.mrb[0].mxu0
      %2617 = vmatprep.mubr.f32.mxu0 0.0
      %2618 = vmatmul.mubr.f32.gmra.mrb[0].mxu0 %v2163
      %v2619 = vpop.f32.mrb[0].mxu0
      %v2620 = vadd.f32 0.0, %v2619
      %v2621 = vpop.f32.mrb[0].mxu0
      %2622 = vmatprep.mubr.f32.mxu0 0.0
      %2623 = vmatmul.mubr.f32.gmra.mrb[0].mxu0 %v2166
      %v2624 = vpop.f32.mrb[0].mxu0
      %v2625 = vadd.f32 0.0, %v2624
      %v2626 = vpop.f32.mrb[0].mxu0
      %2627 = vmatprep.mubr.f32.mxu0 0.0
      %2628 = vmatmul.mubr.f32.gmra.mrb[0].mxu0 %v2169
      %v2629 = vpop.f32.mrb[0].mxu0
      %v2630 = vadd.f32 0.0, %v2629
      %v2631 = vpop.f32.mrb[0].mxu0
      %2632 = vmatprep.mubr.f32.mxu0 0.0
      %2633 = vmatmul.mubr.f32.gmra.mrb[0].mxu0 %v2172
      %v2634 = vpop.f32.mrb[0].mxu0
      %v2635 = vadd.f32 0.0, %v2634
      %v2636 = vpop.f32.mrb[0].mxu0
      %2637 = vmatprep.mubr.f32.mxu0 0.0
      %2638 = vmatmul.mubr.f32.gmra.mrb[0].mxu0 %v2175
      %v2639 = vpop.f32.mrb[0].mxu0
      %v2640 = vadd.f32 0.0, %v2639
      %v2641 = vpop.f32.mrb[0].mxu0
      %2642 = vmatprep.mubr.f32.mxu0 0.0
      %2643 = vmatmul.mubr.f32.gmra.mrb[0].mxu0 %v2178
      %v2644 = vpop.f32.mrb[0].mxu0
      %v2645 = vadd.f32 0.0, %v2644
      %v2646 = vpop.f32.mrb[0].mxu0
      %2647 = vmatprep.mubr.f32.mxu0 0.0
      %2648 = vmatmul.mubr.f32.gmra.mrb[0].mxu0 %v2181
      %v2649 = vpop.f32.mrb[0].mxu0
      %v2650 = vadd.f32 0.0, %v2649
      %v2651 = vpop.f32.mrb[0].mxu0
      %2652 = vmatprep.mubr.f32.mxu0 0.0
      %2653 = vmatmul.mubr.f32.gmra.mrb[0].mxu0 %v2184
      %v2654 = vpop.f32.mrb[0].mxu0
      %v2655 = vadd.f32 0.0, %v2654
      %v2656 = vpop.f32.mrb[0].mxu0
      %2657 = vmatprep.mubr.f32.mxu0 0.0
      %2658 = vmatmul.mubr.f32.gmra.mrb[0].mxu0 %v2187
      %v2659 = vpop.f32.mrb[0].mxu0
      %v2660 = vadd.f32 0.0, %v2659
      %v2661 = vpop.f32.mrb[0].mxu0
      %2662 = vmatprep.mubr.f32.mxu0 0.0
      %2663 = vmatmul.mubr.f32.gmra.mrb[0].mxu0 %v2190
      %v2664 = vpop.f32.mrb[0].mxu0
      %v2665 = vadd.f32 0.0, %v2664
      %v2666 = vpop.f32.mrb[0].mxu0
      %2667 = vmatprep.mubr.f32.mxu0 0.0
      %2668 = vmatmul.mubr.f32.gmra.mrb[0].mxu0 %v2193
      %v2669 = vpop.f32.mrb[0].mxu0
      %v2670 = vadd.f32 0.0, %v2669
      %v2671 = vpop.f32.mrb[0].mxu0
      %2672 = vmatprep.mubr.f32.mxu0 0.0
      %2673 = vmatmul.mubr.f32.gmra.mrb[0].mxu0 %v2196
      %v2674 = vpop.f32.mrb[0].mxu0
      %v2675 = vadd.f32 0.0, %v2674
      %v2676 = vpop.f32.mrb[0].mxu0
      %2677 = vmatprep.mubr.f32.mxu0 0.0
      %2678 = vmatmul.mubr.f32.gmra.mrb[0].mxu0 %v2199
      %v2679 = vpop.f32.mrb[0].mxu0
      %v2680 = vadd.f32 0.0, %v2679
      %v2681 = vpop.f32.mrb[0].mxu0
      %2682 = vmatprep.mubr.f32.mxu0 0.0
      %2683 = vmatmul.mubr.f32.gmra.mrb[0].mxu0 %v2202
      %v2684 = vpop.f32.mrb[0].mxu0
      %v2685 = vadd.f32 0.0, %v2684
      %v2686 = vpop.f32.mrb[0].mxu0
      %2687 = vmatprep.mubr.f32.mxu0 0.0
      %2688 = vmatmul.mubr.f32.gmra.mrb[0].mxu0 %v2465
      %v2689 = vpop.f32.mrb[0].mxu0
      %v2690 = vadd.f32 0.0, %v2689
      %v2691 = vpop.f32.mrb[0].mxu0
      %2692 = vmatprep.mubr.f32.mxu0 0.0
      %2693 = vmatmul.mubr.f32.gmra.mrb[0].mxu0 %v2468
      %v2694 = vpop.f32.mrb[0].mxu0
      %v2695 = vadd.f32 0.0, %v2694
      %v2696 = vpop.f32.mrb[0].mxu0
      %2697 = vdwg.mxu0
      %v2698 = vadd.f32 %v2432, %v2540
      %v2699 = vadd.f32 %v2433, %v2545
      %v2700 = vadd.f32 %v2434, %v2550
      %v2701 = vadd.f32 %v2435, %v2555
      %v2702 = vadd.f32 %v2436, %v2560
      %v2703 = vadd.f32 %v2437, %v2565
      %v2704 = vadd.f32 %v2438, %v2570
      %v2705 = vadd.f32 %v2439, %v2575
      %v2706 = vadd.f32 %v2440, %v2580
      %v2707 = vadd.f32 %v2441, %v2585
      %v2708 = vadd.f32 %v2442, %v2590
      %v2709 = vadd.f32 %v2443, %v2595
      %v2710 = vadd.f32 %v2444, %v2600
      %v2711 = vadd.f32 %v2445, %v2605
      %v2712 = vadd.f32 %v2446, %v2610
      %v2713 = vadd.f32 %v2447, %v2615
      %v2714 = vadd.f32 %v2448, %v2620
      %v2715 = vadd.f32 %v2449, %v2625
      %v2716 = vadd.f32 %v2450, %v2630
      %v2717 = vadd.f32 %v2451, %v2635
      %v2718 = vadd.f32 %v2452, %v2640
      %v2719 = vadd.f32 %v2453, %v2645
      %v2720 = vadd.f32 %v2454, %v2650
      %v2721 = vadd.f32 %v2455, %v2655
      %v2722 = vadd.f32 %v2456, %v2660
      %v2723 = vadd.f32 %v2457, %v2665
      %v2724 = vadd.f32 %v2458, %v2670
      %v2725 = vadd.f32 %v2459, %v2675
      %v2726 = vadd.f32 %v2460, %v2680
      %v2727 = vadd.f32 %v2461, %v2685
      %v2728 = vadd.f32 %v2462, %v2690
      %v2729 = vadd.f32 %v2463, %v2695
      %v2731 = vsel %vm171, %v2106, 0
      %v2734 = vsel %vm171, %v2107, 0
      %v2737 = vsel %vm419, %v286, 0
      %2739 = vmatprep.subr.mxu0 0.0
      %2740 = vmatpush1.msra.mxu0 %v2737
      %2741 = vmatprep.subr.mxu0 0.0
      %2742 = vmatpush1.msra.mxu0 0.0
      %2743 = vmatprep.subr.mxu0 0.0
      %2744 = vmatpush1.msra.mxu0 0.0
      %2745 = vmatprep.subr.mxu0 0.0
      %2746 = vmatpush1.msra.mxu0 0.0
      %2747 = vmatprep.subr.mxu0 0.0
      %2748 = vmatpush1.msra.mxu0 0.0
      %2749 = vmatprep.subr.mxu0 0.0
      %2750 = vmatpush1.msra.mxu0 0.0
      %2751 = vmatprep.subr.mxu0 0.0
      %2752 = vmatpush1.msra.mxu0 0.0
      %2753 = vmatprep.subr.mxu0 0.0
      %2754 = vmatpush1.msra.mxu0 0.0
      %2755 = vmatprep.subr.mxu0 0.0
      %2756 = vmatpush1.msra.mxu0 0.0
      %2757 = vmatprep.subr.mxu0 0.0
      %2758 = vmatpush1.msra.mxu0 0.0
      %2759 = vmatprep.subr.mxu0 0.0
      %2760 = vmatpush1.msra.mxu0 0.0
      %2761 = vmatprep.subr.mxu0 0.0
      %2762 = vmatpush1.msra.mxu0 0.0
      %2763 = vmatprep.subr.mxu0 0.0
      %2764 = vmatpush1.msra.mxu0 0.0
      %2765 = vmatprep.subr.mxu0 0.0
      %2766 = vmatpush1.msra.mxu0 0.0
      %2767 = vmatprep.subr.mxu0 0.0
      %2768 = vmatpush1.msra.mxu0 0.0
      %2769 = vmatprep.subr.mxu0 0.0
      %2770 = vmatpush1.msra.mxu0 0.0
      %2771 = vmatprep.subr.mxu0 0.0
      %2772 = vmatpush1.msra.mxu0 0.0
      %2773 = vmatprep.subr.mxu0 0.0
      %2774 = vmatpush1.msra.mxu0 0.0
      %2775 = vmatprep.subr.mxu0 0.0
      %2776 = vmatpush1.msra.mxu0 0.0
      %2777 = vmatprep.subr.mxu0 0.0
      %2778 = vmatpush1.msra.mxu0 0.0
      %2779 = vmatprep.subr.mxu0 0.0
      %2780 = vmatpush1.msra.mxu0 0.0
      %2781 = vmatprep.subr.mxu0 0.0
      %2782 = vmatpush1.msra.mxu0 0.0
      %2783 = vmatprep.subr.mxu0 0.0
      %2784 = vmatpush1.msra.mxu0 0.0
      %2785 = vmatprep.subr.mxu0 0.0
      %2786 = vmatpush1.msra.mxu0 0.0
      %2787 = vmatprep.subr.mxu0 0.0
      %2788 = vmatpush1.msra.mxu0 0.0
      %2789 = vmatprep.subr.mxu0 0.0
      %2790 = vmatpush1.msra.mxu0 0.0
      %2791 = vmatprep.subr.mxu0 0.0
      %2792 = vmatpush1.msra.mxu0 0.0
      %2793 = vmatprep.subr.mxu0 0.0
      %2794 = vmatpush1.msra.mxu0 0.0
      %2795 = vmatprep.subr.mxu0 0.0
      %2796 = vmatpush1.msra.mxu0 0.0
      %2797 = vmatprep.subr.mxu0 0.0
      %2798 = vmatpush1.msra.mxu0 0.0
      %2799 = vmatprep.subr.mxu0 0.0
      %2800 = vmatpush1.msra.mxu0 0.0
      %2801 = vmatprep.subr.mxu0 0.0
      %2802 = vmatpush1.msra.mxu0 0.0
      %2803 = vmatprep.mubr.f32.mxu0 0.0
      %2804 = vmatmul.mubr.f32.gmra.mrb[0].mxu0 %v2121
      %v2805 = vpop.f32.mrb[0].mxu0
      %v2806 = vadd.f32 0.0, %v2805
      %v2807 = vpop.f32.mrb[0].mxu0
      %2808 = vmatprep.mubr.f32.mxu0 0.0
      %2809 = vmatmul.mubr.f32.gmra.mrb[0].mxu0 %v2124
      %v2810 = vpop.f32.mrb[0].mxu0
      %v2811 = vadd.f32 0.0, %v2810
      %v2812 = vpop.f32.mrb[0].mxu0
      %2813 = vmatprep.mubr.f32.mxu0 0.0
      %2814 = vmatmul.mubr.f32.gmra.mrb[0].mxu0 %v2127
      %v2815 = vpop.f32.mrb[0].mxu0
      %v2816 = vadd.f32 0.0, %v2815
      %v2817 = vpop.f32.mrb[0].mxu0
      %2818 = vmatprep.mubr.f32.mxu0 0.0
      %2819 = vmatmul.mubr.f32.gmra.mrb[0].mxu0 %v2130
      %v2820 = vpop.f32.mrb[0].mxu0
      %v2821 = vadd.f32 0.0, %v2820
      %v2822 = vpop.f32.mrb[0].mxu0
      %2823 = vmatprep.mubr.f32.mxu0 0.0
      %2824 = vmatmul.mubr.f32.gmra.mrb[0].mxu0 %v2133
      %v2825 = vpop.f32.mrb[0].mxu0
      %v2826 = vadd.f32 0.0, %v2825
      %v2827 = vpop.f32.mrb[0].mxu0
      %2828 = vmatprep.mubr.f32.mxu0 0.0
      %2829 = vmatmul.mubr.f32.gmra.mrb[0].mxu0 %v2136
      %v2830 = vpop.f32.mrb[0].mxu0
      %v2831 = vadd.f32 0.0, %v2830
      %v2832 = vpop.f32.mrb[0].mxu0
      %2833 = vmatprep.mubr.f32.mxu0 0.0
      %2834 = vmatmul.mubr.f32.gmra.mrb[0].mxu0 %v2139
      %v2835 = vpop.f32.mrb[0].mxu0
      %v2836 = vadd.f32 0.0, %v2835
      %v2837 = vpop.f32.mrb[0].mxu0
      %2838 = vmatprep.mubr.f32.mxu0 0.0
      %2839 = vmatmul.mubr.f32.gmra.mrb[0].mxu0 %v2142
      %v2840 = vpop.f32.mrb[0].mxu0
      %v2841 = vadd.f32 0.0, %v2840
      %v2842 = vpop.f32.mrb[0].mxu0
      %2843 = vmatprep.mubr.f32.mxu0 0.0
      %2844 = vmatmul.mubr.f32.gmra.mrb[0].mxu0 %v2145
      %v2845 = vpop.f32.mrb[0].mxu0
      %v2846 = vadd.f32 0.0, %v2845
      %v2847 = vpop.f32.mrb[0].mxu0
      %2848 = vmatprep.mubr.f32.mxu0 0.0
      %2849 = vmatmul.mubr.f32.gmra.mrb[0].mxu0 %v2148
      %v2850 = vpop.f32.mrb[0].mxu0
      %v2851 = vadd.f32 0.0, %v2850
      %v2852 = vpop.f32.mrb[0].mxu0
      %2853 = vmatprep.mubr.f32.mxu0 0.0
      %2854 = vmatmul.mubr.f32.gmra.mrb[0].mxu0 %v2151
      %v2855 = vpop.f32.mrb[0].mxu0
      %v2856 = vadd.f32 0.0, %v2855
      %v2857 = vpop.f32.mrb[0].mxu0
      %2858 = vmatprep.mubr.f32.mxu0 0.0
      %2859 = vmatmul.mubr.f32.gmra.mrb[0].mxu0 %v2154
      %v2860 = vpop.f32.mrb[0].mxu0
      %v2861 = vadd.f32 0.0, %v2860
      %v2862 = vpop.f32.mrb[0].mxu0
      %2863 = vmatprep.mubr.f32.mxu0 0.0
      %2864 = vmatmul.mubr.f32.gmra.mrb[0].mxu0 %v2157
      %v2865 = vpop.f32.mrb[0].mxu0
      %v2866 = vadd.f32 0.0, %v2865
      %v2867 = vpop.f32.mrb[0].mxu0
      %2868 = vmatprep.mubr.f32.mxu0 0.0
      %2869 = vmatmul.mubr.f32.gmra.mrb[0].mxu0 %v2160
      %v2870 = vpop.f32.mrb[0].mxu0
      %v2871 = vadd.f32 0.0, %v2870
      %v2872 = vpop.f32.mrb[0].mxu0
      %2873 = vmatprep.mubr.f32.mxu0 0.0
      %2874 = vmatmul.mubr.f32.gmra.mrb[0].mxu0 %v2163
      %v2875 = vpop.f32.mrb[0].mxu0
      %v2876 = vadd.f32 0.0, %v2875
      %v2877 = vpop.f32.mrb[0].mxu0
      %2878 = vmatprep.mubr.f32.mxu0 0.0
      %2879 = vmatmul.mubr.f32.gmra.mrb[0].mxu0 %v2166
      %v2880 = vpop.f32.mrb[0].mxu0
      %v2881 = vadd.f32 0.0, %v2880
      %v2882 = vpop.f32.mrb[0].mxu0
      %2883 = vmatprep.mubr.f32.mxu0 0.0
      %2884 = vmatmul.mubr.f32.gmra.mrb[0].mxu0 %v2169
      %v2885 = vpop.f32.mrb[0].mxu0
      %v2886 = vadd.f32 0.0, %v2885
      %v2887 = vpop.f32.mrb[0].mxu0
      %2888 = vmatprep.mubr.f32.mxu0 0.0
      %2889 = vmatmul.mubr.f32.gmra.mrb[0].mxu0 %v2172
      %v2890 = vpop.f32.mrb[0].mxu0
      %v2891 = vadd.f32 0.0, %v2890
      %v2892 = vpop.f32.mrb[0].mxu0
      %2893 = vmatprep.mubr.f32.mxu0 0.0
      %2894 = vmatmul.mubr.f32.gmra.mrb[0].mxu0 %v2175
      %v2895 = vpop.f32.mrb[0].mxu0
      %v2896 = vadd.f32 0.0, %v2895
      %v2897 = vpop.f32.mrb[0].mxu0
      %2898 = vmatprep.mubr.f32.mxu0 0.0
      %2899 = vmatmul.mubr.f32.gmra.mrb[0].mxu0 %v2178
      %v2900 = vpop.f32.mrb[0].mxu0
      %v2901 = vadd.f32 0.0, %v2900
      %v2902 = vpop.f32.mrb[0].mxu0
      %2903 = vmatprep.mubr.f32.mxu0 0.0
      %2904 = vmatmul.mubr.f32.gmra.mrb[0].mxu0 %v2181
      %v2905 = vpop.f32.mrb[0].mxu0
      %v2906 = vadd.f32 0.0, %v2905
      %v2907 = vpop.f32.mrb[0].mxu0
      %2908 = vmatprep.mubr.f32.mxu0 0.0
      %2909 = vmatmul.mubr.f32.gmra.mrb[0].mxu0 %v2184
      %v2910 = vpop.f32.mrb[0].mxu0
      %v2911 = vadd.f32 0.0, %v2910
      %v2912 = vpop.f32.mrb[0].mxu0
      %2913 = vmatprep.mubr.f32.mxu0 0.0
      %2914 = vmatmul.mubr.f32.gmra.mrb[0].mxu0 %v2187
      %v2915 = vpop.f32.mrb[0].mxu0
      %v2916 = vadd.f32 0.0, %v2915
      %v2917 = vpop.f32.mrb[0].mxu0
      %2918 = vmatprep.mubr.f32.mxu0 0.0
      %2919 = vmatmul.mubr.f32.gmra.mrb[0].mxu0 %v2190
      %v2920 = vpop.f32.mrb[0].mxu0
      %v2921 = vadd.f32 0.0, %v2920
      %v2922 = vpop.f32.mrb[0].mxu0
      %2923 = vmatprep.mubr.f32.mxu0 0.0
      %2924 = vmatmul.mubr.f32.gmra.mrb[0].mxu0 %v2193
      %v2925 = vpop.f32.mrb[0].mxu0
      %v2926 = vadd.f32 0.0, %v2925
      %v2927 = vpop.f32.mrb[0].mxu0
      %2928 = vmatprep.mubr.f32.mxu0 0.0
      %2929 = vmatmul.mubr.f32.gmra.mrb[0].mxu0 %v2196
      %v2930 = vpop.f32.mrb[0].mxu0
      %v2931 = vadd.f32 0.0, %v2930
      %v2932 = vpop.f32.mrb[0].mxu0
      %2933 = vmatprep.mubr.f32.mxu0 0.0
      %2934 = vmatmul.mubr.f32.gmra.mrb[0].mxu0 %v2199
      %v2935 = vpop.f32.mrb[0].mxu0
      %v2936 = vadd.f32 0.0, %v2935
      %v2937 = vpop.f32.mrb[0].mxu0
      %2938 = vmatprep.mubr.f32.mxu0 0.0
      %2939 = vmatmul.mubr.f32.gmra.mrb[0].mxu0 %v2202
      %v2940 = vpop.f32.mrb[0].mxu0
      %v2941 = vadd.f32 0.0, %v2940
      %v2942 = vpop.f32.mrb[0].mxu0
      %2943 = vmatprep.mubr.f32.mxu0 0.0
      %2944 = vmatmul.mubr.f32.gmra.mrb[0].mxu0 %v2465
      %v2945 = vpop.f32.mrb[0].mxu0
      %v2946 = vadd.f32 0.0, %v2945
      %v2947 = vpop.f32.mrb[0].mxu0
      %2948 = vmatprep.mubr.f32.mxu0 0.0
      %2949 = vmatmul.mubr.f32.gmra.mrb[0].mxu0 %v2468
      %v2950 = vpop.f32.mrb[0].mxu0
      %v2951 = vadd.f32 0.0, %v2950
      %v2952 = vpop.f32.mrb[0].mxu0
      %2953 = vmatprep.mubr.f32.mxu0 0.0
      %2954 = vmatmul.mubr.f32.gmra.mrb[0].mxu0 %v2731
      %v2955 = vpop.f32.mrb[0].mxu0
      %v2956 = vadd.f32 0.0, %v2955
      %v2957 = vpop.f32.mrb[0].mxu0
      %2958 = vmatprep.mubr.f32.mxu0 0.0
      %2959 = vmatmul.mubr.f32.gmra.mrb[0].mxu0 %v2734
      %v2960 = vpop.f32.mrb[0].mxu0
      %v2961 = vadd.f32 0.0, %v2960
      %v2962 = vpop.f32.mrb[0].mxu0
      %2963 = vdwg.mxu0
      %v2964 = vadd.f32 %v2698, %v2806
      %v2965 = vadd.f32 %v2699, %v2811
      %v2966 = vadd.f32 %v2700, %v2816
      %v2967 = vadd.f32 %v2701, %v2821
      %v2968 = vadd.f32 %v2702, %v2826
      %v2969 = vadd.f32 %v2703, %v2831
      %v2970 = vadd.f32 %v2704, %v2836
      %v2971 = vadd.f32 %v2705, %v2841
      %v2972 = vadd.f32 %v2706, %v2846
      %v2973 = vadd.f32 %v2707, %v2851
      %v2974 = vadd.f32 %v2708, %v2856
      %v2975 = vadd.f32 %v2709, %v2861
      %v2976 = vadd.f32 %v2710, %v2866
      %v2977 = vadd.f32 %v2711, %v2871
      %v2978 = vadd.f32 %v2712, %v2876
      %v2979 = vadd.f32 %v2713, %v2881
      %v2980 = vadd.f32 %v2714, %v2886
      %v2981 = vadd.f32 %v2715, %v2891
      %v2982 = vadd.f32 %v2716, %v2896
      %v2983 = vadd.f32 %v2717, %v2901
      %v2984 = vadd.f32 %v2718, %v2906
      %v2985 = vadd.f32 %v2719, %v2911
      %v2986 = vadd.f32 %v2720, %v2916
      %v2987 = vadd.f32 %v2721, %v2921
      %v2988 = vadd.f32 %v2722, %v2926
      %v2989 = vadd.f32 %v2723, %v2931
      %v2990 = vadd.f32 %v2724, %v2936
      %v2991 = vadd.f32 %v2725, %v2941
      %v2992 = vadd.f32 %v2726, %v2946
      %v2993 = vadd.f32 %v2727, %v2951
      %v2994 = vadd.f32 %v2728, %v2956
      %v2995 = vadd.f32 %v2729, %v2961
      %v2996 = vsel %vm171, %v2964, 0.0
      %v2997 = vsel %vm171, %v2965, 0.0
      %v2998 = vadd.f32 %v2996, %v2997
      %v2999 = vsel %vm171, %v2966, 0.0
      %v3000 = vadd.f32 %v2998, %v2999
      %v3001 = vsel %vm171, %v2967, 0.0
      %v3002 = vadd.f32 %v3000, %v3001
      %v3003 = vsel %vm171, %v2968, 0.0
      %v3004 = vadd.f32 %v3002, %v3003
      %v3005 = vsel %vm171, %v2969, 0.0
      %v3006 = vadd.f32 %v3004, %v3005
      %v3007 = vsel %vm171, %v2970, 0.0
      %v3008 = vadd.f32 %v3006, %v3007
      %v3009 = vsel %vm171, %v2971, 0.0
      %v3010 = vadd.f32 %v3008, %v3009
      %v3011 = vsel %vm171, %v2972, 0.0
      %v3012 = vadd.f32 %v3010, %v3011
      %v3013 = vsel %vm171, %v2973, 0.0
      %v3014 = vadd.f32 %v3012, %v3013
      %v3015 = vsel %vm171, %v2974, 0.0
      %v3016 = vadd.f32 %v3014, %v3015
      %v3017 = vsel %vm171, %v2975, 0.0
      %v3018 = vadd.f32 %v3016, %v3017
      %v3019 = vsel %vm171, %v2976, 0.0
      %v3020 = vadd.f32 %v3018, %v3019
      %v3021 = vsel %vm171, %v2977, 0.0
      %v3022 = vadd.f32 %v3020, %v3021
      %v3023 = vsel %vm171, %v2978, 0.0
      %v3024 = vadd.f32 %v3022, %v3023
      %v3025 = vsel %vm171, %v2979, 0.0
      %v3026 = vadd.f32 %v3024, %v3025
      %v3027 = vsel %vm171, %v2980, 0.0
      %v3028 = vadd.f32 %v3026, %v3027
      %v3029 = vsel %vm171, %v2981, 0.0
      %v3030 = vadd.f32 %v3028, %v3029
      %v3031 = vsel %vm171, %v2982, 0.0
      %v3032 = vadd.f32 %v3030, %v3031
      %v3033 = vsel %vm171, %v2983, 0.0
      %v3034 = vadd.f32 %v3032, %v3033
      %v3035 = vsel %vm171, %v2984, 0.0
      %v3036 = vadd.f32 %v3034, %v3035
      %v3037 = vsel %vm171, %v2985, 0.0
      %v3038 = vadd.f32 %v3036, %v3037
      %v3039 = vsel %vm171, %v2986, 0.0
      %v3040 = vadd.f32 %v3038, %v3039
      %v3041 = vsel %vm171, %v2987, 0.0
      %v3042 = vadd.f32 %v3040, %v3041
      %v3043 = vsel %vm171, %v2988, 0.0
      %v3044 = vadd.f32 %v3042, %v3043
      %v3045 = vsel %vm171, %v2989, 0.0
      %v3046 = vadd.f32 %v3044, %v3045
      %v3047 = vsel %vm171, %v2990, 0.0
      %v3048 = vadd.f32 %v3046, %v3047
      %v3049 = vsel %vm171, %v2991, 0.0
      %v3050 = vadd.f32 %v3048, %v3049
      %v3051 = vsel %vm171, %v2992, 0.0
      %v3052 = vadd.f32 %v3050, %v3051
      %v3053 = vsel %vm171, %v2993, 0.0
      %v3054 = vadd.f32 %v3052, %v3053
      %v3055 = vsel %vm171, %v2994, 0.0
      %v3056 = vadd.f32 %v3054, %v3055
      %v3057 = vsel %vm171, %v2995, 0.0
      %v3058 = vadd.f32 %v3056, %v3057
      %v3059 = vrot.slane %v3058, 4
      %v3060 = vadd.f32 %v3058, %v3059
      %v3061 = vrot.slane %v3060, 2
      %v3062 = vadd.f32 %v3060, %v3061
      %v3063 = vrot.slane %v3062, 1
      %v3064 = vadd.f32 %v3062, %v3063
      %v3065 = vmul.f32 %v2964, %v2964
      %v3066 = vmul.f32 %v2965, %v2965
      %v3067 = vmul.f32 %v2966, %v2966
      %v3068 = vmul.f32 %v2967, %v2967
      %v3069 = vmul.f32 %v2968, %v2968
      %v3070 = vmul.f32 %v2969, %v2969
      %v3071 = vmul.f32 %v2970, %v2970
      %v3072 = vmul.f32 %v2971, %v2971
      %v3073 = vmul.f32 %v2972, %v2972
      %v3074 = vmul.f32 %v2973, %v2973
      %v3075 = vmul.f32 %v2974, %v2974
      %v3076 = vmul.f32 %v2975, %v2975
      %v3077 = vmul.f32 %v2976, %v2976
      %v3078 = vmul.f32 %v2977, %v2977
      %v3079 = vmul.f32 %v2978, %v2978
      %v3080 = vmul.f32 %v2979, %v2979
      %v3081 = vmul.f32 %v2980, %v2980
      %v3082 = vmul.f32 %v2981, %v2981
      %v3083 = vmul.f32 %v2982, %v2982
      %v3084 = vmul.f32 %v2983, %v2983
      %v3085 = vmul.f32 %v2984, %v2984
      %v3086 = vmul.f32 %v2985, %v2985
      %v3087 = vmul.f32 %v2986, %v2986
      %v3088 = vmul.f32 %v2987, %v2987
      %v3089 = vmul.f32 %v2988, %v2988
      %v3090 = vmul.f32 %v2989, %v2989
      %v3091 = vmul.f32 %v2990, %v2990
      %v3092 = vmul.f32 %v2991, %v2991
      %v3093 = vmul.f32 %v2992, %v2992
      %v3094 = vmul.f32 %v2993, %v2993
      %v3095 = vmul.f32 %v2994, %v2994
      %v3096 = vmul.f32 %v2995, %v2995
      %v3097 = vsel %vm171, %v3065, 0.0
      %v3098 = vsel %vm171, %v3066, 0.0
      %v3099 = vadd.f32 %v3097, %v3098
      %v3100 = vsel %vm171, %v3067, 0.0
      %v3101 = vadd.f32 %v3099, %v3100
      %v3102 = vsel %vm171, %v3068, 0.0
      %v3103 = vadd.f32 %v3101, %v3102
      %v3104 = vsel %vm171, %v3069, 0.0
      %v3105 = vadd.f32 %v3103, %v3104
      %v3106 = vsel %vm171, %v3070, 0.0
      %v3107 = vadd.f32 %v3105, %v3106
      %v3108 = vsel %vm171, %v3071, 0.0
      %v3109 = vadd.f32 %v3107, %v3108
      %v3110 = vsel %vm171, %v3072, 0.0
      %v3111 = vadd.f32 %v3109, %v3110
      %v3112 = vsel %vm171, %v3073, 0.0
      %v3113 = vadd.f32 %v3111, %v3112
      %v3114 = vsel %vm171, %v3074, 0.0
      %v3115 = vadd.f32 %v3113, %v3114
      %v3116 = vsel %vm171, %v3075, 0.0
      %v3117 = vadd.f32 %v3115, %v3116
      %v3118 = vsel %vm171, %v3076, 0.0
      %v3119 = vadd.f32 %v3117, %v3118
      %v3120 = vsel %vm171, %v3077, 0.0
      %v3121 = vadd.f32 %v3119, %v3120
      %v3122 = vsel %vm171, %v3078, 0.0
      %v3123 = vadd.f32 %v3121, %v3122
      %v3124 = vsel %vm171, %v3079, 0.0
      %v3125 = vadd.f32 %v3123, %v3124
      %v3126 = vsel %vm171, %v3080, 0.0
      %v3127 = vadd.f32 %v3125, %v3126
      %v3128 = vsel %vm171, %v3081, 0.0
      %v3129 = vadd.f32 %v3127, %v3128
      %v3130 = vsel %vm171, %v3082, 0.0
      %v3131 = vadd.f32 %v3129, %v3130
      %v3132 = vsel %vm171, %v3083, 0.0
      %v3133 = vadd.f32 %v3131, %v3132
      %v3134 = vsel %vm171, %v3084, 0.0
      %v3135 = vadd.f32 %v3133, %v3134
      %v3136 = vsel %vm171, %v3085, 0.0
      %v3137 = vadd.f32 %v3135, %v3136
      %v3138 = vsel %vm171, %v3086, 0.0
      %v3139 = vadd.f32 %v3137, %v3138
      %v3140 = vsel %vm171, %v3087, 0.0
      %v3141 = vadd.f32 %v3139, %v3140
      %v3142 = vsel %vm171, %v3088, 0.0
      %v3143 = vadd.f32 %v3141, %v3142
      %v3144 = vsel %vm171, %v3089, 0.0
      %v3145 = vadd.f32 %v3143, %v3144
      %v3146 = vsel %vm171, %v3090, 0.0
      %v3147 = vadd.f32 %v3145, %v3146
      %v3148 = vsel %vm171, %v3091, 0.0
      %v3149 = vadd.f32 %v3147, %v3148
      %v3150 = vsel %vm171, %v3092, 0.0
      %v3151 = vadd.f32 %v3149, %v3150
      %v3152 = vsel %vm171, %v3093, 0.0
      %v3153 = vadd.f32 %v3151, %v3152
      %v3154 = vsel %vm171, %v3094, 0.0
      %v3155 = vadd.f32 %v3153, %v3154
      %v3156 = vsel %vm171, %v3095, 0.0
      %v3157 = vadd.f32 %v3155, %v3156
      %v3158 = vsel %vm171, %v3096, 0.0
      %v3159 = vadd.f32 %v3157, %v3158
      %v3160 = vrot.slane %v3159, 4
      %v3161 = vadd.f32 %v3159, %v3160
      %v3162 = vrot.slane %v3161, 2
      %v3163 = vadd.f32 %v3161, %v3162
      %v3164 = vrot.slane %v3163, 1
      %v3165 = vadd.f32 %v3163, %v3164
      %v3166 = vmul.f32 %v3064, 0.00390625
      %v3167 = vmul.f32 %v3165, 0.00390625
      %v3168 = vmul.f32 %v3166, %v3166
      %v3169 = vsub.f32 %v3167, %v3168
      %v3170 = vmax.f32 %v3169, 0.0
      %v3171 = vsub.f32 %v2964, %v3166
      %v3172 = vsub.f32 %v2965, %v3166
      %v3173 = vsub.f32 %v2966, %v3166
      %v3174 = vsub.f32 %v2967, %v3166
      %v3175 = vsub.f32 %v2968, %v3166
      %v3176 = vsub.f32 %v2969, %v3166
      %v3177 = vsub.f32 %v2970, %v3166
      %v3178 = vsub.f32 %v2971, %v3166
      %v3179 = vsub.f32 %v2972, %v3166
      %v3180 = vsub.f32 %v2973, %v3166
      %v3181 = vsub.f32 %v2974, %v3166
      %v3182 = vsub.f32 %v2975, %v3166
      %v3183 = vsub.f32 %v2976, %v3166
      %v3184 = vsub.f32 %v2977, %v3166
      %v3185 = vsub.f32 %v2978, %v3166
      %v3186 = vsub.f32 %v2979, %v3166
      %v3187 = vsub.f32 %v2980, %v3166
      %v3188 = vsub.f32 %v2981, %v3166
      %v3189 = vsub.f32 %v2982, %v3166
      %v3190 = vsub.f32 %v2983, %v3166
      %v3191 = vsub.f32 %v2984, %v3166
      %v3192 = vsub.f32 %v2985, %v3166
      %v3193 = vsub.f32 %v2986, %v3166
      %v3194 = vsub.f32 %v2987, %v3166
      %v3195 = vsub.f32 %v2988, %v3166
      %v3196 = vsub.f32 %v2989, %v3166
      %v3197 = vsub.f32 %v2990, %v3166
      %v3198 = vsub.f32 %v2991, %v3166
      %v3199 = vsub.f32 %v2992, %v3166
      %v3200 = vsub.f32 %v2993, %v3166
      %v3201 = vsub.f32 %v2994, %v3166
      %v3202 = vsub.f32 %v2995, %v3166
      %v3203 = vadd.f32 %v3170, 1e-05
      %v3204 = vrsqrt.pop %v3203
      %v3205 = vmul.f32 %v3171, %v3204
      %v3206 = vmul.f32 %v3172, %v3204
      %v3207 = vmul.f32 %v3173, %v3204
      %v3208 = vmul.f32 %v3174, %v3204
      %v3209 = vmul.f32 %v3175, %v3204
      %v3210 = vmul.f32 %v3176, %v3204
      %v3211 = vmul.f32 %v3177, %v3204
      %v3212 = vmul.f32 %v3178, %v3204
      %v3213 = vmul.f32 %v3179, %v3204
      %v3214 = vmul.f32 %v3180, %v3204
      %v3215 = vmul.f32 %v3181, %v3204
      %v3216 = vmul.f32 %v3182, %v3204
      %v3217 = vmul.f32 %v3183, %v3204
      %v3218 = vmul.f32 %v3184, %v3204
      %v3219 = vmul.f32 %v3185, %v3204
      %v3220 = vmul.f32 %v3186, %v3204
      %v3221 = vmul.f32 %v3187, %v3204
      %v3222 = vmul.f32 %v3188, %v3204
      %v3223 = vmul.f32 %v3189, %v3204
      %v3224 = vmul.f32 %v3190, %v3204
      %v3225 = vmul.f32 %v3191, %v3204
      %v3226 = vmul.f32 %v3192, %v3204
      %v3227 = vmul.f32 %v3193, %v3204
      %v3228 = vmul.f32 %v3194, %v3204
      %v3229 = vmul.f32 %v3195, %v3204
      %v3230 = vmul.f32 %v3196, %v3204
      %v3231 = vmul.f32 %v3197, %v3204
      %v3232 = vmul.f32 %v3198, %v3204
      %v3233 = vmul.f32 %v3199, %v3204
      %v3234 = vmul.f32 %v3200, %v3204
      %v3235 = vmul.f32 %v3201, %v3204
      %v3236 = vmul.f32 %v3202, %v3204
      %v3237 = vmax.f32 %v3205, 0.0
      %v3238 = vmax.f32 %v3206, 0.0
      %v3239 = vmax.f32 %v3207, 0.0
      %v3240 = vmax.f32 %v3208, 0.0
      %v3241 = vmax.f32 %v3209, 0.0
      %v3242 = vmax.f32 %v3210, 0.0
      %v3243 = vmax.f32 %v3211, 0.0
      %v3244 = vmax.f32 %v3212, 0.0
      %v3245 = vmax.f32 %v3213, 0.0
      %v3246 = vmax.f32 %v3214, 0.0
      %v3247 = vmax.f32 %v3215, 0.0
      %v3248 = vmax.f32 %v3216, 0.0
      %v3249 = vmax.f32 %v3217, 0.0
      %v3250 = vmax.f32 %v3218, 0.0
      %v3251 = vmax.f32 %v3219, 0.0
      %v3252 = vmax.f32 %v3220, 0.0
      %v3253 = vmax.f32 %v3221, 0.0
      %v3254 = vmax.f32 %v3222, 0.0
      %v3255 = vmax.f32 %v3223, 0.0
      %v3256 = vmax.f32 %v3224, 0.0
      %v3257 = vmax.f32 %v3225, 0.0
      %v3258 = vmax.f32 %v3226, 0.0
      %v3259 = vmax.f32 %v3227, 0.0
      %v3260 = vmax.f32 %v3228, 0.0
      %v3261 = vmax.f32 %v3229, 0.0
      %v3262 = vmax.f32 %v3230, 0.0
      %v3263 = vmax.f32 %v3231, 0.0
      %v3264 = vmax.f32 %v3232, 0.0
      %v3265 = vmax.f32 %v3233, 0.0
      %v3266 = vmax.f32 %v3234, 0.0
      %v3267 = vmax.f32 %v3235, 0.0
      %v3268 = vmax.f32 %v3236, 0.0
      %3269 = vst.msk [vmem:[%s180 + $0x8] sm:$0xff] %vm171, %v3237
      %3270 = vst.msk [vmem:[%s180 + $0x10] sm:$0xff] %vm171, %v3238
      %3271 = vst.msk [vmem:[%s180 + $0x28] sm:$0xff] %vm171, %v3239
      %3272 = vst.msk [vmem:[%s180 + $0x30] sm:$0xff] %vm171, %v3240
      %3273 = vst.msk [vmem:[%s180 + $0x48] sm:$0xff] %vm171, %v3241
      %3274 = vst.msk [vmem:[%s180 + $0x50] sm:$0xff] %vm171, %v3242
      %3275 = vst.msk [vmem:[%s180 + $0x68] sm:$0xff] %vm171, %v3243
      %3276 = vst.msk [vmem:[%s180 + $0x70] sm:$0xff] %vm171, %v3244
      %3277 = vst.msk [vmem:[%s180 + $0x88] sm:$0xff] %vm171, %v3245
      %3278 = vst.msk [vmem:[%s180 + $0x90] sm:$0xff] %vm171, %v3246
      %3279 = vst.msk [vmem:[%s180 + $0xa8] sm:$0xff] %vm171, %v3247
      %3280 = vst.msk [vmem:[%s180 + $0xb0] sm:$0xff] %vm171, %v3248
      %3281 = vst.msk [vmem:[%s180 + $0xc8] sm:$0xff] %vm171, %v3249
      %3282 = vst.msk [vmem:[%s180 + $0xd0] sm:$0xff] %vm171, %v3250
      %3283 = vst.msk [vmem:[%s180 + $0xe8] sm:$0xff] %vm171, %v3251
      %3284 = vst.msk [vmem:[%s180 + $0xf0] sm:$0xff] %vm171, %v3252
      %3285 = vst.msk [vmem:[%s180 + $0x108] sm:$0xff] %vm171, %v3253
      %3286 = vst.msk [vmem:[%s180 + $0x110] sm:$0xff] %vm171, %v3254
      %3287 = vst.msk [vmem:[%s180 + $0x128] sm:$0xff] %vm171, %v3255
      %3288 = vst.msk [vmem:[%s180 + $0x130] sm:$0xff] %vm171, %v3256
      %3289 = vst.msk [vmem:[%s180 + $0x148] sm:$0xff] %vm171, %v3257
      %3290 = vst.msk [vmem:[%s180 + $0x150] sm:$0xff] %vm171, %v3258
      %3291 = vst.msk [vmem:[%s180 + $0x168] sm:$0xff] %vm171, %v3259
      %3292 = vst.msk [vmem:[%s180 + $0x170] sm:$0xff] %vm171, %v3260
      %3293 = vst.msk [vmem:[%s180 + $0x188] sm:$0xff] %vm171, %v3261
      %3294 = vst.msk [vmem:[%s180 + $0x190] sm:$0xff] %vm171, %v3262
      %3295 = vst.msk [vmem:[%s180 + $0x1a8] sm:$0xff] %vm171, %v3263
      %3296 = vst.msk [vmem:[%s180 + $0x1b0] sm:$0xff] %vm171, %v3264
      %3297 = vst.msk [vmem:[%s180 + $0x1c8] sm:$0xff] %vm171, %v3265
      %3298 = vst.msk [vmem:[%s180 + $0x1d0] sm:$0xff] %vm171, %v3266
      %3299 = vst.msk [vmem:[%s180 + $0x1e8] sm:$0xff] %vm171, %v3267
      %3300 = vst.msk [vmem:[%s180 + $0x1f0] sm:$0xff] %vm171, %v3268
      %v3301 = vld [vmem:[%s2] sm:$0xf]
      %v3302 = vld [vmem:[%s2 + $0x4] sm:$0xf]
      %v3303 = vld [vmem:[%s2 + $0x8] sm:$0xf]
      %v3304 = vld [vmem:[%s2 + $0xc] sm:$0xf]
      %v3305 = vld [vmem:[%s2 + $0x10] sm:$0xf]
      %v3306 = vld [vmem:[%s2 + $0x14] sm:$0xf]
      %v3307 = vld [vmem:[%s2 + $0x18] sm:$0xf]
      %v3308 = vld [vmem:[%s2 + $0x1c] sm:$0xf]
      %v3309 = vld [vmem:[%s2 + $0x20] sm:$0xf]
      %v3310 = vld [vmem:[#allocation2 + $0x7] sm:$0xff]
      %v3311 = vld [vmem:[#allocation2 + $0xf] sm:$0xff]
      %v3312 = vld [vmem:[#allocation2 + $0x27] sm:$0xff]
      %v3313 = vld [vmem:[#allocation2 + $0x2f] sm:$0xff]
      %v3314 = vld [vmem:[#allocation2 + $0x47] sm:$0xff]
      %v3315 = vld [vmem:[#allocation2 + $0x4f] sm:$0xff]
      %v3316 = vld [vmem:[#allocation2 + $0x67] sm:$0xff]
      %v3317 = vld [vmem:[#allocation2 + $0x6f] sm:$0xff]
      %v3318 = vld [vmem:[#allocation2 + $0x87] sm:$0xff]
      %v3319 = vld [vmem:[#allocation2 + $0x8f] sm:$0xff]
      %v3320 = vld [vmem:[#allocation2 + $0xa7] sm:$0xff]
      %v3321 = vld [vmem:[#allocation2 + $0xaf] sm:$0xff]
      %v3322 = vld [vmem:[#allocation2 + $0xc7] sm:$0xff]
      %v3323 = vld [vmem:[#allocation2 + $0xcf] sm:$0xff]
      %v3324 = vld [vmem:[#allocation2 + $0xe7] sm:$0xff]
      %v3325 = vld [vmem:[#allocation2 + $0xef] sm:$0xff]
      %v3326 = vld [vmem:[#allocation2 + $0x107] sm:$0xff]
      %v3327 = vld [vmem:[#allocation2 + $0x10f] sm:$0xff]
      %v3328 = vld [vmem:[#allocation2 + $0x127] sm:$0xff]
      %v3329 = vld [vmem:[#allocation2 + $0x12f] sm:$0xff]
      %v3330 = vld [vmem:[#allocation2 + $0x147] sm:$0xff]
      %v3331 = vld [vmem:[#allocation2 + $0x14f] sm:$0xff]
      %v3332 = vld [vmem:[#allocation2 + $0x167] sm:$0xff]
      %v3333 = vld [vmem:[#allocation2 + $0x16f] sm:$0xff]
      %v3334 = vld [vmem:[#allocation2 + $0x187] sm:$0xff]
      %v3335 = vld [vmem:[#allocation2 + $0x18f] sm:$0xff]
      %v3336 = vld [vmem:[#allocation2 + $0x1a7] sm:$0xff]
      %v3337 = vld [vmem:[#allocation2 + $0x1af] sm:$0xff]
      %v3338 = vld [vmem:[#allocation2 + $0x1c7] sm:$0xff]
      %v3339 = vld [vmem:[#allocation2 + $0x1cf] sm:$0xff]
      %v3340 = vld [vmem:[#allocation2 + $0x1e7] sm:$0xff]
      %v3341 = vld [vmem:[#allocation2 + $0x1ef] sm:$0xff]
      %v3342 = vld [vmem:[#allocation2 + $0x207] sm:$0xff]
      %v3343 = vld [vmem:[#allocation2 + $0x20f] sm:$0xff]
      %v3344 = vld [vmem:[#allocation2 + $0x227] sm:$0xff]
      %v3345 = vld [vmem:[#allocation2 + $0x22f] sm:$0xff]
      %v3347 = vsel %vm171, %v3312, 0
      %v3350 = vsel %vm171, %v3313, 0
      %v3353 = vsel %vm171, %v3314, 0
      %v3356 = vsel %vm171, %v3315, 0
      %v3359 = vsel %vm171, %v3316, 0
      %v3362 = vsel %vm171, %v3317, 0
      %v3365 = vsel %vm171, %v3318, 0
      %v3368 = vsel %vm171, %v3319, 0
      %v3371 = vsel %vm171, %v3320, 0
      %v3374 = vsel %vm171, %v3321, 0
      %v3377 = vsel %vm171, %v3322, 0
      %v3380 = vsel %vm171, %v3323, 0
      %v3383 = vsel %vm171, %v3324, 0
      %v3386 = vsel %vm171, %v3325, 0
      %v3389 = vsel %vm171, %v3326, 0
      %v3392 = vsel %vm171, %v3327, 0
      %v3395 = vsel %vm171, %v3328, 0
      %v3398 = vsel %vm171, %v3329, 0
      %v3401 = vsel %vm171, %v3330, 0
      %v3404 = vsel %vm171, %v3331, 0
      %v3407 = vsel %vm171, %v3332, 0
      %v3410 = vsel %vm171, %v3333, 0
      %v3413 = vsel %vm171, %v3334, 0
      %v3416 = vsel %vm171, %v3335, 0
      %v3419 = vsel %vm171, %v3336, 0
      %v3422 = vsel %vm171, %v3337, 0
      %v3425 = vsel %vm171, %v3338, 0
      %v3428 = vsel %vm171, %v3339, 0
      %v3431 = vsel %vm171, %v3340, 0
      %v3434 = vsel %vm171, %v3341, 0
      %v3437 = vsel %vm171, %v3342, 0
      %v3440 = vsel %vm171, %v3343, 0
      %v3443 = vsel %vm419, %v3304, 0
      %3445 = vmatprep.subr.mxu0 0.0
      %3446 = vmatpush1.msra.mxu0 %v3443
      %3447 = vmatprep.subr.mxu0 0.0
      %3448 = vmatpush1.msra.mxu0 0.0
      %3449 = vmatprep.subr.mxu0 0.0
      %3450 = vmatpush1.msra.mxu0 0.0
      %3451 = vmatprep.subr.mxu0 0.0
      %3452 = vmatpush1.msra.mxu0 0.0
      %3453 = vmatprep.subr.mxu0 0.0
      %3454 = vmatpush1.msra.mxu0 0.0
      %3455 = vmatprep.subr.mxu0 0.0
      %3456 = vmatpush1.msra.mxu0 0.0
      %3457 = vmatprep.subr.mxu0 0.0
      %3458 = vmatpush1.msra.mxu0 0.0
      %3459 = vmatprep.subr.mxu0 0.0
      %3460 = vmatpush1.msra.mxu0 0.0
      %3461 = vmatprep.subr.mxu0 0.0
      %3462 = vmatpush1.msra.mxu0 0.0
      %3463 = vmatprep.subr.mxu0 0.0
      %3464 = vmatpush1.msra.mxu0 0.0
      %3465 = vmatprep.subr.mxu0 0.0
      %3466 = vmatpush1.msra.mxu0 0.0
      %3467 = vmatprep.subr.mxu0 0.0
      %3468 = vmatpush1.msra.mxu0 0.0
      %3469 = vmatprep.subr.mxu0 0.0
      %3470 = vmatpush1.msra.mxu0 0.0
      %3471 = vmatprep.subr.mxu0 0.0
      %3472 = vmatpush1.msra.mxu0 0.0
      %3473 = vmatprep.subr.mxu0 0.0
      %3474 = vmatpush1.msra.mxu0 0.0
      %3475 = vmatprep.subr.mxu0 0.0
      %3476 = vmatpush1.msra.mxu0 0.0
      %3477 = vmatprep.subr.mxu0 0.0
      %3478 = vmatpush1.msra.mxu0 0.0
      %3479 = vmatprep.subr.mxu0 0.0
      %3480 = vmatpush1.msra.mxu0 0.0
      %3481 = vmatprep.subr.mxu0 0.0
      %3482 = vmatpush1.msra.mxu0 0.0
      %3483 = vmatprep.subr.mxu0 0.0
      %3484 = vmatpush1.msra.mxu0 0.0
      %3485 = vmatprep.subr.mxu0 0.0
      %3486 = vmatpush1.msra.mxu0 0.0
      %3487 = vmatprep.subr.mxu0 0.0
      %3488 = vmatpush1.msra.mxu0 0.0
      %3489 = vmatprep.subr.mxu0 0.0
      %3490 = vmatpush1.msra.mxu0 0.0
      %3491 = vmatprep.subr.mxu0 0.0
      %3492 = vmatpush1.msra.mxu0 0.0
      %3493 = vmatprep.subr.mxu0 0.0
      %3494 = vmatpush1.msra.mxu0 0.0
      %3495 = vmatprep.subr.mxu0 0.0
      %3496 = vmatpush1.msra.mxu0 0.0
      %3497 = vmatprep.subr.mxu0 0.0
      %3498 = vmatpush1.msra.mxu0 0.0
      %3499 = vmatprep.subr.mxu0 0.0
      %3500 = vmatpush1.msra.mxu0 0.0
      %3501 = vmatprep.subr.mxu0 0.0
      %3502 = vmatpush1.msra.mxu0 0.0
      %3503 = vmatprep.subr.mxu0 0.0
      %3504 = vmatpush1.msra.mxu0 0.0
      %3505 = vmatprep.subr.mxu0 0.0
      %3506 = vmatpush1.msra.mxu0 0.0
      %3507 = vmatprep.subr.mxu0 0.0
      %3508 = vmatpush1.msra.mxu0 0.0
      %3509 = vmatprep.mubr.f32.mxu0 0.0
      %3510 = vmatmul.mubr.f32.gmra.mrb[0].mxu0 %v3347
      %v3511 = vpop.f32.mrb[0].mxu0
      %v3512 = vadd.f32 0.0, %v3511
      %v3513 = vpop.f32.mrb[0].mxu0
      %3514 = vmatprep.mubr.f32.mxu0 0.0
      %3515 = vmatmul.mubr.f32.gmra.mrb[0].mxu0 %v3350
      %v3516 = vpop.f32.mrb[0].mxu0
      %v3517 = vadd.f32 0.0, %v3516
      %v3518 = vpop.f32.mrb[0].mxu0
      %3519 = vmatprep.mubr.f32.mxu0 0.0
      %3520 = vmatmul.mubr.f32.gmra.mrb[0].mxu0 %v3353
      %v3521 = vpop.f32.mrb[0].mxu0
      %v3522 = vadd.f32 0.0, %v3521
      %v3523 = vpop.f32.mrb[0].mxu0
      %3524 = vmatprep.mubr.f32.mxu0 0.0
      %3525 = vmatmul.mubr.f32.gmra.mrb[0].mxu0 %v3356
      %v3526 = vpop.f32.mrb[0].mxu0
      %v3527 = vadd.f32 0.0, %v3526
      %v3528 = vpop.f32.mrb[0].mxu0
      %3529 = vmatprep.mubr.f32.mxu0 0.0
      %3530 = vmatmul.mubr.f32.gmra.mrb[0].mxu0 %v3359
      %v3531 = vpop.f32.mrb[0].mxu0
      %v3532 = vadd.f32 0.0, %v3531
      %v3533 = vpop.f32.mrb[0].mxu0
      %3534 = vmatprep.mubr.f32.mxu0 0.0
      %3535 = vmatmul.mubr.f32.gmra.mrb[0].mxu0 %v3362
      %v3536 = vpop.f32.mrb[0].mxu0
      %v3537 = vadd.f32 0.0, %v3536
      %v3538 = vpop.f32.mrb[0].mxu0
      %3539 = vmatprep.mubr.f32.mxu0 0.0
      %3540 = vmatmul.mubr.f32.gmra.mrb[0].mxu0 %v3365
      %v3541 = vpop.f32.mrb[0].mxu0
      %v3542 = vadd.f32 0.0, %v3541
      %v3543 = vpop.f32.mrb[0].mxu0
      %3544 = vmatprep.mubr.f32.mxu0 0.0
      %3545 = vmatmul.mubr.f32.gmra.mrb[0].mxu0 %v3368
      %v3546 = vpop.f32.mrb[0].mxu0
      %v3547 = vadd.f32 0.0, %v3546
      %v3548 = vpop.f32.mrb[0].mxu0
      %3549 = vmatprep.mubr.f32.mxu0 0.0
      %3550 = vmatmul.mubr.f32.gmra.mrb[0].mxu0 %v3371
      %v3551 = vpop.f32.mrb[0].mxu0
      %v3552 = vadd.f32 0.0, %v3551
      %v3553 = vpop.f32.mrb[0].mxu0
      %3554 = vmatprep.mubr.f32.mxu0 0.0
      %3555 = vmatmul.mubr.f32.gmra.mrb[0].mxu0 %v3374
      %v3556 = vpop.f32.mrb[0].mxu0
      %v3557 = vadd.f32 0.0, %v3556
      %v3558 = vpop.f32.mrb[0].mxu0
      %3559 = vmatprep.mubr.f32.mxu0 0.0
      %3560 = vmatmul.mubr.f32.gmra.mrb[0].mxu0 %v3377
      %v3561 = vpop.f32.mrb[0].mxu0
      %v3562 = vadd.f32 0.0, %v3561
      %v3563 = vpop.f32.mrb[0].mxu0
      %3564 = vmatprep.mubr.f32.mxu0 0.0
      %3565 = vmatmul.mubr.f32.gmra.mrb[0].mxu0 %v3380
      %v3566 = vpop.f32.mrb[0].mxu0
      %v3567 = vadd.f32 0.0, %v3566
      %v3568 = vpop.f32.mrb[0].mxu0
      %3569 = vmatprep.mubr.f32.mxu0 0.0
      %3570 = vmatmul.mubr.f32.gmra.mrb[0].mxu0 %v3383
      %v3571 = vpop.f32.mrb[0].mxu0
      %v3572 = vadd.f32 0.0, %v3571
      %v3573 = vpop.f32.mrb[0].mxu0
      %3574 = vmatprep.mubr.f32.mxu0 0.0
      %3575 = vmatmul.mubr.f32.gmra.mrb[0].mxu0 %v3386
      %v3576 = vpop.f32.mrb[0].mxu0
      %v3577 = vadd.f32 0.0, %v3576
      %v3578 = vpop.f32.mrb[0].mxu0
      %3579 = vmatprep.mubr.f32.mxu0 0.0
      %3580 = vmatmul.mubr.f32.gmra.mrb[0].mxu0 %v3389
      %v3581 = vpop.f32.mrb[0].mxu0
      %v3582 = vadd.f32 0.0, %v3581
      %v3583 = vpop.f32.mrb[0].mxu0
      %3584 = vmatprep.mubr.f32.mxu0 0.0
      %3585 = vmatmul.mubr.f32.gmra.mrb[0].mxu0 %v3392
      %v3586 = vpop.f32.mrb[0].mxu0
      %v3587 = vadd.f32 0.0, %v3586
      %v3588 = vpop.f32.mrb[0].mxu0
      %3589 = vmatprep.mubr.f32.mxu0 0.0
      %3590 = vmatmul.mubr.f32.gmra.mrb[0].mxu0 %v3395
      %v3591 = vpop.f32.mrb[0].mxu0
      %v3592 = vadd.f32 0.0, %v3591
      %v3593 = vpop.f32.mrb[0].mxu0
      %3594 = vmatprep.mubr.f32.mxu0 0.0
      %3595 = vmatmul.mubr.f32.gmra.mrb[0].mxu0 %v3398
      %v3596 = vpop.f32.mrb[0].mxu0
      %v3597 = vadd.f32 0.0, %v3596
      %v3598 = vpop.f32.mrb[0].mxu0
      %3599 = vmatprep.mubr.f32.mxu0 0.0
      %3600 = vmatmul.mubr.f32.gmra.mrb[0].mxu0 %v3401
      %v3601 = vpop.f32.mrb[0].mxu0
      %v3602 = vadd.f32 0.0, %v3601
      %v3603 = vpop.f32.mrb[0].mxu0
      %3604 = vmatprep.mubr.f32.mxu0 0.0
      %3605 = vmatmul.mubr.f32.gmra.mrb[0].mxu0 %v3404
      %v3606 = vpop.f32.mrb[0].mxu0
      %v3607 = vadd.f32 0.0, %v3606
      %v3608 = vpop.f32.mrb[0].mxu0
      %3609 = vmatprep.mubr.f32.mxu0 0.0
      %3610 = vmatmul.mubr.f32.gmra.mrb[0].mxu0 %v3407
      %v3611 = vpop.f32.mrb[0].mxu0
      %v3612 = vadd.f32 0.0, %v3611
      %v3613 = vpop.f32.mrb[0].mxu0
      %3614 = vmatprep.mubr.f32.mxu0 0.0
      %3615 = vmatmul.mubr.f32.gmra.mrb[0].mxu0 %v3410
      %v3616 = vpop.f32.mrb[0].mxu0
      %v3617 = vadd.f32 0.0, %v3616
      %v3618 = vpop.f32.mrb[0].mxu0
      %3619 = vmatprep.mubr.f32.mxu0 0.0
      %3620 = vmatmul.mubr.f32.gmra.mrb[0].mxu0 %v3413
      %v3621 = vpop.f32.mrb[0].mxu0
      %v3622 = vadd.f32 0.0, %v3621
      %v3623 = vpop.f32.mrb[0].mxu0
      %3624 = vmatprep.mubr.f32.mxu0 0.0
      %3625 = vmatmul.mubr.f32.gmra.mrb[0].mxu0 %v3416
      %v3626 = vpop.f32.mrb[0].mxu0
      %v3627 = vadd.f32 0.0, %v3626
      %v3628 = vpop.f32.mrb[0].mxu0
      %3629 = vmatprep.mubr.f32.mxu0 0.0
      %3630 = vmatmul.mubr.f32.gmra.mrb[0].mxu0 %v3419
      %v3631 = vpop.f32.mrb[0].mxu0
      %v3632 = vadd.f32 0.0, %v3631
      %v3633 = vpop.f32.mrb[0].mxu0
      %3634 = vmatprep.mubr.f32.mxu0 0.0
      %3635 = vmatmul.mubr.f32.gmra.mrb[0].mxu0 %v3422
      %v3636 = vpop.f32.mrb[0].mxu0
      %v3637 = vadd.f32 0.0, %v3636
      %v3638 = vpop.f32.mrb[0].mxu0
      %3639 = vmatprep.mubr.f32.mxu0 0.0
      %3640 = vmatmul.mubr.f32.gmra.mrb[0].mxu0 %v3425
      %v3641 = vpop.f32.mrb[0].mxu0
      %v3642 = vadd.f32 0.0, %v3641
      %v3643 = vpop.f32.mrb[0].mxu0
      %3644 = vmatprep.mubr.f32.mxu0 0.0
      %3645 = vmatmul.mubr.f32.gmra.mrb[0].mxu0 %v3428
      %v3646 = vpop.f32.mrb[0].mxu0
      %v3647 = vadd.f32 0.0, %v3646
      %v3648 = vpop.f32.mrb[0].mxu0
      %3649 = vmatprep.mubr.f32.mxu0 0.0
      %3650 = vmatmul.mubr.f32.gmra.mrb[0].mxu0 %v3431
      %v3651 = vpop.f32.mrb[0].mxu0
      %v3652 = vadd.f32 0.0, %v3651
      %v3653 = vpop.f32.mrb[0].mxu0
      %3654 = vmatprep.mubr.f32.mxu0 0.0
      %3655 = vmatmul.mubr.f32.gmra.mrb[0].mxu0 %v3434
      %v3656 = vpop.f32.mrb[0].mxu0
      %v3657 = vadd.f32 0.0, %v3656
      %v3658 = vpop.f32.mrb[0].mxu0
      %3659 = vmatprep.mubr.f32.mxu0 0.0
      %3660 = vmatmul.mubr.f32.gmra.mrb[0].mxu0 %v3437
      %v3661 = vpop.f32.mrb[0].mxu0
      %v3662 = vadd.f32 0.0, %v3661
      %v3663 = vpop.f32.mrb[0].mxu0
      %3664 = vmatprep.mubr.f32.mxu0 0.0
      %3665 = vmatmul.mubr.f32.gmra.mrb[0].mxu0 %v3440
      %v3666 = vpop.f32.mrb[0].mxu0
      %v3667 = vadd.f32 0.0, %v3666
      %v3668 = vpop.f32.mrb[0].mxu0
      %3669 = vdwg.mxu0
      %v3671 = vsel %vm171, %v3310, 0
      %v3674 = vsel %vm171, %v3311, 0
      %v3677 = vsel %vm419, %v3301, 0
      %3679 = vmatprep.subr.mxu0 0.0
      %3680 = vmatpush1.msra.mxu0 %v3677
      %3681 = vmatprep.subr.mxu0 0.0
      %3682 = vmatpush1.msra.mxu0 0.0
      %3683 = vmatprep.subr.mxu0 0.0
      %3684 = vmatpush1.msra.mxu0 0.0
      %3685 = vmatprep.subr.mxu0 0.0
      %3686 = vmatpush1.msra.mxu0 0.0
      %3687 = vmatprep.subr.mxu0 0.0
      %3688 = vmatpush1.msra.mxu0 0.0
      %3689 = vmatprep.subr.mxu0 0.0
      %3690 = vmatpush1.msra.mxu0 0.0
      %3691 = vmatprep.subr.mxu0 0.0
      %3692 = vmatpush1.msra.mxu0 0.0
      %3693 = vmatprep.subr.mxu0 0.0
      %3694 = vmatpush1.msra.mxu0 0.0
      %3695 = vmatprep.subr.mxu0 0.0
      %3696 = vmatpush1.msra.mxu0 0.0
      %3697 = vmatprep.subr.mxu0 0.0
      %3698 = vmatpush1.msra.mxu0 0.0
      %3699 = vmatprep.subr.mxu0 0.0
      %3700 = vmatpush1.msra.mxu0 0.0
      %3701 = vmatprep.subr.mxu0 0.0
      %3702 = vmatpush1.msra.mxu0 0.0
      %3703 = vmatprep.subr.mxu0 0.0
      %3704 = vmatpush1.msra.mxu0 0.0
      %3705 = vmatprep.subr.mxu0 0.0
      %3706 = vmatpush1.msra.mxu0 0.0
      %3707 = vmatprep.subr.mxu0 0.0
      %3708 = vmatpush1.msra.mxu0 0.0
      %3709 = vmatprep.subr.mxu0 0.0
      %3710 = vmatpush1.msra.mxu0 0.0
      %3711 = vmatprep.subr.mxu0 0.0
      %3712 = vmatpush1.msra.mxu0 0.0
      %3713 = vmatprep.subr.mxu0 0.0
      %3714 = vmatpush1.msra.mxu0 0.0
      %3715 = vmatprep.subr.mxu0 0.0
      %3716 = vmatpush1.msra.mxu0 0.0
      %3717 = vmatprep.subr.mxu0 0.0
      %3718 = vmatpush1.msra.mxu0 0.0
      %3719 = vmatprep.subr.mxu0 0.0
      %3720 = vmatpush1.msra.mxu0 0.0
      %3721 = vmatprep.subr.mxu0 0.0
      %3722 = vmatpush1.msra.mxu0 0.0
      %3723 = vmatprep.subr.mxu0 0.0
      %3724 = vmatpush1.msra.mxu0 0.0
      %3725 = vmatprep.subr.mxu0 0.0
      %3726 = vmatpush1.msra.mxu0 0.0
      %3727 = vmatprep.subr.mxu0 0.0
      %3728 = vmatpush1.msra.mxu0 0.0
      %3729 = vmatprep.subr.mxu0 0.0
      %3730 = vmatpush1.msra.mxu0 0.0
      %3731 = vmatprep.subr.mxu0 0.0
      %3732 = vmatpush1.msra.mxu0 0.0
      %3733 = vmatprep.subr.mxu0 0.0
      %3734 = vmatpush1.msra.mxu0 0.0
      %3735 = vmatprep.subr.mxu0 0.0
      %3736 = vmatpush1.msra.mxu0 0.0
      %3737 = vmatprep.subr.mxu0 0.0
      %3738 = vmatpush1.msra.mxu0 0.0
      %3739 = vmatprep.subr.mxu0 0.0
      %3740 = vmatpush1.msra.mxu0 0.0
      %3741 = vmatprep.subr.mxu0 0.0
      %3742 = vmatpush1.msra.mxu0 0.0
      %3743 = vmatprep.mubr.f32.mxu0 0.0
      %3744 = vmatmul.mubr.f32.gmra.mrb[0].mxu0 %v3671
      %v3745 = vpop.f32.mrb[0].mxu0
      %v3746 = vadd.f32 %v3512, %v3745
      %v3747 = vpop.f32.mrb[0].mxu0
      %3748 = vmatprep.mubr.f32.mxu0 0.0
      %3749 = vmatmul.mubr.f32.gmra.mrb[0].mxu0 %v3674
      %v3750 = vpop.f32.mrb[0].mxu0
      %v3751 = vadd.f32 %v3517, %v3750
      %v3752 = vpop.f32.mrb[0].mxu0
      %3753 = vmatprep.mubr.f32.mxu0 0.0
      %3754 = vmatmul.mubr.f32.gmra.mrb[0].mxu0 %v3347
      %v3755 = vpop.f32.mrb[0].mxu0
      %v3756 = vadd.f32 %v3522, %v3755
      %v3757 = vpop.f32.mrb[0].mxu0
      %3758 = vmatprep.mubr.f32.mxu0 0.0
      %3759 = vmatmul.mubr.f32.gmra.mrb[0].mxu0 %v3350
      %v3760 = vpop.f32.mrb[0].mxu0
      %v3761 = vadd.f32 %v3527, %v3760
      %v3762 = vpop.f32.mrb[0].mxu0
      %3763 = vmatprep.mubr.f32.mxu0 0.0
      %3764 = vmatmul.mubr.f32.gmra.mrb[0].mxu0 %v3353
      %v3765 = vpop.f32.mrb[0].mxu0
      %v3766 = vadd.f32 %v3532, %v3765
      %v3767 = vpop.f32.mrb[0].mxu0
      %3768 = vmatprep.mubr.f32.mxu0 0.0
      %3769 = vmatmul.mubr.f32.gmra.mrb[0].mxu0 %v3356
      %v3770 = vpop.f32.mrb[0].mxu0
      %v3771 = vadd.f32 %v3537, %v3770
      %v3772 = vpop.f32.mrb[0].mxu0
      %3773 = vmatprep.mubr.f32.mxu0 0.0
      %3774 = vmatmul.mubr.f32.gmra.mrb[0].mxu0 %v3359
      %v3775 = vpop.f32.mrb[0].mxu0
      %v3776 = vadd.f32 %v3542, %v3775
      %v3777 = vpop.f32.mrb[0].mxu0
      %3778 = vmatprep.mubr.f32.mxu0 0.0
      %3779 = vmatmul.mubr.f32.gmra.mrb[0].mxu0 %v3362
      %v3780 = vpop.f32.mrb[0].mxu0
      %v3781 = vadd.f32 %v3547, %v3780
      %v3782 = vpop.f32.mrb[0].mxu0
      %3783 = vmatprep.mubr.f32.mxu0 0.0
      %3784 = vmatmul.mubr.f32.gmra.mrb[0].mxu0 %v3365
      %v3785 = vpop.f32.mrb[0].mxu0
      %v3786 = vadd.f32 %v3552, %v3785
      %v3787 = vpop.f32.mrb[0].mxu0
      %3788 = vmatprep.mubr.f32.mxu0 0.0
      %3789 = vmatmul.mubr.f32.gmra.mrb[0].mxu0 %v3368
      %v3790 = vpop.f32.mrb[0].mxu0
      %v3791 = vadd.f32 %v3557, %v3790
      %v3792 = vpop.f32.mrb[0].mxu0
      %3793 = vmatprep.mubr.f32.mxu0 0.0
      %3794 = vmatmul.mubr.f32.gmra.mrb[0].mxu0 %v3371
      %v3795 = vpop.f32.mrb[0].mxu0
      %v3796 = vadd.f32 %v3562, %v3795
      %v3797 = vpop.f32.mrb[0].mxu0
      %3798 = vmatprep.mubr.f32.mxu0 0.0
      %3799 = vmatmul.mubr.f32.gmra.mrb[0].mxu0 %v3374
      %v3800 = vpop.f32.mrb[0].mxu0
      %v3801 = vadd.f32 %v3567, %v3800
      %v3802 = vpop.f32.mrb[0].mxu0
      %3803 = vmatprep.mubr.f32.mxu0 0.0
      %3804 = vmatmul.mubr.f32.gmra.mrb[0].mxu0 %v3377
      %v3805 = vpop.f32.mrb[0].mxu0
      %v3806 = vadd.f32 %v3572, %v3805
      %v3807 = vpop.f32.mrb[0].mxu0
      %3808 = vmatprep.mubr.f32.mxu0 0.0
      %3809 = vmatmul.mubr.f32.gmra.mrb[0].mxu0 %v3380
      %v3810 = vpop.f32.mrb[0].mxu0
      %v3811 = vadd.f32 %v3577, %v3810
      %v3812 = vpop.f32.mrb[0].mxu0
      %3813 = vmatprep.mubr.f32.mxu0 0.0
      %3814 = vmatmul.mubr.f32.gmra.mrb[0].mxu0 %v3383
      %v3815 = vpop.f32.mrb[0].mxu0
      %v3816 = vadd.f32 %v3582, %v3815
      %v3817 = vpop.f32.mrb[0].mxu0
      %3818 = vmatprep.mubr.f32.mxu0 0.0
      %3819 = vmatmul.mubr.f32.gmra.mrb[0].mxu0 %v3386
      %v3820 = vpop.f32.mrb[0].mxu0
      %v3821 = vadd.f32 %v3587, %v3820
      %v3822 = vpop.f32.mrb[0].mxu0
      %3823 = vmatprep.mubr.f32.mxu0 0.0
      %3824 = vmatmul.mubr.f32.gmra.mrb[0].mxu0 %v3389
      %v3825 = vpop.f32.mrb[0].mxu0
      %v3826 = vadd.f32 %v3592, %v3825
      %v3827 = vpop.f32.mrb[0].mxu0
      %3828 = vmatprep.mubr.f32.mxu0 0.0
      %3829 = vmatmul.mubr.f32.gmra.mrb[0].mxu0 %v3392
      %v3830 = vpop.f32.mrb[0].mxu0
      %v3831 = vadd.f32 %v3597, %v3830
      %v3832 = vpop.f32.mrb[0].mxu0
      %3833 = vmatprep.mubr.f32.mxu0 0.0
      %3834 = vmatmul.mubr.f32.gmra.mrb[0].mxu0 %v3395
      %v3835 = vpop.f32.mrb[0].mxu0
      %v3836 = vadd.f32 %v3602, %v3835
      %v3837 = vpop.f32.mrb[0].mxu0
      %3838 = vmatprep.mubr.f32.mxu0 0.0
      %3839 = vmatmul.mubr.f32.gmra.mrb[0].mxu0 %v3398
      %v3840 = vpop.f32.mrb[0].mxu0
      %v3841 = vadd.f32 %v3607, %v3840
      %v3842 = vpop.f32.mrb[0].mxu0
      %3843 = vmatprep.mubr.f32.mxu0 0.0
      %3844 = vmatmul.mubr.f32.gmra.mrb[0].mxu0 %v3401
      %v3845 = vpop.f32.mrb[0].mxu0
      %v3846 = vadd.f32 %v3612, %v3845
      %v3847 = vpop.f32.mrb[0].mxu0
      %3848 = vmatprep.mubr.f32.mxu0 0.0
      %3849 = vmatmul.mubr.f32.gmra.mrb[0].mxu0 %v3404
      %v3850 = vpop.f32.mrb[0].mxu0
      %v3851 = vadd.f32 %v3617, %v3850
      %v3852 = vpop.f32.mrb[0].mxu0
      %3853 = vmatprep.mubr.f32.mxu0 0.0
      %3854 = vmatmul.mubr.f32.gmra.mrb[0].mxu0 %v3407
      %v3855 = vpop.f32.mrb[0].mxu0
      %v3856 = vadd.f32 %v3622, %v3855
      %v3857 = vpop.f32.mrb[0].mxu0
      %3858 = vmatprep.mubr.f32.mxu0 0.0
      %3859 = vmatmul.mubr.f32.gmra.mrb[0].mxu0 %v3410
      %v3860 = vpop.f32.mrb[0].mxu0
      %v3861 = vadd.f32 %v3627, %v3860
      %v3862 = vpop.f32.mrb[0].mxu0
      %3863 = vmatprep.mubr.f32.mxu0 0.0
      %3864 = vmatmul.mubr.f32.gmra.mrb[0].mxu0 %v3413
      %v3865 = vpop.f32.mrb[0].mxu0
      %v3866 = vadd.f32 %v3632, %v3865
      %v3867 = vpop.f32.mrb[0].mxu0
      %3868 = vmatprep.mubr.f32.mxu0 0.0
      %3869 = vmatmul.mubr.f32.gmra.mrb[0].mxu0 %v3416
      %v3870 = vpop.f32.mrb[0].mxu0
      %v3871 = vadd.f32 %v3637, %v3870
      %v3872 = vpop.f32.mrb[0].mxu0
      %3873 = vmatprep.mubr.f32.mxu0 0.0
      %3874 = vmatmul.mubr.f32.gmra.mrb[0].mxu0 %v3419
      %v3875 = vpop.f32.mrb[0].mxu0
      %v3876 = vadd.f32 %v3642, %v3875
      %v3877 = vpop.f32.mrb[0].mxu0
      %3878 = vmatprep.mubr.f32.mxu0 0.0
      %3879 = vmatmul.mubr.f32.gmra.mrb[0].mxu0 %v3422
      %v3880 = vpop.f32.mrb[0].mxu0
      %v3881 = vadd.f32 %v3647, %v3880
      %v3882 = vpop.f32.mrb[0].mxu0
      %3883 = vmatprep.mubr.f32.mxu0 0.0
      %3884 = vmatmul.mubr.f32.gmra.mrb[0].mxu0 %v3425
      %v3885 = vpop.f32.mrb[0].mxu0
      %v3886 = vadd.f32 %v3652, %v3885
      %v3887 = vpop.f32.mrb[0].mxu0
      %3888 = vmatprep.mubr.f32.mxu0 0.0
      %3889 = vmatmul.mubr.f32.gmra.mrb[0].mxu0 %v3428
      %v3890 = vpop.f32.mrb[0].mxu0
      %v3891 = vadd.f32 %v3657, %v3890
      %v3892 = vpop.f32.mrb[0].mxu0
      %3893 = vmatprep.mubr.f32.mxu0 0.0
      %3894 = vmatmul.mubr.f32.gmra.mrb[0].mxu0 %v3431
      %v3895 = vpop.f32.mrb[0].mxu0
      %v3896 = vadd.f32 %v3662, %v3895
      %v3897 = vpop.f32.mrb[0].mxu0
      %3898 = vmatprep.mubr.f32.mxu0 0.0
      %3899 = vmatmul.mubr.f32.gmra.mrb[0].mxu0 %v3434
      %v3900 = vpop.f32.mrb[0].mxu0
      %v3901 = vadd.f32 %v3667, %v3900
      %v3902 = vpop.f32.mrb[0].mxu0
      %3903 = vdwg.mxu0
      %v3905 = vsel %vm171, %v3344, 0
      %v3908 = vsel %vm171, %v3345, 0
      %v3911 = vsel %vm419, %v3307, 0
      %3913 = vmatprep.subr.mxu0 0.0
      %3914 = vmatpush1.msra.mxu0 %v3911
      %3915 = vmatprep.subr.mxu0 0.0
      %3916 = vmatpush1.msra.mxu0 0.0
      %3917 = vmatprep.subr.mxu0 0.0
      %3918 = vmatpush1.msra.mxu0 0.0
      %3919 = vmatprep.subr.mxu0 0.0
      %3920 = vmatpush1.msra.mxu0 0.0
      %3921 = vmatprep.subr.mxu0 0.0
      %3922 = vmatpush1.msra.mxu0 0.0
      %3923 = vmatprep.subr.mxu0 0.0
      %3924 = vmatpush1.msra.mxu0 0.0
      %3925 = vmatprep.subr.mxu0 0.0
      %3926 = vmatpush1.msra.mxu0 0.0
      %3927 = vmatprep.subr.mxu0 0.0
      %3928 = vmatpush1.msra.mxu0 0.0
      %3929 = vmatprep.subr.mxu0 0.0
      %3930 = vmatpush1.msra.mxu0 0.0
      %3931 = vmatprep.subr.mxu0 0.0
      %3932 = vmatpush1.msra.mxu0 0.0
      %3933 = vmatprep.subr.mxu0 0.0
      %3934 = vmatpush1.msra.mxu0 0.0
      %3935 = vmatprep.subr.mxu0 0.0
      %3936 = vmatpush1.msra.mxu0 0.0
      %3937 = vmatprep.subr.mxu0 0.0
      %3938 = vmatpush1.msra.mxu0 0.0
      %3939 = vmatprep.subr.mxu0 0.0
      %3940 = vmatpush1.msra.mxu0 0.0
      %3941 = vmatprep.subr.mxu0 0.0
      %3942 = vmatpush1.msra.mxu0 0.0
      %3943 = vmatprep.subr.mxu0 0.0
      %3944 = vmatpush1.msra.mxu0 0.0
      %3945 = vmatprep.subr.mxu0 0.0
      %3946 = vmatpush1.msra.mxu0 0.0
      %3947 = vmatprep.subr.mxu0 0.0
      %3948 = vmatpush1.msra.mxu0 0.0
      %3949 = vmatprep.subr.mxu0 0.0
      %3950 = vmatpush1.msra.mxu0 0.0
      %3951 = vmatprep.subr.mxu0 0.0
      %3952 = vmatpush1.msra.mxu0 0.0
      %3953 = vmatprep.subr.mxu0 0.0
      %3954 = vmatpush1.msra.mxu0 0.0
      %3955 = vmatprep.subr.mxu0 0.0
      %3956 = vmatpush1.msra.mxu0 0.0
      %3957 = vmatprep.subr.mxu0 0.0
      %3958 = vmatpush1.msra.mxu0 0.0
      %3959 = vmatprep.subr.mxu0 0.0
      %3960 = vmatpush1.msra.mxu0 0.0
      %3961 = vmatprep.subr.mxu0 0.0
      %3962 = vmatpush1.msra.mxu0 0.0
      %3963 = vmatprep.subr.mxu0 0.0
      %3964 = vmatpush1.msra.mxu0 0.0
      %3965 = vmatprep.subr.mxu0 0.0
      %3966 = vmatpush1.msra.mxu0 0.0
      %3967 = vmatprep.subr.mxu0 0.0
      %3968 = vmatpush1.msra.mxu0 0.0
      %3969 = vmatprep.subr.mxu0 0.0
      %3970 = vmatpush1.msra.mxu0 0.0
      %3971 = vmatprep.subr.mxu0 0.0
      %3972 = vmatpush1.msra.mxu0 0.0
      %3973 = vmatprep.subr.mxu0 0.0
      %3974 = vmatpush1.msra.mxu0 0.0
      %3975 = vmatprep.subr.mxu0 0.0
      %3976 = vmatpush1.msra.mxu0 0.0
      %3977 = vmatprep.mubr.f32.mxu0 0.0
      %3978 = vmatmul.mubr.f32.gmra.mrb[0].mxu0 %v3353
      %v3979 = vpop.f32.mrb[0].mxu0
      %v3980 = vadd.f32 0.0, %v3979
      %v3981 = vpop.f32.mrb[0].mxu0
      %3982 = vmatprep.mubr.f32.mxu0 0.0
      %3983 = vmatmul.mubr.f32.gmra.mrb[0].mxu0 %v3356
      %v3984 = vpop.f32.mrb[0].mxu0
      %v3985 = vadd.f32 0.0, %v3984
      %v3986 = vpop.f32.mrb[0].mxu0
      %3987 = vmatprep.mubr.f32.mxu0 0.0
      %3988 = vmatmul.mubr.f32.gmra.mrb[0].mxu0 %v3359
      %v3989 = vpop.f32.mrb[0].mxu0
      %v3990 = vadd.f32 0.0, %v3989
      %v3991 = vpop.f32.mrb[0].mxu0
      %3992 = vmatprep.mubr.f32.mxu0 0.0
      %3993 = vmatmul.mubr.f32.gmra.mrb[0].mxu0 %v3362
      %v3994 = vpop.f32.mrb[0].mxu0
      %v3995 = vadd.f32 0.0, %v3994
      %v3996 = vpop.f32.mrb[0].mxu0
      %3997 = vmatprep.mubr.f32.mxu0 0.0
      %3998 = vmatmul.mubr.f32.gmra.mrb[0].mxu0 %v3365
      %v3999 = vpop.f32.mrb[0].mxu0
      %v4000 = vadd.f32 0.0, %v3999
      %v4001 = vpop.f32.mrb[0].mxu0
      %4002 = vmatprep.mubr.f32.mxu0 0.0
      %4003 = vmatmul.mubr.f32.gmra.mrb[0].mxu0 %v3368
      %v4004 = vpop.f32.mrb[0].mxu0
      %v4005 = vadd.f32 0.0, %v4004
      %v4006 = vpop.f32.mrb[0].mxu0
      %4007 = vmatprep.mubr.f32.mxu0 0.0
      %4008 = vmatmul.mubr.f32.gmra.mrb[0].mxu0 %v3371
      %v4009 = vpop.f32.mrb[0].mxu0
      %v4010 = vadd.f32 0.0, %v4009
      %v4011 = vpop.f32.mrb[0].mxu0
      %4012 = vmatprep.mubr.f32.mxu0 0.0
      %4013 = vmatmul.mubr.f32.gmra.mrb[0].mxu0 %v3374
      %v4014 = vpop.f32.mrb[0].mxu0
      %v4015 = vadd.f32 0.0, %v4014
      %v4016 = vpop.f32.mrb[0].mxu0
      %4017 = vmatprep.mubr.f32.mxu0 0.0
      %4018 = vmatmul.mubr.f32.gmra.mrb[0].mxu0 %v3377
      %v4019 = vpop.f32.mrb[0].mxu0
      %v4020 = vadd.f32 0.0, %v4019
      %v4021 = vpop.f32.mrb[0].mxu0
      %4022 = vmatprep.mubr.f32.mxu0 0.0
      %4023 = vmatmul.mubr.f32.gmra.mrb[0].mxu0 %v3380
      %v4024 = vpop.f32.mrb[0].mxu0
      %v4025 = vadd.f32 0.0, %v4024
      %v4026 = vpop.f32.mrb[0].mxu0
      %4027 = vmatprep.mubr.f32.mxu0 0.0
      %4028 = vmatmul.mubr.f32.gmra.mrb[0].mxu0 %v3383
      %v4029 = vpop.f32.mrb[0].mxu0
      %v4030 = vadd.f32 0.0, %v4029
      %v4031 = vpop.f32.mrb[0].mxu0
      %4032 = vmatprep.mubr.f32.mxu0 0.0
      %4033 = vmatmul.mubr.f32.gmra.mrb[0].mxu0 %v3386
      %v4034 = vpop.f32.mrb[0].mxu0
      %v4035 = vadd.f32 0.0, %v4034
      %v4036 = vpop.f32.mrb[0].mxu0
      %4037 = vmatprep.mubr.f32.mxu0 0.0
      %4038 = vmatmul.mubr.f32.gmra.mrb[0].mxu0 %v3389
      %v4039 = vpop.f32.mrb[0].mxu0
      %v4040 = vadd.f32 0.0, %v4039
      %v4041 = vpop.f32.mrb[0].mxu0
      %4042 = vmatprep.mubr.f32.mxu0 0.0
      %4043 = vmatmul.mubr.f32.gmra.mrb[0].mxu0 %v3392
      %v4044 = vpop.f32.mrb[0].mxu0
      %v4045 = vadd.f32 0.0, %v4044
      %v4046 = vpop.f32.mrb[0].mxu0
      %4047 = vmatprep.mubr.f32.mxu0 0.0
      %4048 = vmatmul.mubr.f32.gmra.mrb[0].mxu0 %v3395
      %v4049 = vpop.f32.mrb[0].mxu0
      %v4050 = vadd.f32 0.0, %v4049
      %v4051 = vpop.f32.mrb[0].mxu0
      %4052 = vmatprep.mubr.f32.mxu0 0.0
      %4053 = vmatmul.mubr.f32.gmra.mrb[0].mxu0 %v3398
      %v4054 = vpop.f32.mrb[0].mxu0
      %v4055 = vadd.f32 0.0, %v4054
      %v4056 = vpop.f32.mrb[0].mxu0
      %4057 = vmatprep.mubr.f32.mxu0 0.0
      %4058 = vmatmul.mubr.f32.gmra.mrb[0].mxu0 %v3401
      %v4059 = vpop.f32.mrb[0].mxu0
      %v4060 = vadd.f32 0.0, %v4059
      %v4061 = vpop.f32.mrb[0].mxu0
      %4062 = vmatprep.mubr.f32.mxu0 0.0
      %4063 = vmatmul.mubr.f32.gmra.mrb[0].mxu0 %v3404
      %v4064 = vpop.f32.mrb[0].mxu0
      %v4065 = vadd.f32 0.0, %v4064
      %v4066 = vpop.f32.mrb[0].mxu0
      %4067 = vmatprep.mubr.f32.mxu0 0.0
      %4068 = vmatmul.mubr.f32.gmra.mrb[0].mxu0 %v3407
      %v4069 = vpop.f32.mrb[0].mxu0
      %v4070 = vadd.f32 0.0, %v4069
      %v4071 = vpop.f32.mrb[0].mxu0
      %4072 = vmatprep.mubr.f32.mxu0 0.0
      %4073 = vmatmul.mubr.f32.gmra.mrb[0].mxu0 %v3410
      %v4074 = vpop.f32.mrb[0].mxu0
      %v4075 = vadd.f32 0.0, %v4074
      %v4076 = vpop.f32.mrb[0].mxu0
      %4077 = vmatprep.mubr.f32.mxu0 0.0
      %4078 = vmatmul.mubr.f32.gmra.mrb[0].mxu0 %v3413
      %v4079 = vpop.f32.mrb[0].mxu0
      %v4080 = vadd.f32 0.0, %v4079
      %v4081 = vpop.f32.mrb[0].mxu0
      %4082 = vmatprep.mubr.f32.mxu0 0.0
      %4083 = vmatmul.mubr.f32.gmra.mrb[0].mxu0 %v3416
      %v4084 = vpop.f32.mrb[0].mxu0
      %v4085 = vadd.f32 0.0, %v4084
      %v4086 = vpop.f32.mrb[0].mxu0
      %4087 = vmatprep.mubr.f32.mxu0 0.0
      %4088 = vmatmul.mubr.f32.gmra.mrb[0].mxu0 %v3419
      %v4089 = vpop.f32.mrb[0].mxu0
      %v4090 = vadd.f32 0.0, %v4089
      %v4091 = vpop.f32.mrb[0].mxu0
      %4092 = vmatprep.mubr.f32.mxu0 0.0
      %4093 = vmatmul.mubr.f32.gmra.mrb[0].mxu0 %v3422
      %v4094 = vpop.f32.mrb[0].mxu0
      %v4095 = vadd.f32 0.0, %v4094
      %v4096 = vpop.f32.mrb[0].mxu0
      %4097 = vmatprep.mubr.f32.mxu0 0.0
      %4098 = vmatmul.mubr.f32.gmra.mrb[0].mxu0 %v3425
      %v4099 = vpop.f32.mrb[0].mxu0
      %v4100 = vadd.f32 0.0, %v4099
      %v4101 = vpop.f32.mrb[0].mxu0
      %4102 = vmatprep.mubr.f32.mxu0 0.0
      %4103 = vmatmul.mubr.f32.gmra.mrb[0].mxu0 %v3428
      %v4104 = vpop.f32.mrb[0].mxu0
      %v4105 = vadd.f32 0.0, %v4104
      %v4106 = vpop.f32.mrb[0].mxu0
      %4107 = vmatprep.mubr.f32.mxu0 0.0
      %4108 = vmatmul.mubr.f32.gmra.mrb[0].mxu0 %v3431
      %v4109 = vpop.f32.mrb[0].mxu0
      %v4110 = vadd.f32 0.0, %v4109
      %v4111 = vpop.f32.mrb[0].mxu0
      %4112 = vmatprep.mubr.f32.mxu0 0.0
      %4113 = vmatmul.mubr.f32.gmra.mrb[0].mxu0 %v3434
      %v4114 = vpop.f32.mrb[0].mxu0
      %v4115 = vadd.f32 0.0, %v4114
      %v4116 = vpop.f32.mrb[0].mxu0
      %4117 = vmatprep.mubr.f32.mxu0 0.0
      %4118 = vmatmul.mubr.f32.gmra.mrb[0].mxu0 %v3437
      %v4119 = vpop.f32.mrb[0].mxu0
      %v4120 = vadd.f32 0.0, %v4119
      %v4121 = vpop.f32.mrb[0].mxu0
      %4122 = vmatprep.mubr.f32.mxu0 0.0
      %4123 = vmatmul.mubr.f32.gmra.mrb[0].mxu0 %v3440
      %v4124 = vpop.f32.mrb[0].mxu0
      %v4125 = vadd.f32 0.0, %v4124
      %v4126 = vpop.f32.mrb[0].mxu0
      %4127 = vmatprep.mubr.f32.mxu0 0.0
      %4128 = vmatmul.mubr.f32.gmra.mrb[0].mxu0 %v3905
      %v4129 = vpop.f32.mrb[0].mxu0
      %v4130 = vadd.f32 0.0, %v4129
      %v4131 = vpop.f32.mrb[0].mxu0
      %4132 = vmatprep.mubr.f32.mxu0 0.0
      %4133 = vmatmul.mubr.f32.gmra.mrb[0].mxu0 %v3908
      %v4134 = vpop.f32.mrb[0].mxu0
      %v4135 = vadd.f32 0.0, %v4134
      %v4136 = vpop.f32.mrb[0].mxu0
      %4137 = vdwg.mxu0
      %v4138 = vadd.f32 %v3746, %v3980
      %v4139 = vadd.f32 %v3751, %v3985
      %v4140 = vadd.f32 %v3756, %v3990
      %v4141 = vadd.f32 %v3761, %v3995
      %v4142 = vadd.f32 %v3766, %v4000
      %v4143 = vadd.f32 %v3771, %v4005
      %v4144 = vadd.f32 %v3776, %v4010
      %v4145 = vadd.f32 %v3781, %v4015
      %v4146 = vadd.f32 %v3786, %v4020
      %v4147 = vadd.f32 %v3791, %v4025
      %v4148 = vadd.f32 %v3796, %v4030
      %v4149 = vadd.f32 %v3801, %v4035
      %v4150 = vadd.f32 %v3806, %v4040
      %v4151 = vadd.f32 %v3811, %v4045
      %v4152 = vadd.f32 %v3816, %v4050
      %v4153 = vadd.f32 %v3821, %v4055
      %v4154 = vadd.f32 %v3826, %v4060
      %v4155 = vadd.f32 %v3831, %v4065
      %v4156 = vadd.f32 %v3836, %v4070
      %v4157 = vadd.f32 %v3841, %v4075
      %v4158 = vadd.f32 %v3846, %v4080
      %v4159 = vadd.f32 %v3851, %v4085
      %v4160 = vadd.f32 %v3856, %v4090
      %v4161 = vadd.f32 %v3861, %v4095
      %v4162 = vadd.f32 %v3866, %v4100
      %v4163 = vadd.f32 %v3871, %v4105
      %v4164 = vadd.f32 %v3876, %v4110
      %v4165 = vadd.f32 %v3881, %v4115
      %v4166 = vadd.f32 %v3886, %v4120
      %v4167 = vadd.f32 %v3891, %v4125
      %v4168 = vadd.f32 %v3896, %v4130
      %v4169 = vadd.f32 %v3901, %v4135
      %v4170 = vld [vmem:[#allocation2 + $0x8] sm:$0xff]
      %v4171 = vld [vmem:[#allocation2 + $0x10] sm:$0xff]
      %v4172 = vld [vmem:[#allocation2 + $0x28] sm:$0xff]
      %v4173 = vld [vmem:[#allocation2 + $0x30] sm:$0xff]
      %v4174 = vld [vmem:[#allocation2 + $0x48] sm:$0xff]
      %v4175 = vld [vmem:[#allocation2 + $0x50] sm:$0xff]
      %v4176 = vld [vmem:[#allocation2 + $0x68] sm:$0xff]
      %v4177 = vld [vmem:[#allocation2 + $0x70] sm:$0xff]
      %v4178 = vld [vmem:[#allocation2 + $0x88] sm:$0xff]
      %v4179 = vld [vmem:[#allocation2 + $0x90] sm:$0xff]
      %v4180 = vld [vmem:[#allocation2 + $0xa8] sm:$0xff]
      %v4181 = vld [vmem:[#allocation2 + $0xb0] sm:$0xff]
      %v4182 = vld [vmem:[#allocation2 + $0xc8] sm:$0xff]
      %v4183 = vld [vmem:[#allocation2 + $0xd0] sm:$0xff]
      %v4184 = vld [vmem:[#allocation2 + $0xe8] sm:$0xff]
      %v4185 = vld [vmem:[#allocation2 + $0xf0] sm:$0xff]
      %v4186 = vld [vmem:[#allocation2 + $0x108] sm:$0xff]
      %v4187 = vld [vmem:[#allocation2 + $0x110] sm:$0xff]
      %v4188 = vld [vmem:[#allocation2 + $0x128] sm:$0xff]
      %v4189 = vld [vmem:[#allocation2 + $0x130] sm:$0xff]
      %v4190 = vld [vmem:[#allocation2 + $0x148] sm:$0xff]
      %v4191 = vld [vmem:[#allocation2 + $0x150] sm:$0xff]
      %v4192 = vld [vmem:[#allocation2 + $0x168] sm:$0xff]
      %v4193 = vld [vmem:[#allocation2 + $0x170] sm:$0xff]
      %v4194 = vld [vmem:[#allocation2 + $0x188] sm:$0xff]
      %v4195 = vld [vmem:[#allocation2 + $0x190] sm:$0xff]
      %v4196 = vld [vmem:[#allocation2 + $0x1a8] sm:$0xff]
      %v4197 = vld [vmem:[#allocation2 + $0x1b0] sm:$0xff]
      %v4198 = vld [vmem:[#allocation2 + $0x1c8] sm:$0xff]
      %v4199 = vld [vmem:[#allocation2 + $0x1d0] sm:$0xff]
      %v4200 = vld [vmem:[#allocation2 + $0x1e8] sm:$0xff]
      %v4201 = vld [vmem:[#allocation2 + $0x1f0] sm:$0xff]
      %v4202 = vld [vmem:[#allocation2 + $0x208] sm:$0xff]
      %v4203 = vld [vmem:[#allocation2 + $0x210] sm:$0xff]
      %v4204 = vld [vmem:[#allocation2 + $0x228] sm:$0xff]
      %v4205 = vld [vmem:[#allocation2 + $0x230] sm:$0xff]
      %v4207 = vsel %vm171, %v4170, 0
      %v4210 = vsel %vm171, %v4171, 0
      %v4213 = vsel %vm171, %v4172, 0
      %v4216 = vsel %vm171, %v4173, 0
      %v4219 = vsel %vm171, %v4174, 0
      %v4222 = vsel %vm171, %v4175, 0
      %v4225 = vsel %vm171, %v4176, 0
      %v4228 = vsel %vm171, %v4177, 0
      %v4231 = vsel %vm171, %v4178, 0
      %v4234 = vsel %vm171, %v4179, 0
      %v4237 = vsel %vm171, %v4180, 0
      %v4240 = vsel %vm171, %v4181, 0
      %v4243 = vsel %vm171, %v4182, 0
      %v4246 = vsel %vm171, %v4183, 0
      %v4249 = vsel %vm171, %v4184, 0
      %v4252 = vsel %vm171, %v4185, 0
      %v4255 = vsel %vm171, %v4186, 0
      %v4258 = vsel %vm171, %v4187, 0
      %v4261 = vsel %vm171, %v4188, 0
      %v4264 = vsel %vm171, %v4189, 0
      %v4267 = vsel %vm171, %v4190, 0
      %v4270 = vsel %vm171, %v4191, 0
      %v4273 = vsel %vm171, %v4192, 0
      %v4276 = vsel %vm171, %v4193, 0
      %v4279 = vsel %vm171, %v4194, 0
      %v4282 = vsel %vm171, %v4195, 0
      %v4285 = vsel %vm171, %v4196, 0
      %v4288 = vsel %vm171, %v4197, 0
      %v4291 = vsel %vm171, %v4198, 0
      %v4294 = vsel %vm171, %v4199, 0
      %v4297 = vsel %vm171, %v4200, 0
      %v4300 = vsel %vm171, %v4201, 0
      %v4303 = vsel %vm419, %v3302, 0
      %4305 = vmatprep.subr.mxu0 0.0
      %4306 = vmatpush1.msra.mxu0 %v4303
      %4307 = vmatprep.subr.mxu0 0.0
      %4308 = vmatpush1.msra.mxu0 0.0
      %4309 = vmatprep.subr.mxu0 0.0
      %4310 = vmatpush1.msra.mxu0 0.0
      %4311 = vmatprep.subr.mxu0 0.0
      %4312 = vmatpush1.msra.mxu0 0.0
      %4313 = vmatprep.subr.mxu0 0.0
      %4314 = vmatpush1.msra.mxu0 0.0
      %4315 = vmatprep.subr.mxu0 0.0
      %4316 = vmatpush1.msra.mxu0 0.0
      %4317 = vmatprep.subr.mxu0 0.0
      %4318 = vmatpush1.msra.mxu0 0.0
      %4319 = vmatprep.subr.mxu0 0.0
      %4320 = vmatpush1.msra.mxu0 0.0
      %4321 = vmatprep.subr.mxu0 0.0
      %4322 = vmatpush1.msra.mxu0 0.0
      %4323 = vmatprep.subr.mxu0 0.0
      %4324 = vmatpush1.msra.mxu0 0.0
      %4325 = vmatprep.subr.mxu0 0.0
      %4326 = vmatpush1.msra.mxu0 0.0
      %4327 = vmatprep.subr.mxu0 0.0
      %4328 = vmatpush1.msra.mxu0 0.0
      %4329 = vmatprep.subr.mxu0 0.0
      %4330 = vmatpush1.msra.mxu0 0.0
      %4331 = vmatprep.subr.mxu0 0.0
      %4332 = vmatpush1.msra.mxu0 0.0
      %4333 = vmatprep.subr.mxu0 0.0
      %4334 = vmatpush1.msra.mxu0 0.0
      %4335 = vmatprep.subr.mxu0 0.0
      %4336 = vmatpush1.msra.mxu0 0.0
      %4337 = vmatprep.subr.mxu0 0.0
      %4338 = vmatpush1.msra.mxu0 0.0
      %4339 = vmatprep.subr.mxu0 0.0
      %4340 = vmatpush1.msra.mxu0 0.0
      %4341 = vmatprep.subr.mxu0 0.0
      %4342 = vmatpush1.msra.mxu0 0.0
      %4343 = vmatprep.subr.mxu0 0.0
      %4344 = vmatpush1.msra.mxu0 0.0
      %4345 = vmatprep.subr.mxu0 0.0
      %4346 = vmatpush1.msra.mxu0 0.0
      %4347 = vmatprep.subr.mxu0 0.0
      %4348 = vmatpush1.msra.mxu0 0.0
      %4349 = vmatprep.subr.mxu0 0.0
      %4350 = vmatpush1.msra.mxu0 0.0
      %4351 = vmatprep.subr.mxu0 0.0
      %4352 = vmatpush1.msra.mxu0 0.0
      %4353 = vmatprep.subr.mxu0 0.0
      %4354 = vmatpush1.msra.mxu0 0.0
      %4355 = vmatprep.subr.mxu0 0.0
      %4356 = vmatpush1.msra.mxu0 0.0
      %4357 = vmatprep.subr.mxu0 0.0
      %4358 = vmatpush1.msra.mxu0 0.0
      %4359 = vmatprep.subr.mxu0 0.0
      %4360 = vmatpush1.msra.mxu0 0.0
      %4361 = vmatprep.subr.mxu0 0.0
      %4362 = vmatpush1.msra.mxu0 0.0
      %4363 = vmatprep.subr.mxu0 0.0
      %4364 = vmatpush1.msra.mxu0 0.0
      %4365 = vmatprep.subr.mxu0 0.0
      %4366 = vmatpush1.msra.mxu0 0.0
      %4367 = vmatprep.subr.mxu0 0.0
      %4368 = vmatpush1.msra.mxu0 0.0
      %4369 = vmatprep.mubr.f32.mxu0 0.0
      %4370 = vmatmul.mubr.f32.gmra.mrb[0].mxu0 %v4207
      %v4371 = vpop.f32.mrb[0].mxu0
      %v4372 = vadd.f32 0.0, %v4371
      %v4373 = vpop.f32.mrb[0].mxu0
      %4374 = vmatprep.mubr.f32.mxu0 0.0
      %4375 = vmatmul.mubr.f32.gmra.mrb[0].mxu0 %v4210
      %v4376 = vpop.f32.mrb[0].mxu0
      %v4377 = vadd.f32 0.0, %v4376
      %v4378 = vpop.f32.mrb[0].mxu0
      %4379 = vmatprep.mubr.f32.mxu0 0.0
      %4380 = vmatmul.mubr.f32.gmra.mrb[0].mxu0 %v4213
      %v4381 = vpop.f32.mrb[0].mxu0
      %v4382 = vadd.f32 0.0, %v4381
      %v4383 = vpop.f32.mrb[0].mxu0
      %4384 = vmatprep.mubr.f32.mxu0 0.0
      %4385 = vmatmul.mubr.f32.gmra.mrb[0].mxu0 %v4216
      %v4386 = vpop.f32.mrb[0].mxu0
      %v4387 = vadd.f32 0.0, %v4386
      %v4388 = vpop.f32.mrb[0].mxu0
      %4389 = vmatprep.mubr.f32.mxu0 0.0
      %4390 = vmatmul.mubr.f32.gmra.mrb[0].mxu0 %v4219
      %v4391 = vpop.f32.mrb[0].mxu0
      %v4392 = vadd.f32 0.0, %v4391
      %v4393 = vpop.f32.mrb[0].mxu0
      %4394 = vmatprep.mubr.f32.mxu0 0.0
      %4395 = vmatmul.mubr.f32.gmra.mrb[0].mxu0 %v4222
      %v4396 = vpop.f32.mrb[0].mxu0
      %v4397 = vadd.f32 0.0, %v4396
      %v4398 = vpop.f32.mrb[0].mxu0
      %4399 = vmatprep.mubr.f32.mxu0 0.0
      %4400 = vmatmul.mubr.f32.gmra.mrb[0].mxu0 %v4225
      %v4401 = vpop.f32.mrb[0].mxu0
      %v4402 = vadd.f32 0.0, %v4401
      %v4403 = vpop.f32.mrb[0].mxu0
      %4404 = vmatprep.mubr.f32.mxu0 0.0
      %4405 = vmatmul.mubr.f32.gmra.mrb[0].mxu0 %v4228
      %v4406 = vpop.f32.mrb[0].mxu0
      %v4407 = vadd.f32 0.0, %v4406
      %v4408 = vpop.f32.mrb[0].mxu0
      %4409 = vmatprep.mubr.f32.mxu0 0.0
      %4410 = vmatmul.mubr.f32.gmra.mrb[0].mxu0 %v4231
      %v4411 = vpop.f32.mrb[0].mxu0
      %v4412 = vadd.f32 0.0, %v4411
      %v4413 = vpop.f32.mrb[0].mxu0
      %4414 = vmatprep.mubr.f32.mxu0 0.0
      %4415 = vmatmul.mubr.f32.gmra.mrb[0].mxu0 %v4234
      %v4416 = vpop.f32.mrb[0].mxu0
      %v4417 = vadd.f32 0.0, %v4416
      %v4418 = vpop.f32.mrb[0].mxu0
      %4419 = vmatprep.mubr.f32.mxu0 0.0
      %4420 = vmatmul.mubr.f32.gmra.mrb[0].mxu0 %v4237
      %v4421 = vpop.f32.mrb[0].mxu0
      %v4422 = vadd.f32 0.0, %v4421
      %v4423 = vpop.f32.mrb[0].mxu0
      %4424 = vmatprep.mubr.f32.mxu0 0.0
      %4425 = vmatmul.mubr.f32.gmra.mrb[0].mxu0 %v4240
      %v4426 = vpop.f32.mrb[0].mxu0
      %v4427 = vadd.f32 0.0, %v4426
      %v4428 = vpop.f32.mrb[0].mxu0
      %4429 = vmatprep.mubr.f32.mxu0 0.0
      %4430 = vmatmul.mubr.f32.gmra.mrb[0].mxu0 %v4243
      %v4431 = vpop.f32.mrb[0].mxu0
      %v4432 = vadd.f32 0.0, %v4431
      %v4433 = vpop.f32.mrb[0].mxu0
      %4434 = vmatprep.mubr.f32.mxu0 0.0
      %4435 = vmatmul.mubr.f32.gmra.mrb[0].mxu0 %v4246
      %v4436 = vpop.f32.mrb[0].mxu0
      %v4437 = vadd.f32 0.0, %v4436
      %v4438 = vpop.f32.mrb[0].mxu0
      %4439 = vmatprep.mubr.f32.mxu0 0.0
      %4440 = vmatmul.mubr.f32.gmra.mrb[0].mxu0 %v4249
      %v4441 = vpop.f32.mrb[0].mxu0
      %v4442 = vadd.f32 0.0, %v4441
      %v4443 = vpop.f32.mrb[0].mxu0
      %4444 = vmatprep.mubr.f32.mxu0 0.0
      %4445 = vmatmul.mubr.f32.gmra.mrb[0].mxu0 %v4252
      %v4446 = vpop.f32.mrb[0].mxu0
      %v4447 = vadd.f32 0.0, %v4446
      %v4448 = vpop.f32.mrb[0].mxu0
      %4449 = vmatprep.mubr.f32.mxu0 0.0
      %4450 = vmatmul.mubr.f32.gmra.mrb[0].mxu0 %v4255
      %v4451 = vpop.f32.mrb[0].mxu0
      %v4452 = vadd.f32 0.0, %v4451
      %v4453 = vpop.f32.mrb[0].mxu0
      %4454 = vmatprep.mubr.f32.mxu0 0.0
      %4455 = vmatmul.mubr.f32.gmra.mrb[0].mxu0 %v4258
      %v4456 = vpop.f32.mrb[0].mxu0
      %v4457 = vadd.f32 0.0, %v4456
      %v4458 = vpop.f32.mrb[0].mxu0
      %4459 = vmatprep.mubr.f32.mxu0 0.0
      %4460 = vmatmul.mubr.f32.gmra.mrb[0].mxu0 %v4261
      %v4461 = vpop.f32.mrb[0].mxu0
      %v4462 = vadd.f32 0.0, %v4461
      %v4463 = vpop.f32.mrb[0].mxu0
      %4464 = vmatprep.mubr.f32.mxu0 0.0
      %4465 = vmatmul.mubr.f32.gmra.mrb[0].mxu0 %v4264
      %v4466 = vpop.f32.mrb[0].mxu0
      %v4467 = vadd.f32 0.0, %v4466
      %v4468 = vpop.f32.mrb[0].mxu0
      %4469 = vmatprep.mubr.f32.mxu0 0.0
      %4470 = vmatmul.mubr.f32.gmra.mrb[0].mxu0 %v4267
      %v4471 = vpop.f32.mrb[0].mxu0
      %v4472 = vadd.f32 0.0, %v4471
      %v4473 = vpop.f32.mrb[0].mxu0
      %4474 = vmatprep.mubr.f32.mxu0 0.0
      %4475 = vmatmul.mubr.f32.gmra.mrb[0].mxu0 %v4270
      %v4476 = vpop.f32.mrb[0].mxu0
      %v4477 = vadd.f32 0.0, %v4476
      %v4478 = vpop.f32.mrb[0].mxu0
      %4479 = vmatprep.mubr.f32.mxu0 0.0
      %4480 = vmatmul.mubr.f32.gmra.mrb[0].mxu0 %v4273
      %v4481 = vpop.f32.mrb[0].mxu0
      %v4482 = vadd.f32 0.0, %v4481
      %v4483 = vpop.f32.mrb[0].mxu0
      %4484 = vmatprep.mubr.f32.mxu0 0.0
      %4485 = vmatmul.mubr.f32.gmra.mrb[0].mxu0 %v4276
      %v4486 = vpop.f32.mrb[0].mxu0
      %v4487 = vadd.f32 0.0, %v4486
      %v4488 = vpop.f32.mrb[0].mxu0
      %4489 = vmatprep.mubr.f32.mxu0 0.0
      %4490 = vmatmul.mubr.f32.gmra.mrb[0].mxu0 %v4279
      %v4491 = vpop.f32.mrb[0].mxu0
      %v4492 = vadd.f32 0.0, %v4491
      %v4493 = vpop.f32.mrb[0].mxu0
      %4494 = vmatprep.mubr.f32.mxu0 0.0
      %4495 = vmatmul.mubr.f32.gmra.mrb[0].mxu0 %v4282
      %v4496 = vpop.f32.mrb[0].mxu0
      %v4497 = vadd.f32 0.0, %v4496
      %v4498 = vpop.f32.mrb[0].mxu0
      %4499 = vmatprep.mubr.f32.mxu0 0.0
      %4500 = vmatmul.mubr.f32.gmra.mrb[0].mxu0 %v4285
      %v4501 = vpop.f32.mrb[0].mxu0
      %v4502 = vadd.f32 0.0, %v4501
      %v4503 = vpop.f32.mrb[0].mxu0
      %4504 = vmatprep.mubr.f32.mxu0 0.0
      %4505 = vmatmul.mubr.f32.gmra.mrb[0].mxu0 %v4288
      %v4506 = vpop.f32.mrb[0].mxu0
      %v4507 = vadd.f32 0.0, %v4506
      %v4508 = vpop.f32.mrb[0].mxu0
      %4509 = vmatprep.mubr.f32.mxu0 0.0
      %4510 = vmatmul.mubr.f32.gmra.mrb[0].mxu0 %v4291
      %v4511 = vpop.f32.mrb[0].mxu0
      %v4512 = vadd.f32 0.0, %v4511
      %v4513 = vpop.f32.mrb[0].mxu0
      %4514 = vmatprep.mubr.f32.mxu0 0.0
      %4515 = vmatmul.mubr.f32.gmra.mrb[0].mxu0 %v4294
      %v4516 = vpop.f32.mrb[0].mxu0
      %v4517 = vadd.f32 0.0, %v4516
      %v4518 = vpop.f32.mrb[0].mxu0
      %4519 = vmatprep.mubr.f32.mxu0 0.0
      %4520 = vmatmul.mubr.f32.gmra.mrb[0].mxu0 %v4297
      %v4521 = vpop.f32.mrb[0].mxu0
      %v4522 = vadd.f32 0.0, %v4521
      %v4523 = vpop.f32.mrb[0].mxu0
      %4524 = vmatprep.mubr.f32.mxu0 0.0
      %4525 = vmatmul.mubr.f32.gmra.mrb[0].mxu0 %v4300
      %v4526 = vpop.f32.mrb[0].mxu0
      %v4527 = vadd.f32 0.0, %v4526
      %v4528 = vpop.f32.mrb[0].mxu0
      %4529 = vdwg.mxu0
      %v4530 = vadd.f32 %v4138, %v4372
      %v4531 = vadd.f32 %v4139, %v4377
      %v4532 = vadd.f32 %v4140, %v4382
      %v4533 = vadd.f32 %v4141, %v4387
      %v4534 = vadd.f32 %v4142, %v4392
      %v4535 = vadd.f32 %v4143, %v4397
      %v4536 = vadd.f32 %v4144, %v4402
      %v4537 = vadd.f32 %v4145, %v4407
      %v4538 = vadd.f32 %v4146, %v4412
      %v4539 = vadd.f32 %v4147, %v4417
      %v4540 = vadd.f32 %v4148, %v4422
      %v4541 = vadd.f32 %v4149, %v4427
      %v4542 = vadd.f32 %v4150, %v4432
      %v4543 = vadd.f32 %v4151, %v4437
      %v4544 = vadd.f32 %v4152, %v4442
      %v4545 = vadd.f32 %v4153, %v4447
      %v4546 = vadd.f32 %v4154, %v4452
      %v4547 = vadd.f32 %v4155, %v4457
      %v4548 = vadd.f32 %v4156, %v4462
      %v4549 = vadd.f32 %v4157, %v4467
      %v4550 = vadd.f32 %v4158, %v4472
      %v4551 = vadd.f32 %v4159, %v4477
      %v4552 = vadd.f32 %v4160, %v4482
      %v4553 = vadd.f32 %v4161, %v4487
      %v4554 = vadd.f32 %v4162, %v4492
      %v4555 = vadd.f32 %v4163, %v4497
      %v4556 = vadd.f32 %v4164, %v4502
      %v4557 = vadd.f32 %v4165, %v4507
      %v4558 = vadd.f32 %v4166, %v4512
      %v4559 = vadd.f32 %v4167, %v4517
      %v4560 = vadd.f32 %v4168, %v4522
      %v4561 = vadd.f32 %v4169, %v4527
      %v4563 = vsel %vm171, %v4202, 0
      %v4566 = vsel %vm171, %v4203, 0
      %v4569 = vsel %vm419, %v3305, 0
      %4571 = vmatprep.subr.mxu0 0.0
      %4572 = vmatpush1.msra.mxu0 %v4569
      %4573 = vmatprep.subr.mxu0 0.0
      %4574 = vmatpush1.msra.mxu0 0.0
      %4575 = vmatprep.subr.mxu0 0.0
      %4576 = vmatpush1.msra.mxu0 0.0
      %4577 = vmatprep.subr.mxu0 0.0
      %4578 = vmatpush1.msra.mxu0 0.0
      %4579 = vmatprep.subr.mxu0 0.0
      %4580 = vmatpush1.msra.mxu0 0.0
      %4581 = vmatprep.subr.mxu0 0.0
      %4582 = vmatpush1.msra.mxu0 0.0
      %4583 = vmatprep.subr.mxu0 0.0
      %4584 = vmatpush1.msra.mxu0 0.0
      %4585 = vmatprep.subr.mxu0 0.0
      %4586 = vmatpush1.msra.mxu0 0.0
      %4587 = vmatprep.subr.mxu0 0.0
      %4588 = vmatpush1.msra.mxu0 0.0
      %4589 = vmatprep.subr.mxu0 0.0
      %4590 = vmatpush1.msra.mxu0 0.0
      %4591 = vmatprep.subr.mxu0 0.0
      %4592 = vmatpush1.msra.mxu0 0.0
      %4593 = vmatprep.subr.mxu0 0.0
      %4594 = vmatpush1.msra.mxu0 0.0
      %4595 = vmatprep.subr.mxu0 0.0
      %4596 = vmatpush1.msra.mxu0 0.0
      %4597 = vmatprep.subr.mxu0 0.0
      %4598 = vmatpush1.msra.mxu0 0.0
      %4599 = vmatprep.subr.mxu0 0.0
      %4600 = vmatpush1.msra.mxu0 0.0
      %4601 = vmatprep.subr.mxu0 0.0
      %4602 = vmatpush1.msra.mxu0 0.0
      %4603 = vmatprep.subr.mxu0 0.0
      %4604 = vmatpush1.msra.mxu0 0.0
      %4605 = vmatprep.subr.mxu0 0.0
      %4606 = vmatpush1.msra.mxu0 0.0
      %4607 = vmatprep.subr.mxu0 0.0
      %4608 = vmatpush1.msra.mxu0 0.0
      %4609 = vmatprep.subr.mxu0 0.0
      %4610 = vmatpush1.msra.mxu0 0.0
      %4611 = vmatprep.subr.mxu0 0.0
      %4612 = vmatpush1.msra.mxu0 0.0
      %4613 = vmatprep.subr.mxu0 0.0
      %4614 = vmatpush1.msra.mxu0 0.0
      %4615 = vmatprep.subr.mxu0 0.0
      %4616 = vmatpush1.msra.mxu0 0.0
      %4617 = vmatprep.subr.mxu0 0.0
      %4618 = vmatpush1.msra.mxu0 0.0
      %4619 = vmatprep.subr.mxu0 0.0
      %4620 = vmatpush1.msra.mxu0 0.0
      %4621 = vmatprep.subr.mxu0 0.0
      %4622 = vmatpush1.msra.mxu0 0.0
      %4623 = vmatprep.subr.mxu0 0.0
      %4624 = vmatpush1.msra.mxu0 0.0
      %4625 = vmatprep.subr.mxu0 0.0
      %4626 = vmatpush1.msra.mxu0 0.0
      %4627 = vmatprep.subr.mxu0 0.0
      %4628 = vmatpush1.msra.mxu0 0.0
      %4629 = vmatprep.subr.mxu0 0.0
      %4630 = vmatpush1.msra.mxu0 0.0
      %4631 = vmatprep.subr.mxu0 0.0
      %4632 = vmatpush1.msra.mxu0 0.0
      %4633 = vmatprep.subr.mxu0 0.0
      %4634 = vmatpush1.msra.mxu0 0.0
      %4635 = vmatprep.mubr.f32.mxu0 0.0
      %4636 = vmatmul.mubr.f32.gmra.mrb[0].mxu0 %v4213
      %v4637 = vpop.f32.mrb[0].mxu0
      %v4638 = vadd.f32 0.0, %v4637
      %v4639 = vpop.f32.mrb[0].mxu0
      %4640 = vmatprep.mubr.f32.mxu0 0.0
      %4641 = vmatmul.mubr.f32.gmra.mrb[0].mxu0 %v4216
      %v4642 = vpop.f32.mrb[0].mxu0
      %v4643 = vadd.f32 0.0, %v4642
      %v4644 = vpop.f32.mrb[0].mxu0
      %4645 = vmatprep.mubr.f32.mxu0 0.0
      %4646 = vmatmul.mubr.f32.gmra.mrb[0].mxu0 %v4219
      %v4647 = vpop.f32.mrb[0].mxu0
      %v4648 = vadd.f32 0.0, %v4647
      %v4649 = vpop.f32.mrb[0].mxu0
      %4650 = vmatprep.mubr.f32.mxu0 0.0
      %4651 = vmatmul.mubr.f32.gmra.mrb[0].mxu0 %v4222
      %v4652 = vpop.f32.mrb[0].mxu0
      %v4653 = vadd.f32 0.0, %v4652
      %v4654 = vpop.f32.mrb[0].mxu0
      %4655 = vmatprep.mubr.f32.mxu0 0.0
      %4656 = vmatmul.mubr.f32.gmra.mrb[0].mxu0 %v4225
      %v4657 = vpop.f32.mrb[0].mxu0
      %v4658 = vadd.f32 0.0, %v4657
      %v4659 = vpop.f32.mrb[0].mxu0
      %4660 = vmatprep.mubr.f32.mxu0 0.0
      %4661 = vmatmul.mubr.f32.gmra.mrb[0].mxu0 %v4228
      %v4662 = vpop.f32.mrb[0].mxu0
      %v4663 = vadd.f32 0.0, %v4662
      %v4664 = vpop.f32.mrb[0].mxu0
      %4665 = vmatprep.mubr.f32.mxu0 0.0
      %4666 = vmatmul.mubr.f32.gmra.mrb[0].mxu0 %v4231
      %v4667 = vpop.f32.mrb[0].mxu0
      %v4668 = vadd.f32 0.0, %v4667
      %v4669 = vpop.f32.mrb[0].mxu0
      %4670 = vmatprep.mubr.f32.mxu0 0.0
      %4671 = vmatmul.mubr.f32.gmra.mrb[0].mxu0 %v4234
      %v4672 = vpop.f32.mrb[0].mxu0
      %v4673 = vadd.f32 0.0, %v4672
      %v4674 = vpop.f32.mrb[0].mxu0
      %4675 = vmatprep.mubr.f32.mxu0 0.0
      %4676 = vmatmul.mubr.f32.gmra.mrb[0].mxu0 %v4237
      %v4677 = vpop.f32.mrb[0].mxu0
      %v4678 = vadd.f32 0.0, %v4677
      %v4679 = vpop.f32.mrb[0].mxu0
      %4680 = vmatprep.mubr.f32.mxu0 0.0
      %4681 = vmatmul.mubr.f32.gmra.mrb[0].mxu0 %v4240
      %v4682 = vpop.f32.mrb[0].mxu0
      %v4683 = vadd.f32 0.0, %v4682
      %v4684 = vpop.f32.mrb[0].mxu0
      %4685 = vmatprep.mubr.f32.mxu0 0.0
      %4686 = vmatmul.mubr.f32.gmra.mrb[0].mxu0 %v4243
      %v4687 = vpop.f32.mrb[0].mxu0
      %v4688 = vadd.f32 0.0, %v4687
      %v4689 = vpop.f32.mrb[0].mxu0
      %4690 = vmatprep.mubr.f32.mxu0 0.0
      %4691 = vmatmul.mubr.f32.gmra.mrb[0].mxu0 %v4246
      %v4692 = vpop.f32.mrb[0].mxu0
      %v4693 = vadd.f32 0.0, %v4692
      %v4694 = vpop.f32.mrb[0].mxu0
      %4695 = vmatprep.mubr.f32.mxu0 0.0
      %4696 = vmatmul.mubr.f32.gmra.mrb[0].mxu0 %v4249
      %v4697 = vpop.f32.mrb[0].mxu0
      %v4698 = vadd.f32 0.0, %v4697
      %v4699 = vpop.f32.mrb[0].mxu0
      %4700 = vmatprep.mubr.f32.mxu0 0.0
      %4701 = vmatmul.mubr.f32.gmra.mrb[0].mxu0 %v4252
      %v4702 = vpop.f32.mrb[0].mxu0
      %v4703 = vadd.f32 0.0, %v4702
      %v4704 = vpop.f32.mrb[0].mxu0
      %4705 = vmatprep.mubr.f32.mxu0 0.0
      %4706 = vmatmul.mubr.f32.gmra.mrb[0].mxu0 %v4255
      %v4707 = vpop.f32.mrb[0].mxu0
      %v4708 = vadd.f32 0.0, %v4707
      %v4709 = vpop.f32.mrb[0].mxu0
      %4710 = vmatprep.mubr.f32.mxu0 0.0
      %4711 = vmatmul.mubr.f32.gmra.mrb[0].mxu0 %v4258
      %v4712 = vpop.f32.mrb[0].mxu0
      %v4713 = vadd.f32 0.0, %v4712
      %v4714 = vpop.f32.mrb[0].mxu0
      %4715 = vmatprep.mubr.f32.mxu0 0.0
      %4716 = vmatmul.mubr.f32.gmra.mrb[0].mxu0 %v4261
      %v4717 = vpop.f32.mrb[0].mxu0
      %v4718 = vadd.f32 0.0, %v4717
      %v4719 = vpop.f32.mrb[0].mxu0
      %4720 = vmatprep.mubr.f32.mxu0 0.0
      %4721 = vmatmul.mubr.f32.gmra.mrb[0].mxu0 %v4264
      %v4722 = vpop.f32.mrb[0].mxu0
      %v4723 = vadd.f32 0.0, %v4722
      %v4724 = vpop.f32.mrb[0].mxu0
      %4725 = vmatprep.mubr.f32.mxu0 0.0
      %4726 = vmatmul.mubr.f32.gmra.mrb[0].mxu0 %v4267
      %v4727 = vpop.f32.mrb[0].mxu0
      %v4728 = vadd.f32 0.0, %v4727
      %v4729 = vpop.f32.mrb[0].mxu0
      %4730 = vmatprep.mubr.f32.mxu0 0.0
      %4731 = vmatmul.mubr.f32.gmra.mrb[0].mxu0 %v4270
      %v4732 = vpop.f32.mrb[0].mxu0
      %v4733 = vadd.f32 0.0, %v4732
      %v4734 = vpop.f32.mrb[0].mxu0
      %4735 = vmatprep.mubr.f32.mxu0 0.0
      %4736 = vmatmul.mubr.f32.gmra.mrb[0].mxu0 %v4273
      %v4737 = vpop.f32.mrb[0].mxu0
      %v4738 = vadd.f32 0.0, %v4737
      %v4739 = vpop.f32.mrb[0].mxu0
      %4740 = vmatprep.mubr.f32.mxu0 0.0
      %4741 = vmatmul.mubr.f32.gmra.mrb[0].mxu0 %v4276
      %v4742 = vpop.f32.mrb[0].mxu0
      %v4743 = vadd.f32 0.0, %v4742
      %v4744 = vpop.f32.mrb[0].mxu0
      %4745 = vmatprep.mubr.f32.mxu0 0.0
      %4746 = vmatmul.mubr.f32.gmra.mrb[0].mxu0 %v4279
      %v4747 = vpop.f32.mrb[0].mxu0
      %v4748 = vadd.f32 0.0, %v4747
      %v4749 = vpop.f32.mrb[0].mxu0
      %4750 = vmatprep.mubr.f32.mxu0 0.0
      %4751 = vmatmul.mubr.f32.gmra.mrb[0].mxu0 %v4282
      %v4752 = vpop.f32.mrb[0].mxu0
      %v4753 = vadd.f32 0.0, %v4752
      %v4754 = vpop.f32.mrb[0].mxu0
      %4755 = vmatprep.mubr.f32.mxu0 0.0
      %4756 = vmatmul.mubr.f32.gmra.mrb[0].mxu0 %v4285
      %v4757 = vpop.f32.mrb[0].mxu0
      %v4758 = vadd.f32 0.0, %v4757
      %v4759 = vpop.f32.mrb[0].mxu0
      %4760 = vmatprep.mubr.f32.mxu0 0.0
      %4761 = vmatmul.mubr.f32.gmra.mrb[0].mxu0 %v4288
      %v4762 = vpop.f32.mrb[0].mxu0
      %v4763 = vadd.f32 0.0, %v4762
      %v4764 = vpop.f32.mrb[0].mxu0
      %4765 = vmatprep.mubr.f32.mxu0 0.0
      %4766 = vmatmul.mubr.f32.gmra.mrb[0].mxu0 %v4291
      %v4767 = vpop.f32.mrb[0].mxu0
      %v4768 = vadd.f32 0.0, %v4767
      %v4769 = vpop.f32.mrb[0].mxu0
      %4770 = vmatprep.mubr.f32.mxu0 0.0
      %4771 = vmatmul.mubr.f32.gmra.mrb[0].mxu0 %v4294
      %v4772 = vpop.f32.mrb[0].mxu0
      %v4773 = vadd.f32 0.0, %v4772
      %v4774 = vpop.f32.mrb[0].mxu0
      %4775 = vmatprep.mubr.f32.mxu0 0.0
      %4776 = vmatmul.mubr.f32.gmra.mrb[0].mxu0 %v4297
      %v4777 = vpop.f32.mrb[0].mxu0
      %v4778 = vadd.f32 0.0, %v4777
      %v4779 = vpop.f32.mrb[0].mxu0
      %4780 = vmatprep.mubr.f32.mxu0 0.0
      %4781 = vmatmul.mubr.f32.gmra.mrb[0].mxu0 %v4300
      %v4782 = vpop.f32.mrb[0].mxu0
      %v4783 = vadd.f32 0.0, %v4782
      %v4784 = vpop.f32.mrb[0].mxu0
      %4785 = vmatprep.mubr.f32.mxu0 0.0
      %4786 = vmatmul.mubr.f32.gmra.mrb[0].mxu0 %v4563
      %v4787 = vpop.f32.mrb[0].mxu0
      %v4788 = vadd.f32 0.0, %v4787
      %v4789 = vpop.f32.mrb[0].mxu0
      %4790 = vmatprep.mubr.f32.mxu0 0.0
      %4791 = vmatmul.mubr.f32.gmra.mrb[0].mxu0 %v4566
      %v4792 = vpop.f32.mrb[0].mxu0
      %v4793 = vadd.f32 0.0, %v4792
      %v4794 = vpop.f32.mrb[0].mxu0
      %4795 = vdwg.mxu0
      %v4796 = vadd.f32 %v4530, %v4638
      %v4797 = vadd.f32 %v4531, %v4643
      %v4798 = vadd.f32 %v4532, %v4648
      %v4799 = vadd.f32 %v4533, %v4653
      %v4800 = vadd.f32 %v4534, %v4658
      %v4801 = vadd.f32 %v4535, %v4663
      %v4802 = vadd.f32 %v4536, %v4668
      %v4803 = vadd.f32 %v4537, %v4673
      %v4804 = vadd.f32 %v4538, %v4678
      %v4805 = vadd.f32 %v4539, %v4683
      %v4806 = vadd.f32 %v4540, %v4688
      %v4807 = vadd.f32 %v4541, %v4693
      %v4808 = vadd.f32 %v4542, %v4698
      %v4809 = vadd.f32 %v4543, %v4703
      %v4810 = vadd.f32 %v4544, %v4708
      %v4811 = vadd.f32 %v4545, %v4713
      %v4812 = vadd.f32 %v4546, %v4718
      %v4813 = vadd.f32 %v4547, %v4723
      %v4814 = vadd.f32 %v4548, %v4728
      %v4815 = vadd.f32 %v4549, %v4733
      %v4816 = vadd.f32 %v4550, %v4738
      %v4817 = vadd.f32 %v4551, %v4743
      %v4818 = vadd.f32 %v4552, %v4748
      %v4819 = vadd.f32 %v4553, %v4753
      %v4820 = vadd.f32 %v4554, %v4758
      %v4821 = vadd.f32 %v4555, %v4763
      %v4822 = vadd.f32 %v4556, %v4768
      %v4823 = vadd.f32 %v4557, %v4773
      %v4824 = vadd.f32 %v4558, %v4778
      %v4825 = vadd.f32 %v4559, %v4783
      %v4826 = vadd.f32 %v4560, %v4788
      %v4827 = vadd.f32 %v4561, %v4793
      %v4829 = vsel %vm171, %v4204, 0
      %v4832 = vsel %vm171, %v4205, 0
      %v4835 = vsel %vm419, %v3308, 0
      %4837 = vmatprep.subr.mxu0 0.0
      %4838 = vmatpush1.msra.mxu0 %v4835
      %4839 = vmatprep.subr.mxu0 0.0
      %4840 = vmatpush1.msra.mxu0 0.0
      %4841 = vmatprep.subr.mxu0 0.0
      %4842 = vmatpush1.msra.mxu0 0.0
      %4843 = vmatprep.subr.mxu0 0.0
      %4844 = vmatpush1.msra.mxu0 0.0
      %4845 = vmatprep.subr.mxu0 0.0
      %4846 = vmatpush1.msra.mxu0 0.0
      %4847 = vmatprep.subr.mxu0 0.0
      %4848 = vmatpush1.msra.mxu0 0.0
      %4849 = vmatprep.subr.mxu0 0.0
      %4850 = vmatpush1.msra.mxu0 0.0
      %4851 = vmatprep.subr.mxu0 0.0
      %4852 = vmatpush1.msra.mxu0 0.0
      %4853 = vmatprep.subr.mxu0 0.0
      %4854 = vmatpush1.msra.mxu0 0.0
      %4855 = vmatprep.subr.mxu0 0.0
      %4856 = vmatpush1.msra.mxu0 0.0
      %4857 = vmatprep.subr.mxu0 0.0
      %4858 = vmatpush1.msra.mxu0 0.0
      %4859 = vmatprep.subr.mxu0 0.0
      %4860 = vmatpush1.msra.mxu0 0.0
      %4861 = vmatprep.subr.mxu0 0.0
      %4862 = vmatpush1.msra.mxu0 0.0
      %4863 = vmatprep.subr.mxu0 0.0
      %4864 = vmatpush1.msra.mxu0 0.0
      %4865 = vmatprep.subr.mxu0 0.0
      %4866 = vmatpush1.msra.mxu0 0.0
      %4867 = vmatprep.subr.mxu0 0.0
      %4868 = vmatpush1.msra.mxu0 0.0
      %4869 = vmatprep.subr.mxu0 0.0
      %4870 = vmatpush1.msra.mxu0 0.0
      %4871 = vmatprep.subr.mxu0 0.0
      %4872 = vmatpush1.msra.mxu0 0.0
      %4873 = vmatprep.subr.mxu0 0.0
      %4874 = vmatpush1.msra.mxu0 0.0
      %4875 = vmatprep.subr.mxu0 0.0
      %4876 = vmatpush1.msra.mxu0 0.0
      %4877 = vmatprep.subr.mxu0 0.0
      %4878 = vmatpush1.msra.mxu0 0.0
      %4879 = vmatprep.subr.mxu0 0.0
      %4880 = vmatpush1.msra.mxu0 0.0
      %4881 = vmatprep.subr.mxu0 0.0
      %4882 = vmatpush1.msra.mxu0 0.0
      %4883 = vmatprep.subr.mxu0 0.0
      %4884 = vmatpush1.msra.mxu0 0.0
      %4885 = vmatprep.subr.mxu0 0.0
      %4886 = vmatpush1.msra.mxu0 0.0
      %4887 = vmatprep.subr.mxu0 0.0
      %4888 = vmatpush1.msra.mxu0 0.0
      %4889 = vmatprep.subr.mxu0 0.0
      %4890 = vmatpush1.msra.mxu0 0.0
      %4891 = vmatprep.subr.mxu0 0.0
      %4892 = vmatpush1.msra.mxu0 0.0
      %4893 = vmatprep.subr.mxu0 0.0
      %4894 = vmatpush1.msra.mxu0 0.0
      %4895 = vmatprep.subr.mxu0 0.0
      %4896 = vmatpush1.msra.mxu0 0.0
      %4897 = vmatprep.subr.mxu0 0.0
      %4898 = vmatpush1.msra.mxu0 0.0
      %4899 = vmatprep.subr.mxu0 0.0
      %4900 = vmatpush1.msra.mxu0 0.0
      %4901 = vmatprep.mubr.f32.mxu0 0.0
      %4902 = vmatmul.mubr.f32.gmra.mrb[0].mxu0 %v4219
      %v4903 = vpop.f32.mrb[0].mxu0
      %v4904 = vadd.f32 0.0, %v4903
      %v4905 = vpop.f32.mrb[0].mxu0
      %4906 = vmatprep.mubr.f32.mxu0 0.0
      %4907 = vmatmul.mubr.f32.gmra.mrb[0].mxu0 %v4222
      %v4908 = vpop.f32.mrb[0].mxu0
      %v4909 = vadd.f32 0.0, %v4908
      %v4910 = vpop.f32.mrb[0].mxu0
      %4911 = vmatprep.mubr.f32.mxu0 0.0
      %4912 = vmatmul.mubr.f32.gmra.mrb[0].mxu0 %v4225
      %v4913 = vpop.f32.mrb[0].mxu0
      %v4914 = vadd.f32 0.0, %v4913
      %v4915 = vpop.f32.mrb[0].mxu0
      %4916 = vmatprep.mubr.f32.mxu0 0.0
      %4917 = vmatmul.mubr.f32.gmra.mrb[0].mxu0 %v4228
      %v4918 = vpop.f32.mrb[0].mxu0
      %v4919 = vadd.f32 0.0, %v4918
      %v4920 = vpop.f32.mrb[0].mxu0
      %4921 = vmatprep.mubr.f32.mxu0 0.0
      %4922 = vmatmul.mubr.f32.gmra.mrb[0].mxu0 %v4231
      %v4923 = vpop.f32.mrb[0].mxu0
      %v4924 = vadd.f32 0.0, %v4923
      %v4925 = vpop.f32.mrb[0].mxu0
      %4926 = vmatprep.mubr.f32.mxu0 0.0
      %4927 = vmatmul.mubr.f32.gmra.mrb[0].mxu0 %v4234
      %v4928 = vpop.f32.mrb[0].mxu0
      %v4929 = vadd.f32 0.0, %v4928
      %v4930 = vpop.f32.mrb[0].mxu0
      %4931 = vmatprep.mubr.f32.mxu0 0.0
      %4932 = vmatmul.mubr.f32.gmra.mrb[0].mxu0 %v4237
      %v4933 = vpop.f32.mrb[0].mxu0
      %v4934 = vadd.f32 0.0, %v4933
      %v4935 = vpop.f32.mrb[0].mxu0
      %4936 = vmatprep.mubr.f32.mxu0 0.0
      %4937 = vmatmul.mubr.f32.gmra.mrb[0].mxu0 %v4240
      %v4938 = vpop.f32.mrb[0].mxu0
      %v4939 = vadd.f32 0.0, %v4938
      %v4940 = vpop.f32.mrb[0].mxu0
      %4941 = vmatprep.mubr.f32.mxu0 0.0
      %4942 = vmatmul.mubr.f32.gmra.mrb[0].mxu0 %v4243
      %v4943 = vpop.f32.mrb[0].mxu0
      %v4944 = vadd.f32 0.0, %v4943
      %v4945 = vpop.f32.mrb[0].mxu0
      %4946 = vmatprep.mubr.f32.mxu0 0.0
      %4947 = vmatmul.mubr.f32.gmra.mrb[0].mxu0 %v4246
      %v4948 = vpop.f32.mrb[0].mxu0
      %v4949 = vadd.f32 0.0, %v4948
      %v4950 = vpop.f32.mrb[0].mxu0
      %4951 = vmatprep.mubr.f32.mxu0 0.0
      %4952 = vmatmul.mubr.f32.gmra.mrb[0].mxu0 %v4249
      %v4953 = vpop.f32.mrb[0].mxu0
      %v4954 = vadd.f32 0.0, %v4953
      %v4955 = vpop.f32.mrb[0].mxu0
      %4956 = vmatprep.mubr.f32.mxu0 0.0
      %4957 = vmatmul.mubr.f32.gmra.mrb[0].mxu0 %v4252
      %v4958 = vpop.f32.mrb[0].mxu0
      %v4959 = vadd.f32 0.0, %v4958
      %v4960 = vpop.f32.mrb[0].mxu0
      %4961 = vmatprep.mubr.f32.mxu0 0.0
      %4962 = vmatmul.mubr.f32.gmra.mrb[0].mxu0 %v4255
      %v4963 = vpop.f32.mrb[0].mxu0
      %v4964 = vadd.f32 0.0, %v4963
      %v4965 = vpop.f32.mrb[0].mxu0
      %4966 = vmatprep.mubr.f32.mxu0 0.0
      %4967 = vmatmul.mubr.f32.gmra.mrb[0].mxu0 %v4258
      %v4968 = vpop.f32.mrb[0].mxu0
      %v4969 = vadd.f32 0.0, %v4968
      %v4970 = vpop.f32.mrb[0].mxu0
      %4971 = vmatprep.mubr.f32.mxu0 0.0
      %4972 = vmatmul.mubr.f32.gmra.mrb[0].mxu0 %v4261
      %v4973 = vpop.f32.mrb[0].mxu0
      %v4974 = vadd.f32 0.0, %v4973
      %v4975 = vpop.f32.mrb[0].mxu0
      %4976 = vmatprep.mubr.f32.mxu0 0.0
      %4977 = vmatmul.mubr.f32.gmra.mrb[0].mxu0 %v4264
      %v4978 = vpop.f32.mrb[0].mxu0
      %v4979 = vadd.f32 0.0, %v4978
      %v4980 = vpop.f32.mrb[0].mxu0
      %4981 = vmatprep.mubr.f32.mxu0 0.0
      %4982 = vmatmul.mubr.f32.gmra.mrb[0].mxu0 %v4267
      %v4983 = vpop.f32.mrb[0].mxu0
      %v4984 = vadd.f32 0.0, %v4983
      %v4985 = vpop.f32.mrb[0].mxu0
      %4986 = vmatprep.mubr.f32.mxu0 0.0
      %4987 = vmatmul.mubr.f32.gmra.mrb[0].mxu0 %v4270
      %v4988 = vpop.f32.mrb[0].mxu0
      %v4989 = vadd.f32 0.0, %v4988
      %v4990 = vpop.f32.mrb[0].mxu0
      %4991 = vmatprep.mubr.f32.mxu0 0.0
      %4992 = vmatmul.mubr.f32.gmra.mrb[0].mxu0 %v4273
      %v4993 = vpop.f32.mrb[0].mxu0
      %v4994 = vadd.f32 0.0, %v4993
      %v4995 = vpop.f32.mrb[0].mxu0
      %4996 = vmatprep.mubr.f32.mxu0 0.0
      %4997 = vmatmul.mubr.f32.gmra.mrb[0].mxu0 %v4276
      %v4998 = vpop.f32.mrb[0].mxu0
      %v4999 = vadd.f32 0.0, %v4998
      %v5000 = vpop.f32.mrb[0].mxu0
      %5001 = vmatprep.mubr.f32.mxu0 0.0
      %5002 = vmatmul.mubr.f32.gmra.mrb[0].mxu0 %v4279
      %v5003 = vpop.f32.mrb[0].mxu0
      %v5004 = vadd.f32 0.0, %v5003
      %v5005 = vpop.f32.mrb[0].mxu0
      %5006 = vmatprep.mubr.f32.mxu0 0.0
      %5007 = vmatmul.mubr.f32.gmra.mrb[0].mxu0 %v4282
      %v5008 = vpop.f32.mrb[0].mxu0
      %v5009 = vadd.f32 0.0, %v5008
      %v5010 = vpop.f32.mrb[0].mxu0
      %5011 = vmatprep.mubr.f32.mxu0 0.0
      %5012 = vmatmul.mubr.f32.gmra.mrb[0].mxu0 %v4285
      %v5013 = vpop.f32.mrb[0].mxu0
      %v5014 = vadd.f32 0.0, %v5013
      %v5015 = vpop.f32.mrb[0].mxu0
      %5016 = vmatprep.mubr.f32.mxu0 0.0
      %5017 = vmatmul.mubr.f32.gmra.mrb[0].mxu0 %v4288
      %v5018 = vpop.f32.mrb[0].mxu0
      %v5019 = vadd.f32 0.0, %v5018
      %v5020 = vpop.f32.mrb[0].mxu0
      %5021 = vmatprep.mubr.f32.mxu0 0.0
      %5022 = vmatmul.mubr.f32.gmra.mrb[0].mxu0 %v4291
      %v5023 = vpop.f32.mrb[0].mxu0
      %v5024 = vadd.f32 0.0, %v5023
      %v5025 = vpop.f32.mrb[0].mxu0
      %5026 = vmatprep.mubr.f32.mxu0 0.0
      %5027 = vmatmul.mubr.f32.gmra.mrb[0].mxu0 %v4294
      %v5028 = vpop.f32.mrb[0].mxu0
      %v5029 = vadd.f32 0.0, %v5028
      %v5030 = vpop.f32.mrb[0].mxu0
      %5031 = vmatprep.mubr.f32.mxu0 0.0
      %5032 = vmatmul.mubr.f32.gmra.mrb[0].mxu0 %v4297
      %v5033 = vpop.f32.mrb[0].mxu0
      %v5034 = vadd.f32 0.0, %v5033
      %v5035 = vpop.f32.mrb[0].mxu0
      %5036 = vmatprep.mubr.f32.mxu0 0.0
      %5037 = vmatmul.mubr.f32.gmra.mrb[0].mxu0 %v4300
      %v5038 = vpop.f32.mrb[0].mxu0
      %v5039 = vadd.f32 0.0, %v5038
      %v5040 = vpop.f32.mrb[0].mxu0
      %5041 = vmatprep.mubr.f32.mxu0 0.0
      %5042 = vmatmul.mubr.f32.gmra.mrb[0].mxu0 %v4563
      %v5043 = vpop.f32.mrb[0].mxu0
      %v5044 = vadd.f32 0.0, %v5043
      %v5045 = vpop.f32.mrb[0].mxu0
      %5046 = vmatprep.mubr.f32.mxu0 0.0
      %5047 = vmatmul.mubr.f32.gmra.mrb[0].mxu0 %v4566
      %v5048 = vpop.f32.mrb[0].mxu0
      %v5049 = vadd.f32 0.0, %v5048
      %v5050 = vpop.f32.mrb[0].mxu0
      %5051 = vmatprep.mubr.f32.mxu0 0.0
      %5052 = vmatmul.mubr.f32.gmra.mrb[0].mxu0 %v4829
      %v5053 = vpop.f32.mrb[0].mxu0
      %v5054 = vadd.f32 0.0, %v5053
      %v5055 = vpop.f32.mrb[0].mxu0
      %5056 = vmatprep.mubr.f32.mxu0 0.0
      %5057 = vmatmul.mubr.f32.gmra.mrb[0].mxu0 %v4832
      %v5058 = vpop.f32.mrb[0].mxu0
      %v5059 = vadd.f32 0.0, %v5058
      %v5060 = vpop.f32.mrb[0].mxu0
      %5061 = vdwg.mxu0
      %v5062 = vadd.f32 %v4796, %v4904
      %v5063 = vadd.f32 %v4797, %v4909
      %v5064 = vadd.f32 %v4798, %v4914
      %v5065 = vadd.f32 %v4799, %v4919
      %v5066 = vadd.f32 %v4800, %v4924
      %v5067 = vadd.f32 %v4801, %v4929
      %v5068 = vadd.f32 %v4802, %v4934
      %v5069 = vadd.f32 %v4803, %v4939
      %v5070 = vadd.f32 %v4804, %v4944
      %v5071 = vadd.f32 %v4805, %v4949
      %v5072 = vadd.f32 %v4806, %v4954
      %v5073 = vadd.f32 %v4807, %v4959
      %v5074 = vadd.f32 %v4808, %v4964
      %v5075 = vadd.f32 %v4809, %v4969
      %v5076 = vadd.f32 %v4810, %v4974
      %v5077 = vadd.f32 %v4811, %v4979
      %v5078 = vadd.f32 %v4812, %v4984
      %v5079 = vadd.f32 %v4813, %v4989
      %v5080 = vadd.f32 %v4814, %v4994
      %v5081 = vadd.f32 %v4815, %v4999
      %v5082 = vadd.f32 %v4816, %v5004
      %v5083 = vadd.f32 %v4817, %v5009
      %v5084 = vadd.f32 %v4818, %v5014
      %v5085 = vadd.f32 %v4819, %v5019
      %v5086 = vadd.f32 %v4820, %v5024
      %v5087 = vadd.f32 %v4821, %v5029
      %v5088 = vadd.f32 %v4822, %v5034
      %v5089 = vadd.f32 %v4823, %v5039
      %v5090 = vadd.f32 %v4824, %v5044
      %v5091 = vadd.f32 %v4825, %v5049
      %v5092 = vadd.f32 %v4826, %v5054
      %v5093 = vadd.f32 %v4827, %v5059
      %v5094 = vld [vmem:[#allocation2 + $0x9] sm:$0xff]
      %v5095 = vld [vmem:[#allocation2 + $0x11] sm:$0xff]
      %v5096 = vld [vmem:[#allocation2 + $0x29] sm:$0xff]
      %v5097 = vld [vmem:[#allocation2 + $0x31] sm:$0xff]
      %v5098 = vld [vmem:[#allocation2 + $0x49] sm:$0xff]
      %v5099 = vld [vmem:[#allocation2 + $0x51] sm:$0xff]
      %v5100 = vld [vmem:[#allocation2 + $0x69] sm:$0xff]
      %v5101 = vld [vmem:[#allocation2 + $0x71] sm:$0xff]
      %v5102 = vld [vmem:[#allocation2 + $0x89] sm:$0xff]
      %v5103 = vld [vmem:[#allocation2 + $0x91] sm:$0xff]
      %v5104 = vld [vmem:[#allocation2 + $0xa9] sm:$0xff]
      %v5105 = vld [vmem:[#allocation2 + $0xb1] sm:$0xff]
      %v5106 = vld [vmem:[#allocation2 + $0xc9] sm:$0xff]
      %v5107 = vld [vmem:[#allocation2 + $0xd1] sm:$0xff]
      %v5108 = vld [vmem:[#allocation2 + $0xe9] sm:$0xff]
      %v5109 = vld [vmem:[#allocation2 + $0xf1] sm:$0xff]
      %v5110 = vld [vmem:[#allocation2 + $0x109] sm:$0xff]
      %v5111 = vld [vmem:[#allocation2 + $0x111] sm:$0xff]
      %v5112 = vld [vmem:[#allocation2 + $0x129] sm:$0xff]
      %v5113 = vld [vmem:[#allocation2 + $0x131] sm:$0xff]
      %v5114 = vld [vmem:[#allocation2 + $0x149] sm:$0xff]
      %v5115 = vld [vmem:[#allocation2 + $0x151] sm:$0xff]
      %v5116 = vld [vmem:[#allocation2 + $0x169] sm:$0xff]
      %v5117 = vld [vmem:[#allocation2 + $0x171] sm:$0xff]
      %v5118 = vld [vmem:[#allocation2 + $0x189] sm:$0xff]
      %v5119 = vld [vmem:[#allocation2 + $0x191] sm:$0xff]
      %v5120 = vld [vmem:[#allocation2 + $0x1a9] sm:$0xff]
      %v5121 = vld [vmem:[#allocation2 + $0x1b1] sm:$0xff]
      %v5122 = vld [vmem:[#allocation2 + $0x1c9] sm:$0xff]
      %v5123 = vld [vmem:[#allocation2 + $0x1d1] sm:$0xff]
      %v5124 = vld [vmem:[#allocation2 + $0x1e9] sm:$0xff]
      %v5125 = vld [vmem:[#allocation2 + $0x1f1] sm:$0xff]
      %v5126 = vld [vmem:[#allocation2 + $0x209] sm:$0xff]
      %v5127 = vld [vmem:[#allocation2 + $0x211] sm:$0xff]
      %v5128 = vld [vmem:[#allocation2 + $0x229] sm:$0xff]
      %v5129 = vld [vmem:[#allocation2 + $0x231] sm:$0xff]
      %v5131 = vsel %vm171, %v5094, 0
      %v5134 = vsel %vm171, %v5095, 0
      %v5137 = vsel %vm171, %v5096, 0
      %v5140 = vsel %vm171, %v5097, 0
      %v5143 = vsel %vm171, %v5098, 0
      %v5146 = vsel %vm171, %v5099, 0
      %v5149 = vsel %vm171, %v5100, 0
      %v5152 = vsel %vm171, %v5101, 0
      %v5155 = vsel %vm171, %v5102, 0
      %v5158 = vsel %vm171, %v5103, 0
      %v5161 = vsel %vm171, %v5104, 0
      %v5164 = vsel %vm171, %v5105, 0
      %v5167 = vsel %vm171, %v5106, 0
      %v5170 = vsel %vm171, %v5107, 0
      %v5173 = vsel %vm171, %v5108, 0
      %v5176 = vsel %vm171, %v5109, 0
      %v5179 = vsel %vm171, %v5110, 0
      %v5182 = vsel %vm171, %v5111, 0
      %v5185 = vsel %vm171, %v5112, 0
      %v5188 = vsel %vm171, %v5113, 0
      %v5191 = vsel %vm171, %v5114, 0
      %v5194 = vsel %vm171, %v5115, 0
      %v5197 = vsel %vm171, %v5116, 0
      %v5200 = vsel %vm171, %v5117, 0
      %v5203 = vsel %vm171, %v5118, 0
      %v5206 = vsel %vm171, %v5119, 0
      %v5209 = vsel %vm171, %v5120, 0
      %v5212 = vsel %vm171, %v5121, 0
      %v5215 = vsel %vm171, %v5122, 0
      %v5218 = vsel %vm171, %v5123, 0
      %v5221 = vsel %vm171, %v5124, 0
      %v5224 = vsel %vm171, %v5125, 0
      %v5227 = vsel %vm419, %v3303, 0
      %5229 = vmatprep.subr.mxu0 0.0
      %5230 = vmatpush1.msra.mxu0 %v5227
      %5231 = vmatprep.subr.mxu0 0.0
      %5232 = vmatpush1.msra.mxu0 0.0
      %5233 = vmatprep.subr.mxu0 0.0
      %5234 = vmatpush1.msra.mxu0 0.0
      %5235 = vmatprep.subr.mxu0 0.0
      %5236 = vmatpush1.msra.mxu0 0.0
      %5237 = vmatprep.subr.mxu0 0.0
      %5238 = vmatpush1.msra.mxu0 0.0
      %5239 = vmatprep.subr.mxu0 0.0
      %5240 = vmatpush1.msra.mxu0 0.0
      %5241 = vmatprep.subr.mxu0 0.0
      %5242 = vmatpush1.msra.mxu0 0.0
      %5243 = vmatprep.subr.mxu0 0.0
      %5244 = vmatpush1.msra.mxu0 0.0
      %5245 = vmatprep.subr.mxu0 0.0
      %5246 = vmatpush1.msra.mxu0 0.0
      %5247 = vmatprep.subr.mxu0 0.0
      %5248 = vmatpush1.msra.mxu0 0.0
      %5249 = vmatprep.subr.mxu0 0.0
      %5250 = vmatpush1.msra.mxu0 0.0
      %5251 = vmatprep.subr.mxu0 0.0
      %5252 = vmatpush1.msra.mxu0 0.0
      %5253 = vmatprep.subr.mxu0 0.0
      %5254 = vmatpush1.msra.mxu0 0.0
      %5255 = vmatprep.subr.mxu0 0.0
      %5256 = vmatpush1.msra.mxu0 0.0
      %5257 = vmatprep.subr.mxu0 0.0
      %5258 = vmatpush1.msra.mxu0 0.0
      %5259 = vmatprep.subr.mxu0 0.0
      %5260 = vmatpush1.msra.mxu0 0.0
      %5261 = vmatprep.subr.mxu0 0.0
      %5262 = vmatpush1.msra.mxu0 0.0
      %5263 = vmatprep.subr.mxu0 0.0
      %5264 = vmatpush1.msra.mxu0 0.0
      %5265 = vmatprep.subr.mxu0 0.0
      %5266 = vmatpush1.msra.mxu0 0.0
      %5267 = vmatprep.subr.mxu0 0.0
      %5268 = vmatpush1.msra.mxu0 0.0
      %5269 = vmatprep.subr.mxu0 0.0
      %5270 = vmatpush1.msra.mxu0 0.0
      %5271 = vmatprep.subr.mxu0 0.0
      %5272 = vmatpush1.msra.mxu0 0.0
      %5273 = vmatprep.subr.mxu0 0.0
      %5274 = vmatpush1.msra.mxu0 0.0
      %5275 = vmatprep.subr.mxu0 0.0
      %5276 = vmatpush1.msra.mxu0 0.0
      %5277 = vmatprep.subr.mxu0 0.0
      %5278 = vmatpush1.msra.mxu0 0.0
      %5279 = vmatprep.subr.mxu0 0.0
      %5280 = vmatpush1.msra.mxu0 0.0
      %5281 = vmatprep.subr.mxu0 0.0
      %5282 = vmatpush1.msra.mxu0 0.0
      %5283 = vmatprep.subr.mxu0 0.0
      %5284 = vmatpush1.msra.mxu0 0.0
      %5285 = vmatprep.subr.mxu0 0.0
      %5286 = vmatpush1.msra.mxu0 0.0
      %5287 = vmatprep.subr.mxu0 0.0
      %5288 = vmatpush1.msra.mxu0 0.0
      %5289 = vmatprep.subr.mxu0 0.0
      %5290 = vmatpush1.msra.mxu0 0.0
      %5291 = vmatprep.subr.mxu0 0.0
      %5292 = vmatpush1.msra.mxu0 0.0
      %5293 = vmatprep.mubr.f32.mxu0 0.0
      %5294 = vmatmul.mubr.f32.gmra.mrb[0].mxu0 %v5131
      %v5295 = vpop.f32.mrb[0].mxu0
      %v5296 = vadd.f32 0.0, %v5295
      %v5297 = vpop.f32.mrb[0].mxu0
      %5298 = vmatprep.mubr.f32.mxu0 0.0
      %5299 = vmatmul.mubr.f32.gmra.mrb[0].mxu0 %v5134
      %v5300 = vpop.f32.mrb[0].mxu0
      %v5301 = vadd.f32 0.0, %v5300
      %v5302 = vpop.f32.mrb[0].mxu0
      %5303 = vmatprep.mubr.f32.mxu0 0.0
      %5304 = vmatmul.mubr.f32.gmra.mrb[0].mxu0 %v5137
      %v5305 = vpop.f32.mrb[0].mxu0
      %v5306 = vadd.f32 0.0, %v5305
      %v5307 = vpop.f32.mrb[0].mxu0
      %5308 = vmatprep.mubr.f32.mxu0 0.0
      %5309 = vmatmul.mubr.f32.gmra.mrb[0].mxu0 %v5140
      %v5310 = vpop.f32.mrb[0].mxu0
      %v5311 = vadd.f32 0.0, %v5310
      %v5312 = vpop.f32.mrb[0].mxu0
      %5313 = vmatprep.mubr.f32.mxu0 0.0
      %5314 = vmatmul.mubr.f32.gmra.mrb[0].mxu0 %v5143
      %v5315 = vpop.f32.mrb[0].mxu0
      %v5316 = vadd.f32 0.0, %v5315
      %v5317 = vpop.f32.mrb[0].mxu0
      %5318 = vmatprep.mubr.f32.mxu0 0.0
      %5319 = vmatmul.mubr.f32.gmra.mrb[0].mxu0 %v5146
      %v5320 = vpop.f32.mrb[0].mxu0
      %v5321 = vadd.f32 0.0, %v5320
      %v5322 = vpop.f32.mrb[0].mxu0
      %5323 = vmatprep.mubr.f32.mxu0 0.0
      %5324 = vmatmul.mubr.f32.gmra.mrb[0].mxu0 %v5149
      %v5325 = vpop.f32.mrb[0].mxu0
      %v5326 = vadd.f32 0.0, %v5325
      %v5327 = vpop.f32.mrb[0].mxu0
      %5328 = vmatprep.mubr.f32.mxu0 0.0
      %5329 = vmatmul.mubr.f32.gmra.mrb[0].mxu0 %v5152
      %v5330 = vpop.f32.mrb[0].mxu0
      %v5331 = vadd.f32 0.0, %v5330
      %v5332 = vpop.f32.mrb[0].mxu0
      %5333 = vmatprep.mubr.f32.mxu0 0.0
      %5334 = vmatmul.mubr.f32.gmra.mrb[0].mxu0 %v5155
      %v5335 = vpop.f32.mrb[0].mxu0
      %v5336 = vadd.f32 0.0, %v5335
      %v5337 = vpop.f32.mrb[0].mxu0
      %5338 = vmatprep.mubr.f32.mxu0 0.0
      %5339 = vmatmul.mubr.f32.gmra.mrb[0].mxu0 %v5158
      %v5340 = vpop.f32.mrb[0].mxu0
      %v5341 = vadd.f32 0.0, %v5340
      %v5342 = vpop.f32.mrb[0].mxu0
      %5343 = vmatprep.mubr.f32.mxu0 0.0
      %5344 = vmatmul.mubr.f32.gmra.mrb[0].mxu0 %v5161
      %v5345 = vpop.f32.mrb[0].mxu0
      %v5346 = vadd.f32 0.0, %v5345
      %v5347 = vpop.f32.mrb[0].mxu0
      %5348 = vmatprep.mubr.f32.mxu0 0.0
      %5349 = vmatmul.mubr.f32.gmra.mrb[0].mxu0 %v5164
      %v5350 = vpop.f32.mrb[0].mxu0
      %v5351 = vadd.f32 0.0, %v5350
      %v5352 = vpop.f32.mrb[0].mxu0
      %5353 = vmatprep.mubr.f32.mxu0 0.0
      %5354 = vmatmul.mubr.f32.gmra.mrb[0].mxu0 %v5167
      %v5355 = vpop.f32.mrb[0].mxu0
      %v5356 = vadd.f32 0.0, %v5355
      %v5357 = vpop.f32.mrb[0].mxu0
      %5358 = vmatprep.mubr.f32.mxu0 0.0
      %5359 = vmatmul.mubr.f32.gmra.mrb[0].mxu0 %v5170
      %v5360 = vpop.f32.mrb[0].mxu0
      %v5361 = vadd.f32 0.0, %v5360
      %v5362 = vpop.f32.mrb[0].mxu0
      %5363 = vmatprep.mubr.f32.mxu0 0.0
      %5364 = vmatmul.mubr.f32.gmra.mrb[0].mxu0 %v5173
      %v5365 = vpop.f32.mrb[0].mxu0
      %v5366 = vadd.f32 0.0, %v5365
      %v5367 = vpop.f32.mrb[0].mxu0
      %5368 = vmatprep.mubr.f32.mxu0 0.0
      %5369 = vmatmul.mubr.f32.gmra.mrb[0].mxu0 %v5176
      %v5370 = vpop.f32.mrb[0].mxu0
      %v5371 = vadd.f32 0.0, %v5370
      %v5372 = vpop.f32.mrb[0].mxu0
      %5373 = vmatprep.mubr.f32.mxu0 0.0
      %5374 = vmatmul.mubr.f32.gmra.mrb[0].mxu0 %v5179
      %v5375 = vpop.f32.mrb[0].mxu0
      %v5376 = vadd.f32 0.0, %v5375
      %v5377 = vpop.f32.mrb[0].mxu0
      %5378 = vmatprep.mubr.f32.mxu0 0.0
      %5379 = vmatmul.mubr.f32.gmra.mrb[0].mxu0 %v5182
      %v5380 = vpop.f32.mrb[0].mxu0
      %v5381 = vadd.f32 0.0, %v5380
      %v5382 = vpop.f32.mrb[0].mxu0
      %5383 = vmatprep.mubr.f32.mxu0 0.0
      %5384 = vmatmul.mubr.f32.gmra.mrb[0].mxu0 %v5185
      %v5385 = vpop.f32.mrb[0].mxu0
      %v5386 = vadd.f32 0.0, %v5385
      %v5387 = vpop.f32.mrb[0].mxu0
      %5388 = vmatprep.mubr.f32.mxu0 0.0
      %5389 = vmatmul.mubr.f32.gmra.mrb[0].mxu0 %v5188
      %v5390 = vpop.f32.mrb[0].mxu0
      %v5391 = vadd.f32 0.0, %v5390
      %v5392 = vpop.f32.mrb[0].mxu0
      %5393 = vmatprep.mubr.f32.mxu0 0.0
      %5394 = vmatmul.mubr.f32.gmra.mrb[0].mxu0 %v5191
      %v5395 = vpop.f32.mrb[0].mxu0
      %v5396 = vadd.f32 0.0, %v5395
      %v5397 = vpop.f32.mrb[0].mxu0
      %5398 = vmatprep.mubr.f32.mxu0 0.0
      %5399 = vmatmul.mubr.f32.gmra.mrb[0].mxu0 %v5194
      %v5400 = vpop.f32.mrb[0].mxu0
      %v5401 = vadd.f32 0.0, %v5400
      %v5402 = vpop.f32.mrb[0].mxu0
      %5403 = vmatprep.mubr.f32.mxu0 0.0
      %5404 = vmatmul.mubr.f32.gmra.mrb[0].mxu0 %v5197
      %v5405 = vpop.f32.mrb[0].mxu0
      %v5406 = vadd.f32 0.0, %v5405
      %v5407 = vpop.f32.mrb[0].mxu0
      %5408 = vmatprep.mubr.f32.mxu0 0.0
      %5409 = vmatmul.mubr.f32.gmra.mrb[0].mxu0 %v5200
      %v5410 = vpop.f32.mrb[0].mxu0
      %v5411 = vadd.f32 0.0, %v5410
      %v5412 = vpop.f32.mrb[0].mxu0
      %5413 = vmatprep.mubr.f32.mxu0 0.0
      %5414 = vmatmul.mubr.f32.gmra.mrb[0].mxu0 %v5203
      %v5415 = vpop.f32.mrb[0].mxu0
      %v5416 = vadd.f32 0.0, %v5415
      %v5417 = vpop.f32.mrb[0].mxu0
      %5418 = vmatprep.mubr.f32.mxu0 0.0
      %5419 = vmatmul.mubr.f32.gmra.mrb[0].mxu0 %v5206
      %v5420 = vpop.f32.mrb[0].mxu0
      %v5421 = vadd.f32 0.0, %v5420
      %v5422 = vpop.f32.mrb[0].mxu0
      %5423 = vmatprep.mubr.f32.mxu0 0.0
      %5424 = vmatmul.mubr.f32.gmra.mrb[0].mxu0 %v5209
      %v5425 = vpop.f32.mrb[0].mxu0
      %v5426 = vadd.f32 0.0, %v5425
      %v5427 = vpop.f32.mrb[0].mxu0
      %5428 = vmatprep.mubr.f32.mxu0 0.0
      %5429 = vmatmul.mubr.f32.gmra.mrb[0].mxu0 %v5212
      %v5430 = vpop.f32.mrb[0].mxu0
      %v5431 = vadd.f32 0.0, %v5430
      %v5432 = vpop.f32.mrb[0].mxu0
      %5433 = vmatprep.mubr.f32.mxu0 0.0
      %5434 = vmatmul.mubr.f32.gmra.mrb[0].mxu0 %v5215
      %v5435 = vpop.f32.mrb[0].mxu0
      %v5436 = vadd.f32 0.0, %v5435
      %v5437 = vpop.f32.mrb[0].mxu0
      %5438 = vmatprep.mubr.f32.mxu0 0.0
      %5439 = vmatmul.mubr.f32.gmra.mrb[0].mxu0 %v5218
      %v5440 = vpop.f32.mrb[0].mxu0
      %v5441 = vadd.f32 0.0, %v5440
      %v5442 = vpop.f32.mrb[0].mxu0
      %5443 = vmatprep.mubr.f32.mxu0 0.0
      %5444 = vmatmul.mubr.f32.gmra.mrb[0].mxu0 %v5221
      %v5445 = vpop.f32.mrb[0].mxu0
      %v5446 = vadd.f32 0.0, %v5445
      %v5447 = vpop.f32.mrb[0].mxu0
      %5448 = vmatprep.mubr.f32.mxu0 0.0
      %5449 = vmatmul.mubr.f32.gmra.mrb[0].mxu0 %v5224
      %v5450 = vpop.f32.mrb[0].mxu0
      %v5451 = vadd.f32 0.0, %v5450
      %v5452 = vpop.f32.mrb[0].mxu0
      %5453 = vdwg.mxu0
      %v5454 = vadd.f32 %v5062, %v5296
      %v5455 = vadd.f32 %v5063, %v5301
      %v5456 = vadd.f32 %v5064, %v5306
      %v5457 = vadd.f32 %v5065, %v5311
      %v5458 = vadd.f32 %v5066, %v5316
      %v5459 = vadd.f32 %v5067, %v5321
      %v5460 = vadd.f32 %v5068, %v5326
      %v5461 = vadd.f32 %v5069, %v5331
      %v5462 = vadd.f32 %v5070, %v5336
      %v5463 = vadd.f32 %v5071, %v5341
      %v5464 = vadd.f32 %v5072, %v5346
      %v5465 = vadd.f32 %v5073, %v5351
      %v5466 = vadd.f32 %v5074, %v5356
      %v5467 = vadd.f32 %v5075, %v5361
      %v5468 = vadd.f32 %v5076, %v5366
      %v5469 = vadd.f32 %v5077, %v5371
      %v5470 = vadd.f32 %v5078, %v5376
      %v5471 = vadd.f32 %v5079, %v5381
      %v5472 = vadd.f32 %v5080, %v5386
      %v5473 = vadd.f32 %v5081, %v5391
      %v5474 = vadd.f32 %v5082, %v5396
      %v5475 = vadd.f32 %v5083, %v5401
      %v5476 = vadd.f32 %v5084, %v5406
      %v5477 = vadd.f32 %v5085, %v5411
      %v5478 = vadd.f32 %v5086, %v5416
      %v5479 = vadd.f32 %v5087, %v5421
      %v5480 = vadd.f32 %v5088, %v5426
      %v5481 = vadd.f32 %v5089, %v5431
      %v5482 = vadd.f32 %v5090, %v5436
      %v5483 = vadd.f32 %v5091, %v5441
      %v5484 = vadd.f32 %v5092, %v5446
      %v5485 = vadd.f32 %v5093, %v5451
      %v5487 = vsel %vm171, %v5126, 0
      %v5490 = vsel %vm171, %v5127, 0
      %v5493 = vsel %vm419, %v3306, 0
      %5495 = vmatprep.subr.mxu0 0.0
      %5496 = vmatpush1.msra.mxu0 %v5493
      %5497 = vmatprep.subr.mxu0 0.0
      %5498 = vmatpush1.msra.mxu0 0.0
      %5499 = vmatprep.subr.mxu0 0.0
      %5500 = vmatpush1.msra.mxu0 0.0
      %5501 = vmatprep.subr.mxu0 0.0
      %5502 = vmatpush1.msra.mxu0 0.0
      %5503 = vmatprep.subr.mxu0 0.0
      %5504 = vmatpush1.msra.mxu0 0.0
      %5505 = vmatprep.subr.mxu0 0.0
      %5506 = vmatpush1.msra.mxu0 0.0
      %5507 = vmatprep.subr.mxu0 0.0
      %5508 = vmatpush1.msra.mxu0 0.0
      %5509 = vmatprep.subr.mxu0 0.0
      %5510 = vmatpush1.msra.mxu0 0.0
      %5511 = vmatprep.subr.mxu0 0.0
      %5512 = vmatpush1.msra.mxu0 0.0
      %5513 = vmatprep.subr.mxu0 0.0
      %5514 = vmatpush1.msra.mxu0 0.0
      %5515 = vmatprep.subr.mxu0 0.0
      %5516 = vmatpush1.msra.mxu0 0.0
      %5517 = vmatprep.subr.mxu0 0.0
      %5518 = vmatpush1.msra.mxu0 0.0
      %5519 = vmatprep.subr.mxu0 0.0
      %5520 = vmatpush1.msra.mxu0 0.0
      %5521 = vmatprep.subr.mxu0 0.0
      %5522 = vmatpush1.msra.mxu0 0.0
      %5523 = vmatprep.subr.mxu0 0.0
      %5524 = vmatpush1.msra.mxu0 0.0
      %5525 = vmatprep.subr.mxu0 0.0
      %5526 = vmatpush1.msra.mxu0 0.0
      %5527 = vmatprep.subr.mxu0 0.0
      %5528 = vmatpush1.msra.mxu0 0.0
      %5529 = vmatprep.subr.mxu0 0.0
      %5530 = vmatpush1.msra.mxu0 0.0
      %5531 = vmatprep.subr.mxu0 0.0
      %5532 = vmatpush1.msra.mxu0 0.0
      %5533 = vmatprep.subr.mxu0 0.0
      %5534 = vmatpush1.msra.mxu0 0.0
      %5535 = vmatprep.subr.mxu0 0.0
      %5536 = vmatpush1.msra.mxu0 0.0
      %5537 = vmatprep.subr.mxu0 0.0
      %5538 = vmatpush1.msra.mxu0 0.0
      %5539 = vmatprep.subr.mxu0 0.0
      %5540 = vmatpush1.msra.mxu0 0.0
      %5541 = vmatprep.subr.mxu0 0.0
      %5542 = vmatpush1.msra.mxu0 0.0
      %5543 = vmatprep.subr.mxu0 0.0
      %5544 = vmatpush1.msra.mxu0 0.0
      %5545 = vmatprep.subr.mxu0 0.0
      %5546 = vmatpush1.msra.mxu0 0.0
      %5547 = vmatprep.subr.mxu0 0.0
      %5548 = vmatpush1.msra.mxu0 0.0
      %5549 = vmatprep.subr.mxu0 0.0
      %5550 = vmatpush1.msra.mxu0 0.0
      %5551 = vmatprep.subr.mxu0 0.0
      %5552 = vmatpush1.msra.mxu0 0.0
      %5553 = vmatprep.subr.mxu0 0.0
      %5554 = vmatpush1.msra.mxu0 0.0
      %5555 = vmatprep.subr.mxu0 0.0
      %5556 = vmatpush1.msra.mxu0 0.0
      %5557 = vmatprep.subr.mxu0 0.0
      %5558 = vmatpush1.msra.mxu0 0.0
      %5559 = vmatprep.mubr.f32.mxu0 0.0
      %5560 = vmatmul.mubr.f32.gmra.mrb[0].mxu0 %v5137
      %v5561 = vpop.f32.mrb[0].mxu0
      %v5562 = vadd.f32 0.0, %v5561
      %v5563 = vpop.f32.mrb[0].mxu0
      %5564 = vmatprep.mubr.f32.mxu0 0.0
      %5565 = vmatmul.mubr.f32.gmra.mrb[0].mxu0 %v5140
      %v5566 = vpop.f32.mrb[0].mxu0
      %v5567 = vadd.f32 0.0, %v5566
      %v5568 = vpop.f32.mrb[0].mxu0
      %5569 = vmatprep.mubr.f32.mxu0 0.0
      %5570 = vmatmul.mubr.f32.gmra.mrb[0].mxu0 %v5143
      %v5571 = vpop.f32.mrb[0].mxu0
      %v5572 = vadd.f32 0.0, %v5571
      %v5573 = vpop.f32.mrb[0].mxu0
      %5574 = vmatprep.mubr.f32.mxu0 0.0
      %5575 = vmatmul.mubr.f32.gmra.mrb[0].mxu0 %v5146
      %v5576 = vpop.f32.mrb[0].mxu0
      %v5577 = vadd.f32 0.0, %v5576
      %v5578 = vpop.f32.mrb[0].mxu0
      %5579 = vmatprep.mubr.f32.mxu0 0.0
      %5580 = vmatmul.mubr.f32.gmra.mrb[0].mxu0 %v5149
      %v5581 = vpop.f32.mrb[0].mxu0
      %v5582 = vadd.f32 0.0, %v5581
      %v5583 = vpop.f32.mrb[0].mxu0
      %5584 = vmatprep.mubr.f32.mxu0 0.0
      %5585 = vmatmul.mubr.f32.gmra.mrb[0].mxu0 %v5152
      %v5586 = vpop.f32.mrb[0].mxu0
      %v5587 = vadd.f32 0.0, %v5586
      %v5588 = vpop.f32.mrb[0].mxu0
      %5589 = vmatprep.mubr.f32.mxu0 0.0
      %5590 = vmatmul.mubr.f32.gmra.mrb[0].mxu0 %v5155
      %v5591 = vpop.f32.mrb[0].mxu0
      %v5592 = vadd.f32 0.0, %v5591
      %v5593 = vpop.f32.mrb[0].mxu0
      %5594 = vmatprep.mubr.f32.mxu0 0.0
      %5595 = vmatmul.mubr.f32.gmra.mrb[0].mxu0 %v5158
      %v5596 = vpop.f32.mrb[0].mxu0
      %v5597 = vadd.f32 0.0, %v5596
      %v5598 = vpop.f32.mrb[0].mxu0
      %5599 = vmatprep.mubr.f32.mxu0 0.0
      %5600 = vmatmul.mubr.f32.gmra.mrb[0].mxu0 %v5161
      %v5601 = vpop.f32.mrb[0].mxu0
      %v5602 = vadd.f32 0.0, %v5601
      %v5603 = vpop.f32.mrb[0].mxu0
      %5604 = vmatprep.mubr.f32.mxu0 0.0
      %5605 = vmatmul.mubr.f32.gmra.mrb[0].mxu0 %v5164
      %v5606 = vpop.f32.mrb[0].mxu0
      %v5607 = vadd.f32 0.0, %v5606
      %v5608 = vpop.f32.mrb[0].mxu0
      %5609 = vmatprep.mubr.f32.mxu0 0.0
      %5610 = vmatmul.mubr.f32.gmra.mrb[0].mxu0 %v5167
      %v5611 = vpop.f32.mrb[0].mxu0
      %v5612 = vadd.f32 0.0, %v5611
      %v5613 = vpop.f32.mrb[0].mxu0
      %5614 = vmatprep.mubr.f32.mxu0 0.0
      %5615 = vmatmul.mubr.f32.gmra.mrb[0].mxu0 %v5170
      %v5616 = vpop.f32.mrb[0].mxu0
      %v5617 = vadd.f32 0.0, %v5616
      %v5618 = vpop.f32.mrb[0].mxu0
      %5619 = vmatprep.mubr.f32.mxu0 0.0
      %5620 = vmatmul.mubr.f32.gmra.mrb[0].mxu0 %v5173
      %v5621 = vpop.f32.mrb[0].mxu0
      %v5622 = vadd.f32 0.0, %v5621
      %v5623 = vpop.f32.mrb[0].mxu0
      %5624 = vmatprep.mubr.f32.mxu0 0.0
      %5625 = vmatmul.mubr.f32.gmra.mrb[0].mxu0 %v5176
      %v5626 = vpop.f32.mrb[0].mxu0
      %v5627 = vadd.f32 0.0, %v5626
      %v5628 = vpop.f32.mrb[0].mxu0
      %5629 = vmatprep.mubr.f32.mxu0 0.0
      %5630 = vmatmul.mubr.f32.gmra.mrb[0].mxu0 %v5179
      %v5631 = vpop.f32.mrb[0].mxu0
      %v5632 = vadd.f32 0.0, %v5631
      %v5633 = vpop.f32.mrb[0].mxu0
      %5634 = vmatprep.mubr.f32.mxu0 0.0
      %5635 = vmatmul.mubr.f32.gmra.mrb[0].mxu0 %v5182
      %v5636 = vpop.f32.mrb[0].mxu0
      %v5637 = vadd.f32 0.0, %v5636
      %v5638 = vpop.f32.mrb[0].mxu0
      %5639 = vmatprep.mubr.f32.mxu0 0.0
      %5640 = vmatmul.mubr.f32.gmra.mrb[0].mxu0 %v5185
      %v5641 = vpop.f32.mrb[0].mxu0
      %v5642 = vadd.f32 0.0, %v5641
      %v5643 = vpop.f32.mrb[0].mxu0
      %5644 = vmatprep.mubr.f32.mxu0 0.0
      %5645 = vmatmul.mubr.f32.gmra.mrb[0].mxu0 %v5188
      %v5646 = vpop.f32.mrb[0].mxu0
      %v5647 = vadd.f32 0.0, %v5646
      %v5648 = vpop.f32.mrb[0].mxu0
      %5649 = vmatprep.mubr.f32.mxu0 0.0
      %5650 = vmatmul.mubr.f32.gmra.mrb[0].mxu0 %v5191
      %v5651 = vpop.f32.mrb[0].mxu0
      %v5652 = vadd.f32 0.0, %v5651
      %v5653 = vpop.f32.mrb[0].mxu0
      %5654 = vmatprep.mubr.f32.mxu0 0.0
      %5655 = vmatmul.mubr.f32.gmra.mrb[0].mxu0 %v5194
      %v5656 = vpop.f32.mrb[0].mxu0
      %v5657 = vadd.f32 0.0, %v5656
      %v5658 = vpop.f32.mrb[0].mxu0
      %5659 = vmatprep.mubr.f32.mxu0 0.0
      %5660 = vmatmul.mubr.f32.gmra.mrb[0].mxu0 %v5197
      %v5661 = vpop.f32.mrb[0].mxu0
      %v5662 = vadd.f32 0.0, %v5661
      %v5663 = vpop.f32.mrb[0].mxu0
      %5664 = vmatprep.mubr.f32.mxu0 0.0
      %5665 = vmatmul.mubr.f32.gmra.mrb[0].mxu0 %v5200
      %v5666 = vpop.f32.mrb[0].mxu0
      %v5667 = vadd.f32 0.0, %v5666
      %v5668 = vpop.f32.mrb[0].mxu0
      %5669 = vmatprep.mubr.f32.mxu0 0.0
      %5670 = vmatmul.mubr.f32.gmra.mrb[0].mxu0 %v5203
      %v5671 = vpop.f32.mrb[0].mxu0
      %v5672 = vadd.f32 0.0, %v5671
      %v5673 = vpop.f32.mrb[0].mxu0
      %5674 = vmatprep.mubr.f32.mxu0 0.0
      %5675 = vmatmul.mubr.f32.gmra.mrb[0].mxu0 %v5206
      %v5676 = vpop.f32.mrb[0].mxu0
      %v5677 = vadd.f32 0.0, %v5676
      %v5678 = vpop.f32.mrb[0].mxu0
      %5679 = vmatprep.mubr.f32.mxu0 0.0
      %5680 = vmatmul.mubr.f32.gmra.mrb[0].mxu0 %v5209
      %v5681 = vpop.f32.mrb[0].mxu0
      %v5682 = vadd.f32 0.0, %v5681
      %v5683 = vpop.f32.mrb[0].mxu0
      %5684 = vmatprep.mubr.f32.mxu0 0.0
      %5685 = vmatmul.mubr.f32.gmra.mrb[0].mxu0 %v5212
      %v5686 = vpop.f32.mrb[0].mxu0
      %v5687 = vadd.f32 0.0, %v5686
      %v5688 = vpop.f32.mrb[0].mxu0
      %5689 = vmatprep.mubr.f32.mxu0 0.0
      %5690 = vmatmul.mubr.f32.gmra.mrb[0].mxu0 %v5215
      %v5691 = vpop.f32.mrb[0].mxu0
      %v5692 = vadd.f32 0.0, %v5691
      %v5693 = vpop.f32.mrb[0].mxu0
      %5694 = vmatprep.mubr.f32.mxu0 0.0
      %5695 = vmatmul.mubr.f32.gmra.mrb[0].mxu0 %v5218
      %v5696 = vpop.f32.mrb[0].mxu0
      %v5697 = vadd.f32 0.0, %v5696
      %v5698 = vpop.f32.mrb[0].mxu0
      %5699 = vmatprep.mubr.f32.mxu0 0.0
      %5700 = vmatmul.mubr.f32.gmra.mrb[0].mxu0 %v5221
      %v5701 = vpop.f32.mrb[0].mxu0
      %v5702 = vadd.f32 0.0, %v5701
      %v5703 = vpop.f32.mrb[0].mxu0
      %5704 = vmatprep.mubr.f32.mxu0 0.0
      %5705 = vmatmul.mubr.f32.gmra.mrb[0].mxu0 %v5224
      %v5706 = vpop.f32.mrb[0].mxu0
      %v5707 = vadd.f32 0.0, %v5706
      %v5708 = vpop.f32.mrb[0].mxu0
      %5709 = vmatprep.mubr.f32.mxu0 0.0
      %5710 = vmatmul.mubr.f32.gmra.mrb[0].mxu0 %v5487
      %v5711 = vpop.f32.mrb[0].mxu0
      %v5712 = vadd.f32 0.0, %v5711
      %v5713 = vpop.f32.mrb[0].mxu0
      %5714 = vmatprep.mubr.f32.mxu0 0.0
      %5715 = vmatmul.mubr.f32.gmra.mrb[0].mxu0 %v5490
      %v5716 = vpop.f32.mrb[0].mxu0
      %v5717 = vadd.f32 0.0, %v5716
      %v5718 = vpop.f32.mrb[0].mxu0
      %5719 = vdwg.mxu0
      %v5720 = vadd.f32 %v5454, %v5562
      %v5721 = vadd.f32 %v5455, %v5567
      %v5722 = vadd.f32 %v5456, %v5572
      %v5723 = vadd.f32 %v5457, %v5577
      %v5724 = vadd.f32 %v5458, %v5582
      %v5725 = vadd.f32 %v5459, %v5587
      %v5726 = vadd.f32 %v5460, %v5592
      %v5727 = vadd.f32 %v5461, %v5597
      %v5728 = vadd.f32 %v5462, %v5602
      %v5729 = vadd.f32 %v5463, %v5607
      %v5730 = vadd.f32 %v5464, %v5612
      %v5731 = vadd.f32 %v5465, %v5617
      %v5732 = vadd.f32 %v5466, %v5622
      %v5733 = vadd.f32 %v5467, %v5627
      %v5734 = vadd.f32 %v5468, %v5632
      %v5735 = vadd.f32 %v5469, %v5637
      %v5736 = vadd.f32 %v5470, %v5642
      %v5737 = vadd.f32 %v5471, %v5647
      %v5738 = vadd.f32 %v5472, %v5652
      %v5739 = vadd.f32 %v5473, %v5657
      %v5740 = vadd.f32 %v5474, %v5662
      %v5741 = vadd.f32 %v5475, %v5667
      %v5742 = vadd.f32 %v5476, %v5672
      %v5743 = vadd.f32 %v5477, %v5677
      %v5744 = vadd.f32 %v5478, %v5682
      %v5745 = vadd.f32 %v5479, %v5687
      %v5746 = vadd.f32 %v5480, %v5692
      %v5747 = vadd.f32 %v5481, %v5697
      %v5748 = vadd.f32 %v5482, %v5702
      %v5749 = vadd.f32 %v5483, %v5707
      %v5750 = vadd.f32 %v5484, %v5712
      %v5751 = vadd.f32 %v5485, %v5717
      %v5753 = vsel %vm171, %v5128, 0
      %v5756 = vsel %vm171, %v5129, 0
      %v5759 = vsel %vm419, %v3309, 0
      %5761 = vmatprep.subr.mxu0 0.0
      %5762 = vmatpush1.msra.mxu0 %v5759
      %5763 = vmatprep.subr.mxu0 0.0
      %5764 = vmatpush1.msra.mxu0 0.0
      %5765 = vmatprep.subr.mxu0 0.0
      %5766 = vmatpush1.msra.mxu0 0.0
      %5767 = vmatprep.subr.mxu0 0.0
      %5768 = vmatpush1.msra.mxu0 0.0
      %5769 = vmatprep.subr.mxu0 0.0
      %5770 = vmatpush1.msra.mxu0 0.0
      %5771 = vmatprep.subr.mxu0 0.0
      %5772 = vmatpush1.msra.mxu0 0.0
      %5773 = vmatprep.subr.mxu0 0.0
      %5774 = vmatpush1.msra.mxu0 0.0
      %5775 = vmatprep.subr.mxu0 0.0
      %5776 = vmatpush1.msra.mxu0 0.0
      %5777 = vmatprep.subr.mxu0 0.0
      %5778 = vmatpush1.msra.mxu0 0.0
      %5779 = vmatprep.subr.mxu0 0.0
      %5780 = vmatpush1.msra.mxu0 0.0
      %5781 = vmatprep.subr.mxu0 0.0
      %5782 = vmatpush1.msra.mxu0 0.0
      %5783 = vmatprep.subr.mxu0 0.0
      %5784 = vmatpush1.msra.mxu0 0.0
      %5785 = vmatprep.subr.mxu0 0.0
      %5786 = vmatpush1.msra.mxu0 0.0
      %5787 = vmatprep.subr.mxu0 0.0
      %5788 = vmatpush1.msra.mxu0 0.0
      %5789 = vmatprep.subr.mxu0 0.0
      %5790 = vmatpush1.msra.mxu0 0.0
      %5791 = vmatprep.subr.mxu0 0.0
      %5792 = vmatpush1.msra.mxu0 0.0
      %5793 = vmatprep.subr.mxu0 0.0
      %5794 = vmatpush1.msra.mxu0 0.0
      %5795 = vmatprep.subr.mxu0 0.0
      %5796 = vmatpush1.msra.mxu0 0.0
      %5797 = vmatprep.subr.mxu0 0.0
      %5798 = vmatpush1.msra.mxu0 0.0
      %5799 = vmatprep.subr.mxu0 0.0
      %5800 = vmatpush1.msra.mxu0 0.0
      %5801 = vmatprep.subr.mxu0 0.0
      %5802 = vmatpush1.msra.mxu0 0.0
      %5803 = vmatprep.subr.mxu0 0.0
      %5804 = vmatpush1.msra.mxu0 0.0
      %5805 = vmatprep.subr.mxu0 0.0
      %5806 = vmatpush1.msra.mxu0 0.0
      %5807 = vmatprep.subr.mxu0 0.0
      %5808 = vmatpush1.msra.mxu0 0.0
      %5809 = vmatprep.subr.mxu0 0.0
      %5810 = vmatpush1.msra.mxu0 0.0
      %5811 = vmatprep.subr.mxu0 0.0
      %5812 = vmatpush1.msra.mxu0 0.0
      %5813 = vmatprep.subr.mxu0 0.0
      %5814 = vmatpush1.msra.mxu0 0.0
      %5815 = vmatprep.subr.mxu0 0.0
      %5816 = vmatpush1.msra.mxu0 0.0
      %5817 = vmatprep.subr.mxu0 0.0
      %5818 = vmatpush1.msra.mxu0 0.0
      %5819 = vmatprep.subr.mxu0 0.0
      %5820 = vmatpush1.msra.mxu0 0.0
      %5821 = vmatprep.subr.mxu0 0.0
      %5822 = vmatpush1.msra.mxu0 0.0
      %5823 = vmatprep.subr.mxu0 0.0
      %5824 = vmatpush1.msra.mxu0 0.0
      %5825 = vmatprep.mubr.f32.mxu0 0.0
      %5826 = vmatmul.mubr.f32.gmra.mrb[0].mxu0 %v5143
      %v5827 = vpop.f32.mrb[0].mxu0
      %v5828 = vadd.f32 0.0, %v5827
      %v5829 = vpop.f32.mrb[0].mxu0
      %5830 = vmatprep.mubr.f32.mxu0 0.0
      %5831 = vmatmul.mubr.f32.gmra.mrb[0].mxu0 %v5146
      %v5832 = vpop.f32.mrb[0].mxu0
      %v5833 = vadd.f32 0.0, %v5832
      %v5834 = vpop.f32.mrb[0].mxu0
      %5835 = vmatprep.mubr.f32.mxu0 0.0
      %5836 = vmatmul.mubr.f32.gmra.mrb[0].mxu0 %v5149
      %v5837 = vpop.f32.mrb[0].mxu0
      %v5838 = vadd.f32 0.0, %v5837
      %v5839 = vpop.f32.mrb[0].mxu0
      %5840 = vmatprep.mubr.f32.mxu0 0.0
      %5841 = vmatmul.mubr.f32.gmra.mrb[0].mxu0 %v5152
      %v5842 = vpop.f32.mrb[0].mxu0
      %v5843 = vadd.f32 0.0, %v5842
      %v5844 = vpop.f32.mrb[0].mxu0
      %5845 = vmatprep.mubr.f32.mxu0 0.0
      %5846 = vmatmul.mubr.f32.gmra.mrb[0].mxu0 %v5155
      %v5847 = vpop.f32.mrb[0].mxu0
      %v5848 = vadd.f32 0.0, %v5847
      %v5849 = vpop.f32.mrb[0].mxu0
      %5850 = vmatprep.mubr.f32.mxu0 0.0
      %5851 = vmatmul.mubr.f32.gmra.mrb[0].mxu0 %v5158
      %v5852 = vpop.f32.mrb[0].mxu0
      %v5853 = vadd.f32 0.0, %v5852
      %v5854 = vpop.f32.mrb[0].mxu0
      %5855 = vmatprep.mubr.f32.mxu0 0.0
      %5856 = vmatmul.mubr.f32.gmra.mrb[0].mxu0 %v5161
      %v5857 = vpop.f32.mrb[0].mxu0
      %v5858 = vadd.f32 0.0, %v5857
      %v5859 = vpop.f32.mrb[0].mxu0
      %5860 = vmatprep.mubr.f32.mxu0 0.0
      %5861 = vmatmul.mubr.f32.gmra.mrb[0].mxu0 %v5164
      %v5862 = vpop.f32.mrb[0].mxu0
      %v5863 = vadd.f32 0.0, %v5862
      %v5864 = vpop.f32.mrb[0].mxu0
      %5865 = vmatprep.mubr.f32.mxu0 0.0
      %5866 = vmatmul.mubr.f32.gmra.mrb[0].mxu0 %v5167
      %v5867 = vpop.f32.mrb[0].mxu0
      %v5868 = vadd.f32 0.0, %v5867
      %v5869 = vpop.f32.mrb[0].mxu0
      %5870 = vmatprep.mubr.f32.mxu0 0.0
      %5871 = vmatmul.mubr.f32.gmra.mrb[0].mxu0 %v5170
      %v5872 = vpop.f32.mrb[0].mxu0
      %v5873 = vadd.f32 0.0, %v5872
      %v5874 = vpop.f32.mrb[0].mxu0
      %5875 = vmatprep.mubr.f32.mxu0 0.0
      %5876 = vmatmul.mubr.f32.gmra.mrb[0].mxu0 %v5173
      %v5877 = vpop.f32.mrb[0].mxu0
      %v5878 = vadd.f32 0.0, %v5877
      %v5879 = vpop.f32.mrb[0].mxu0
      %5880 = vmatprep.mubr.f32.mxu0 0.0
      %5881 = vmatmul.mubr.f32.gmra.mrb[0].mxu0 %v5176
      %v5882 = vpop.f32.mrb[0].mxu0
      %v5883 = vadd.f32 0.0, %v5882
      %v5884 = vpop.f32.mrb[0].mxu0
      %5885 = vmatprep.mubr.f32.mxu0 0.0
      %5886 = vmatmul.mubr.f32.gmra.mrb[0].mxu0 %v5179
      %v5887 = vpop.f32.mrb[0].mxu0
      %v5888 = vadd.f32 0.0, %v5887
      %v5889 = vpop.f32.mrb[0].mxu0
      %5890 = vmatprep.mubr.f32.mxu0 0.0
      %5891 = vmatmul.mubr.f32.gmra.mrb[0].mxu0 %v5182
      %v5892 = vpop.f32.mrb[0].mxu0
      %v5893 = vadd.f32 0.0, %v5892
      %v5894 = vpop.f32.mrb[0].mxu0
      %5895 = vmatprep.mubr.f32.mxu0 0.0
      %5896 = vmatmul.mubr.f32.gmra.mrb[0].mxu0 %v5185
      %v5897 = vpop.f32.mrb[0].mxu0
      %v5898 = vadd.f32 0.0, %v5897
      %v5899 = vpop.f32.mrb[0].mxu0
      %5900 = vmatprep.mubr.f32.mxu0 0.0
      %5901 = vmatmul.mubr.f32.gmra.mrb[0].mxu0 %v5188
      %v5902 = vpop.f32.mrb[0].mxu0
      %v5903 = vadd.f32 0.0, %v5902
      %v5904 = vpop.f32.mrb[0].mxu0
      %5905 = vmatprep.mubr.f32.mxu0 0.0
      %5906 = vmatmul.mubr.f32.gmra.mrb[0].mxu0 %v5191
      %v5907 = vpop.f32.mrb[0].mxu0
      %v5908 = vadd.f32 0.0, %v5907
      %v5909 = vpop.f32.mrb[0].mxu0
      %5910 = vmatprep.mubr.f32.mxu0 0.0
      %5911 = vmatmul.mubr.f32.gmra.mrb[0].mxu0 %v5194
      %v5912 = vpop.f32.mrb[0].mxu0
      %v5913 = vadd.f32 0.0, %v5912
      %v5914 = vpop.f32.mrb[0].mxu0
      %5915 = vmatprep.mubr.f32.mxu0 0.0
      %5916 = vmatmul.mubr.f32.gmra.mrb[0].mxu0 %v5197
      %v5917 = vpop.f32.mrb[0].mxu0
      %v5918 = vadd.f32 0.0, %v5917
      %v5919 = vpop.f32.mrb[0].mxu0
      %5920 = vmatprep.mubr.f32.mxu0 0.0
      %5921 = vmatmul.mubr.f32.gmra.mrb[0].mxu0 %v5200
      %v5922 = vpop.f32.mrb[0].mxu0
      %v5923 = vadd.f32 0.0, %v5922
      %v5924 = vpop.f32.mrb[0].mxu0
      %5925 = vmatprep.mubr.f32.mxu0 0.0
      %5926 = vmatmul.mubr.f32.gmra.mrb[0].mxu0 %v5203
      %v5927 = vpop.f32.mrb[0].mxu0
      %v5928 = vadd.f32 0.0, %v5927
      %v5929 = vpop.f32.mrb[0].mxu0
      %5930 = vmatprep.mubr.f32.mxu0 0.0
      %5931 = vmatmul.mubr.f32.gmra.mrb[0].mxu0 %v5206
      %v5932 = vpop.f32.mrb[0].mxu0
      %v5933 = vadd.f32 0.0, %v5932
      %v5934 = vpop.f32.mrb[0].mxu0
      %5935 = vmatprep.mubr.f32.mxu0 0.0
      %5936 = vmatmul.mubr.f32.gmra.mrb[0].mxu0 %v5209
      %v5937 = vpop.f32.mrb[0].mxu0
      %v5938 = vadd.f32 0.0, %v5937
      %v5939 = vpop.f32.mrb[0].mxu0
      %5940 = vmatprep.mubr.f32.mxu0 0.0
      %5941 = vmatmul.mubr.f32.gmra.mrb[0].mxu0 %v5212
      %v5942 = vpop.f32.mrb[0].mxu0
      %v5943 = vadd.f32 0.0, %v5942
      %v5944 = vpop.f32.mrb[0].mxu0
      %5945 = vmatprep.mubr.f32.mxu0 0.0
      %5946 = vmatmul.mubr.f32.gmra.mrb[0].mxu0 %v5215
      %v5947 = vpop.f32.mrb[0].mxu0
      %v5948 = vadd.f32 0.0, %v5947
      %v5949 = vpop.f32.mrb[0].mxu0
      %5950 = vmatprep.mubr.f32.mxu0 0.0
      %5951 = vmatmul.mubr.f32.gmra.mrb[0].mxu0 %v5218
      %v5952 = vpop.f32.mrb[0].mxu0
      %v5953 = vadd.f32 0.0, %v5952
      %v5954 = vpop.f32.mrb[0].mxu0
      %5955 = vmatprep.mubr.f32.mxu0 0.0
      %5956 = vmatmul.mubr.f32.gmra.mrb[0].mxu0 %v5221
      %v5957 = vpop.f32.mrb[0].mxu0
      %v5958 = vadd.f32 0.0, %v5957
      %v5959 = vpop.f32.mrb[0].mxu0
      %5960 = vmatprep.mubr.f32.mxu0 0.0
      %5961 = vmatmul.mubr.f32.gmra.mrb[0].mxu0 %v5224
      %v5962 = vpop.f32.mrb[0].mxu0
      %v5963 = vadd.f32 0.0, %v5962
      %v5964 = vpop.f32.mrb[0].mxu0
      %5965 = vmatprep.mubr.f32.mxu0 0.0
      %5966 = vmatmul.mubr.f32.gmra.mrb[0].mxu0 %v5487
      %v5967 = vpop.f32.mrb[0].mxu0
      %v5968 = vadd.f32 0.0, %v5967
      %v5969 = vpop.f32.mrb[0].mxu0
      %5970 = vmatprep.mubr.f32.mxu0 0.0
      %5971 = vmatmul.mubr.f32.gmra.mrb[0].mxu0 %v5490
      %v5972 = vpop.f32.mrb[0].mxu0
      %v5973 = vadd.f32 0.0, %v5972
      %v5974 = vpop.f32.mrb[0].mxu0
      %5975 = vmatprep.mubr.f32.mxu0 0.0
      %5976 = vmatmul.mubr.f32.gmra.mrb[0].mxu0 %v5753
      %v5977 = vpop.f32.mrb[0].mxu0
      %v5978 = vadd.f32 0.0, %v5977
      %v5979 = vpop.f32.mrb[0].mxu0
      %5980 = vmatprep.mubr.f32.mxu0 0.0
      %5981 = vmatmul.mubr.f32.gmra.mrb[0].mxu0 %v5756
      %v5982 = vpop.f32.mrb[0].mxu0
      %v5983 = vadd.f32 0.0, %v5982
      %v5984 = vpop.f32.mrb[0].mxu0
      %5985 = vdwg.mxu0
      %v5986 = vadd.f32 %v5720, %v5828
      %v5987 = vadd.f32 %v5721, %v5833
      %v5988 = vadd.f32 %v5722, %v5838
      %v5989 = vadd.f32 %v5723, %v5843
      %v5990 = vadd.f32 %v5724, %v5848
      %v5991 = vadd.f32 %v5725, %v5853
      %v5992 = vadd.f32 %v5726, %v5858
      %v5993 = vadd.f32 %v5727, %v5863
      %v5994 = vadd.f32 %v5728, %v5868
      %v5995 = vadd.f32 %v5729, %v5873
      %v5996 = vadd.f32 %v5730, %v5878
      %v5997 = vadd.f32 %v5731, %v5883
      %v5998 = vadd.f32 %v5732, %v5888
      %v5999 = vadd.f32 %v5733, %v5893
      %v6000 = vadd.f32 %v5734, %v5898
      %v6001 = vadd.f32 %v5735, %v5903
      %v6002 = vadd.f32 %v5736, %v5908
      %v6003 = vadd.f32 %v5737, %v5913
      %v6004 = vadd.f32 %v5738, %v5918
      %v6005 = vadd.f32 %v5739, %v5923
      %v6006 = vadd.f32 %v5740, %v5928
      %v6007 = vadd.f32 %v5741, %v5933
      %v6008 = vadd.f32 %v5742, %v5938
      %v6009 = vadd.f32 %v5743, %v5943
      %v6010 = vadd.f32 %v5744, %v5948
      %v6011 = vadd.f32 %v5745, %v5953
      %v6012 = vadd.f32 %v5746, %v5958
      %v6013 = vadd.f32 %v5747, %v5963
      %v6014 = vadd.f32 %v5748, %v5968
      %v6015 = vadd.f32 %v5749, %v5973
      %v6016 = vadd.f32 %v5750, %v5978
      %v6017 = vadd.f32 %v5751, %v5983
      %v6018 = vsel %vm171, %v5986, 0.0
      %v6019 = vsel %vm171, %v5987, 0.0
      %v6020 = vadd.f32 %v6018, %v6019
      %v6021 = vsel %vm171, %v5988, 0.0
      %v6022 = vadd.f32 %v6020, %v6021
      %v6023 = vsel %vm171, %v5989, 0.0
      %v6024 = vadd.f32 %v6022, %v6023
      %v6025 = vsel %vm171, %v5990, 0.0
      %v6026 = vadd.f32 %v6024, %v6025
      %v6027 = vsel %vm171, %v5991, 0.0
      %v6028 = vadd.f32 %v6026, %v6027
      %v6029 = vsel %vm171, %v5992, 0.0
      %v6030 = vadd.f32 %v6028, %v6029
      %v6031 = vsel %vm171, %v5993, 0.0
      %v6032 = vadd.f32 %v6030, %v6031
      %v6033 = vsel %vm171, %v5994, 0.0
      %v6034 = vadd.f32 %v6032, %v6033
      %v6035 = vsel %vm171, %v5995, 0.0
      %v6036 = vadd.f32 %v6034, %v6035
      %v6037 = vsel %vm171, %v5996, 0.0
      %v6038 = vadd.f32 %v6036, %v6037
      %v6039 = vsel %vm171, %v5997, 0.0
      %v6040 = vadd.f32 %v6038, %v6039
      %v6041 = vsel %vm171, %v5998, 0.0
      %v6042 = vadd.f32 %v6040, %v6041
      %v6043 = vsel %vm171, %v5999, 0.0
      %v6044 = vadd.f32 %v6042, %v6043
      %v6045 = vsel %vm171, %v6000, 0.0
      %v6046 = vadd.f32 %v6044, %v6045
      %v6047 = vsel %vm171, %v6001, 0.0
      %v6048 = vadd.f32 %v6046, %v6047
      %v6049 = vsel %vm171, %v6002, 0.0
      %v6050 = vadd.f32 %v6048, %v6049
      %v6051 = vsel %vm171, %v6003, 0.0
      %v6052 = vadd.f32 %v6050, %v6051
      %v6053 = vsel %vm171, %v6004, 0.0
      %v6054 = vadd.f32 %v6052, %v6053
      %v6055 = vsel %vm171, %v6005, 0.0
      %v6056 = vadd.f32 %v6054, %v6055
      %v6057 = vsel %vm171, %v6006, 0.0
      %v6058 = vadd.f32 %v6056, %v6057
      %v6059 = vsel %vm171, %v6007, 0.0
      %v6060 = vadd.f32 %v6058, %v6059
      %v6061 = vsel %vm171, %v6008, 0.0
      %v6062 = vadd.f32 %v6060, %v6061
      %v6063 = vsel %vm171, %v6009, 0.0
      %v6064 = vadd.f32 %v6062, %v6063
      %v6065 = vsel %vm171, %v6010, 0.0
      %v6066 = vadd.f32 %v6064, %v6065
      %v6067 = vsel %vm171, %v6011, 0.0
      %v6068 = vadd.f32 %v6066, %v6067
      %v6069 = vsel %vm171, %v6012, 0.0
      %v6070 = vadd.f32 %v6068, %v6069
      %v6071 = vsel %vm171, %v6013, 0.0
      %v6072 = vadd.f32 %v6070, %v6071
      %v6073 = vsel %vm171, %v6014, 0.0
      %v6074 = vadd.f32 %v6072, %v6073
      %v6075 = vsel %vm171, %v6015, 0.0
      %v6076 = vadd.f32 %v6074, %v6075
      %v6077 = vsel %vm171, %v6016, 0.0
      %v6078 = vadd.f32 %v6076, %v6077
      %v6079 = vsel %vm171, %v6017, 0.0
      %v6080 = vadd.f32 %v6078, %v6079
      %v6081 = vrot.slane %v6080, 4
      %v6082 = vadd.f32 %v6080, %v6081
      %v6083 = vrot.slane %v6082, 2
      %v6084 = vadd.f32 %v6082, %v6083
      %v6085 = vrot.slane %v6084, 1
      %v6086 = vadd.f32 %v6084, %v6085
      %v6087 = vmul.f32 %v5986, %v5986
      %v6088 = vmul.f32 %v5987, %v5987
      %v6089 = vmul.f32 %v5988, %v5988
      %v6090 = vmul.f32 %v5989, %v5989
      %v6091 = vmul.f32 %v5990, %v5990
      %v6092 = vmul.f32 %v5991, %v5991
      %v6093 = vmul.f32 %v5992, %v5992
      %v6094 = vmul.f32 %v5993, %v5993
      %v6095 = vmul.f32 %v5994, %v5994
      %v6096 = vmul.f32 %v5995, %v5995
      %v6097 = vmul.f32 %v5996, %v5996
      %v6098 = vmul.f32 %v5997, %v5997
      %v6099 = vmul.f32 %v5998, %v5998
      %v6100 = vmul.f32 %v5999, %v5999
      %v6101 = vmul.f32 %v6000, %v6000
      %v6102 = vmul.f32 %v6001, %v6001
      %v6103 = vmul.f32 %v6002, %v6002
      %v6104 = vmul.f32 %v6003, %v6003
      %v6105 = vmul.f32 %v6004, %v6004
      %v6106 = vmul.f32 %v6005, %v6005
      %v6107 = vmul.f32 %v6006, %v6006
      %v6108 = vmul.f32 %v6007, %v6007
      %v6109 = vmul.f32 %v6008, %v6008
      %v6110 = vmul.f32 %v6009, %v6009
      %v6111 = vmul.f32 %v6010, %v6010
      %v6112 = vmul.f32 %v6011, %v6011
      %v6113 = vmul.f32 %v6012, %v6012
      %v6114 = vmul.f32 %v6013, %v6013
      %v6115 = vmul.f32 %v6014, %v6014
      %v6116 = vmul.f32 %v6015, %v6015
      %v6117 = vmul.f32 %v6016, %v6016
      %v6118 = vmul.f32 %v6017, %v6017
      %v6119 = vsel %vm171, %v6087, 0.0
      %v6120 = vsel %vm171, %v6088, 0.0
      %v6121 = vadd.f32 %v6119, %v6120
      %v6122 = vsel %vm171, %v6089, 0.0
      %v6123 = vadd.f32 %v6121, %v6122
      %v6124 = vsel %vm171, %v6090, 0.0
      %v6125 = vadd.f32 %v6123, %v6124
      %v6126 = vsel %vm171, %v6091, 0.0
      %v6127 = vadd.f32 %v6125, %v6126
      %v6128 = vsel %vm171, %v6092, 0.0
      %v6129 = vadd.f32 %v6127, %v6128
      %v6130 = vsel %vm171, %v6093, 0.0
      %v6131 = vadd.f32 %v6129, %v6130
      %v6132 = vsel %vm171, %v6094, 0.0
      %v6133 = vadd.f32 %v6131, %v6132
      %v6134 = vsel %vm171, %v6095, 0.0
      %v6135 = vadd.f32 %v6133, %v6134
      %v6136 = vsel %vm171, %v6096, 0.0
      %v6137 = vadd.f32 %v6135, %v6136
      %v6138 = vsel %vm171, %v6097, 0.0
      %v6139 = vadd.f32 %v6137, %v6138
      %v6140 = vsel %vm171, %v6098, 0.0
      %v6141 = vadd.f32 %v6139, %v6140
      %v6142 = vsel %vm171, %v6099, 0.0
      %v6143 = vadd.f32 %v6141, %v6142
      %v6144 = vsel %vm171, %v6100, 0.0
      %v6145 = vadd.f32 %v6143, %v6144
      %v6146 = vsel %vm171, %v6101, 0.0
      %v6147 = vadd.f32 %v6145, %v6146
      %v6148 = vsel %vm171, %v6102, 0.0
      %v6149 = vadd.f32 %v6147, %v6148
      %v6150 = vsel %vm171, %v6103, 0.0
      %v6151 = vadd.f32 %v6149, %v6150
      %v6152 = vsel %vm171, %v6104, 0.0
      %v6153 = vadd.f32 %v6151, %v6152
      %v6154 = vsel %vm171, %v6105, 0.0
      %v6155 = vadd.f32 %v6153, %v6154
      %v6156 = vsel %vm171, %v6106, 0.0
      %v6157 = vadd.f32 %v6155, %v6156
      %v6158 = vsel %vm171, %v6107, 0.0
      %v6159 = vadd.f32 %v6157, %v6158
      %v6160 = vsel %vm171, %v6108, 0.0
      %v6161 = vadd.f32 %v6159, %v6160
      %v6162 = vsel %vm171, %v6109, 0.0
      %v6163 = vadd.f32 %v6161, %v6162
      %v6164 = vsel %vm171, %v6110, 0.0
      %v6165 = vadd.f32 %v6163, %v6164
      %v6166 = vsel %vm171, %v6111, 0.0
      %v6167 = vadd.f32 %v6165, %v6166
      %v6168 = vsel %vm171, %v6112, 0.0
      %v6169 = vadd.f32 %v6167, %v6168
      %v6170 = vsel %vm171, %v6113, 0.0
      %v6171 = vadd.f32 %v6169, %v6170
      %v6172 = vsel %vm171, %v6114, 0.0
      %v6173 = vadd.f32 %v6171, %v6172
      %v6174 = vsel %vm171, %v6115, 0.0
      %v6175 = vadd.f32 %v6173, %v6174
      %v6176 = vsel %vm171, %v6116, 0.0
      %v6177 = vadd.f32 %v6175, %v6176
      %v6178 = vsel %vm171, %v6117, 0.0
      %v6179 = vadd.f32 %v6177, %v6178
      %v6180 = vsel %vm171, %v6118, 0.0
      %v6181 = vadd.f32 %v6179, %v6180
      %v6182 = vrot.slane %v6181, 4
      %v6183 = vadd.f32 %v6181, %v6182
      %v6184 = vrot.slane %v6183, 2
      %v6185 = vadd.f32 %v6183, %v6184
      %v6186 = vrot.slane %v6185, 1
      %v6187 = vadd.f32 %v6185, %v6186
      %v6188 = vmul.f32 %v6086, 0.00390625
      %v6189 = vmul.f32 %v6187, 0.00390625
      %v6190 = vmul.f32 %v6188, %v6188
      %v6191 = vsub.f32 %v6189, %v6190
      %v6192 = vmax.f32 %v6191, 0.0
      %v6193 = vsub.f32 %v5986, %v6188
      %v6194 = vsub.f32 %v5987, %v6188
      %v6195 = vsub.f32 %v5988, %v6188
      %v6196 = vsub.f32 %v5989, %v6188
      %v6197 = vsub.f32 %v5990, %v6188
      %v6198 = vsub.f32 %v5991, %v6188
      %v6199 = vsub.f32 %v5992, %v6188
      %v6200 = vsub.f32 %v5993, %v6188
      %v6201 = vsub.f32 %v5994, %v6188
      %v6202 = vsub.f32 %v5995, %v6188
      %v6203 = vsub.f32 %v5996, %v6188
      %v6204 = vsub.f32 %v5997, %v6188
      %v6205 = vsub.f32 %v5998, %v6188
      %v6206 = vsub.f32 %v5999, %v6188
      %v6207 = vsub.f32 %v6000, %v6188
      %v6208 = vsub.f32 %v6001, %v6188
      %v6209 = vsub.f32 %v6002, %v6188
      %v6210 = vsub.f32 %v6003, %v6188
      %v6211 = vsub.f32 %v6004, %v6188
      %v6212 = vsub.f32 %v6005, %v6188
      %v6213 = vsub.f32 %v6006, %v6188
      %v6214 = vsub.f32 %v6007, %v6188
      %v6215 = vsub.f32 %v6008, %v6188
      %v6216 = vsub.f32 %v6009, %v6188
      %v6217 = vsub.f32 %v6010, %v6188
      %v6218 = vsub.f32 %v6011, %v6188
      %v6219 = vsub.f32 %v6012, %v6188
      %v6220 = vsub.f32 %v6013, %v6188
      %v6221 = vsub.f32 %v6014, %v6188
      %v6222 = vsub.f32 %v6015, %v6188
      %v6223 = vsub.f32 %v6016, %v6188
      %v6224 = vsub.f32 %v6017, %v6188
      %v6225 = vadd.f32 %v6192, 1e-05
      %v6226 = vrsqrt.pop %v6225
      %v6227 = vmul.f32 %v6193, %v6226
      %v6228 = vmul.f32 %v6194, %v6226
      %v6229 = vmul.f32 %v6195, %v6226
      %v6230 = vmul.f32 %v6196, %v6226
      %v6231 = vmul.f32 %v6197, %v6226
      %v6232 = vmul.f32 %v6198, %v6226
      %v6233 = vmul.f32 %v6199, %v6226
      %v6234 = vmul.f32 %v6200, %v6226
      %v6235 = vmul.f32 %v6201, %v6226
      %v6236 = vmul.f32 %v6202, %v6226
      %v6237 = vmul.f32 %v6203, %v6226
      %v6238 = vmul.f32 %v6204, %v6226
      %v6239 = vmul.f32 %v6205, %v6226
      %v6240 = vmul.f32 %v6206, %v6226
      %v6241 = vmul.f32 %v6207, %v6226
      %v6242 = vmul.f32 %v6208, %v6226
      %v6243 = vmul.f32 %v6209, %v6226
      %v6244 = vmul.f32 %v6210, %v6226
      %v6245 = vmul.f32 %v6211, %v6226
      %v6246 = vmul.f32 %v6212, %v6226
      %v6247 = vmul.f32 %v6213, %v6226
      %v6248 = vmul.f32 %v6214, %v6226
      %v6249 = vmul.f32 %v6215, %v6226
      %v6250 = vmul.f32 %v6216, %v6226
      %v6251 = vmul.f32 %v6217, %v6226
      %v6252 = vmul.f32 %v6218, %v6226
      %v6253 = vmul.f32 %v6219, %v6226
      %v6254 = vmul.f32 %v6220, %v6226
      %v6255 = vmul.f32 %v6221, %v6226
      %v6256 = vmul.f32 %v6222, %v6226
      %v6257 = vmul.f32 %v6223, %v6226
      %v6258 = vmul.f32 %v6224, %v6226
      %v6259 = vld [vmem:[%s165] sm:$0xff]
      %v6260 = vld [vmem:[%s165 + $0x8] sm:$0xff]
      %v6261 = vld [vmem:[%s165 + $0x10] sm:$0xff]
      %v6262 = vld [vmem:[%s165 + $0x18] sm:$0xff]
      %v6263 = vld [vmem:[%s165 + $0x20] sm:$0xff]
      %v6264 = vld [vmem:[%s165 + $0x28] sm:$0xff]
      %v6265 = vld [vmem:[%s165 + $0x30] sm:$0xff]
      %v6266 = vld [vmem:[%s165 + $0x38] sm:$0xff]
      %v6267 = vld [vmem:[%s165 + $0x40] sm:$0xff]
      %v6268 = vld [vmem:[%s165 + $0x48] sm:$0xff]
      %v6269 = vld [vmem:[%s165 + $0x50] sm:$0xff]
      %v6270 = vld [vmem:[%s165 + $0x58] sm:$0xff]
      %v6271 = vld [vmem:[%s165 + $0x60] sm:$0xff]
      %v6272 = vld [vmem:[%s165 + $0x68] sm:$0xff]
      %v6273 = vld [vmem:[%s165 + $0x70] sm:$0xff]
      %v6274 = vld [vmem:[%s165 + $0x78] sm:$0xff]
      %v6275 = vld [vmem:[%s165 + $0x80] sm:$0xff]
      %v6276 = vld [vmem:[%s165 + $0x88] sm:$0xff]
      %v6277 = vld [vmem:[%s165 + $0x90] sm:$0xff]
      %v6278 = vld [vmem:[%s165 + $0x98] sm:$0xff]
      %v6279 = vld [vmem:[%s165 + $0xa0] sm:$0xff]
      %v6280 = vld [vmem:[%s165 + $0xa8] sm:$0xff]
      %v6281 = vld [vmem:[%s165 + $0xb0] sm:$0xff]
      %v6282 = vld [vmem:[%s165 + $0xb8] sm:$0xff]
      %v6283 = vld [vmem:[%s165 + $0xc0] sm:$0xff]
      %v6284 = vld [vmem:[%s165 + $0xc8] sm:$0xff]
      %v6285 = vld [vmem:[%s165 + $0xd0] sm:$0xff]
      %v6286 = vld [vmem:[%s165 + $0xd8] sm:$0xff]
      %v6287 = vld [vmem:[%s165 + $0xe0] sm:$0xff]
      %v6288 = vld [vmem:[%s165 + $0xe8] sm:$0xff]
      %v6289 = vld [vmem:[%s165 + $0xf0] sm:$0xff]
      %v6290 = vld [vmem:[%s165 + $0xf8] sm:$0xff]
      %v6291 = vadd.f32 %v6227, %v6259
      %v6292 = vadd.f32 %v6228, %v6260
      %v6293 = vadd.f32 %v6229, %v6261
      %v6294 = vadd.f32 %v6230, %v6262
      %v6295 = vadd.f32 %v6231, %v6263
      %v6296 = vadd.f32 %v6232, %v6264
      %v6297 = vadd.f32 %v6233, %v6265
      %v6298 = vadd.f32 %v6234, %v6266
      %v6299 = vadd.f32 %v6235, %v6267
      %v6300 = vadd.f32 %v6236, %v6268
      %v6301 = vadd.f32 %v6237, %v6269
      %v6302 = vadd.f32 %v6238, %v6270
      %v6303 = vadd.f32 %v6239, %v6271
      %v6304 = vadd.f32 %v6240, %v6272
      %v6305 = vadd.f32 %v6241, %v6273
      %v6306 = vadd.f32 %v6242, %v6274
      %v6307 = vadd.f32 %v6243, %v6275
      %v6308 = vadd.f32 %v6244, %v6276
      %v6309 = vadd.f32 %v6245, %v6277
      %v6310 = vadd.f32 %v6246, %v6278
      %v6311 = vadd.f32 %v6247, %v6279
      %v6312 = vadd.f32 %v6248, %v6280
      %v6313 = vadd.f32 %v6249, %v6281
      %v6314 = vadd.f32 %v6250, %v6282
      %v6315 = vadd.f32 %v6251, %v6283
      %v6316 = vadd.f32 %v6252, %v6284
      %v6317 = vadd.f32 %v6253, %v6285
      %v6318 = vadd.f32 %v6254, %v6286
      %v6319 = vadd.f32 %v6255, %v6287
      %v6320 = vadd.f32 %v6256, %v6288
      %v6321 = vadd.f32 %v6257, %v6289
      %v6322 = vadd.f32 %v6258, %v6290
      %6323 = vst.msk [vmem:[%s170] sm:$0xff] %vm171, %v6291
      %6324 = vst.msk [vmem:[%s170 + $0x8] sm:$0xff] %vm171, %v6292
      %6325 = vst.msk [vmem:[%s170 + $0x10] sm:$0xff] %vm171, %v6293
      %6326 = vst.msk [vmem:[%s170 + $0x18] sm:$0xff] %vm171, %v6294
      %6327 = vst.msk [vmem:[%s170 + $0x20] sm:$0xff] %vm171, %v6295
      %6328 = vst.msk [vmem:[%s170 + $0x28] sm:$0xff] %vm171, %v6296
      %6329 = vst.msk [vmem:[%s170 + $0x30] sm:$0xff] %vm171, %v6297
      %6330 = vst.msk [vmem:[%s170 + $0x38] sm:$0xff] %vm171, %v6298
      %6331 = vst.msk [vmem:[%s170 + $0x40] sm:$0xff] %vm171, %v6299
      %6332 = vst.msk [vmem:[%s170 + $0x48] sm:$0xff] %vm171, %v6300
      %6333 = vst.msk [vmem:[%s170 + $0x50] sm:$0xff] %vm171, %v6301
      %6334 = vst.msk [vmem:[%s170 + $0x58] sm:$0xff] %vm171, %v6302
      %6335 = vst.msk [vmem:[%s170 + $0x60] sm:$0xff] %vm171, %v6303
      %6336 = vst.msk [vmem:[%s170 + $0x68] sm:$0xff] %vm171, %v6304
      %6337 = vst.msk [vmem:[%s170 + $0x70] sm:$0xff] %vm171, %v6305
      %6338 = vst.msk [vmem:[%s170 + $0x78] sm:$0xff] %vm171, %v6306
      %6339 = vst.msk [vmem:[%s170 + $0x80] sm:$0xff] %vm171, %v6307
      %6340 = vst.msk [vmem:[%s170 + $0x88] sm:$0xff] %vm171, %v6308
      %6341 = vst.msk [vmem:[%s170 + $0x90] sm:$0xff] %vm171, %v6309
      %6342 = vst.msk [vmem:[%s170 + $0x98] sm:$0xff] %vm171, %v6310
      %6343 = vst.msk [vmem:[%s170 + $0xa0] sm:$0xff] %vm171, %v6311
      %6344 = vst.msk [vmem:[%s170 + $0xa8] sm:$0xff] %vm171, %v6312
      %6345 = vst.msk [vmem:[%s170 + $0xb0] sm:$0xff] %vm171, %v6313
      %6346 = vst.msk [vmem:[%s170 + $0xb8] sm:$0xff] %vm171, %v6314
      %6347 = vst.msk [vmem:[%s170 + $0xc0] sm:$0xff] %vm171, %v6315
      %6348 = vst.msk [vmem:[%s170 + $0xc8] sm:$0xff] %vm171, %v6316
      %6349 = vst.msk [vmem:[%s170 + $0xd0] sm:$0xff] %vm171, %v6317
      %6350 = vst.msk [vmem:[%s170 + $0xd8] sm:$0xff] %vm171, %v6318
      %6351 = vst.msk [vmem:[%s170 + $0xe0] sm:$0xff] %vm171, %v6319
      %6352 = vst.msk [vmem:[%s170 + $0xe8] sm:$0xff] %vm171, %v6320
      %6353 = vst.msk [vmem:[%s170 + $0xf0] sm:$0xff] %vm171, %v6321
      %6354 = vst.msk [vmem:[%s170 + $0xf8] sm:$0xff] %vm171, %v6322
      %p6355 = scmp.lt.s32.totalorder %s14, 1
      %s6356 = scalar_select %p6355, %s14, 1
      %s6357 = smul.addr %s6356, 32
      %s6358 = smul.addr %s6357, 8
      %s6359 = scalar_lea.vmem %s3, %s6358
      // Predicated region
      $region33: #{resblock_forward_nhwc.1} parent=31 // pred_check
        %p6360 = pneg %p100
      $region34: #{resblock_forward_nhwc.1} parent=31 // pred_check_branch
        %6362 = sbr.rel (%p6360) target = $region36
      $region35: #{resblock_forward_nhwc.1} parent=31 // pred_region
        _
      $region36: #{resblock_forward_nhwc.1} parent=31 // pred_fallthru
        _
    $region32: #{resblock_forward_nhwc.1} parent=5 // pred_fallthru
      _
    %p6363 = scmp.le.s32.totalorder 2, %s9
    // Predicated region
    $region37: #{resblock_forward_nhwc.1} parent=5 // pred_check
      %p6364 = pneg %p6363
    $region38: #{resblock_forward_nhwc.1} parent=5 // pred_check_branch
      %6366 = sbr.rel (%p6364) target = $region40
    $region39: #{resblock_forward_nhwc.1} parent=5 // pred_region
      %s6367 = ssub.s32 %s9, 2
      // Predicated region
      $region41: #{resblock_forward_nhwc.1} parent=39 // pred_check
        %p6368 = pneg %p106
      $region42: #{resblock_forward_nhwc.1} parent=39 // pred_check_branch
        %6370 = sbr.rel (%p6368) target = $region44
      $region43: #{resblock_forward_nhwc.1} parent=39 // pred_region
        %p6371 = scmp.lt.s32.totalorder %s15, 1
        %s6372 = scalar_select %p6371, %s15, 1
        %s6373 = smul.addr %s6372, 32
        %s6374 = smul.addr %s6373, 8
        %s6375 = scalar_lea.vmem %s3, %s6374
      $region44: #{resblock_forward_nhwc.1} parent=39 // pred_fallthru
        _
    $region40: #{resblock_forward_nhwc.1} parent=5 // pred_fallthru
      _
  $region6: #{resblock_forward_nhwc.1} parent=0 // loop_footer
    %s13 = sadd.s32 1, %s9
  $region7: #{resblock_forward_nhwc.1} parent=0 // loop_footer_branch
    %8 = sbr.rel target = $region3
  $region8: #{resblock_forward_nhwc.1} parent=0 // loop_exit
    _

</llo_original>
